<compile_context>
chip_gen: v7x
topology: tpu7x:2x2x1
jax: 0.10.0
libtpu: 0.0.40
codegen_flags: <defaults>
</compile_context>

<pallas_src>
import functools
import math

import jax
import jax.numpy as jnp
from jax import lax
from jax.experimental import pallas as pl
from jax.experimental.pallas import tpu as pltpu


# ----------------------------- small helpers --------------------------------
def _round_up(x, m):
    return (x + m - 1) // m * m


def _bytes(shape, dtype):
    return math.prod(shape) * jnp.dtype(dtype).itemsize


def _pad_to(x, shape):
    return jnp.pad(x, [(0, s - d) for d, s in zip(x.shape, shape)])


def _pad_gate_cols(w, H, Hp):
    """[in_dim, 4H] -> [in_dim, 4Hp]; each PyTorch gate block (i,f,g,o) padded to Hp."""
    in_dim = w.shape[0]
    w4 = w.reshape(in_dim, 4, H)
    w4 = jnp.pad(w4, ((0, 0), (0, 0), (0, Hp - H)))
    return w4.reshape(in_dim, 4 * Hp)


def _vmem_limit(block_bytes):
    # 2x the live blocks, floored at 32 MiB, capped at 64 MiB (v7x physical).
    return int(min(max(2 * block_bytes, 32 * 1024 * 1024), 64 * 1024 * 1024))


def _packed_indices(lengths, B):
    # pack_padded_sequence (batch_first=True, lengths sorted descending):
    # data is time-major, at each t only batch elements with length > t.
    idx_t, idx_b = [], []
    for t in range(max(lengths)):
        for b in range(B):
            if lengths[b] > t:
                idx_t.append(t)
                idx_b.append(b)
    return jnp.array(idx_t, dtype=jnp.int32), jnp.array(idx_b, dtype=jnp.int32)


# ---------------------------------------------------------------------------
# Kernel 1: stacked LSTM over time (emits the last layer's hidden sequence).
# ---------------------------------------------------------------------------
def _lstm_kernel(num_layers, T, BB, Hp, emb_ref, *refs):
    layer_refs = refs[:3 * num_layers]
    out_ref = refs[3 * num_layers]        # [T, BB, Hp] bf16; also reused as the
    zx_scr = refs[3 * num_layers + 1]     #   next layer's input sequence.

    for layer in range(num_layers):
        w_ih_ref = layer_refs[3 * layer]       # [in_dim_p, 4Hp] bf16
        w_hh_ref = layer_refs[3 * layer + 1]   # [Hp, 4Hp]       bf16
        b_ref = layer_refs[3 * layer + 2]      # [1, 4Hp]        f32 (b_ih + b_hh)

        in_dim = w_ih_ref.shape[0]
        x_ref = emb_ref if layer == 0 else out_ref

        # Hoisted input-to-hidden matmul: one MXU matmul with M = T*BB
        # (bias folded in), stored to a VMEM scratch consumed by the loop.
        x_flat = x_ref[...].reshape(T * BB, in_dim)                 # bf16
        zx = jnp.dot(x_flat, w_ih_ref[...],
                     preferred_element_type=jnp.float32) + b_ref[...]
        zx_scr[...] = zx.reshape(T, BB, 4 * Hp)

        def step(t, carry, w_hh_ref=w_hh_ref):
            h, c = carry                                            # f32, in vregs
            z = zx_scr[t] + jnp.dot(h.astype(jnp.bfloat16), w_hh_ref[...],
                                    preferred_element_type=jnp.float32)
            # Lane-aligned gate slices (Hp is a multiple of 128), order i,f,g,o.
            i_g = jax.nn.sigmoid(z[:, 0:Hp])
            f_g = jax.nn.sigmoid(z[:, Hp:2 * Hp])
            g_g = jnp.tanh(z[:, 2 * Hp:3 * Hp])
            o_g = jax.nn.sigmoid(z[:, 3 * Hp:4 * Hp])
            c_new = f_g * c + i_g * g_g
            h_new = o_g * jnp.tanh(c_new)
            out_ref[t] = h_new.astype(out_ref.dtype)                # only store / step
            return (h_new, c_new)

        h0 = jnp.zeros((BB, Hp), jnp.float32)
        c0 = jnp.zeros((BB, Hp), jnp.float32)
        lax.fori_loop(0, T, step, (h0, c0), unroll=True)


# ---------------------------------------------------------------------------
# Kernel 2: classifier  [tm, Hp] @ [Hp, tn] + b  (lane-dense, 2-D parallel grid)
# ---------------------------------------------------------------------------
def _linear_kernel(h_ref, w_ref, b_ref, o_ref):
    o_ref[...] = (jnp.dot(h_ref[...], w_ref[...],
                          preferred_element_type=jnp.float32)
                  + b_ref[...]).astype(o_ref.dtype)


# ------------------------------- wrapper -------------------------------------
def decoder_forward(features, captions, lengths, params, num_layers):
    """features: [B, E] f32, captions: [B, T_cap] int32,
       lengths: python list of ints, sorted descending, each <= T_cap + 1."""
    embed_w = params["embed_w"]                               # [V, E]
    emb = embed_w[captions]                                   # [B, T_cap, E] (gather = glue)
    emb = jnp.concatenate([features[:, None, :], emb], 1)     # [B, T, E]
    B, T, E = emb.shape
    H = params["w_hh"][0].shape[0]
    V = params["w_lin"].shape[1]

    # (sublane, lane)-friendly padded sizes.
    Bp = _round_up(B, 16) if B <= 128 else _round_up(B, 128)
    BB = min(Bp, 128)                                         # batch tile per grid step
    Ep = _round_up(E, 128)
    Hp = _round_up(H, 128)

    # Time-major, padded, bf16 embedded sequence.
    emb_tbe = jnp.transpose(emb, (1, 0, 2))                   # [T, B, E]
    emb_tbe = _pad_to(emb_tbe, (T, Bp, Ep)).astype(jnp.bfloat16)

    # Per-gate-padded LSTM weights (zero padding keeps padded hidden units at 0).
    w_ih_p, w_hh_p, b_p = [], [], []
    for l in range(num_layers):
        in_dim, in_dim_p = (E, Ep) if l == 0 else (H, Hp)
        w_ih = _pad_gate_cols(params["w_ih"][l], H, Hp)
        w_ih = jnp.pad(w_ih, ((0, in_dim_p - in_dim), (0, 0)))
        w_hh = _pad_gate_cols(params["w_hh"][l], H, Hp)
        w_hh = jnp.pad(w_hh, ((0, Hp - H), (0, 0)))
        w_ih_p.append(w_ih.astype(jnp.bfloat16))
        w_hh_p.append(w_hh.astype(jnp.bfloat16))
        b_p.append(_pad_gate_cols(params["b"][l], H, Hp).astype(jnp.float32))

    # ---- pallas_call #1: stacked LSTM (hidden sequence only) ----
    inputs = [emb_tbe]
    in_specs = [pl.BlockSpec((T, BB, Ep), lambda i: (0, i, 0))]
    lstm_bytes = 2 * _bytes((T, BB, Ep), jnp.bfloat16)
    for l in range(num_layers):
        for arr in (w_ih_p[l], w_hh_p[l], b_p[l]):
            inputs.append(arr)
            in_specs.append(pl.BlockSpec(arr.shape, lambda i: (0, 0)))
            lstm_bytes += 2 * _bytes(arr.shape, arr.dtype)
    lstm_bytes += 2 * _bytes((T, BB, Hp), jnp.bfloat16)       # output block
    lstm_bytes += _bytes((T, BB, 4 * Hp), jnp.float32)        # zx scratch

    hidden = pl.pallas_call(
        functools.partial(_lstm_kernel, num_layers, T, BB, Hp),
        out_shape=jax.ShapeDtypeStruct((T, Bp, Hp), jnp.bfloat16),
        grid=(Bp // BB,),
        in_specs=in_specs,
        out_specs=pl.BlockSpec((T, BB, Hp), lambda i: (0, i, 0)),
        scratch_shapes=[pltpu.VMEM((T, BB, 4 * Hp), jnp.float32)],
        compiler_params=pltpu.CompilerParams(
            dimension_semantics=("parallel",),
            vmem_limit_bytes=_vmem_limit(lstm_bytes)),
    )(*inputs)

    # ---- pallas_call #2: classifier over all (padded) timesteps ----
    R = T * Bp
    h2d = hidden.reshape(R, Hp)                               # bf16, row = t*Bp + b
    tm = min(256, R)                                          # R is a multiple of 16
    Rp = _round_up(R, tm)
    tn = min(512, _round_up(V, 128))
    Vp = _round_up(V, tn)
    h2d = _pad_to(h2d, (Rp, Hp))
    w_lin = _pad_to(params["w_lin"], (Hp, Vp)).astype(jnp.bfloat16)
    b_lin = _pad_to(params["b_lin"], (1, Vp)).astype(jnp.float32)

    lin_bytes = 2 * (_bytes((tm, Hp), jnp.bfloat16) + _bytes((Hp, tn), jnp.bfloat16)
                     + _bytes((1, tn), jnp.float32) + _bytes((tm, tn), jnp.float32))

    logits = pl.pallas_call(
        _linear_kernel,
        out_shape=jax.ShapeDtypeStruct((Rp, Vp), jnp.float32),
        grid=(Rp // tm, Vp // tn),
        in_specs=[pl.BlockSpec((tm, Hp), lambda i, j: (i, 0)),
                  pl.BlockSpec((Hp, tn), lambda i, j: (0, j)),
                  pl.BlockSpec((1, tn), lambda i, j: (0, j))],
        out_specs=pl.BlockSpec((tm, tn), lambda i, j: (i, j)),
        compiler_params=pltpu.CompilerParams(
            dimension_semantics=("parallel", "parallel"),
            vmem_limit_bytes=_vmem_limit(lin_bytes)),
    )(h2d, w_lin, b_lin)

    # pack_padded_sequence ordering (glue).
    logits = logits[:R, :V].reshape(T, Bp, V)
    idx_t, idx_b = _packed_indices(lengths, B)
    return logits[idx_t, idx_b]                               # [sum(lengths), V]


# ------------------------------ reference ------------------------------------
def decoder_forward_ref(features, captions, lengths, params, num_layers,
                        matmul_dtype=jnp.float32):
    """Pure-JAX reference.  With matmul_dtype=bf16 it mirrors the kernel's
    mixed precision (bf16 matmul inputs, f32 accumulation/gates)."""
    md = matmul_dtype
    emb = params["embed_w"][captions]
    emb = jnp.concatenate([features[:, None, :], emb], 1)     # [B, T, E]
    B, T, _ = emb.shape
    H = params["w_hh"][0].shape[0]
    x = emb
    for l in range(num_layers):
        w_ih = params["w_ih"][l].astype(md)
        w_hh = params["w_hh"][l].astype(md)
        b = params["b"][l]
        xs = x.astype(md)
        zx = jnp.dot(xs.reshape(B * T, -1), w_ih,
                     preferred_element_type=jnp.float32).reshape(B, T, 4 * H) + b
        h = jnp.zeros((B, H), jnp.float32)
        c = jnp.zeros((B, H), jnp.float32)
        outs = []
        for t in range(T):
            z = zx[:, t] + jnp.dot(h.astype(md), w_hh,
                                   preferred_element_type=jnp.float32)
            i_g = jax.nn.sigmoid(z[:, 0:H])
            f_g = jax.nn.sigmoid(z[:, H:2 * H])
            g_g = jnp.tanh(z[:, 2 * H:3 * H])
            o_g = jax.nn.sigmoid(z[:, 3 * H:4 * H])
            c = f_g * c + i_g * g_g
            h = o_g * jnp.tanh(c)
            outs.append(h)
        x = jnp.stack(outs, axis=1)
    logits = (jnp.dot(x.astype(md).reshape(B * T, H),
                      params["w_lin"].astype(md),
                      preferred_element_type=jnp.float32).reshape(B, T, -1)
              + params["b_lin"])
    idx_t, idx_b = _packed_indices(lengths, B)
    return logits[idx_b, idx_t]


def init_params(key, embed_size, hidden_size, vocab_size, num_layers):
    E, H, V = embed_size, hidden_size, vocab_size
    ks = jax.random.split(key, 2 + 4 * num_layers)
    k = H ** -0.5
    params = {
        "embed_w": jax.random.uniform(ks[0], (V, E), jnp.float32, -0.1, 0.1),
        "w_lin": jax.random.uniform(ks[1], (H, V), jnp.float32, -0.1, 0.1),
        "b_lin": jnp.zeros((1, V), jnp.float32),
        "w_ih": [], "w_hh": [], "b": [],
    }
    for l in range(num_layers):
        in_dim = E if l == 0 else H
        kw = ks[2 + 4 * l: 6 + 4 * l]
        params["w_ih"].append(
            jax.random.uniform(kw[0], (in_dim, 4 * H), jnp.float32, -k, k))
        params["w_hh"].append(
            jax.random.uniform(kw[1], (H, 4 * H), jnp.float32, -k, k))
        b_ih = jax.random.uniform(kw[2], (1, 4 * H), jnp.float32, -k, k)
        b_hh = jax.random.uniform(kw[3], (1, 4 * H), jnp.float32, -k, k)
        params["b"].append(b_ih + b_hh)
    return params

# TODO(synk): sample() (120-step greedy autoregressive decode) not implemented;
# only forward() was requested.


if __name__ == "__main__":
    embed_size, hidden_size, vocab_size, num_layers = 32, 32, 64, 2
    B, T_cap = 2, 8

    key = jax.random.PRNGKey(0)
    kp, kf, kc = jax.random.split(key, 3)
    params = init_params(kp, embed_size, hidden_size, vocab_size, num_layers)

    features = jax.random.normal(kf, (B, embed_size), jnp.float32)
    captions = jax.random.randint(kc, (B, T_cap), 0, vocab_size, jnp.int32)
    lengths = [9, 7]  # sorted descending, <= T_cap + 1

    out = decoder_forward(features, captions, lengths, params, num_layers)
    out = jax.block_until_ready(out)
    assert out.shape == (sum(lengths), vocab_size), out.shape

    # Reference that mirrors the kernel's bf16-input / f32-accumulate matmuls.
    ref_bf16 = decoder_forward_ref(features, captions, lengths, params,
                                   num_layers, matmul_dtype=jnp.bfloat16)
    assert jnp.allclose(out, ref_bf16, rtol=5e-3, atol=5e-3), float(
        jnp.max(jnp.abs(out - ref_bf16)))

    # Full-f32 reference (true PyTorch numerics) -- loose check on bf16 drift.
    ref_f32 = decoder_forward_ref(features, captions, lengths, params,
                                  num_layers, matmul_dtype=jnp.float32)
    assert jnp.allclose(out, ref_f32, rtol=1e-1, atol=1e-1), float(
        jnp.max(jnp.abs(out - ref_f32)))

    print("KERNEL_OK")
</pallas_src>

<mosaic_0001>
module attributes {stable_mosaic.version = 11 : i64} {
  func.func @_lstm_kernel(%arg0: i32, %arg1: memref<9x16x128xbf16, #tpu.memory_space<vmem>>, %arg2: memref<128x512xbf16, #tpu.memory_space<vmem>>, %arg3: memref<128x512xbf16, #tpu.memory_space<vmem>>, %arg4: memref<1x512xf32, #tpu.memory_space<vmem>>, %arg5: memref<128x512xbf16, #tpu.memory_space<vmem>>, %arg6: memref<128x512xbf16, #tpu.memory_space<vmem>>, %arg7: memref<1x512xf32, #tpu.memory_space<vmem>>, %arg8: memref<9x16x128xbf16, #tpu.memory_space<vmem>>, %arg9: memref<9x16x512xf32, #tpu.memory_space<vmem>>) attributes {dimension_semantics = [#tpu.dimension_semantics<parallel>], iteration_bounds = array<i64: 1>, scalar_prefetch = 0 : i64, scratch_operands = 1 : i64, tpu.core_type = #tpu.core_type<tc>, window_params = [{transform_indices = @transform_0, window_bounds = array<i64: 9, 16, 128>}, {pipeline_mode = #tpu.pipeline_mode<synchronous>, transform_indices = @transform_1, window_bounds = array<i64: 128, 512>}, {pipeline_mode = #tpu.pipeline_mode<synchronous>, transform_indices = @transform_2, window_bounds = array<i64: 128, 512>}, {pipeline_mode = #tpu.pipeline_mode<synchronous>, transform_indices = @transform_3, window_bounds = array<i64: 1, 512>}, {pipeline_mode = #tpu.pipeline_mode<synchronous>, transform_indices = @transform_4, window_bounds = array<i64: 128, 512>}, {pipeline_mode = #tpu.pipeline_mode<synchronous>, transform_indices = @transform_5, window_bounds = array<i64: 128, 512>}, {pipeline_mode = #tpu.pipeline_mode<synchronous>, transform_indices = @transform_6, window_bounds = array<i64: 1, 512>}, {transform_indices = @transform_7, window_bounds = array<i64: 9, 16, 128>}]} {
    %c0 = arith.constant 0 : index
    %c0_0 = arith.constant 0 : index
    %c0_1 = arith.constant 0 : index
    %0 = vector.load %arg1[%c0, %c0_0, %c0_1] : memref<9x16x128xbf16, #tpu.memory_space<vmem>>, vector<9x16x128xbf16>
    %1 = vector.shape_cast %0 : vector<9x16x128xbf16> to vector<144x128xbf16>
    %c0_2 = arith.constant 0 : index
    %c0_3 = arith.constant 0 : index
    %2 = vector.load %arg2[%c0_2, %c0_3] : memref<128x512xbf16, #tpu.memory_space<vmem>>, vector<128x512xbf16>
    %cst = arith.constant dense<0.000000e+00> : vector<144x512xf32>
    %3 = tpu.matmul %1, %2, %cst {dimension_numbers = #tpu.dot_dimension_numbers<[1], [0], [0], [1], [0, 0, 1, 1], [], []>} : vector<144x128xbf16>, vector<128x512xbf16>, vector<144x512xf32> -> vector<144x512xf32>
    %c0_4 = arith.constant 0 : index
    %c0_5 = arith.constant 0 : index
    %4 = vector.load %arg4[%c0_4, %c0_5] : memref<1x512xf32, #tpu.memory_space<vmem>>, vector<1x512xf32>
    %5 = vector.broadcast %4 : vector<1x512xf32> to vector<144x512xf32>
    %6 = arith.addf %3, %5 : vector<144x512xf32>
    %7 = vector.shape_cast %6 : vector<144x512xf32> to vector<9x16x512xf32>
    %c0_6 = arith.constant 0 : index
    %c0_7 = arith.constant 0 : index
    %c0_8 = arith.constant 0 : index
    %8 = vector.load %arg9[%c0_6, %c0_7, %c0_8] : memref<9x16x512xf32, #tpu.memory_space<vmem>>, vector<9x16x512xf32>
    tpu.vector_store %arg9[%c0_6, %c0_7, %c0_8], %7 {strides = array<i32>} : memref<9x16x512xf32, #tpu.memory_space<vmem>>, vector<9x16x512xf32>,
    %cst_9 = arith.constant 0.000000e+00 : f32
    %9 = vector.broadcast %cst_9 : f32 to vector<16x128xf32>
    %cst_10 = arith.constant 0.000000e+00 : f32
    %10 = vector.broadcast %cst_10 : f32 to vector<16x128xf32>
    %c0_i32 = arith.constant 0 : i32
    %11 = arith.index_cast %c0_i32 : i32 to index
    %c0_11 = arith.constant 0 : index
    %c0_12 = arith.constant 0 : index
    %12 = vector.load %arg9[%11, %c0_11, %c0_12] : memref<9x16x512xf32, #tpu.memory_space<vmem>>, vector<1x16x512xf32>
    %13 = vector.shape_cast %12 : vector<1x16x512xf32> to vector<16x512xf32>
    %14 = arith.truncf %9 : vector<16x128xf32> to vector<16x128xbf16>
    %c0_13 = arith.constant 0 : index
    %c0_14 = arith.constant 0 : index
    %15 = vector.load %arg3[%c0_13, %c0_14] : memref<128x512xbf16, #tpu.memory_space<vmem>>, vector<128x512xbf16>
    %cst_15 = arith.constant dense<0.000000e+00> : vector<16x512xf32>
    %16 = tpu.matmul %14, %15, %cst_15 {dimension_numbers = #tpu.dot_dimension_numbers<[1], [0], [0], [1], [0, 0, 1, 1], [], []>} : vector<16x128xbf16>, vector<128x512xbf16>, vector<16x512xf32> -> vector<16x512xf32>
    %17 = arith.addf %13, %16 : vector<16x512xf32>
    %18 = vector.extract_strided_slice %17 {offsets = [0, 0], sizes = [16, 128], strides = [1, 1]} : vector<16x512xf32> to vector<16x128xf32>
    %19 = arith.negf %18 : vector<16x128xf32>
    %20 = math.exp %19 : vector<16x128xf32>
    %cst_16 = arith.constant 1.000000e+00 : f32
    %21 = vector.broadcast %cst_16 : f32 to vector<16x128xf32>
    %22 = arith.addf %21, %20 : vector<16x128xf32>
    %23 = arith.divf %21, %22 : vector<16x128xf32>
    %24 = vector.extract_strided_slice %17 {offsets = [0, 128], sizes = [16, 128], strides = [1, 1]} : vector<16x512xf32> to vector<16x128xf32>
    %25 = arith.negf %24 : vector<16x128xf32>
    %26 = math.exp %25 : vector<16x128xf32>
    %cst_17 = arith.constant 1.000000e+00 : f32
    %27 = vector.broadcast %cst_17 : f32 to vector<16x128xf32>
    %28 = arith.addf %27, %26 : vector<16x128xf32>
    %29 = arith.divf %27, %28 : vector<16x128xf32>
    %30 = vector.extract_strided_slice %17 {offsets = [0, 256], sizes = [16, 128], strides = [1, 1]} : vector<16x512xf32> to vector<16x128xf32>
    %31 = math.tanh %30 : vector<16x128xf32>
    %32 = vector.extract_strided_slice %17 {offsets = [0, 384], sizes = [16, 128], strides = [1, 1]} : vector<16x512xf32> to vector<16x128xf32>
    %33 = arith.negf %32 : vector<16x128xf32>
    %34 = math.exp %33 : vector<16x128xf32>
    %cst_18 = arith.constant 1.000000e+00 : f32
    %35 = vector.broadcast %cst_18 : f32 to vector<16x128xf32>
    %36 = arith.addf %35, %34 : vector<16x128xf32>
    %37 = arith.divf %35, %36 : vector<16x128xf32>
    %38 = arith.mulf %29, %10 : vector<16x128xf32>
    %39 = arith.mulf %23, %31 : vector<16x128xf32>
    %40 = arith.addf %38, %39 : vector<16x128xf32>
    %41 = math.tanh %40 : vector<16x128xf32>
    %42 = arith.mulf %37, %41 : vector<16x128xf32>
    %43 = arith.truncf %42 : vector<16x128xf32> to vector<16x128xbf16>
    %44 = arith.index_cast %c0_i32 : i32 to index
    %c0_19 = arith.constant 0 : index
    %c0_20 = arith.constant 0 : index
    %45 = vector.load %arg8[%44, %c0_19, %c0_20] : memref<9x16x128xbf16, #tpu.memory_space<vmem>>, vector<1x16x128xbf16>
    %46 = vector.shape_cast %45 : vector<1x16x128xbf16> to vector<16x128xbf16>
    %47 = vector.shape_cast %43 : vector<16x128xbf16> to vector<1x16x128xbf16>
    tpu.vector_store %arg8[%44, %c0_19, %c0_20], %47 {strides = array<i32>} : memref<9x16x128xbf16, #tpu.memory_space<vmem>>, vector<1x16x128xbf16>,
    %c1_i32 = arith.constant 1 : i32
    %48 = arith.index_cast %c1_i32 : i32 to index
    %c0_21 = arith.constant 0 : index
    %c0_22 = arith.constant 0 : index
    %49 = vector.load %arg9[%48, %c0_21, %c0_22] : memref<9x16x512xf32, #tpu.memory_space<vmem>>, vector<1x16x512xf32>
    %50 = vector.shape_cast %49 : vector<1x16x512xf32> to vector<16x512xf32>
    %51 = arith.truncf %42 : vector<16x128xf32> to vector<16x128xbf16>
    %c0_23 = arith.constant 0 : index
    %c0_24 = arith.constant 0 : index
    %52 = vector.load %arg3[%c0_23, %c0_24] : memref<128x512xbf16, #tpu.memory_space<vmem>>, vector<128x512xbf16>
    %cst_25 = arith.constant dense<0.000000e+00> : vector<16x512xf32>
    %53 = tpu.matmul %51, %52, %cst_25 {dimension_numbers = #tpu.dot_dimension_numbers<[1], [0], [0], [1], [0, 0, 1, 1], [], []>} : vector<16x128xbf16>, vector<128x512xbf16>, vector<16x512xf32> -> vector<16x512xf32>
    %54 = arith.addf %50, %53 : vector<16x512xf32>
    %55 = vector.extract_strided_slice %54 {offsets = [0, 0], sizes = [16, 128], strides = [1, 1]} : vector<16x512xf32> to vector<16x128xf32>
    %56 = arith.negf %55 : vector<16x128xf32>
    %57 = math.exp %56 : vector<16x128xf32>
    %cst_26 = arith.constant 1.000000e+00 : f32
    %58 = vector.broadcast %cst_26 : f32 to vector<16x128xf32>
    %59 = arith.addf %58, %57 : vector<16x128xf32>
    %60 = arith.divf %58, %59 : vector<16x128xf32>
    %61 = vector.extract_strided_slice %54 {offsets = [0, 128], sizes = [16, 128], strides = [1, 1]} : vector<16x512xf32> to vector<16x128xf32>
    %62 = arith.negf %61 : vector<16x128xf32>
    %63 = math.exp %62 : vector<16x128xf32>
    %cst_27 = arith.constant 1.000000e+00 : f32
    %64 = vector.broadcast %cst_27 : f32 to vector<16x128xf32>
    %65 = arith.addf %64, %63 : vector<16x128xf32>
    %66 = arith.divf %64, %65 : vector<16x128xf32>
    %67 = vector.extract_strided_slice %54 {offsets = [0, 256], sizes = [16, 128], strides = [1, 1]} : vector<16x512xf32> to vector<16x128xf32>
    %68 = math.tanh %67 : vector<16x128xf32>
    %69 = vector.extract_strided_slice %54 {offsets = [0, 384], sizes = [16, 128], strides = [1, 1]} : vector<16x512xf32> to vector<16x128xf32>
    %70 = arith.negf %69 : vector<16x128xf32>
    %71 = math.exp %70 : vector<16x128xf32>
    %cst_28 = arith.constant 1.000000e+00 : f32
    %72 = vector.broadcast %cst_28 : f32 to vector<16x128xf32>
    %73 = arith.addf %72, %71 : vector<16x128xf32>
    %74 = arith.divf %72, %73 : vector<16x128xf32>
    %75 = arith.mulf %66, %40 : vector<16x128xf32>
    %76 = arith.mulf %60, %68 : vector<16x128xf32>
    %77 = arith.addf %75, %76 : vector<16x128xf32>
    %78 = math.tanh %77 : vector<16x128xf32>
    %79 = arith.mulf %74, %78 : vector<16x128xf32>
    %80 = arith.truncf %79 : vector<16x128xf32> to vector<16x128xbf16>
    %81 = arith.index_cast %c1_i32 : i32 to index
    %c0_29 = arith.constant 0 : index
    %c0_30 = arith.constant 0 : index
    %82 = vector.load %arg8[%81, %c0_29, %c0_30] : memref<9x16x128xbf16, #tpu.memory_space<vmem>>, vector<1x16x128xbf16>
    %83 = vector.shape_cast %82 : vector<1x16x128xbf16> to vector<16x128xbf16>
    %84 = vector.shape_cast %80 : vector<16x128xbf16> to vector<1x16x128xbf16>
    tpu.vector_store %arg8[%81, %c0_29, %c0_30], %84 {strides = array<i32>} : memref<9x16x128xbf16, #tpu.memory_space<vmem>>, vector<1x16x128xbf16>,
    %c2_i32 = arith.constant 2 : i32
    %85 = arith.index_cast %c2_i32 : i32 to index
    %c0_31 = arith.constant 0 : index
    %c0_32 = arith.constant 0 : index
    %86 = vector.load %arg9[%85, %c0_31, %c0_32] : memref<9x16x512xf32, #tpu.memory_space<vmem>>, vector<1x16x512xf32>
    %87 = vector.shape_cast %86 : vector<1x16x512xf32> to vector<16x512xf32>
    %88 = arith.truncf %79 : vector<16x128xf32> to vector<16x128xbf16>
    %c0_33 = arith.constant 0 : index
    %c0_34 = arith.constant 0 : index
    %89 = vector.load %arg3[%c0_33, %c0_34] : memref<128x512xbf16, #tpu.memory_space<vmem>>, vector<128x512xbf16>
    %cst_35 = arith.constant dense<0.000000e+00> : vector<16x512xf32>
    %90 = tpu.matmul %88, %89, %cst_35 {dimension_numbers = #tpu.dot_dimension_numbers<[1], [0], [0], [1], [0, 0, 1, 1], [], []>} : vector<16x128xbf16>, vector<128x512xbf16>, vector<16x512xf32> -> vector<16x512xf32>
    %91 = arith.addf %87, %90 : vector<16x512xf32>
    %92 = vector.extract_strided_slice %91 {offsets = [0, 0], sizes = [16, 128], strides = [1, 1]} : vector<16x512xf32> to vector<16x128xf32>
    %93 = arith.negf %92 : vector<16x128xf32>
    %94 = math.exp %93 : vector<16x128xf32>
    %cst_36 = arith.constant 1.000000e+00 : f32
    %95 = vector.broadcast %cst_36 : f32 to vector<16x128xf32>
    %96 = arith.addf %95, %94 : vector<16x128xf32>
    %97 = arith.divf %95, %96 : vector<16x128xf32>
    %98 = vector.extract_strided_slice %91 {offsets = [0, 128], sizes = [16, 128], strides = [1, 1]} : vector<16x512xf32> to vector<16x128xf32>
    %99 = arith.negf %98 : vector<16x128xf32>
    %100 = math.exp %99 : vector<16x128xf32>
    %cst_37 = arith.constant 1.000000e+00 : f32
    %101 = vector.broadcast %cst_37 : f32 to vector<16x128xf32>
    %102 = arith.addf %101, %100 : vector<16x128xf32>
    %103 = arith.divf %101, %102 : vector<16x128xf32>
    %104 = vector.extract_strided_slice %91 {offsets = [0, 256], sizes = [16, 128], strides = [1, 1]} : vector<16x512xf32> to vector<16x128xf32>
    %105 = math.tanh %104 : vector<16x128xf32>
    %106 = vector.extract_strided_slice %91 {offsets = [0, 384], sizes = [16, 128], strides = [1, 1]} : vector<16x512xf32> to vector<16x128xf32>
    %107 = arith.negf %106 : vector<16x128xf32>
    %108 = math.exp %107 : vector<16x128xf32>
    %cst_38 = arith.constant 1.000000e+00 : f32
    %109 = vector.broadcast %cst_38 : f32 to vector<16x128xf32>
    %110 = arith.addf %109, %108 : vector<16x128xf32>
    %111 = arith.divf %109, %110 : vector<16x128xf32>
    %112 = arith.mulf %103, %77 : vector<16x128xf32>
    %113 = arith.mulf %97, %105 : vector<16x128xf32>
    %114 = arith.addf %112, %113 : vector<16x128xf32>
    %115 = math.tanh %114 : vector<16x128xf32>
    %116 = arith.mulf %111, %115 : vector<16x128xf32>
    %117 = arith.truncf %116 : vector<16x128xf32> to vector<16x128xbf16>
    %118 = arith.index_cast %c2_i32 : i32 to index
    %c0_39 = arith.constant 0 : index
    %c0_40 = arith.constant 0 : index
    %119 = vector.load %arg8[%118, %c0_39, %c0_40] : memref<9x16x128xbf16, #tpu.memory_space<vmem>>, vector<1x16x128xbf16>
    %120 = vector.shape_cast %119 : vector<1x16x128xbf16> to vector<16x128xbf16>
    %121 = vector.shape_cast %117 : vector<16x128xbf16> to vector<1x16x128xbf16>
    tpu.vector_store %arg8[%118, %c0_39, %c0_40], %121 {strides = array<i32>} : memref<9x16x128xbf16, #tpu.memory_space<vmem>>, vector<1x16x128xbf16>,
    %c3_i32 = arith.constant 3 : i32
    %122 = arith.index_cast %c3_i32 : i32 to index
    %c0_41 = arith.constant 0 : index
    %c0_42 = arith.constant 0 : index
    %123 = vector.load %arg9[%122, %c0_41, %c0_42] : memref<9x16x512xf32, #tpu.memory_space<vmem>>, vector<1x16x512xf32>
    %124 = vector.shape_cast %123 : vector<1x16x512xf32> to vector<16x512xf32>
    %125 = arith.truncf %116 : vector<16x128xf32> to vector<16x128xbf16>
    %c0_43 = arith.constant 0 : index
    %c0_44 = arith.constant 0 : index
    %126 = vector.load %arg3[%c0_43, %c0_44] : memref<128x512xbf16, #tpu.memory_space<vmem>>, vector<128x512xbf16>
    %cst_45 = arith.constant dense<0.000000e+00> : vector<16x512xf32>
    %127 = tpu.matmul %125, %126, %cst_45 {dimension_numbers = #tpu.dot_dimension_numbers<[1], [0], [0], [1], [0, 0, 1, 1], [], []>} : vector<16x128xbf16>, vector<128x512xbf16>, vector<16x512xf32> -> vector<16x512xf32>
    %128 = arith.addf %124, %127 : vector<16x512xf32>
    %129 = vector.extract_strided_slice %128 {offsets = [0, 0], sizes = [16, 128], strides = [1, 1]} : vector<16x512xf32> to vector<16x128xf32>
    %130 = arith.negf %129 : vector<16x128xf32>
    %131 = math.exp %130 : vector<16x128xf32>
    %cst_46 = arith.constant 1.000000e+00 : f32
    %132 = vector.broadcast %cst_46 : f32 to vector<16x128xf32>
    %133 = arith.addf %132, %131 : vector<16x128xf32>
    %134 = arith.divf %132, %133 : vector<16x128xf32>
    %135 = vector.extract_strided_slice %128 {offsets = [0, 128], sizes = [16, 128], strides = [1, 1]} : vector<16x512xf32> to vector<16x128xf32>
    %136 = arith.negf %135 : vector<16x128xf32>
    %137 = math.exp %136 : vector<16x128xf32>
    %cst_47 = arith.constant 1.000000e+00 : f32
    %138 = vector.broadcast %cst_47 : f32 to vector<16x128xf32>
    %139 = arith.addf %138, %137 : vector<16x128xf32>
    %140 = arith.divf %138, %139 : vector<16x128xf32>
    %141 = vector.extract_strided_slice %128 {offsets = [0, 256], sizes = [16, 128], strides = [1, 1]} : vector<16x512xf32> to vector<16x128xf32>
    %142 = math.tanh %141 : vector<16x128xf32>
    %143 = vector.extract_strided_slice %128 {offsets = [0, 384], sizes = [16, 128], strides = [1, 1]} : vector<16x512xf32> to vector<16x128xf32>
    %144 = arith.negf %143 : vector<16x128xf32>
    %145 = math.exp %144 : vector<16x128xf32>
    %cst_48 = arith.constant 1.000000e+00 : f32
    %146 = vector.broadcast %cst_48 : f32 to vector<16x128xf32>
    %147 = arith.addf %146, %145 : vector<16x128xf32>
    %148 = arith.divf %146, %147 : vector<16x128xf32>
    %149 = arith.mulf %140, %114 : vector<16x128xf32>
    %150 = arith.mulf %134, %142 : vector<16x128xf32>
    %151 = arith.addf %149, %150 : vector<16x128xf32>
    %152 = math.tanh %151 : vector<16x128xf32>
    %153 = arith.mulf %148, %152 : vector<16x128xf32>
    %154 = arith.truncf %153 : vector<16x128xf32> to vector<16x128xbf16>
    %155 = arith.index_cast %c3_i32 : i32 to index
    %c0_49 = arith.constant 0 : index
    %c0_50 = arith.constant 0 : index
    %156 = vector.load %arg8[%155, %c0_49, %c0_50] : memref<9x16x128xbf16, #tpu.memory_space<vmem>>, vector<1x16x128xbf16>
    %157 = vector.shape_cast %156 : vector<1x16x128xbf16> to vector<16x128xbf16>
    %158 = vector.shape_cast %154 : vector<16x128xbf16> to vector<1x16x128xbf16>
    tpu.vector_store %arg8[%155, %c0_49, %c0_50], %158 {strides = array<i32>} : memref<9x16x128xbf16, #tpu.memory_space<vmem>>, vector<1x16x128xbf16>,
    %c4_i32 = arith.constant 4 : i32
    %159 = arith.index_cast %c4_i32 : i32 to index
    %c0_51 = arith.constant 0 : index
    %c0_52 = arith.constant 0 : index
    %160 = vector.load %arg9[%159, %c0_51, %c0_52] : memref<9x16x512xf32, #tpu.memory_space<vmem>>, vector<1x16x512xf32>
    %161 = vector.shape_cast %160 : vector<1x16x512xf32> to vector<16x512xf32>
    %162 = arith.truncf %153 : vector<16x128xf32> to vector<16x128xbf16>
    %c0_53 = arith.constant 0 : index
    %c0_54 = arith.constant 0 : index
    %163 = vector.load %arg3[%c0_53, %c0_54] : memref<128x512xbf16, #tpu.memory_space<vmem>>, vector<128x512xbf16>
    %cst_55 = arith.constant dense<0.000000e+00> : vector<16x512xf32>
    %164 = tpu.matmul %162, %163, %cst_55 {dimension_numbers = #tpu.dot_dimension_numbers<[1], [0], [0], [1], [0, 0, 1, 1], [], []>} : vector<16x128xbf16>, vector<128x512xbf16>, vector<16x512xf32> -> vector<16x512xf32>
    %165 = arith.addf %161, %164 : vector<16x512xf32>
    %166 = vector.extract_strided_slice %165 {offsets = [0, 0], sizes = [16, 128], strides = [1, 1]} : vector<16x512xf32> to vector<16x128xf32>
    %167 = arith.negf %166 : vector<16x128xf32>
    %168 = math.exp %167 : vector<16x128xf32>
    %cst_56 = arith.constant 1.000000e+00 : f32
    %169 = vector.broadcast %cst_56 : f32 to vector<16x128xf32>
    %170 = arith.addf %169, %168 : vector<16x128xf32>
    %171 = arith.divf %169, %170 : vector<16x128xf32>
    %172 = vector.extract_strided_slice %165 {offsets = [0, 128], sizes = [16, 128], strides = [1, 1]} : vector<16x512xf32> to vector<16x128xf32>
    %173 = arith.negf %172 : vector<16x128xf32>
    %174 = math.exp %173 : vector<16x128xf32>
    %cst_57 = arith.constant 1.000000e+00 : f32
    %175 = vector.broadcast %cst_57 : f32 to vector<16x128xf32>
    %176 = arith.addf %175, %174 : vector<16x128xf32>
    %177 = arith.divf %175, %176 : vector<16x128xf32>
    %178 = vector.extract_strided_slice %165 {offsets = [0, 256], sizes = [16, 128], strides = [1, 1]} : vector<16x512xf32> to vector<16x128xf32>
    %179 = math.tanh %178 : vector<16x128xf32>
    %180 = vector.extract_strided_slice %165 {offsets = [0, 384], sizes = [16, 128], strides = [1, 1]} : vector<16x512xf32> to vector<16x128xf32>
    %181 = arith.negf %180 : vector<16x128xf32>
    %182 = math.exp %181 : vector<16x128xf32>
    %cst_58 = arith.constant 1.000000e+00 : f32
    %183 = vector.broadcast %cst_58 : f32 to vector<16x128xf32>
    %184 = arith.addf %183, %182 : vector<16x128xf32>
    %185 = arith.divf %183, %184 : vector<16x128xf32>
    %186 = arith.mulf %177, %151 : vector<16x128xf32>
    %187 = arith.mulf %171, %179 : vector<16x128xf32>
    %188 = arith.addf %186, %187 : vector<16x128xf32>
    %189 = math.tanh %188 : vector<16x128xf32>
    %190 = arith.mulf %185, %189 : vector<16x128xf32>
    %191 = arith.truncf %190 : vector<16x128xf32> to vector<16x128xbf16>
    %192 = arith.index_cast %c4_i32 : i32 to index
    %c0_59 = arith.constant 0 : index
    %c0_60 = arith.constant 0 : index
    %193 = vector.load %arg8[%192, %c0_59, %c0_60] : memref<9x16x128xbf16, #tpu.memory_space<vmem>>, vector<1x16x128xbf16>
    %194 = vector.shape_cast %193 : vector<1x16x128xbf16> to vector<16x128xbf16>
    %195 = vector.shape_cast %191 : vector<16x128xbf16> to vector<1x16x128xbf16>
    tpu.vector_store %arg8[%192, %c0_59, %c0_60], %195 {strides = array<i32>} : memref<9x16x128xbf16, #tpu.memory_space<vmem>>, vector<1x16x128xbf16>,
    %c5_i32 = arith.constant 5 : i32
    %196 = arith.index_cast %c5_i32 : i32 to index
    %c0_61 = arith.constant 0 : index
    %c0_62 = arith.constant 0 : index
    %197 = vector.load %arg9[%196, %c0_61, %c0_62] : memref<9x16x512xf32, #tpu.memory_space<vmem>>, vector<1x16x512xf32>
    %198 = vector.shape_cast %197 : vector<1x16x512xf32> to vector<16x512xf32>
    %199 = arith.truncf %190 : vector<16x128xf32> to vector<16x128xbf16>
    %c0_63 = arith.constant 0 : index
    %c0_64 = arith.constant 0 : index
    %200 = vector.load %arg3[%c0_63, %c0_64] : memref<128x512xbf16, #tpu.memory_space<vmem>>, vector<128x512xbf16>
    %cst_65 = arith.constant dense<0.000000e+00> : vector<16x512xf32>
    %201 = tpu.matmul %199, %200, %cst_65 {dimension_numbers = #tpu.dot_dimension_numbers<[1], [0], [0], [1], [0, 0, 1, 1], [], []>} : vector<16x128xbf16>, vector<128x512xbf16>, vector<16x512xf32> -> vector<16x512xf32>
    %202 = arith.addf %198, %201 : vector<16x512xf32>
    %203 = vector.extract_strided_slice %202 {offsets = [0, 0], sizes = [16, 128], strides = [1, 1]} : vector<16x512xf32> to vector<16x128xf32>
    %204 = arith.negf %203 : vector<16x128xf32>
    %205 = math.exp %204 : vector<16x128xf32>
    %cst_66 = arith.constant 1.000000e+00 : f32
    %206 = vector.broadcast %cst_66 : f32 to vector<16x128xf32>
    %207 = arith.addf %206, %205 : vector<16x128xf32>
    %208 = arith.divf %206, %207 : vector<16x128xf32>
    %209 = vector.extract_strided_slice %202 {offsets = [0, 128], sizes = [16, 128], strides = [1, 1]} : vector<16x512xf32> to vector<16x128xf32>
    %210 = arith.negf %209 : vector<16x128xf32>
    %211 = math.exp %210 : vector<16x128xf32>
    %cst_67 = arith.constant 1.000000e+00 : f32
    %212 = vector.broadcast %cst_67 : f32 to vector<16x128xf32>
    %213 = arith.addf %212, %211 : vector<16x128xf32>
    %214 = arith.divf %212, %213 : vector<16x128xf32>
    %215 = vector.extract_strided_slice %202 {offsets = [0, 256], sizes = [16, 128], strides = [1, 1]} : vector<16x512xf32> to vector<16x128xf32>
    %216 = math.tanh %215 : vector<16x128xf32>
    %217 = vector.extract_strided_slice %202 {offsets = [0, 384], sizes = [16, 128], strides = [1, 1]} : vector<16x512xf32> to vector<16x128xf32>
    %218 = arith.negf %217 : vector<16x128xf32>
    %219 = math.exp %218 : vector<16x128xf32>
    %cst_68 = arith.constant 1.000000e+00 : f32
    %220 = vector.broadcast %cst_68 : f32 to vector<16x128xf32>
    %221 = arith.addf %220, %219 : vector<16x128xf32>
    %222 = arith.divf %220, %221 : vector<16x128xf32>
    %223 = arith.mulf %214, %188 : vector<16x128xf32>
    %224 = arith.mulf %208, %216 : vector<16x128xf32>
    %225 = arith.addf %223, %224 : vector<16x128xf32>
    %226 = math.tanh %225 : vector<16x128xf32>
    %227 = arith.mulf %222, %226 : vector<16x128xf32>
    %228 = arith.truncf %227 : vector<16x128xf32> to vector<16x128xbf16>
    %229 = arith.index_cast %c5_i32 : i32 to index
    %c0_69 = arith.constant 0 : index
    %c0_70 = arith.constant 0 : index
    %230 = vector.load %arg8[%229, %c0_69, %c0_70] : memref<9x16x128xbf16, #tpu.memory_space<vmem>>, vector<1x16x128xbf16>
    %231 = vector.shape_cast %230 : vector<1x16x128xbf16> to vector<16x128xbf16>
    %232 = vector.shape_cast %228 : vector<16x128xbf16> to vector<1x16x128xbf16>
    tpu.vector_store %arg8[%229, %c0_69, %c0_70], %232 {strides = array<i32>} : memref<9x16x128xbf16, #tpu.memory_space<vmem>>, vector<1x16x128xbf16>,
    %c6_i32 = arith.constant 6 : i32
    %233 = arith.index_cast %c6_i32 : i32 to index
    %c0_71 = arith.constant 0 : index
    %c0_72 = arith.constant 0 : index
    %234 = vector.load %arg9[%233, %c0_71, %c0_72] : memref<9x16x512xf32, #tpu.memory_space<vmem>>, vector<1x16x512xf32>
    %235 = vector.shape_cast %234 : vector<1x16x512xf32> to vector<16x512xf32>
    %236 = arith.truncf %227 : vector<16x128xf32> to vector<16x128xbf16>
    %c0_73 = arith.constant 0 : index
    %c0_74 = arith.constant 0 : index
    %237 = vector.load %arg3[%c0_73, %c0_74] : memref<128x512xbf16, #tpu.memory_space<vmem>>, vector<128x512xbf16>
    %cst_75 = arith.constant dense<0.000000e+00> : vector<16x512xf32>
    %238 = tpu.matmul %236, %237, %cst_75 {dimension_numbers = #tpu.dot_dimension_numbers<[1], [0], [0], [1], [0, 0, 1, 1], [], []>} : vector<16x128xbf16>, vector<128x512xbf16>, vector<16x512xf32> -> vector<16x512xf32>
    %239 = arith.addf %235, %238 : vector<16x512xf32>
    %240 = vector.extract_strided_slice %239 {offsets = [0, 0], sizes = [16, 128], strides = [1, 1]} : vector<16x512xf32> to vector<16x128xf32>
    %241 = arith.negf %240 : vector<16x128xf32>
    %242 = math.exp %241 : vector<16x128xf32>
    %cst_76 = arith.constant 1.000000e+00 : f32
    %243 = vector.broadcast %cst_76 : f32 to vector<16x128xf32>
    %244 = arith.addf %243, %242 : vector<16x128xf32>
    %245 = arith.divf %243, %244 : vector<16x128xf32>
    %246 = vector.extract_strided_slice %239 {offsets = [0, 128], sizes = [16, 128], strides = [1, 1]} : vector<16x512xf32> to vector<16x128xf32>
    %247 = arith.negf %246 : vector<16x128xf32>
    %248 = math.exp %247 : vector<16x128xf32>
    %cst_77 = arith.constant 1.000000e+00 : f32
    %249 = vector.broadcast %cst_77 : f32 to vector<16x128xf32>
    %250 = arith.addf %249, %248 : vector<16x128xf32>
    %251 = arith.divf %249, %250 : vector<16x128xf32>
    %252 = vector.extract_strided_slice %239 {offsets = [0, 256], sizes = [16, 128], strides = [1, 1]} : vector<16x512xf32> to vector<16x128xf32>
    %253 = math.tanh %252 : vector<16x128xf32>
    %254 = vector.extract_strided_slice %239 {offsets = [0, 384], sizes = [16, 128], strides = [1, 1]} : vector<16x512xf32> to vector<16x128xf32>
    %255 = arith.negf %254 : vector<16x128xf32>
    %256 = math.exp %255 : vector<16x128xf32>
    %cst_78 = arith.constant 1.000000e+00 : f32
    %257 = vector.broadcast %cst_78 : f32 to vector<16x128xf32>
    %258 = arith.addf %257, %256 : vector<16x128xf32>
    %259 = arith.divf %257, %258 : vector<16x128xf32>
    %260 = arith.mulf %251, %225 : vector<16x128xf32>
    %261 = arith.mulf %245, %253 : vector<16x128xf32>
    %262 = arith.addf %260, %261 : vector<16x128xf32>
    %263 = math.tanh %262 : vector<16x128xf32>
    %264 = arith.mulf %259, %263 : vector<16x128xf32>
    %265 = arith.truncf %264 : vector<16x128xf32> to vector<16x128xbf16>
    %266 = arith.index_cast %c6_i32 : i32 to index
    %c0_79 = arith.constant 0 : index
    %c0_80 = arith.constant 0 : index
    %267 = vector.load %arg8[%266, %c0_79, %c0_80] : memref<9x16x128xbf16, #tpu.memory_space<vmem>>, vector<1x16x128xbf16>
    %268 = vector.shape_cast %267 : vector<1x16x128xbf16> to vector<16x128xbf16>
    %269 = vector.shape_cast %265 : vector<16x128xbf16> to vector<1x16x128xbf16>
    tpu.vector_store %arg8[%266, %c0_79, %c0_80], %269 {strides = array<i32>} : memref<9x16x128xbf16, #tpu.memory_space<vmem>>, vector<1x16x128xbf16>,
    %c7_i32 = arith.constant 7 : i32
    %270 = arith.index_cast %c7_i32 : i32 to index
    %c0_81 = arith.constant 0 : index
    %c0_82 = arith.constant 0 : index
    %271 = vector.load %arg9[%270, %c0_81, %c0_82] : memref<9x16x512xf32, #tpu.memory_space<vmem>>, vector<1x16x512xf32>
    %272 = vector.shape_cast %271 : vector<1x16x512xf32> to vector<16x512xf32>
    %273 = arith.truncf %264 : vector<16x128xf32> to vector<16x128xbf16>
    %c0_83 = arith.constant 0 : index
    %c0_84 = arith.constant 0 : index
    %274 = vector.load %arg3[%c0_83, %c0_84] : memref<128x512xbf16, #tpu.memory_space<vmem>>, vector<128x512xbf16>
    %cst_85 = arith.constant dense<0.000000e+00> : vector<16x512xf32>
    %275 = tpu.matmul %273, %274, %cst_85 {dimension_numbers = #tpu.dot_dimension_numbers<[1], [0], [0], [1], [0, 0, 1, 1], [], []>} : vector<16x128xbf16>, vector<128x512xbf16>, vector<16x512xf32> -> vector<16x512xf32>
    %276 = arith.addf %272, %275 : vector<16x512xf32>
    %277 = vector.extract_strided_slice %276 {offsets = [0, 0], sizes = [16, 128], strides = [1, 1]} : vector<16x512xf32> to vector<16x128xf32>
    %278 = arith.negf %277 : vector<16x128xf32>
    %279 = math.exp %278 : vector<16x128xf32>
    %cst_86 = arith.constant 1.000000e+00 : f32
    %280 = vector.broadcast %cst_86 : f32 to vector<16x128xf32>
    %281 = arith.addf %280, %279 : vector<16x128xf32>
    %282 = arith.divf %280, %281 : vector<16x128xf32>
    %283 = vector.extract_strided_slice %276 {offsets = [0, 128], sizes = [16, 128], strides = [1, 1]} : vector<16x512xf32> to vector<16x128xf32>
    %284 = arith.negf %283 : vector<16x128xf32>
    %285 = math.exp %284 : vector<16x128xf32>
    %cst_87 = arith.constant 1.000000e+00 : f32
    %286 = vector.broadcast %cst_87 : f32 to vector<16x128xf32>
    %287 = arith.addf %286, %285 : vector<16x128xf32>
    %288 = arith.divf %286, %287 : vector<16x128xf32>
    %289 = vector.extract_strided_slice %276 {offsets = [0, 256], sizes = [16, 128], strides = [1, 1]} : vector<16x512xf32> to vector<16x128xf32>
    %290 = math.tanh %289 : vector<16x128xf32>
    %291 = vector.extract_strided_slice %276 {offsets = [0, 384], sizes = [16, 128], strides = [1, 1]} : vector<16x512xf32> to vector<16x128xf32>
    %292 = arith.negf %291 : vector<16x128xf32>
    %293 = math.exp %292 : vector<16x128xf32>
    %cst_88 = arith.constant 1.000000e+00 : f32
    %294 = vector.broadcast %cst_88 : f32 to vector<16x128xf32>
    %295 = arith.addf %294, %293 : vector<16x128xf32>
    %296 = arith.divf %294, %295 : vector<16x128xf32>
    %297 = arith.mulf %288, %262 : vector<16x128xf32>
    %298 = arith.mulf %282, %290 : vector<16x128xf32>
    %299 = arith.addf %297, %298 : vector<16x128xf32>
    %300 = math.tanh %299 : vector<16x128xf32>
    %301 = arith.mulf %296, %300 : vector<16x128xf32>
    %302 = arith.truncf %301 : vector<16x128xf32> to vector<16x128xbf16>
    %303 = arith.index_cast %c7_i32 : i32 to index
    %c0_89 = arith.constant 0 : index
    %c0_90 = arith.constant 0 : index
    %304 = vector.load %arg8[%303, %c0_89, %c0_90] : memref<9x16x128xbf16, #tpu.memory_space<vmem>>, vector<1x16x128xbf16>
    %305 = vector.shape_cast %304 : vector<1x16x128xbf16> to vector<16x128xbf16>
    %306 = vector.shape_cast %302 : vector<16x128xbf16> to vector<1x16x128xbf16>
    tpu.vector_store %arg8[%303, %c0_89, %c0_90], %306 {strides = array<i32>} : memref<9x16x128xbf16, #tpu.memory_space<vmem>>, vector<1x16x128xbf16>,
    %c8_i32 = arith.constant 8 : i32
    %307 = arith.index_cast %c8_i32 : i32 to index
    %c0_91 = arith.constant 0 : index
    %c0_92 = arith.constant 0 : index
    %308 = vector.load %arg9[%307, %c0_91, %c0_92] : memref<9x16x512xf32, #tpu.memory_space<vmem>>, vector<1x16x512xf32>
    %309 = vector.shape_cast %308 : vector<1x16x512xf32> to vector<16x512xf32>
    %310 = arith.truncf %301 : vector<16x128xf32> to vector<16x128xbf16>
    %c0_93 = arith.constant 0 : index
    %c0_94 = arith.constant 0 : index
    %311 = vector.load %arg3[%c0_93, %c0_94] : memref<128x512xbf16, #tpu.memory_space<vmem>>, vector<128x512xbf16>
    %cst_95 = arith.constant dense<0.000000e+00> : vector<16x512xf32>
    %312 = tpu.matmul %310, %311, %cst_95 {dimension_numbers = #tpu.dot_dimension_numbers<[1], [0], [0], [1], [0, 0, 1, 1], [], []>} : vector<16x128xbf16>, vector<128x512xbf16>, vector<16x512xf32> -> vector<16x512xf32>
    %313 = arith.addf %309, %312 : vector<16x512xf32>
    %314 = vector.extract_strided_slice %313 {offsets = [0, 0], sizes = [16, 128], strides = [1, 1]} : vector<16x512xf32> to vector<16x128xf32>
    %315 = arith.negf %314 : vector<16x128xf32>
    %316 = math.exp %315 : vector<16x128xf32>
    %cst_96 = arith.constant 1.000000e+00 : f32
    %317 = vector.broadcast %cst_96 : f32 to vector<16x128xf32>
    %318 = arith.addf %317, %316 : vector<16x128xf32>
    %319 = arith.divf %317, %318 : vector<16x128xf32>
    %320 = vector.extract_strided_slice %313 {offsets = [0, 128], sizes = [16, 128], strides = [1, 1]} : vector<16x512xf32> to vector<16x128xf32>
    %321 = arith.negf %320 : vector<16x128xf32>
    %322 = math.exp %321 : vector<16x128xf32>
    %cst_97 = arith.constant 1.000000e+00 : f32
    %323 = vector.broadcast %cst_97 : f32 to vector<16x128xf32>
    %324 = arith.addf %323, %322 : vector<16x128xf32>
    %325 = arith.divf %323, %324 : vector<16x128xf32>
    %326 = vector.extract_strided_slice %313 {offsets = [0, 256], sizes = [16, 128], strides = [1, 1]} : vector<16x512xf32> to vector<16x128xf32>
    %327 = math.tanh %326 : vector<16x128xf32>
    %328 = vector.extract_strided_slice %313 {offsets = [0, 384], sizes = [16, 128], strides = [1, 1]} : vector<16x512xf32> to vector<16x128xf32>
    %329 = arith.negf %328 : vector<16x128xf32>
    %330 = math.exp %329 : vector<16x128xf32>
    %cst_98 = arith.constant 1.000000e+00 : f32
    %331 = vector.broadcast %cst_98 : f32 to vector<16x128xf32>
    %332 = arith.addf %331, %330 : vector<16x128xf32>
    %333 = arith.divf %331, %332 : vector<16x128xf32>
    %334 = arith.mulf %325, %299 : vector<16x128xf32>
    %335 = arith.mulf %319, %327 : vector<16x128xf32>
    %336 = arith.addf %334, %335 : vector<16x128xf32>
    %337 = math.tanh %336 : vector<16x128xf32>
    %338 = arith.mulf %333, %337 : vector<16x128xf32>
    %339 = arith.truncf %338 : vector<16x128xf32> to vector<16x128xbf16>
    %340 = arith.index_cast %c8_i32 : i32 to index
    %c0_99 = arith.constant 0 : index
    %c0_100 = arith.constant 0 : index
    %341 = vector.load %arg8[%340, %c0_99, %c0_100] : memref<9x16x128xbf16, #tpu.memory_space<vmem>>, vector<1x16x128xbf16>
    %342 = vector.shape_cast %341 : vector<1x16x128xbf16> to vector<16x128xbf16>
    %343 = vector.shape_cast %339 : vector<16x128xbf16> to vector<1x16x128xbf16>
    tpu.vector_store %arg8[%340, %c0_99, %c0_100], %343 {strides = array<i32>} : memref<9x16x128xbf16, #tpu.memory_space<vmem>>, vector<1x16x128xbf16>,
    %c9_i32 = arith.constant 9 : i32
    %c0_101 = arith.constant 0 : index
    %c0_102 = arith.constant 0 : index
    %c0_103 = arith.constant 0 : index
    %344 = vector.load %arg8[%c0_101, %c0_102, %c0_103] : memref<9x16x128xbf16, #tpu.memory_space<vmem>>, vector<9x16x128xbf16>
    %345 = vector.shape_cast %344 : vector<9x16x128xbf16> to vector<144x128xbf16>
    %c0_104 = arith.constant 0 : index
    %c0_105 = arith.constant 0 : index
    %346 = vector.load %arg5[%c0_104, %c0_105] : memref<128x512xbf16, #tpu.memory_space<vmem>>, vector<128x512xbf16>
    %cst_106 = arith.constant dense<0.000000e+00> : vector<144x512xf32>
    %347 = tpu.matmul %345, %346, %cst_106 {dimension_numbers = #tpu.dot_dimension_numbers<[1], [0], [0], [1], [0, 0, 1, 1], [], []>} : vector<144x128xbf16>, vector<128x512xbf16>, vector<144x512xf32> -> vector<144x512xf32>
    %c0_107 = arith.constant 0 : index
    %c0_108 = arith.constant 0 : index
    %348 = vector.load %arg7[%c0_107, %c0_108] : memref<1x512xf32, #tpu.memory_space<vmem>>, vector<1x512xf32>
    %349 = vector.broadcast %348 : vector<1x512xf32> to vector<144x512xf32>
    %350 = arith.addf %347, %349 : vector<144x512xf32>
    %351 = vector.shape_cast %350 : vector<144x512xf32> to vector<9x16x512xf32>
    %c0_109 = arith.constant 0 : index
    %c0_110 = arith.constant 0 : index
    %c0_111 = arith.constant 0 : index
    %352 = vector.load %arg9[%c0_109, %c0_110, %c0_111] : memref<9x16x512xf32, #tpu.memory_space<vmem>>, vector<9x16x512xf32>
    tpu.vector_store %arg9[%c0_109, %c0_110, %c0_111], %351 {strides = array<i32>} : memref<9x16x512xf32, #tpu.memory_space<vmem>>, vector<9x16x512xf32>,
    %cst_112 = arith.constant 0.000000e+00 : f32
    %353 = vector.broadcast %cst_112 : f32 to vector<16x128xf32>
    %cst_113 = arith.constant 0.000000e+00 : f32
    %354 = vector.broadcast %cst_113 : f32 to vector<16x128xf32>
    %c0_i32_114 = arith.constant 0 : i32
    %355 = arith.index_cast %c0_i32_114 : i32 to index
    %c0_115 = arith.constant 0 : index
    %c0_116 = arith.constant 0 : index
    %356 = vector.load %arg9[%355, %c0_115, %c0_116] : memref<9x16x512xf32, #tpu.memory_space<vmem>>, vector<1x16x512xf32>
    %357 = vector.shape_cast %356 : vector<1x16x512xf32> to vector<16x512xf32>
    %358 = arith.truncf %353 : vector<16x128xf32> to vector<16x128xbf16>
    %c0_117 = arith.constant 0 : index
    %c0_118 = arith.constant 0 : index
    %359 = vector.load %arg6[%c0_117, %c0_118] : memref<128x512xbf16, #tpu.memory_space<vmem>>, vector<128x512xbf16>
    %cst_119 = arith.constant dense<0.000000e+00> : vector<16x512xf32>
    %360 = tpu.matmul %358, %359, %cst_119 {dimension_numbers = #tpu.dot_dimension_numbers<[1], [0], [0], [1], [0, 0, 1, 1], [], []>} : vector<16x128xbf16>, vector<128x512xbf16>, vector<16x512xf32> -> vector<16x512xf32>
    %361 = arith.addf %357, %360 : vector<16x512xf32>
    %362 = vector.extract_strided_slice %361 {offsets = [0, 0], sizes = [16, 128], strides = [1, 1]} : vector<16x512xf32> to vector<16x128xf32>
    %363 = arith.negf %362 : vector<16x128xf32>
    %364 = math.exp %363 : vector<16x128xf32>
    %cst_120 = arith.constant 1.000000e+00 : f32
    %365 = vector.broadcast %cst_120 : f32 to vector<16x128xf32>
    %366 = arith.addf %365, %364 : vector<16x128xf32>
    %367 = arith.divf %365, %366 : vector<16x128xf32>
    %368 = vector.extract_strided_slice %361 {offsets = [0, 128], sizes = [16, 128], strides = [1, 1]} : vector<16x512xf32> to vector<16x128xf32>
    %369 = arith.negf %368 : vector<16x128xf32>
    %370 = math.exp %369 : vector<16x128xf32>
    %cst_121 = arith.constant 1.000000e+00 : f32
    %371 = vector.broadcast %cst_121 : f32 to vector<16x128xf32>
    %372 = arith.addf %371, %370 : vector<16x128xf32>
    %373 = arith.divf %371, %372 : vector<16x128xf32>
    %374 = vector.extract_strided_slice %361 {offsets = [0, 256], sizes = [16, 128], strides = [1, 1]} : vector<16x512xf32> to vector<16x128xf32>
    %375 = math.tanh %374 : vector<16x128xf32>
    %376 = vector.extract_strided_slice %361 {offsets = [0, 384], sizes = [16, 128], strides = [1, 1]} : vector<16x512xf32> to vector<16x128xf32>
    %377 = arith.negf %376 : vector<16x128xf32>
    %378 = math.exp %377 : vector<16x128xf32>
    %cst_122 = arith.constant 1.000000e+00 : f32
    %379 = vector.broadcast %cst_122 : f32 to vector<16x128xf32>
    %380 = arith.addf %379, %378 : vector<16x128xf32>
    %381 = arith.divf %379, %380 : vector<16x128xf32>
    %382 = arith.mulf %373, %354 : vector<16x128xf32>
    %383 = arith.mulf %367, %375 : vector<16x128xf32>
    %384 = arith.addf %382, %383 : vector<16x128xf32>
    %385 = math.tanh %384 : vector<16x128xf32>
    %386 = arith.mulf %381, %385 : vector<16x128xf32>
    %387 = arith.truncf %386 : vector<16x128xf32> to vector<16x128xbf16>
    %388 = arith.index_cast %c0_i32_114 : i32 to index
    %c0_123 = arith.constant 0 : index
    %c0_124 = arith.constant 0 : index
    %389 = vector.load %arg8[%388, %c0_123, %c0_124] : memref<9x16x128xbf16, #tpu.memory_space<vmem>>, vector<1x16x128xbf16>
    %390 = vector.shape_cast %389 : vector<1x16x128xbf16> to vector<16x128xbf16>
    %391 = vector.shape_cast %387 : vector<16x128xbf16> to vector<1x16x128xbf16>
    tpu.vector_store %arg8[%388, %c0_123, %c0_124], %391 {strides = array<i32>} : memref<9x16x128xbf16, #tpu.memory_space<vmem>>, vector<1x16x128xbf16>,
    %c1_i32_125 = arith.constant 1 : i32
    %392 = arith.index_cast %c1_i32_125 : i32 to index
    %c0_126 = arith.constant 0 : index
    %c0_127 = arith.constant 0 : index
    %393 = vector.load %arg9[%392, %c0_126, %c0_127] : memref<9x16x512xf32, #tpu.memory_space<vmem>>, vector<1x16x512xf32>
    %394 = vector.shape_cast %393 : vector<1x16x512xf32> to vector<16x512xf32>
    %395 = arith.truncf %386 : vector<16x128xf32> to vector<16x128xbf16>
    %c0_128 = arith.constant 0 : index
    %c0_129 = arith.constant 0 : index
    %396 = vector.load %arg6[%c0_128, %c0_129] : memref<128x512xbf16, #tpu.memory_space<vmem>>, vector<128x512xbf16>
    %cst_130 = arith.constant dense<0.000000e+00> : vector<16x512xf32>
    %397 = tpu.matmul %395, %396, %cst_130 {dimension_numbers = #tpu.dot_dimension_numbers<[1], [0], [0], [1], [0, 0, 1, 1], [], []>} : vector<16x128xbf16>, vector<128x512xbf16>, vector<16x512xf32> -> vector<16x512xf32>
    %398 = arith.addf %394, %397 : vector<16x512xf32>
    %399 = vector.extract_strided_slice %398 {offsets = [0, 0], sizes = [16, 128], strides = [1, 1]} : vector<16x512xf32> to vector<16x128xf32>
    %400 = arith.negf %399 : vector<16x128xf32>
    %401 = math.exp %400 : vector<16x128xf32>
    %cst_131 = arith.constant 1.000000e+00 : f32
    %402 = vector.broadcast %cst_131 : f32 to vector<16x128xf32>
    %403 = arith.addf %402, %401 : vector<16x128xf32>
    %404 = arith.divf %402, %403 : vector<16x128xf32>
    %405 = vector.extract_strided_slice %398 {offsets = [0, 128], sizes = [16, 128], strides = [1, 1]} : vector<16x512xf32> to vector<16x128xf32>
    %406 = arith.negf %405 : vector<16x128xf32>
    %407 = math.exp %406 : vector<16x128xf32>
    %cst_132 = arith.constant 1.000000e+00 : f32
    %408 = vector.broadcast %cst_132 : f32 to vector<16x128xf32>
    %409 = arith.addf %408, %407 : vector<16x128xf32>
    %410 = arith.divf %408, %409 : vector<16x128xf32>
    %411 = vector.extract_strided_slice %398 {offsets = [0, 256], sizes = [16, 128], strides = [1, 1]} : vector<16x512xf32> to vector<16x128xf32>
    %412 = math.tanh %411 : vector<16x128xf32>
    %413 = vector.extract_strided_slice %398 {offsets = [0, 384], sizes = [16, 128], strides = [1, 1]} : vector<16x512xf32> to vector<16x128xf32>
    %414 = arith.negf %413 : vector<16x128xf32>
    %415 = math.exp %414 : vector<16x128xf32>
    %cst_133 = arith.constant 1.000000e+00 : f32
    %416 = vector.broadcast %cst_133 : f32 to vector<16x128xf32>
    %417 = arith.addf %416, %415 : vector<16x128xf32>
    %418 = arith.divf %416, %417 : vector<16x128xf32>
    %419 = arith.mulf %410, %384 : vector<16x128xf32>
    %420 = arith.mulf %404, %412 : vector<16x128xf32>
    %421 = arith.addf %419, %420 : vector<16x128xf32>
    %422 = math.tanh %421 : vector<16x128xf32>
    %423 = arith.mulf %418, %422 : vector<16x128xf32>
    %424 = arith.truncf %423 : vector<16x128xf32> to vector<16x128xbf16>
    %425 = arith.index_cast %c1_i32_125 : i32 to index
    %c0_134 = arith.constant 0 : index
    %c0_135 = arith.constant 0 : index
    %426 = vector.load %arg8[%425, %c0_134, %c0_135] : memref<9x16x128xbf16, #tpu.memory_space<vmem>>, vector<1x16x128xbf16>
    %427 = vector.shape_cast %426 : vector<1x16x128xbf16> to vector<16x128xbf16>
    %428 = vector.shape_cast %424 : vector<16x128xbf16> to vector<1x16x128xbf16>
    tpu.vector_store %arg8[%425, %c0_134, %c0_135], %428 {strides = array<i32>} : memref<9x16x128xbf16, #tpu.memory_space<vmem>>, vector<1x16x128xbf16>,
    %c2_i32_136 = arith.constant 2 : i32
    %429 = arith.index_cast %c2_i32_136 : i32 to index
    %c0_137 = arith.constant 0 : index
    %c0_138 = arith.constant 0 : index
    %430 = vector.load %arg9[%429, %c0_137, %c0_138] : memref<9x16x512xf32, #tpu.memory_space<vmem>>, vector<1x16x512xf32>
    %431 = vector.shape_cast %430 : vector<1x16x512xf32> to vector<16x512xf32>
    %432 = arith.truncf %423 : vector<16x128xf32> to vector<16x128xbf16>
    %c0_139 = arith.constant 0 : index
    %c0_140 = arith.constant 0 : index
    %433 = vector.load %arg6[%c0_139, %c0_140] : memref<128x512xbf16, #tpu.memory_space<vmem>>, vector<128x512xbf16>
    %cst_141 = arith.constant dense<0.000000e+00> : vector<16x512xf32>
    %434 = tpu.matmul %432, %433, %cst_141 {dimension_numbers = #tpu.dot_dimension_numbers<[1], [0], [0], [1], [0, 0, 1, 1], [], []>} : vector<16x128xbf16>, vector<128x512xbf16>, vector<16x512xf32> -> vector<16x512xf32>
    %435 = arith.addf %431, %434 : vector<16x512xf32>
    %436 = vector.extract_strided_slice %435 {offsets = [0, 0], sizes = [16, 128], strides = [1, 1]} : vector<16x512xf32> to vector<16x128xf32>
    %437 = arith.negf %436 : vector<16x128xf32>
    %438 = math.exp %437 : vector<16x128xf32>
    %cst_142 = arith.constant 1.000000e+00 : f32
    %439 = vector.broadcast %cst_142 : f32 to vector<16x128xf32>
    %440 = arith.addf %439, %438 : vector<16x128xf32>
    %441 = arith.divf %439, %440 : vector<16x128xf32>
    %442 = vector.extract_strided_slice %435 {offsets = [0, 128], sizes = [16, 128], strides = [1, 1]} : vector<16x512xf32> to vector<16x128xf32>
    %443 = arith.negf %442 : vector<16x128xf32>
    %444 = math.exp %443 : vector<16x128xf32>
    %cst_143 = arith.constant 1.000000e+00 : f32
    %445 = vector.broadcast %cst_143 : f32 to vector<16x128xf32>
    %446 = arith.addf %445, %444 : vector<16x128xf32>
    %447 = arith.divf %445, %446 : vector<16x128xf32>
    %448 = vector.extract_strided_slice %435 {offsets = [0, 256], sizes = [16, 128], strides = [1, 1]} : vector<16x512xf32> to vector<16x128xf32>
    %449 = math.tanh %448 : vector<16x128xf32>
    %450 = vector.extract_strided_slice %435 {offsets = [0, 384], sizes = [16, 128], strides = [1, 1]} : vector<16x512xf32> to vector<16x128xf32>
    %451 = arith.negf %450 : vector<16x128xf32>
    %452 = math.exp %451 : vector<16x128xf32>
    %cst_144 = arith.constant 1.000000e+00 : f32
    %453 = vector.broadcast %cst_144 : f32 to vector<16x128xf32>
    %454 = arith.addf %453, %452 : vector<16x128xf32>
    %455 = arith.divf %453, %454 : vector<16x128xf32>
    %456 = arith.mulf %447, %421 : vector<16x128xf32>
    %457 = arith.mulf %441, %449 : vector<16x128xf32>
    %458 = arith.addf %456, %457 : vector<16x128xf32>
    %459 = math.tanh %458 : vector<16x128xf32>
    %460 = arith.mulf %455, %459 : vector<16x128xf32>
    %461 = arith.truncf %460 : vector<16x128xf32> to vector<16x128xbf16>
    %462 = arith.index_cast %c2_i32_136 : i32 to index
    %c0_145 = arith.constant 0 : index
    %c0_146 = arith.constant 0 : index
    %463 = vector.load %arg8[%462, %c0_145, %c0_146] : memref<9x16x128xbf16, #tpu.memory_space<vmem>>, vector<1x16x128xbf16>
    %464 = vector.shape_cast %463 : vector<1x16x128xbf16> to vector<16x128xbf16>
    %465 = vector.shape_cast %461 : vector<16x128xbf16> to vector<1x16x128xbf16>
    tpu.vector_store %arg8[%462, %c0_145, %c0_146], %465 {strides = array<i32>} : memref<9x16x128xbf16, #tpu.memory_space<vmem>>, vector<1x16x128xbf16>,
    %c3_i32_147 = arith.constant 3 : i32
    %466 = arith.index_cast %c3_i32_147 : i32 to index
    %c0_148 = arith.constant 0 : index
    %c0_149 = arith.constant 0 : index
    %467 = vector.load %arg9[%466, %c0_148, %c0_149] : memref<9x16x512xf32, #tpu.memory_space<vmem>>, vector<1x16x512xf32>
    %468 = vector.shape_cast %467 : vector<1x16x512xf32> to vector<16x512xf32>
    %469 = arith.truncf %460 : vector<16x128xf32> to vector<16x128xbf16>
    %c0_150 = arith.constant 0 : index
    %c0_151 = arith.constant 0 : index
    %470 = vector.load %arg6[%c0_150, %c0_151] : memref<128x512xbf16, #tpu.memory_space<vmem>>, vector<128x512xbf16>
    %cst_152 = arith.constant dense<0.000000e+00> : vector<16x512xf32>
    %471 = tpu.matmul %469, %470, %cst_152 {dimension_numbers = #tpu.dot_dimension_numbers<[1], [0], [0], [1], [0, 0, 1, 1], [], []>} : vector<16x128xbf16>, vector<128x512xbf16>, vector<16x512xf32> -> vector<16x512xf32>
    %472 = arith.addf %468, %471 : vector<16x512xf32>
    %473 = vector.extract_strided_slice %472 {offsets = [0, 0], sizes = [16, 128], strides = [1, 1]} : vector<16x512xf32> to vector<16x128xf32>
    %474 = arith.negf %473 : vector<16x128xf32>
    %475 = math.exp %474 : vector<16x128xf32>
    %cst_153 = arith.constant 1.000000e+00 : f32
    %476 = vector.broadcast %cst_153 : f32 to vector<16x128xf32>
    %477 = arith.addf %476, %475 : vector<16x128xf32>
    %478 = arith.divf %476, %477 : vector<16x128xf32>
    %479 = vector.extract_strided_slice %472 {offsets = [0, 128], sizes = [16, 128], strides = [1, 1]} : vector<16x512xf32> to vector<16x128xf32>
    %480 = arith.negf %479 : vector<16x128xf32>
    %481 = math.exp %480 : vector<16x128xf32>
    %cst_154 = arith.constant 1.000000e+00 : f32
    %482 = vector.broadcast %cst_154 : f32 to vector<16x128xf32>
    %483 = arith.addf %482, %481 : vector<16x128xf32>
    %484 = arith.divf %482, %483 : vector<16x128xf32>
    %485 = vector.extract_strided_slice %472 {offsets = [0, 256], sizes = [16, 128], strides = [1, 1]} : vector<16x512xf32> to vector<16x128xf32>
    %486 = math.tanh %485 : vector<16x128xf32>
    %487 = vector.extract_strided_slice %472 {offsets = [0, 384], sizes = [16, 128], strides = [1, 1]} : vector<16x512xf32> to vector<16x128xf32>
    %488 = arith.negf %487 : vector<16x128xf32>
    %489 = math.exp %488 : vector<16x128xf32>
    %cst_155 = arith.constant 1.000000e+00 : f32
    %490 = vector.broadcast %cst_155 : f32 to vector<16x128xf32>
    %491 = arith.addf %490, %489 : vector<16x128xf32>
    %492 = arith.divf %490, %491 : vector<16x128xf32>
    %493 = arith.mulf %484, %458 : vector<16x128xf32>
    %494 = arith.mulf %478, %486 : vector<16x128xf32>
    %495 = arith.addf %493, %494 : vector<16x128xf32>
    %496 = math.tanh %495 : vector<16x128xf32>
    %497 = arith.mulf %492, %496 : vector<16x128xf32>
    %498 = arith.truncf %497 : vector<16x128xf32> to vector<16x128xbf16>
    %499 = arith.index_cast %c3_i32_147 : i32 to index
    %c0_156 = arith.constant 0 : index
    %c0_157 = arith.constant 0 : index
    %500 = vector.load %arg8[%499, %c0_156, %c0_157] : memref<9x16x128xbf16, #tpu.memory_space<vmem>>, vector<1x16x128xbf16>
    %501 = vector.shape_cast %500 : vector<1x16x128xbf16> to vector<16x128xbf16>
    %502 = vector.shape_cast %498 : vector<16x128xbf16> to vector<1x16x128xbf16>
    tpu.vector_store %arg8[%499, %c0_156, %c0_157], %502 {strides = array<i32>} : memref<9x16x128xbf16, #tpu.memory_space<vmem>>, vector<1x16x128xbf16>,
    %c4_i32_158 = arith.constant 4 : i32
    %503 = arith.index_cast %c4_i32_158 : i32 to index
    %c0_159 = arith.constant 0 : index
    %c0_160 = arith.constant 0 : index
    %504 = vector.load %arg9[%503, %c0_159, %c0_160] : memref<9x16x512xf32, #tpu.memory_space<vmem>>, vector<1x16x512xf32>
    %505 = vector.shape_cast %504 : vector<1x16x512xf32> to vector<16x512xf32>
    %506 = arith.truncf %497 : vector<16x128xf32> to vector<16x128xbf16>
    %c0_161 = arith.constant 0 : index
    %c0_162 = arith.constant 0 : index
    %507 = vector.load %arg6[%c0_161, %c0_162] : memref<128x512xbf16, #tpu.memory_space<vmem>>, vector<128x512xbf16>
    %cst_163 = arith.constant dense<0.000000e+00> : vector<16x512xf32>
    %508 = tpu.matmul %506, %507, %cst_163 {dimension_numbers = #tpu.dot_dimension_numbers<[1], [0], [0], [1], [0, 0, 1, 1], [], []>} : vector<16x128xbf16>, vector<128x512xbf16>, vector<16x512xf32> -> vector<16x512xf32>
    %509 = arith.addf %505, %508 : vector<16x512xf32>
    %510 = vector.extract_strided_slice %509 {offsets = [0, 0], sizes = [16, 128], strides = [1, 1]} : vector<16x512xf32> to vector<16x128xf32>
    %511 = arith.negf %510 : vector<16x128xf32>
    %512 = math.exp %511 : vector<16x128xf32>
    %cst_164 = arith.constant 1.000000e+00 : f32
    %513 = vector.broadcast %cst_164 : f32 to vector<16x128xf32>
    %514 = arith.addf %513, %512 : vector<16x128xf32>
    %515 = arith.divf %513, %514 : vector<16x128xf32>
    %516 = vector.extract_strided_slice %509 {offsets = [0, 128], sizes = [16, 128], strides = [1, 1]} : vector<16x512xf32> to vector<16x128xf32>
    %517 = arith.negf %516 : vector<16x128xf32>
    %518 = math.exp %517 : vector<16x128xf32>
    %cst_165 = arith.constant 1.000000e+00 : f32
    %519 = vector.broadcast %cst_165 : f32 to vector<16x128xf32>
    %520 = arith.addf %519, %518 : vector<16x128xf32>
    %521 = arith.divf %519, %520 : vector<16x128xf32>
    %522 = vector.extract_strided_slice %509 {offsets = [0, 256], sizes = [16, 128], strides = [1, 1]} : vector<16x512xf32> to vector<16x128xf32>
    %523 = math.tanh %522 : vector<16x128xf32>
    %524 = vector.extract_strided_slice %509 {offsets = [0, 384], sizes = [16, 128], strides = [1, 1]} : vector<16x512xf32> to vector<16x128xf32>
    %525 = arith.negf %524 : vector<16x128xf32>
    %526 = math.exp %525 : vector<16x128xf32>
    %cst_166 = arith.constant 1.000000e+00 : f32
    %527 = vector.broadcast %cst_166 : f32 to vector<16x128xf32>
    %528 = arith.addf %527, %526 : vector<16x128xf32>
    %529 = arith.divf %527, %528 : vector<16x128xf32>
    %530 = arith.mulf %521, %495 : vector<16x128xf32>
    %531 = arith.mulf %515, %523 : vector<16x128xf32>
    %532 = arith.addf %530, %531 : vector<16x128xf32>
    %533 = math.tanh %532 : vector<16x128xf32>
    %534 = arith.mulf %529, %533 : vector<16x128xf32>
    %535 = arith.truncf %534 : vector<16x128xf32> to vector<16x128xbf16>
    %536 = arith.index_cast %c4_i32_158 : i32 to index
    %c0_167 = arith.constant 0 : index
    %c0_168 = arith.constant 0 : index
    %537 = vector.load %arg8[%536, %c0_167, %c0_168] : memref<9x16x128xbf16, #tpu.memory_space<vmem>>, vector<1x16x128xbf16>
    %538 = vector.shape_cast %537 : vector<1x16x128xbf16> to vector<16x128xbf16>
    %539 = vector.shape_cast %535 : vector<16x128xbf16> to vector<1x16x128xbf16>
    tpu.vector_store %arg8[%536, %c0_167, %c0_168], %539 {strides = array<i32>} : memref<9x16x128xbf16, #tpu.memory_space<vmem>>, vector<1x16x128xbf16>,
    %c5_i32_169 = arith.constant 5 : i32
    %540 = arith.index_cast %c5_i32_169 : i32 to index
    %c0_170 = arith.constant 0 : index
    %c0_171 = arith.constant 0 : index
    %541 = vector.load %arg9[%540, %c0_170, %c0_171] : memref<9x16x512xf32, #tpu.memory_space<vmem>>, vector<1x16x512xf32>
    %542 = vector.shape_cast %541 : vector<1x16x512xf32> to vector<16x512xf32>
    %543 = arith.truncf %534 : vector<16x128xf32> to vector<16x128xbf16>
    %c0_172 = arith.constant 0 : index
    %c0_173 = arith.constant 0 : index
    %544 = vector.load %arg6[%c0_172, %c0_173] : memref<128x512xbf16, #tpu.memory_space<vmem>>, vector<128x512xbf16>
    %cst_174 = arith.constant dense<0.000000e+00> : vector<16x512xf32>
    %545 = tpu.matmul %543, %544, %cst_174 {dimension_numbers = #tpu.dot_dimension_numbers<[1], [0], [0], [1], [0, 0, 1, 1], [], []>} : vector<16x128xbf16>, vector<128x512xbf16>, vector<16x512xf32> -> vector<16x512xf32>
    %546 = arith.addf %542, %545 : vector<16x512xf32>
    %547 = vector.extract_strided_slice %546 {offsets = [0, 0], sizes = [16, 128], strides = [1, 1]} : vector<16x512xf32> to vector<16x128xf32>
    %548 = arith.negf %547 : vector<16x128xf32>
    %549 = math.exp %548 : vector<16x128xf32>
    %cst_175 = arith.constant 1.000000e+00 : f32
    %550 = vector.broadcast %cst_175 : f32 to vector<16x128xf32>
    %551 = arith.addf %550, %549 : vector<16x128xf32>
    %552 = arith.divf %550, %551 : vector<16x128xf32>
    %553 = vector.extract_strided_slice %546 {offsets = [0, 128], sizes = [16, 128], strides = [1, 1]} : vector<16x512xf32> to vector<16x128xf32>
    %554 = arith.negf %553 : vector<16x128xf32>
    %555 = math.exp %554 : vector<16x128xf32>
    %cst_176 = arith.constant 1.000000e+00 : f32
    %556 = vector.broadcast %cst_176 : f32 to vector<16x128xf32>
    %557 = arith.addf %556, %555 : vector<16x128xf32>
    %558 = arith.divf %556, %557 : vector<16x128xf32>
    %559 = vector.extract_strided_slice %546 {offsets = [0, 256], sizes = [16, 128], strides = [1, 1]} : vector<16x512xf32> to vector<16x128xf32>
    %560 = math.tanh %559 : vector<16x128xf32>
    %561 = vector.extract_strided_slice %546 {offsets = [0, 384], sizes = [16, 128], strides = [1, 1]} : vector<16x512xf32> to vector<16x128xf32>
    %562 = arith.negf %561 : vector<16x128xf32>
    %563 = math.exp %562 : vector<16x128xf32>
    %cst_177 = arith.constant 1.000000e+00 : f32
    %564 = vector.broadcast %cst_177 : f32 to vector<16x128xf32>
    %565 = arith.addf %564, %563 : vector<16x128xf32>
    %566 = arith.divf %564, %565 : vector<16x128xf32>
    %567 = arith.mulf %558, %532 : vector<16x128xf32>
    %568 = arith.mulf %552, %560 : vector<16x128xf32>
    %569 = arith.addf %567, %568 : vector<16x128xf32>
    %570 = math.tanh %569 : vector<16x128xf32>
    %571 = arith.mulf %566, %570 : vector<16x128xf32>
    %572 = arith.truncf %571 : vector<16x128xf32> to vector<16x128xbf16>
    %573 = arith.index_cast %c5_i32_169 : i32 to index
    %c0_178 = arith.constant 0 : index
    %c0_179 = arith.constant 0 : index
    %574 = vector.load %arg8[%573, %c0_178, %c0_179] : memref<9x16x128xbf16, #tpu.memory_space<vmem>>, vector<1x16x128xbf16>
    %575 = vector.shape_cast %574 : vector<1x16x128xbf16> to vector<16x128xbf16>
    %576 = vector.shape_cast %572 : vector<16x128xbf16> to vector<1x16x128xbf16>
    tpu.vector_store %arg8[%573, %c0_178, %c0_179], %576 {strides = array<i32>} : memref<9x16x128xbf16, #tpu.memory_space<vmem>>, vector<1x16x128xbf16>,
    %c6_i32_180 = arith.constant 6 : i32
    %577 = arith.index_cast %c6_i32_180 : i32 to index
    %c0_181 = arith.constant 0 : index
    %c0_182 = arith.constant 0 : index
    %578 = vector.load %arg9[%577, %c0_181, %c0_182] : memref<9x16x512xf32, #tpu.memory_space<vmem>>, vector<1x16x512xf32>
    %579 = vector.shape_cast %578 : vector<1x16x512xf32> to vector<16x512xf32>
    %580 = arith.truncf %571 : vector<16x128xf32> to vector<16x128xbf16>
    %c0_183 = arith.constant 0 : index
    %c0_184 = arith.constant 0 : index
    %581 = vector.load %arg6[%c0_183, %c0_184] : memref<128x512xbf16, #tpu.memory_space<vmem>>, vector<128x512xbf16>
    %cst_185 = arith.constant dense<0.000000e+00> : vector<16x512xf32>
    %582 = tpu.matmul %580, %581, %cst_185 {dimension_numbers = #tpu.dot_dimension_numbers<[1], [0], [0], [1], [0, 0, 1, 1], [], []>} : vector<16x128xbf16>, vector<128x512xbf16>, vector<16x512xf32> -> vector<16x512xf32>
    %583 = arith.addf %579, %582 : vector<16x512xf32>
    %584 = vector.extract_strided_slice %583 {offsets = [0, 0], sizes = [16, 128], strides = [1, 1]} : vector<16x512xf32> to vector<16x128xf32>
    %585 = arith.negf %584 : vector<16x128xf32>
    %586 = math.exp %585 : vector<16x128xf32>
    %cst_186 = arith.constant 1.000000e+00 : f32
    %587 = vector.broadcast %cst_186 : f32 to vector<16x128xf32>
    %588 = arith.addf %587, %586 : vector<16x128xf32>
    %589 = arith.divf %587, %588 : vector<16x128xf32>
    %590 = vector.extract_strided_slice %583 {offsets = [0, 128], sizes = [16, 128], strides = [1, 1]} : vector<16x512xf32> to vector<16x128xf32>
    %591 = arith.negf %590 : vector<16x128xf32>
    %592 = math.exp %591 : vector<16x128xf32>
    %cst_187 = arith.constant 1.000000e+00 : f32
    %593 = vector.broadcast %cst_187 : f32 to vector<16x128xf32>
    %594 = arith.addf %593, %592 : vector<16x128xf32>
    %595 = arith.divf %593, %594 : vector<16x128xf32>
    %596 = vector.extract_strided_slice %583 {offsets = [0, 256], sizes = [16, 128], strides = [1, 1]} : vector<16x512xf32> to vector<16x128xf32>
    %597 = math.tanh %596 : vector<16x128xf32>
    %598 = vector.extract_strided_slice %583 {offsets = [0, 384], sizes = [16, 128], strides = [1, 1]} : vector<16x512xf32> to vector<16x128xf32>
    %599 = arith.negf %598 : vector<16x128xf32>
    %600 = math.exp %599 : vector<16x128xf32>
    %cst_188 = arith.constant 1.000000e+00 : f32
    %601 = vector.broadcast %cst_188 : f32 to vector<16x128xf32>
    %602 = arith.addf %601, %600 : vector<16x128xf32>
    %603 = arith.divf %601, %602 : vector<16x128xf32>
    %604 = arith.mulf %595, %569 : vector<16x128xf32>
    %605 = arith.mulf %589, %597 : vector<16x128xf32>
    %606 = arith.addf %604, %605 : vector<16x128xf32>
    %607 = math.tanh %606 : vector<16x128xf32>
    %608 = arith.mulf %603, %607 : vector<16x128xf32>
    %609 = arith.truncf %608 : vector<16x128xf32> to vector<16x128xbf16>
    %610 = arith.index_cast %c6_i32_180 : i32 to index
    %c0_189 = arith.constant 0 : index
    %c0_190 = arith.constant 0 : index
    %611 = vector.load %arg8[%610, %c0_189, %c0_190] : memref<9x16x128xbf16, #tpu.memory_space<vmem>>, vector<1x16x128xbf16>
    %612 = vector.shape_cast %611 : vector<1x16x128xbf16> to vector<16x128xbf16>
    %613 = vector.shape_cast %609 : vector<16x128xbf16> to vector<1x16x128xbf16>
    tpu.vector_store %arg8[%610, %c0_189, %c0_190], %613 {strides = array<i32>} : memref<9x16x128xbf16, #tpu.memory_space<vmem>>, vector<1x16x128xbf16>,
    %c7_i32_191 = arith.constant 7 : i32
    %614 = arith.index_cast %c7_i32_191 : i32 to index
    %c0_192 = arith.constant 0 : index
    %c0_193 = arith.constant 0 : index
    %615 = vector.load %arg9[%614, %c0_192, %c0_193] : memref<9x16x512xf32, #tpu.memory_space<vmem>>, vector<1x16x512xf32>
    %616 = vector.shape_cast %615 : vector<1x16x512xf32> to vector<16x512xf32>
    %617 = arith.truncf %608 : vector<16x128xf32> to vector<16x128xbf16>
    %c0_194 = arith.constant 0 : index
    %c0_195 = arith.constant 0 : index
    %618 = vector.load %arg6[%c0_194, %c0_195] : memref<128x512xbf16, #tpu.memory_space<vmem>>, vector<128x512xbf16>
    %cst_196 = arith.constant dense<0.000000e+00> : vector<16x512xf32>
    %619 = tpu.matmul %617, %618, %cst_196 {dimension_numbers = #tpu.dot_dimension_numbers<[1], [0], [0], [1], [0, 0, 1, 1], [], []>} : vector<16x128xbf16>, vector<128x512xbf16>, vector<16x512xf32> -> vector<16x512xf32>
    %620 = arith.addf %616, %619 : vector<16x512xf32>
    %621 = vector.extract_strided_slice %620 {offsets = [0, 0], sizes = [16, 128], strides = [1, 1]} : vector<16x512xf32> to vector<16x128xf32>
    %622 = arith.negf %621 : vector<16x128xf32>
    %623 = math.exp %622 : vector<16x128xf32>
    %cst_197 = arith.constant 1.000000e+00 : f32
    %624 = vector.broadcast %cst_197 : f32 to vector<16x128xf32>
    %625 = arith.addf %624, %623 : vector<16x128xf32>
    %626 = arith.divf %624, %625 : vector<16x128xf32>
    %627 = vector.extract_strided_slice %620 {offsets = [0, 128], sizes = [16, 128], strides = [1, 1]} : vector<16x512xf32> to vector<16x128xf32>
    %628 = arith.negf %627 : vector<16x128xf32>
    %629 = math.exp %628 : vector<16x128xf32>
    %cst_198 = arith.constant 1.000000e+00 : f32
    %630 = vector.broadcast %cst_198 : f32 to vector<16x128xf32>
    %631 = arith.addf %630, %629 : vector<16x128xf32>
    %632 = arith.divf %630, %631 : vector<16x128xf32>
    %633 = vector.extract_strided_slice %620 {offsets = [0, 256], sizes = [16, 128], strides = [1, 1]} : vector<16x512xf32> to vector<16x128xf32>
    %634 = math.tanh %633 : vector<16x128xf32>
    %635 = vector.extract_strided_slice %620 {offsets = [0, 384], sizes = [16, 128], strides = [1, 1]} : vector<16x512xf32> to vector<16x128xf32>
    %636 = arith.negf %635 : vector<16x128xf32>
    %637 = math.exp %636 : vector<16x128xf32>
    %cst_199 = arith.constant 1.000000e+00 : f32
    %638 = vector.broadcast %cst_199 : f32 to vector<16x128xf32>
    %639 = arith.addf %638, %637 : vector<16x128xf32>
    %640 = arith.divf %638, %639 : vector<16x128xf32>
    %641 = arith.mulf %632, %606 : vector<16x128xf32>
    %642 = arith.mulf %626, %634 : vector<16x128xf32>
    %643 = arith.addf %641, %642 : vector<16x128xf32>
    %644 = math.tanh %643 : vector<16x128xf32>
    %645 = arith.mulf %640, %644 : vector<16x128xf32>
    %646 = arith.truncf %645 : vector<16x128xf32> to vector<16x128xbf16>
    %647 = arith.index_cast %c7_i32_191 : i32 to index
    %c0_200 = arith.constant 0 : index
    %c0_201 = arith.constant 0 : index
    %648 = vector.load %arg8[%647, %c0_200, %c0_201] : memref<9x16x128xbf16, #tpu.memory_space<vmem>>, vector<1x16x128xbf16>
    %649 = vector.shape_cast %648 : vector<1x16x128xbf16> to vector<16x128xbf16>
    %650 = vector.shape_cast %646 : vector<16x128xbf16> to vector<1x16x128xbf16>
    tpu.vector_store %arg8[%647, %c0_200, %c0_201], %650 {strides = array<i32>} : memref<9x16x128xbf16, #tpu.memory_space<vmem>>, vector<1x16x128xbf16>,
    %c8_i32_202 = arith.constant 8 : i32
    %651 = arith.index_cast %c8_i32_202 : i32 to index
    %c0_203 = arith.constant 0 : index
    %c0_204 = arith.constant 0 : index
    %652 = vector.load %arg9[%651, %c0_203, %c0_204] : memref<9x16x512xf32, #tpu.memory_space<vmem>>, vector<1x16x512xf32>
    %653 = vector.shape_cast %652 : vector<1x16x512xf32> to vector<16x512xf32>
    %654 = arith.truncf %645 : vector<16x128xf32> to vector<16x128xbf16>
    %c0_205 = arith.constant 0 : index
    %c0_206 = arith.constant 0 : index
    %655 = vector.load %arg6[%c0_205, %c0_206] : memref<128x512xbf16, #tpu.memory_space<vmem>>, vector<128x512xbf16>
    %cst_207 = arith.constant dense<0.000000e+00> : vector<16x512xf32>
    %656 = tpu.matmul %654, %655, %cst_207 {dimension_numbers = #tpu.dot_dimension_numbers<[1], [0], [0], [1], [0, 0, 1, 1], [], []>} : vector<16x128xbf16>, vector<128x512xbf16>, vector<16x512xf32> -> vector<16x512xf32>
    %657 = arith.addf %653, %656 : vector<16x512xf32>
    %658 = vector.extract_strided_slice %657 {offsets = [0, 0], sizes = [16, 128], strides = [1, 1]} : vector<16x512xf32> to vector<16x128xf32>
    %659 = arith.negf %658 : vector<16x128xf32>
    %660 = math.exp %659 : vector<16x128xf32>
    %cst_208 = arith.constant 1.000000e+00 : f32
    %661 = vector.broadcast %cst_208 : f32 to vector<16x128xf32>
    %662 = arith.addf %661, %660 : vector<16x128xf32>
    %663 = arith.divf %661, %662 : vector<16x128xf32>
    %664 = vector.extract_strided_slice %657 {offsets = [0, 128], sizes = [16, 128], strides = [1, 1]} : vector<16x512xf32> to vector<16x128xf32>
    %665 = arith.negf %664 : vector<16x128xf32>
    %666 = math.exp %665 : vector<16x128xf32>
    %cst_209 = arith.constant 1.000000e+00 : f32
    %667 = vector.broadcast %cst_209 : f32 to vector<16x128xf32>
    %668 = arith.addf %667, %666 : vector<16x128xf32>
    %669 = arith.divf %667, %668 : vector<16x128xf32>
    %670 = vector.extract_strided_slice %657 {offsets = [0, 256], sizes = [16, 128], strides = [1, 1]} : vector<16x512xf32> to vector<16x128xf32>
    %671 = math.tanh %670 : vector<16x128xf32>
    %672 = vector.extract_strided_slice %657 {offsets = [0, 384], sizes = [16, 128], strides = [1, 1]} : vector<16x512xf32> to vector<16x128xf32>
    %673 = arith.negf %672 : vector<16x128xf32>
    %674 = math.exp %673 : vector<16x128xf32>
    %cst_210 = arith.constant 1.000000e+00 : f32
    %675 = vector.broadcast %cst_210 : f32 to vector<16x128xf32>
    %676 = arith.addf %675, %674 : vector<16x128xf32>
    %677 = arith.divf %675, %676 : vector<16x128xf32>
    %678 = arith.mulf %669, %643 : vector<16x128xf32>
    %679 = arith.mulf %663, %671 : vector<16x128xf32>
    %680 = arith.addf %678, %679 : vector<16x128xf32>
    %681 = math.tanh %680 : vector<16x128xf32>
    %682 = arith.mulf %677, %681 : vector<16x128xf32>
    %683 = arith.truncf %682 : vector<16x128xf32> to vector<16x128xbf16>
    %684 = arith.index_cast %c8_i32_202 : i32 to index
    %c0_211 = arith.constant 0 : index
    %c0_212 = arith.constant 0 : index
    %685 = vector.load %arg8[%684, %c0_211, %c0_212] : memref<9x16x128xbf16, #tpu.memory_space<vmem>>, vector<1x16x128xbf16>
    %686 = vector.shape_cast %685 : vector<1x16x128xbf16> to vector<16x128xbf16>
    %687 = vector.shape_cast %683 : vector<16x128xbf16> to vector<1x16x128xbf16>
    tpu.vector_store %arg8[%684, %c0_211, %c0_212], %687 {strides = array<i32>} : memref<9x16x128xbf16, #tpu.memory_space<vmem>>, vector<1x16x128xbf16>,
    %c9_i32_213 = arith.constant 9 : i32
    return
  }
  func.func @transform_0(%arg0: i32) -> (i32, i32, i32) {
    %c0_i32 = arith.constant 0 : i32
    %c0_i32_0 = arith.constant 0 : i32
    %c0_i32_1 = arith.constant 0 : i32
    return %c0_i32, %arg0, %c0_i32_0 : i32, i32, i32
  }
  func.func @transform_1(%arg0: i32) -> (i32, i32) {
    %c0_i32 = arith.constant 0 : i32
    %c0_i32_0 = arith.constant 0 : i32
    %c0_i32_1 = arith.constant 0 : i32
    return %c0_i32, %c0_i32_0 : i32, i32
  }
  func.func @transform_2(%arg0: i32) -> (i32, i32) {
    %c0_i32 = arith.constant 0 : i32
    %c0_i32_0 = arith.constant 0 : i32
    %c0_i32_1 = arith.constant 0 : i32
    return %c0_i32, %c0_i32_0 : i32, i32
  }
  func.func @transform_3(%arg0: i32) -> (i32, i32) {
    %c0_i32 = arith.constant 0 : i32
    %c0_i32_0 = arith.constant 0 : i32
    %c0_i32_1 = arith.constant 0 : i32
    return %c0_i32, %c0_i32_0 : i32, i32
  }
  func.func @transform_4(%arg0: i32) -> (i32, i32) {
    %c0_i32 = arith.constant 0 : i32
    %c0_i32_0 = arith.constant 0 : i32
    %c0_i32_1 = arith.constant 0 : i32
    return %c0_i32, %c0_i32_0 : i32, i32
  }
  func.func @transform_5(%arg0: i32) -> (i32, i32) {
    %c0_i32 = arith.constant 0 : i32
    %c0_i32_0 = arith.constant 0 : i32
    %c0_i32_1 = arith.constant 0 : i32
    return %c0_i32, %c0_i32_0 : i32, i32
  }
  func.func @transform_6(%arg0: i32) -> (i32, i32) {
    %c0_i32 = arith.constant 0 : i32
    %c0_i32_0 = arith.constant 0 : i32
    %c0_i32_1 = arith.constant 0 : i32
    return %c0_i32, %c0_i32_0 : i32, i32
  }
  func.func @transform_7(%arg0: i32) -> (i32, i32, i32) {
    %c0_i32 = arith.constant 0 : i32
    %c0_i32_0 = arith.constant 0 : i32
    %c0_i32_1 = arith.constant 0 : i32
    return %c0_i32, %arg0, %c0_i32_0 : i32, i32, i32
  }
}

</mosaic_0001>

<llo_original>
// kernel: tpu_custom_call.1
$region0: #{tpu_custom_call.1}
  #allocation0 [shape = 'u32[]', space=smem, size = 0x4, offset = 0x4, fixed_abs, tag = 'smem constant byte address 0x4 - core index']
  #allocation1 [shape = 'u32[144,128]{1,0:T(1,128)}', space=vmem, size = 0x12000, scoped, tag = 'internal scratch']
  #allocation2 [shape = 'f32[9,16,512]{2,1,0:T(8,128)}', space=vmem, size = 0x48000, scoped, tag = 'scratch operand']
  %s0 = inlined_call_operand.hbm [shape: bf16[9,16,128], index: 0, kind: input, shape index: {}]
  %s1 = inlined_call_operand.hbm [shape: bf16[128,512], index: 1, kind: input, shape index: {}]
  %s2 = inlined_call_operand.hbm [shape: bf16[128,512], index: 2, kind: input, shape index: {}]
  %s3 = inlined_call_operand.vmem [shape: f32[1,512], index: 3, kind: input, shape index: {}]
  %s4 = inlined_call_operand.hbm [shape: bf16[128,512], index: 4, kind: input, shape index: {}]
  %s5 = inlined_call_operand.hbm [shape: bf16[128,512], index: 5, kind: input, shape index: {}]
  %s6 = inlined_call_operand.vmem [shape: f32[1,512], index: 6, kind: input, shape index: {}]
  %s7 = inlined_call_operand.hbm [shape: bf16[9,16,128], index: 7, kind: output, shape index: {}]
  %s8 = sld [smem:[#allocation0]]
  $region58: #{tpu_custom_call.1} parent=0
    _
  %s10 = ssub.s32 1, %s8
  %s11 = scalar_select 0, %s10, %s8
  $region1: #{tpu_custom_call.1} parent=0
    #allocation3 [shape = 'u8[36864]{0}', space=vmem, size = 0x9000, scoped, tag = 'input window, operand 0, single buffered']
    #allocation4 [shape = 's32[1]{0}', space=sflag, size = 0x4, scoped, tag = 'scoped memory for tpu_custom_call.1']
    #allocation5 [shape = 's32[1]{0}', space=sflag, size = 0x4, scoped, tag = 'scoped memory for tpu_custom_call.1']
    #allocation6 [shape = 'u8[131072]{0}', space=vmem, size = 0x20000, scoped, tag = 'input window, operand 1, single buffered']
    #allocation7 [shape = 's32[1]{0}', space=sflag, size = 0x4, scoped, tag = 'scoped memory for tpu_custom_call.1']
    #allocation8 [shape = 'u8[131072]{0}', space=vmem, size = 0x20000, scoped, tag = 'input window, operand 2, single buffered']
    #allocation9 [shape = 'u8[131072]{0}', space=vmem, size = 0x20000, scoped, tag = 'input window, operand 4, single buffered']
    #allocation10 [shape = 's32[1]{0}', space=sflag, size = 0x4, scoped, tag = 'scoped memory for tpu_custom_call.1']
    #allocation11 [shape = 'u8[131072]{0}', space=vmem, size = 0x20000, scoped, tag = 'input window, operand 5, single buffered']
    #allocation12 [shape = 'u8[36864]{0}', space=vmem, size = 0x9000, scoped, tag = 'output window, operand 0, single buffered']
    %12 = vsyncpa [#allocation4], 0
    %13 = vsyncpa [#allocation7], 0
    %14 = vsyncpa [#allocation10], 0
    %15 = vsyncpa [#allocation5], 0
    // Predicated region
    $region2: #{tpu_custom_call.1} parent=1 // pred_check
      _
    $region3: #{tpu_custom_call.1} parent=1 // pred_check_branch
      %17 = sbr.rel (0) target = $region5
    $region4: #{tpu_custom_call.1} parent=1 // pred_region
      %s19 = ssub.s32 1152, 1152
      %20 = vsyncadd [#allocation4], %s19
      %s21 = sshll.u32 [#allocation3], 4
      %s22 = int_to_ptr.vmem [resolvable:$true] %s21
      %27 = dma.hbm_to_vmem [thread:$0]  %s0, 1152, %s22, [#allocation4], 64, 64, 4
    $region5: #{tpu_custom_call.1} parent=1 // pred_fallthru
      _
    // Predicated region
    $region6: #{tpu_custom_call.1} parent=1 // pred_check
      _
    $region7: #{tpu_custom_call.1} parent=1 // pred_check_branch
      %29 = sbr.rel (0) target = $region9
    $region8: #{tpu_custom_call.1} parent=1 // pred_region
      %s31 = ssub.s32 4096, 4096
      %32 = vsyncadd [#allocation7], %s31
      %s33 = sshll.u32 [#allocation6], 4
      %s34 = int_to_ptr.vmem [resolvable:$true] %s33
      %39 = dma.hbm_to_vmem [thread:$0]  %s1, 4096, %s34, [#allocation7], 256, 256, 16
    $region9: #{tpu_custom_call.1} parent=1 // pred_fallthru
      _
    // Predicated region
    $region10: #{tpu_custom_call.1} parent=1 // pred_check
      _
    $region11: #{tpu_custom_call.1} parent=1 // pred_check_branch
      %41 = sbr.rel (0) target = $region13
    $region12: #{tpu_custom_call.1} parent=1 // pred_region
      %s43 = ssub.s32 4096, 4096
      %44 = vsyncadd [#allocation7], %s43
      %s45 = sshll.u32 [#allocation8], 4
      %s46 = int_to_ptr.vmem [resolvable:$true] %s45
      %51 = dma.hbm_to_vmem [thread:$0]  %s2, 4096, %s46, [#allocation7], 256, 256, 16
    $region13: #{tpu_custom_call.1} parent=1 // pred_fallthru
      _
    // Predicated region
    $region14: #{tpu_custom_call.1} parent=1 // pred_check
      _
    $region15: #{tpu_custom_call.1} parent=1 // pred_check_branch
      %53 = sbr.rel (0) target = $region17
    $region16: #{tpu_custom_call.1} parent=1 // pred_region
      _
    $region17: #{tpu_custom_call.1} parent=1 // pred_fallthru
      _
    // Predicated region
    $region18: #{tpu_custom_call.1} parent=1 // pred_check
      _
    $region19: #{tpu_custom_call.1} parent=1 // pred_check_branch
      %55 = sbr.rel (0) target = $region21
    $region20: #{tpu_custom_call.1} parent=1 // pred_region
      %s57 = ssub.s32 4096, 4096
      %58 = vsyncadd [#allocation10], %s57
      %s59 = sshll.u32 [#allocation9], 4
      %s60 = int_to_ptr.vmem [resolvable:$true] %s59
      %65 = dma.hbm_to_vmem [thread:$0]  %s4, 4096, %s60, [#allocation10], 256, 256, 16
    $region21: #{tpu_custom_call.1} parent=1 // pred_fallthru
      _
    // Predicated region
    $region22: #{tpu_custom_call.1} parent=1 // pred_check
      _
    $region23: #{tpu_custom_call.1} parent=1 // pred_check_branch
      %67 = sbr.rel (0) target = $region25
    $region24: #{tpu_custom_call.1} parent=1 // pred_region
      %s69 = ssub.s32 4096, 4096
      %70 = vsyncadd [#allocation10], %s69
      %s71 = sshll.u32 [#allocation11], 4
      %s72 = int_to_ptr.vmem [resolvable:$true] %s71
      %77 = dma.hbm_to_vmem [thread:$0]  %s5, 4096, %s72, [#allocation10], 256, 256, 16
    $region25: #{tpu_custom_call.1} parent=1 // pred_fallthru
      _
    // Predicated region
    $region26: #{tpu_custom_call.1} parent=1 // pred_check
      _
    $region27: #{tpu_custom_call.1} parent=1 // pred_check_branch
      %79 = sbr.rel (0) target = $region29
    $region28: #{tpu_custom_call.1} parent=1 // pred_region
      _
    $region29: #{tpu_custom_call.1} parent=1 // pred_fallthru
      _
    // Predicated region
    $region30: #{tpu_custom_call.1} parent=1 // pred_check
      _
    $region31: #{tpu_custom_call.1} parent=1 // pred_check_branch
      %81 = sbr.rel (0) target = $region33
    $region32: #{tpu_custom_call.1} parent=1 // pred_region
      %82 = dma.done [#allocation4], 1152
    $region33: #{tpu_custom_call.1} parent=1 // pred_fallthru
      _
    // Predicated region
    $region34: #{tpu_custom_call.1} parent=1 // pred_check
      _
    $region35: #{tpu_custom_call.1} parent=1 // pred_check_branch
      %84 = sbr.rel (0) target = $region37
    $region36: #{tpu_custom_call.1} parent=1 // pred_region
      %85 = dma.done [#allocation7], 4096
    $region37: #{tpu_custom_call.1} parent=1 // pred_fallthru
      _
    // Predicated region
    $region38: #{tpu_custom_call.1} parent=1 // pred_check
      _
    $region39: #{tpu_custom_call.1} parent=1 // pred_check_branch
      %87 = sbr.rel (0) target = $region41
    $region40: #{tpu_custom_call.1} parent=1 // pred_region
      %88 = dma.done [#allocation7], 4096
    $region41: #{tpu_custom_call.1} parent=1 // pred_fallthru
      _
    // Predicated region
    $region42: #{tpu_custom_call.1} parent=1 // pred_check
      _
    $region43: #{tpu_custom_call.1} parent=1 // pred_check_branch
      %90 = sbr.rel (0) target = $region45
    $region44: #{tpu_custom_call.1} parent=1 // pred_region
      %91 = dma.done [#allocation10], 4096
    $region45: #{tpu_custom_call.1} parent=1 // pred_fallthru
      _
    // Predicated region
    $region46: #{tpu_custom_call.1} parent=1 // pred_check
      _
    $region47: #{tpu_custom_call.1} parent=1 // pred_check_branch
      %93 = sbr.rel (0) target = $region49
    $region48: #{tpu_custom_call.1} parent=1 // pred_region
      %94 = dma.done [#allocation10], 4096
    $region49: #{tpu_custom_call.1} parent=1 // pred_fallthru
      _
    %v96 = vld [vmem:[#allocation3] sm:$0xf]
    %v97 = vld [vmem:[#allocation3 + $0x4] sm:$0xf]
    %v98 = vld [vmem:[#allocation3 + $0x8] sm:$0xf]
    %v99 = vld [vmem:[#allocation3 + $0xc] sm:$0xf]
    %v100 = vld [vmem:[#allocation3 + $0x10] sm:$0xf]
    %v101 = vld [vmem:[#allocation3 + $0x14] sm:$0xf]
    %v102 = vld [vmem:[#allocation3 + $0x18] sm:$0xf]
    %v103 = vld [vmem:[#allocation3 + $0x1c] sm:$0xf]
    %v104 = vld [vmem:[#allocation3 + $0x20] sm:$0xf]
    %v105 = vld [vmem:[#allocation3 + $0x24] sm:$0xf]
    %v106 = vld [vmem:[#allocation3 + $0x28] sm:$0xf]
    %v107 = vld [vmem:[#allocation3 + $0x2c] sm:$0xf]
    %v108 = vld [vmem:[#allocation3 + $0x30] sm:$0xf]
    %v109 = vld [vmem:[#allocation3 + $0x34] sm:$0xf]
    %v110 = vld [vmem:[#allocation3 + $0x38] sm:$0xf]
    %v111 = vld [vmem:[#allocation3 + $0x3c] sm:$0xf]
    %v112 = vld [vmem:[#allocation3 + $0x40] sm:$0xf]
    %v113 = vld [vmem:[#allocation3 + $0x44] sm:$0xf]
    %v114 = vld [vmem:[#allocation6] sm:$0xff]
    %v115 = vld [vmem:[#allocation6 + $0x8] sm:$0xff]
    %v116 = vld [vmem:[#allocation6 + $0x10] sm:$0xff]
    %v117 = vld [vmem:[#allocation6 + $0x18] sm:$0xff]
    %v118 = vld [vmem:[#allocation6 + $0x20] sm:$0xff]
    %v119 = vld [vmem:[#allocation6 + $0x28] sm:$0xff]
    %v120 = vld [vmem:[#allocation6 + $0x30] sm:$0xff]
    %v121 = vld [vmem:[#allocation6 + $0x38] sm:$0xff]
    %v122 = vld [vmem:[#allocation6 + $0x40] sm:$0xff]
    %v123 = vld [vmem:[#allocation6 + $0x48] sm:$0xff]
    %v124 = vld [vmem:[#allocation6 + $0x50] sm:$0xff]
    %v125 = vld [vmem:[#allocation6 + $0x58] sm:$0xff]
    %v126 = vld [vmem:[#allocation6 + $0x60] sm:$0xff]
    %v127 = vld [vmem:[#allocation6 + $0x68] sm:$0xff]
    %v128 = vld [vmem:[#allocation6 + $0x70] sm:$0xff]
    %v129 = vld [vmem:[#allocation6 + $0x78] sm:$0xff]
    %v130 = vld [vmem:[#allocation6 + $0x80] sm:$0xff]
    %v131 = vld [vmem:[#allocation6 + $0x88] sm:$0xff]
    %v132 = vld [vmem:[#allocation6 + $0x90] sm:$0xff]
    %v133 = vld [vmem:[#allocation6 + $0x98] sm:$0xff]
    %v134 = vld [vmem:[#allocation6 + $0xa0] sm:$0xff]
    %v135 = vld [vmem:[#allocation6 + $0xa8] sm:$0xff]
    %v136 = vld [vmem:[#allocation6 + $0xb0] sm:$0xff]
    %v137 = vld [vmem:[#allocation6 + $0xb8] sm:$0xff]
    %v138 = vld [vmem:[#allocation6 + $0xc0] sm:$0xff]
    %v139 = vld [vmem:[#allocation6 + $0xc8] sm:$0xff]
    %v140 = vld [vmem:[#allocation6 + $0xd0] sm:$0xff]
    %v141 = vld [vmem:[#allocation6 + $0xd8] sm:$0xff]
    %v142 = vld [vmem:[#allocation6 + $0xe0] sm:$0xff]
    %v143 = vld [vmem:[#allocation6 + $0xe8] sm:$0xff]
    %v144 = vld [vmem:[#allocation6 + $0xf0] sm:$0xff]
    %v145 = vld [vmem:[#allocation6 + $0xf8] sm:$0xff]
    %v146 = vld [vmem:[%s3] sm:$0xf]
    %v148 = vlaneseq
    %v149 = vshrl.u32 %v148, 7
    %v150 = vsub.s32 0, %v149
    %v151 = vrot.slane %v146, %v150
    %v152 = vlaneseq
    %v153 = vshrl.u32 %v152, 7
    %v154 = vsub.s32 1, %v153
    %v155 = vrot.slane %v146, %v154
    %v156 = vlaneseq
    %v157 = vshrl.u32 %v156, 7
    %v158 = vsub.s32 2, %v157
    %v159 = vrot.slane %v146, %v158
    %v160 = vlaneseq
    %v161 = vshrl.u32 %v160, 7
    %v162 = vsub.s32 3, %v161
    %v163 = vrot.slane %v146, %v162
    %v186 = vunpack.c.l.b16 %v96
    %v187 = vunpack.c.l.b16 %v97
    %v188 = vunpack.c.l.b16 %v98
    %v189 = vunpack.c.l.b16 %v99
    %v190 = vunpack.c.l.b16 %v100
    %v191 = vunpack.c.l.b16 %v101
    %v192 = vunpack.c.l.b16 %v102
    %v193 = vunpack.c.l.b16 %v103
    %v194 = vunpack.c.l.b16 %v104
    %v195 = vunpack.c.l.b16 %v105
    %v196 = vunpack.c.l.b16 %v106
    %v197 = vunpack.c.l.b16 %v107
    %v198 = vunpack.c.l.b16 %v108
    %v199 = vunpack.c.l.b16 %v109
    %v200 = vunpack.c.l.b16 %v110
    %v201 = vunpack.c.l.b16 %v111
    %v202 = vunpack.c.l.b16 %v112
    %v203 = vunpack.c.l.b16 %v113
    %v204 = vpack.c.b16 %v187, %v186
    %v205 = vpack.c.b16 %v189, %v188
    %v206 = vpack.c.b16 %v191, %v190
    %v207 = vpack.c.b16 %v193, %v192
    %v208 = vpack.c.b16 %v195, %v194
    %v209 = vpack.c.b16 %v197, %v196
    %v210 = vpack.c.b16 %v199, %v198
    %v211 = vpack.c.b16 %v201, %v200
    %v212 = vpack.c.b16 %v203, %v202
    %v254 = vunpack.c.l.b16 %v114
    %v255 = vunpack.c.h.b16 %v114
    %v256 = vunpack.c.l.b16 %v115
    %v257 = vunpack.c.h.b16 %v115
    %v258 = vunpack.c.l.b16 %v116
    %v259 = vunpack.c.h.b16 %v116
    %v260 = vunpack.c.l.b16 %v117
    %v261 = vunpack.c.h.b16 %v117
    %v262 = vunpack.c.l.b16 %v118
    %v263 = vunpack.c.h.b16 %v118
    %v264 = vunpack.c.l.b16 %v119
    %v265 = vunpack.c.h.b16 %v119
    %v266 = vunpack.c.l.b16 %v120
    %v267 = vunpack.c.h.b16 %v120
    %v268 = vunpack.c.l.b16 %v121
    %v269 = vunpack.c.h.b16 %v121
    %v270 = vunpack.c.l.b16 %v122
    %v271 = vunpack.c.h.b16 %v122
    %v272 = vunpack.c.l.b16 %v123
    %v273 = vunpack.c.h.b16 %v123
    %v274 = vunpack.c.l.b16 %v124
    %v275 = vunpack.c.h.b16 %v124
    %v276 = vunpack.c.l.b16 %v125
    %v277 = vunpack.c.h.b16 %v125
    %v278 = vunpack.c.l.b16 %v126
    %v279 = vunpack.c.h.b16 %v126
    %v280 = vunpack.c.l.b16 %v127
    %v281 = vunpack.c.h.b16 %v127
    %v282 = vunpack.c.l.b16 %v128
    %v283 = vunpack.c.h.b16 %v128
    %v284 = vunpack.c.l.b16 %v129
    %v285 = vunpack.c.h.b16 %v129
    %v286 = vunpack.c.l.b16 %v130
    %v287 = vunpack.c.h.b16 %v130
    %v288 = vunpack.c.l.b16 %v131
    %v289 = vunpack.c.h.b16 %v131
    %v290 = vunpack.c.l.b16 %v132
    %v291 = vunpack.c.h.b16 %v132
    %v292 = vunpack.c.l.b16 %v133
    %v293 = vunpack.c.h.b16 %v133
    %v294 = vunpack.c.l.b16 %v134
    %v295 = vunpack.c.h.b16 %v134
    %v296 = vunpack.c.l.b16 %v135
    %v297 = vunpack.c.h.b16 %v135
    %v298 = vunpack.c.l.b16 %v136
    %v299 = vunpack.c.h.b16 %v136
    %v300 = vunpack.c.l.b16 %v137
    %v301 = vunpack.c.h.b16 %v137
    %v302 = vunpack.c.l.b16 %v138
    %v303 = vunpack.c.h.b16 %v138
    %v304 = vunpack.c.l.b16 %v139
    %v305 = vunpack.c.h.b16 %v139
    %v306 = vunpack.c.l.b16 %v140
    %v307 = vunpack.c.h.b16 %v140
    %v308 = vunpack.c.l.b16 %v141
    %v309 = vunpack.c.h.b16 %v141
    %v310 = vunpack.c.l.b16 %v142
    %v311 = vunpack.c.h.b16 %v142
    %v312 = vunpack.c.l.b16 %v143
    %v313 = vunpack.c.h.b16 %v143
    %v314 = vunpack.c.l.b16 %v144
    %v315 = vunpack.c.h.b16 %v144
    %v316 = vunpack.c.l.b16 %v145
    %v317 = vunpack.c.h.b16 %v145
    %v318 = vpack.c.b16 %v258, %v254
    %v319 = vpack.c.b16 %v259, %v255
    %v320 = vpack.c.b16 %v260, %v256
    %v321 = vpack.c.b16 %v261, %v257
    %v322 = vpack.c.b16 %v266, %v262
    %v323 = vpack.c.b16 %v267, %v263
    %v324 = vpack.c.b16 %v268, %v264
    %v325 = vpack.c.b16 %v269, %v265
    %v326 = vpack.c.b16 %v274, %v270
    %v327 = vpack.c.b16 %v275, %v271
    %v328 = vpack.c.b16 %v276, %v272
    %v329 = vpack.c.b16 %v277, %v273
    %v330 = vpack.c.b16 %v282, %v278
    %v331 = vpack.c.b16 %v283, %v279
    %v332 = vpack.c.b16 %v284, %v280
    %v333 = vpack.c.b16 %v285, %v281
    %v334 = vpack.c.b16 %v290, %v286
    %v335 = vpack.c.b16 %v291, %v287
    %v336 = vpack.c.b16 %v292, %v288
    %v337 = vpack.c.b16 %v293, %v289
    %v338 = vpack.c.b16 %v298, %v294
    %v339 = vpack.c.b16 %v299, %v295
    %v340 = vpack.c.b16 %v300, %v296
    %v341 = vpack.c.b16 %v301, %v297
    %v342 = vpack.c.b16 %v306, %v302
    %v343 = vpack.c.b16 %v307, %v303
    %v344 = vpack.c.b16 %v308, %v304
    %v345 = vpack.c.b16 %v309, %v305
    %v346 = vpack.c.b16 %v314, %v310
    %v347 = vpack.c.b16 %v315, %v311
    %v348 = vpack.c.b16 %v316, %v312
    %v349 = vpack.c.b16 %v317, %v313
    %382 = vmatprep.subr.bf16.mxu0 %v319
    %383 = vmatpush1.bf16.msra.mxu0 %v318
    %384 = vmatprep.subr.bf16.mxu0 %v323
    %385 = vmatpush1.bf16.msra.mxu0 %v322
    %386 = vmatprep.subr.bf16.mxu0 %v327
    %387 = vmatpush1.bf16.msra.mxu0 %v326
    %388 = vmatprep.subr.bf16.mxu0 %v331
    %389 = vmatpush1.bf16.msra.mxu0 %v330
    %390 = vmatprep.subr.bf16.mxu0 %v335
    %391 = vmatpush1.bf16.msra.mxu0 %v334
    %392 = vmatprep.subr.bf16.mxu0 %v339
    %393 = vmatpush1.bf16.msra.mxu0 %v338
    %394 = vmatprep.subr.bf16.mxu0 %v343
    %395 = vmatpush1.bf16.msra.mxu0 %v342
    %396 = vmatprep.subr.bf16.mxu0 %v347
    %397 = vmatpush1.bf16.msra.mxu0 %v346
    %398 = vmatprep.subr.bf16.mxu0 0
    %399 = vmatpush1.bf16.msra.mxu0 0
    %400 = vmatprep.subr.bf16.mxu0 0
    %401 = vmatpush1.bf16.msra.mxu0 0
    %402 = vmatprep.subr.bf16.mxu0 0
    %403 = vmatpush1.bf16.msra.mxu0 0
    %404 = vmatprep.subr.bf16.mxu0 0
    %405 = vmatpush1.bf16.msra.mxu0 0
    %406 = vmatprep.subr.bf16.mxu0 0
    %407 = vmatpush1.bf16.msra.mxu0 0
    %408 = vmatprep.subr.bf16.mxu0 0
    %409 = vmatpush1.bf16.msra.mxu0 0
    %410 = vmatprep.subr.bf16.mxu0 0
    %411 = vmatpush1.bf16.msra.mxu0 0
    %412 = vmatprep.subr.bf16.mxu0 0
    %413 = vmatpush1.bf16.msra.mxu0 0
    %414 = vmatprep.mubr.bf16.mxu0 0
    %415 = vmatmul.mubr.bf16.gmra.mrb[0].mxu0 %v204
    %v416 = vpop.f32.mrb[0].mxu0
    %v417 = vadd.f32 %v151, %v416
    %v418 = vpop.f32.mrb[0].mxu0
    %v419 = vadd.f32 %v155, %v418
    %v420 = vpop.f32.mrb[0].mxu0
    %v421 = vadd.f32 %v151, %v420
    %v422 = vpop.f32.mrb[0].mxu0
    %v423 = vadd.f32 %v155, %v422
    %424 = vmatprep.mubr.bf16.mxu0 0
    %425 = vmatmul.mubr.bf16.gmra.mrb[0].mxu0 %v205
    %v426 = vpop.f32.mrb[0].mxu0
    %v427 = vadd.f32 %v151, %v426
    %v428 = vpop.f32.mrb[0].mxu0
    %v429 = vadd.f32 %v155, %v428
    %v430 = vpop.f32.mrb[0].mxu0
    %v431 = vadd.f32 %v151, %v430
    %v432 = vpop.f32.mrb[0].mxu0
    %v433 = vadd.f32 %v155, %v432
    %434 = vmatprep.mubr.bf16.mxu0 0
    %435 = vmatmul.mubr.bf16.gmra.mrb[0].mxu0 %v206
    %v436 = vpop.f32.mrb[0].mxu0
    %v437 = vadd.f32 %v151, %v436
    %v438 = vpop.f32.mrb[0].mxu0
    %v439 = vadd.f32 %v155, %v438
    %v440 = vpop.f32.mrb[0].mxu0
    %v441 = vadd.f32 %v151, %v440
    %v442 = vpop.f32.mrb[0].mxu0
    %v443 = vadd.f32 %v155, %v442
    %444 = vmatprep.mubr.bf16.mxu0 0
    %445 = vmatmul.mubr.bf16.gmra.mrb[0].mxu0 %v207
    %v446 = vpop.f32.mrb[0].mxu0
    %v447 = vadd.f32 %v151, %v446
    %v448 = vpop.f32.mrb[0].mxu0
    %v449 = vadd.f32 %v155, %v448
    %v450 = vpop.f32.mrb[0].mxu0
    %v451 = vadd.f32 %v151, %v450
    %v452 = vpop.f32.mrb[0].mxu0
    %v453 = vadd.f32 %v155, %v452
    %454 = vmatprep.mubr.bf16.mxu0 0
    %455 = vmatmul.mubr.bf16.gmra.mrb[0].mxu0 %v208
    %v456 = vpop.f32.mrb[0].mxu0
    %v457 = vadd.f32 %v151, %v456
    %v458 = vpop.f32.mrb[0].mxu0
    %v459 = vadd.f32 %v155, %v458
    %v460 = vpop.f32.mrb[0].mxu0
    %v461 = vadd.f32 %v151, %v460
    %v462 = vpop.f32.mrb[0].mxu0
    %v463 = vadd.f32 %v155, %v462
    %464 = vmatprep.mubr.bf16.mxu0 0
    %465 = vmatmul.mubr.bf16.gmra.mrb[0].mxu0 %v209
    %v466 = vpop.f32.mrb[0].mxu0
    %v467 = vadd.f32 %v151, %v466
    %v468 = vpop.f32.mrb[0].mxu0
    %v469 = vadd.f32 %v155, %v468
    %v470 = vpop.f32.mrb[0].mxu0
    %v471 = vadd.f32 %v151, %v470
    %v472 = vpop.f32.mrb[0].mxu0
    %v473 = vadd.f32 %v155, %v472
    %474 = vmatprep.mubr.bf16.mxu0 0
    %475 = vmatmul.mubr.bf16.gmra.mrb[0].mxu0 %v210
    %v476 = vpop.f32.mrb[0].mxu0
    %v477 = vadd.f32 %v151, %v476
    %v478 = vpop.f32.mrb[0].mxu0
    %v479 = vadd.f32 %v155, %v478
    %v480 = vpop.f32.mrb[0].mxu0
    %v481 = vadd.f32 %v151, %v480
    %v482 = vpop.f32.mrb[0].mxu0
    %v483 = vadd.f32 %v155, %v482
    %484 = vmatprep.mubr.bf16.mxu0 0
    %485 = vmatmul.mubr.bf16.gmra.mrb[0].mxu0 %v211
    %v486 = vpop.f32.mrb[0].mxu0
    %v487 = vadd.f32 %v151, %v486
    %v488 = vpop.f32.mrb[0].mxu0
    %v489 = vadd.f32 %v155, %v488
    %v490 = vpop.f32.mrb[0].mxu0
    %v491 = vadd.f32 %v151, %v490
    %v492 = vpop.f32.mrb[0].mxu0
    %v493 = vadd.f32 %v155, %v492
    %494 = vmatprep.mubr.bf16.mxu0 0
    %495 = vmatmul.mubr.bf16.gmra.mrb[0].mxu0 %v212
    %v496 = vpop.f32.mrb[0].mxu0
    %v497 = vadd.f32 %v151, %v496
    %v498 = vpop.f32.mrb[0].mxu0
    %v499 = vadd.f32 %v155, %v498
    %v500 = vpop.f32.mrb[0].mxu0
    %v501 = vadd.f32 %v151, %v500
    %v502 = vpop.f32.mrb[0].mxu0
    %v503 = vadd.f32 %v155, %v502
    %504 = vdwg.mxu0
    %505 = vmatprep.subr.bf16.mxu0 %v321
    %506 = vmatpush1.bf16.msra.mxu0 %v320
    %507 = vmatprep.subr.bf16.mxu0 %v325
    %508 = vmatpush1.bf16.msra.mxu0 %v324
    %509 = vmatprep.subr.bf16.mxu0 %v329
    %510 = vmatpush1.bf16.msra.mxu0 %v328
    %511 = vmatprep.subr.bf16.mxu0 %v333
    %512 = vmatpush1.bf16.msra.mxu0 %v332
    %513 = vmatprep.subr.bf16.mxu0 %v337
    %514 = vmatpush1.bf16.msra.mxu0 %v336
    %515 = vmatprep.subr.bf16.mxu0 %v341
    %516 = vmatpush1.bf16.msra.mxu0 %v340
    %517 = vmatprep.subr.bf16.mxu0 %v345
    %518 = vmatpush1.bf16.msra.mxu0 %v344
    %519 = vmatprep.subr.bf16.mxu0 %v349
    %520 = vmatpush1.bf16.msra.mxu0 %v348
    %521 = vmatprep.subr.bf16.mxu0 0
    %522 = vmatpush1.bf16.msra.mxu0 0
    %523 = vmatprep.subr.bf16.mxu0 0
    %524 = vmatpush1.bf16.msra.mxu0 0
    %525 = vmatprep.subr.bf16.mxu0 0
    %526 = vmatpush1.bf16.msra.mxu0 0
    %527 = vmatprep.subr.bf16.mxu0 0
    %528 = vmatpush1.bf16.msra.mxu0 0
    %529 = vmatprep.subr.bf16.mxu0 0
    %530 = vmatpush1.bf16.msra.mxu0 0
    %531 = vmatprep.subr.bf16.mxu0 0
    %532 = vmatpush1.bf16.msra.mxu0 0
    %533 = vmatprep.subr.bf16.mxu0 0
    %534 = vmatpush1.bf16.msra.mxu0 0
    %535 = vmatprep.subr.bf16.mxu0 0
    %536 = vmatpush1.bf16.msra.mxu0 0
    %537 = vmatprep.mubr.bf16.mxu0 0
    %538 = vmatmul.mubr.bf16.gmra.mrb[0].mxu0 %v204
    %v539 = vpop.f32.mrb[0].mxu0
    %v540 = vadd.f32 %v159, %v539
    %v541 = vpop.f32.mrb[0].mxu0
    %v542 = vadd.f32 %v163, %v541
    %v543 = vpop.f32.mrb[0].mxu0
    %v544 = vadd.f32 %v159, %v543
    %v545 = vpop.f32.mrb[0].mxu0
    %v546 = vadd.f32 %v163, %v545
    %547 = vmatprep.mubr.bf16.mxu0 0
    %548 = vmatmul.mubr.bf16.gmra.mrb[0].mxu0 %v205
    %v549 = vpop.f32.mrb[0].mxu0
    %v550 = vadd.f32 %v159, %v549
    %v551 = vpop.f32.mrb[0].mxu0
    %v552 = vadd.f32 %v163, %v551
    %v553 = vpop.f32.mrb[0].mxu0
    %v554 = vadd.f32 %v159, %v553
    %v555 = vpop.f32.mrb[0].mxu0
    %v556 = vadd.f32 %v163, %v555
    %557 = vmatprep.mubr.bf16.mxu0 0
    %558 = vmatmul.mubr.bf16.gmra.mrb[0].mxu0 %v206
    %v559 = vpop.f32.mrb[0].mxu0
    %v560 = vadd.f32 %v159, %v559
    %v561 = vpop.f32.mrb[0].mxu0
    %v562 = vadd.f32 %v163, %v561
    %v563 = vpop.f32.mrb[0].mxu0
    %v564 = vadd.f32 %v159, %v563
    %v565 = vpop.f32.mrb[0].mxu0
    %v566 = vadd.f32 %v163, %v565
    %567 = vmatprep.mubr.bf16.mxu0 0
    %568 = vmatmul.mubr.bf16.gmra.mrb[0].mxu0 %v207
    %v569 = vpop.f32.mrb[0].mxu0
    %v570 = vadd.f32 %v159, %v569
    %v571 = vpop.f32.mrb[0].mxu0
    %v572 = vadd.f32 %v163, %v571
    %v573 = vpop.f32.mrb[0].mxu0
    %v574 = vadd.f32 %v159, %v573
    %v575 = vpop.f32.mrb[0].mxu0
    %v576 = vadd.f32 %v163, %v575
    %577 = vmatprep.mubr.bf16.mxu0 0
    %578 = vmatmul.mubr.bf16.gmra.mrb[0].mxu0 %v208
    %v579 = vpop.f32.mrb[0].mxu0
    %v580 = vadd.f32 %v159, %v579
    %v581 = vpop.f32.mrb[0].mxu0
    %v582 = vadd.f32 %v163, %v581
    %v583 = vpop.f32.mrb[0].mxu0
    %v584 = vadd.f32 %v159, %v583
    %v585 = vpop.f32.mrb[0].mxu0
    %v586 = vadd.f32 %v163, %v585
    %587 = vmatprep.mubr.bf16.mxu0 0
    %588 = vmatmul.mubr.bf16.gmra.mrb[0].mxu0 %v209
    %v589 = vpop.f32.mrb[0].mxu0
    %v590 = vadd.f32 %v159, %v589
    %v591 = vpop.f32.mrb[0].mxu0
    %v592 = vadd.f32 %v163, %v591
    %v593 = vpop.f32.mrb[0].mxu0
    %v594 = vadd.f32 %v159, %v593
    %v595 = vpop.f32.mrb[0].mxu0
    %v596 = vadd.f32 %v163, %v595
    %597 = vmatprep.mubr.bf16.mxu0 0
    %598 = vmatmul.mubr.bf16.gmra.mrb[0].mxu0 %v210
    %v599 = vpop.f32.mrb[0].mxu0
    %v600 = vadd.f32 %v159, %v599
    %v601 = vpop.f32.mrb[0].mxu0
    %v602 = vadd.f32 %v163, %v601
    %v603 = vpop.f32.mrb[0].mxu0
    %v604 = vadd.f32 %v159, %v603
    %v605 = vpop.f32.mrb[0].mxu0
    %v606 = vadd.f32 %v163, %v605
    %607 = vmatprep.mubr.bf16.mxu0 0
    %608 = vmatmul.mubr.bf16.gmra.mrb[0].mxu0 %v211
    %v609 = vpop.f32.mrb[0].mxu0
    %v610 = vadd.f32 %v159, %v609
    %v611 = vpop.f32.mrb[0].mxu0
    %v612 = vadd.f32 %v163, %v611
    %v613 = vpop.f32.mrb[0].mxu0
    %v614 = vadd.f32 %v159, %v613
    %v615 = vpop.f32.mrb[0].mxu0
    %v616 = vadd.f32 %v163, %v615
    %617 = vmatprep.mubr.bf16.mxu0 0
    %618 = vmatmul.mubr.bf16.gmra.mrb[0].mxu0 %v212
    %v619 = vpop.f32.mrb[0].mxu0
    %v620 = vadd.f32 %v159, %v619
    %v621 = vpop.f32.mrb[0].mxu0
    %v622 = vadd.f32 %v163, %v621
    %v623 = vpop.f32.mrb[0].mxu0
    %v624 = vadd.f32 %v159, %v623
    %v625 = vpop.f32.mrb[0].mxu0
    %v626 = vadd.f32 %v163, %v625
    %627 = vdwg.mxu0
    %628 = vst [vmem:[#allocation2] sm:$0xff] %v417
    %629 = vst [vmem:[#allocation2 + $0x8] sm:$0xff] %v419
    %630 = vst [vmem:[#allocation2 + $0x10] sm:$0xff] %v540
    %631 = vst [vmem:[#allocation2 + $0x18] sm:$0xff] %v542
    %632 = vst [vmem:[#allocation2 + $0x20] sm:$0xff] %v421
    %633 = vst [vmem:[#allocation2 + $0x28] sm:$0xff] %v423
    %634 = vst [vmem:[#allocation2 + $0x30] sm:$0xff] %v544
    %635 = vst [vmem:[#allocation2 + $0x38] sm:$0xff] %v546
    %636 = vst [vmem:[#allocation2 + $0x40] sm:$0xff] %v427
    %637 = vst [vmem:[#allocation2 + $0x48] sm:$0xff] %v429
    %638 = vst [vmem:[#allocation2 + $0x50] sm:$0xff] %v550
    %639 = vst [vmem:[#allocation2 + $0x58] sm:$0xff] %v552
    %640 = vst [vmem:[#allocation2 + $0x60] sm:$0xff] %v431
    %641 = vst [vmem:[#allocation2 + $0x68] sm:$0xff] %v433
    %642 = vst [vmem:[#allocation2 + $0x70] sm:$0xff] %v554
    %643 = vst [vmem:[#allocation2 + $0x78] sm:$0xff] %v556
    %644 = vst [vmem:[#allocation2 + $0x80] sm:$0xff] %v437
    %645 = vst [vmem:[#allocation2 + $0x88] sm:$0xff] %v439
    %646 = vst [vmem:[#allocation2 + $0x90] sm:$0xff] %v560
    %647 = vst [vmem:[#allocation2 + $0x98] sm:$0xff] %v562
    %648 = vst [vmem:[#allocation2 + $0xa0] sm:$0xff] %v441
    %649 = vst [vmem:[#allocation2 + $0xa8] sm:$0xff] %v443
    %650 = vst [vmem:[#allocation2 + $0xb0] sm:$0xff] %v564
    %651 = vst [vmem:[#allocation2 + $0xb8] sm:$0xff] %v566
    %652 = vst [vmem:[#allocation2 + $0xc0] sm:$0xff] %v447
    %653 = vst [vmem:[#allocation2 + $0xc8] sm:$0xff] %v449
    %654 = vst [vmem:[#allocation2 + $0xd0] sm:$0xff] %v570
    %655 = vst [vmem:[#allocation2 + $0xd8] sm:$0xff] %v572
    %656 = vst [vmem:[#allocation2 + $0xe0] sm:$0xff] %v451
    %657 = vst [vmem:[#allocation2 + $0xe8] sm:$0xff] %v453
    %658 = vst [vmem:[#allocation2 + $0xf0] sm:$0xff] %v574
    %659 = vst [vmem:[#allocation2 + $0xf8] sm:$0xff] %v576
    %660 = vst [vmem:[#allocation2 + $0x100] sm:$0xff] %v457
    %661 = vst [vmem:[#allocation2 + $0x108] sm:$0xff] %v459
    %662 = vst [vmem:[#allocation2 + $0x110] sm:$0xff] %v580
    %663 = vst [vmem:[#allocation2 + $0x118] sm:$0xff] %v582
    %664 = vst [vmem:[#allocation2 + $0x120] sm:$0xff] %v461
    %665 = vst [vmem:[#allocation2 + $0x128] sm:$0xff] %v463
    %666 = vst [vmem:[#allocation2 + $0x130] sm:$0xff] %v584
    %667 = vst [vmem:[#allocation2 + $0x138] sm:$0xff] %v586
    %668 = vst [vmem:[#allocation2 + $0x140] sm:$0xff] %v467
    %669 = vst [vmem:[#allocation2 + $0x148] sm:$0xff] %v469
    %670 = vst [vmem:[#allocation2 + $0x150] sm:$0xff] %v590
    %671 = vst [vmem:[#allocation2 + $0x158] sm:$0xff] %v592
    %672 = vst [vmem:[#allocation2 + $0x160] sm:$0xff] %v471
    %673 = vst [vmem:[#allocation2 + $0x168] sm:$0xff] %v473
    %674 = vst [vmem:[#allocation2 + $0x170] sm:$0xff] %v594
    %675 = vst [vmem:[#allocation2 + $0x178] sm:$0xff] %v596
    %676 = vst [vmem:[#allocation2 + $0x180] sm:$0xff] %v477
    %677 = vst [vmem:[#allocation2 + $0x188] sm:$0xff] %v479
    %678 = vst [vmem:[#allocation2 + $0x190] sm:$0xff] %v600
    %679 = vst [vmem:[#allocation2 + $0x198] sm:$0xff] %v602
    %680 = vst [vmem:[#allocation2 + $0x1a0] sm:$0xff] %v481
    %681 = vst [vmem:[#allocation2 + $0x1a8] sm:$0xff] %v483
    %682 = vst [vmem:[#allocation2 + $0x1b0] sm:$0xff] %v604
    %683 = vst [vmem:[#allocation2 + $0x1b8] sm:$0xff] %v606
    %684 = vst [vmem:[#allocation2 + $0x1c0] sm:$0xff] %v487
    %685 = vst [vmem:[#allocation2 + $0x1c8] sm:$0xff] %v489
    %686 = vst [vmem:[#allocation2 + $0x1d0] sm:$0xff] %v610
    %687 = vst [vmem:[#allocation2 + $0x1d8] sm:$0xff] %v612
    %688 = vst [vmem:[#allocation2 + $0x1e0] sm:$0xff] %v491
    %689 = vst [vmem:[#allocation2 + $0x1e8] sm:$0xff] %v493
    %690 = vst [vmem:[#allocation2 + $0x1f0] sm:$0xff] %v614
    %691 = vst [vmem:[#allocation2 + $0x1f8] sm:$0xff] %v616
    %692 = vst [vmem:[#allocation2 + $0x200] sm:$0xff] %v497
    %693 = vst [vmem:[#allocation2 + $0x208] sm:$0xff] %v499
    %694 = vst [vmem:[#allocation2 + $0x210] sm:$0xff] %v620
    %695 = vst [vmem:[#allocation2 + $0x218] sm:$0xff] %v622
    %696 = vst [vmem:[#allocation2 + $0x220] sm:$0xff] %v501
    %697 = vst [vmem:[#allocation2 + $0x228] sm:$0xff] %v503
    %698 = vst [vmem:[#allocation2 + $0x230] sm:$0xff] %v624
    %699 = vst [vmem:[#allocation2 + $0x238] sm:$0xff] %v626
    %v700 = vld [vmem:[#allocation2] sm:$0xff]
    %v701 = vld [vmem:[#allocation2 + $0x8] sm:$0xff]
    %v702 = vld [vmem:[#allocation2 + $0x10] sm:$0xff]
    %v703 = vld [vmem:[#allocation2 + $0x18] sm:$0xff]
    %v704 = vld [vmem:[#allocation2 + $0x20] sm:$0xff]
    %v705 = vld [vmem:[#allocation2 + $0x28] sm:$0xff]
    %v706 = vld [vmem:[#allocation2 + $0x30] sm:$0xff]
    %v707 = vld [vmem:[#allocation2 + $0x38] sm:$0xff]
    %v708 = vld [vmem:[#allocation8] sm:$0xff]
    %v709 = vld [vmem:[#allocation8 + $0x8] sm:$0xff]
    %v710 = vld [vmem:[#allocation8 + $0x10] sm:$0xff]
    %v711 = vld [vmem:[#allocation8 + $0x18] sm:$0xff]
    %v712 = vld [vmem:[#allocation8 + $0x20] sm:$0xff]
    %v713 = vld [vmem:[#allocation8 + $0x28] sm:$0xff]
    %v714 = vld [vmem:[#allocation8 + $0x30] sm:$0xff]
    %v715 = vld [vmem:[#allocation8 + $0x38] sm:$0xff]
    %v716 = vld [vmem:[#allocation8 + $0x40] sm:$0xff]
    %v717 = vld [vmem:[#allocation8 + $0x48] sm:$0xff]
    %v718 = vld [vmem:[#allocation8 + $0x50] sm:$0xff]
    %v719 = vld [vmem:[#allocation8 + $0x58] sm:$0xff]
    %v720 = vld [vmem:[#allocation8 + $0x60] sm:$0xff]
    %v721 = vld [vmem:[#allocation8 + $0x68] sm:$0xff]
    %v722 = vld [vmem:[#allocation8 + $0x70] sm:$0xff]
    %v723 = vld [vmem:[#allocation8 + $0x78] sm:$0xff]
    %v724 = vld [vmem:[#allocation8 + $0x80] sm:$0xff]
    %v725 = vld [vmem:[#allocation8 + $0x88] sm:$0xff]
    %v726 = vld [vmem:[#allocation8 + $0x90] sm:$0xff]
    %v727 = vld [vmem:[#allocation8 + $0x98] sm:$0xff]
    %v728 = vld [vmem:[#allocation8 + $0xa0] sm:$0xff]
    %v729 = vld [vmem:[#allocation8 + $0xa8] sm:$0xff]
    %v730 = vld [vmem:[#allocation8 + $0xb0] sm:$0xff]
    %v731 = vld [vmem:[#allocation8 + $0xb8] sm:$0xff]
    %v732 = vld [vmem:[#allocation8 + $0xc0] sm:$0xff]
    %v733 = vld [vmem:[#allocation8 + $0xc8] sm:$0xff]
    %v734 = vld [vmem:[#allocation8 + $0xd0] sm:$0xff]
    %v735 = vld [vmem:[#allocation8 + $0xd8] sm:$0xff]
    %v736 = vld [vmem:[#allocation8 + $0xe0] sm:$0xff]
    %v737 = vld [vmem:[#allocation8 + $0xe8] sm:$0xff]
    %v738 = vld [vmem:[#allocation8 + $0xf0] sm:$0xff]
    %v739 = vld [vmem:[#allocation8 + $0xf8] sm:$0xff]
    %v772 = vunpack.c.l.b16 %v708
    %v773 = vunpack.c.h.b16 %v708
    %v774 = vunpack.c.l.b16 %v709
    %v775 = vunpack.c.h.b16 %v709
    %v776 = vunpack.c.l.b16 %v710
    %v777 = vunpack.c.h.b16 %v710
    %v778 = vunpack.c.l.b16 %v711
    %v779 = vunpack.c.h.b16 %v711
    %v780 = vunpack.c.l.b16 %v712
    %v781 = vunpack.c.h.b16 %v712
    %v782 = vunpack.c.l.b16 %v713
    %v783 = vunpack.c.h.b16 %v713
    %v784 = vunpack.c.l.b16 %v714
    %v785 = vunpack.c.h.b16 %v714
    %v786 = vunpack.c.l.b16 %v715
    %v787 = vunpack.c.h.b16 %v715
    %v788 = vunpack.c.l.b16 %v716
    %v789 = vunpack.c.h.b16 %v716
    %v790 = vunpack.c.l.b16 %v717
    %v791 = vunpack.c.h.b16 %v717
    %v792 = vunpack.c.l.b16 %v718
    %v793 = vunpack.c.h.b16 %v718
    %v794 = vunpack.c.l.b16 %v719
    %v795 = vunpack.c.h.b16 %v719
    %v796 = vunpack.c.l.b16 %v720
    %v797 = vunpack.c.h.b16 %v720
    %v798 = vunpack.c.l.b16 %v721
    %v799 = vunpack.c.h.b16 %v721
    %v800 = vunpack.c.l.b16 %v722
    %v801 = vunpack.c.h.b16 %v722
    %v802 = vunpack.c.l.b16 %v723
    %v803 = vunpack.c.h.b16 %v723
    %v804 = vunpack.c.l.b16 %v724
    %v805 = vunpack.c.h.b16 %v724
    %v806 = vunpack.c.l.b16 %v725
    %v807 = vunpack.c.h.b16 %v725
    %v808 = vunpack.c.l.b16 %v726
    %v809 = vunpack.c.h.b16 %v726
    %v810 = vunpack.c.l.b16 %v727
    %v811 = vunpack.c.h.b16 %v727
    %v812 = vunpack.c.l.b16 %v728
    %v813 = vunpack.c.h.b16 %v728
    %v814 = vunpack.c.l.b16 %v729
    %v815 = vunpack.c.h.b16 %v729
    %v816 = vunpack.c.l.b16 %v730
    %v817 = vunpack.c.h.b16 %v730
    %v818 = vunpack.c.l.b16 %v731
    %v819 = vunpack.c.h.b16 %v731
    %v820 = vunpack.c.l.b16 %v732
    %v821 = vunpack.c.h.b16 %v732
    %v822 = vunpack.c.l.b16 %v733
    %v823 = vunpack.c.h.b16 %v733
    %v824 = vunpack.c.l.b16 %v734
    %v825 = vunpack.c.h.b16 %v734
    %v826 = vunpack.c.l.b16 %v735
    %v827 = vunpack.c.h.b16 %v735
    %v828 = vunpack.c.l.b16 %v736
    %v829 = vunpack.c.h.b16 %v736
    %v830 = vunpack.c.l.b16 %v737
    %v831 = vunpack.c.h.b16 %v737
    %v832 = vunpack.c.l.b16 %v738
    %v833 = vunpack.c.h.b16 %v738
    %v834 = vunpack.c.l.b16 %v739
    %v835 = vunpack.c.h.b16 %v739
    %v836 = vpack.c.b16 %v776, %v772
    %v837 = vpack.c.b16 %v777, %v773
    %v838 = vpack.c.b16 %v778, %v774
    %v839 = vpack.c.b16 %v779, %v775
    %v840 = vpack.c.b16 %v784, %v780
    %v841 = vpack.c.b16 %v785, %v781
    %v842 = vpack.c.b16 %v786, %v782
    %v843 = vpack.c.b16 %v787, %v783
    %v844 = vpack.c.b16 %v792, %v788
    %v845 = vpack.c.b16 %v793, %v789
    %v846 = vpack.c.b16 %v794, %v790
    %v847 = vpack.c.b16 %v795, %v791
    %v848 = vpack.c.b16 %v800, %v796
    %v849 = vpack.c.b16 %v801, %v797
    %v850 = vpack.c.b16 %v802, %v798
    %v851 = vpack.c.b16 %v803, %v799
    %v852 = vpack.c.b16 %v808, %v804
    %v853 = vpack.c.b16 %v809, %v805
    %v854 = vpack.c.b16 %v810, %v806
    %v855 = vpack.c.b16 %v811, %v807
    %v856 = vpack.c.b16 %v816, %v812
    %v857 = vpack.c.b16 %v817, %v813
    %v858 = vpack.c.b16 %v818, %v814
    %v859 = vpack.c.b16 %v819, %v815
    %v860 = vpack.c.b16 %v824, %v820
    %v861 = vpack.c.b16 %v825, %v821
    %v862 = vpack.c.b16 %v826, %v822
    %v863 = vpack.c.b16 %v827, %v823
    %v864 = vpack.c.b16 %v832, %v828
    %v865 = vpack.c.b16 %v833, %v829
    %v866 = vpack.c.b16 %v834, %v830
    %v867 = vpack.c.b16 %v835, %v831
    %900 = vmatprep.subr.bf16.mxu0 %v837
    %901 = vmatpush1.bf16.msra.mxu0 %v836
    %902 = vmatprep.subr.bf16.mxu0 %v841
    %903 = vmatpush1.bf16.msra.mxu0 %v840
    %904 = vmatprep.subr.bf16.mxu0 %v845
    %905 = vmatpush1.bf16.msra.mxu0 %v844
    %906 = vmatprep.subr.bf16.mxu0 %v849
    %907 = vmatpush1.bf16.msra.mxu0 %v848
    %908 = vmatprep.subr.bf16.mxu0 %v853
    %909 = vmatpush1.bf16.msra.mxu0 %v852
    %910 = vmatprep.subr.bf16.mxu0 %v857
    %911 = vmatpush1.bf16.msra.mxu0 %v856
    %912 = vmatprep.subr.bf16.mxu0 %v861
    %913 = vmatpush1.bf16.msra.mxu0 %v860
    %914 = vmatprep.subr.bf16.mxu0 %v865
    %915 = vmatpush1.bf16.msra.mxu0 %v864
    %916 = vmatprep.subr.bf16.mxu0 0
    %917 = vmatpush1.bf16.msra.mxu0 0
    %918 = vmatprep.subr.bf16.mxu0 0
    %919 = vmatpush1.bf16.msra.mxu0 0
    %920 = vmatprep.subr.bf16.mxu0 0
    %921 = vmatpush1.bf16.msra.mxu0 0
    %922 = vmatprep.subr.bf16.mxu0 0
    %923 = vmatpush1.bf16.msra.mxu0 0
    %924 = vmatprep.subr.bf16.mxu0 0
    %925 = vmatpush1.bf16.msra.mxu0 0
    %926 = vmatprep.subr.bf16.mxu0 0
    %927 = vmatpush1.bf16.msra.mxu0 0
    %928 = vmatprep.subr.bf16.mxu0 0
    %929 = vmatpush1.bf16.msra.mxu0 0
    %930 = vmatprep.subr.bf16.mxu0 0
    %931 = vmatpush1.bf16.msra.mxu0 0
    %932 = vmatprep.mubr.bf16.mxu0 0
    %933 = vmatmul.mubr.bf16.gmra.mrb[0].mxu0 0
    %v934 = vpop.f32.mrb[0].mxu0
    %v935 = vadd.f32 0.0, %v934
    %v936 = vpop.f32.mrb[0].mxu0
    %v937 = vadd.f32 0.0, %v936
    %v938 = vpop.f32.mrb[0].mxu0
    %v939 = vadd.f32 0.0, %v938
    %v940 = vpop.f32.mrb[0].mxu0
    %v941 = vadd.f32 0.0, %v940
    %942 = vdwg.mxu0
    %943 = vmatprep.subr.bf16.mxu0 %v839
    %944 = vmatpush1.bf16.msra.mxu0 %v838
    %945 = vmatprep.subr.bf16.mxu0 %v843
    %946 = vmatpush1.bf16.msra.mxu0 %v842
    %947 = vmatprep.subr.bf16.mxu0 %v847
    %948 = vmatpush1.bf16.msra.mxu0 %v846
    %949 = vmatprep.subr.bf16.mxu0 %v851
    %950 = vmatpush1.bf16.msra.mxu0 %v850
    %951 = vmatprep.subr.bf16.mxu0 %v855
    %952 = vmatpush1.bf16.msra.mxu0 %v854
    %953 = vmatprep.subr.bf16.mxu0 %v859
    %954 = vmatpush1.bf16.msra.mxu0 %v858
    %955 = vmatprep.subr.bf16.mxu0 %v863
    %956 = vmatpush1.bf16.msra.mxu0 %v862
    %957 = vmatprep.subr.bf16.mxu0 %v867
    %958 = vmatpush1.bf16.msra.mxu0 %v866
    %959 = vmatprep.subr.bf16.mxu0 0
    %960 = vmatpush1.bf16.msra.mxu0 0
    %961 = vmatprep.subr.bf16.mxu0 0
    %962 = vmatpush1.bf16.msra.mxu0 0
    %963 = vmatprep.subr.bf16.mxu0 0
    %964 = vmatpush1.bf16.msra.mxu0 0
    %965 = vmatprep.subr.bf16.mxu0 0
    %966 = vmatpush1.bf16.msra.mxu0 0
    %967 = vmatprep.subr.bf16.mxu0 0
    %968 = vmatpush1.bf16.msra.mxu0 0
    %969 = vmatprep.subr.bf16.mxu0 0
    %970 = vmatpush1.bf16.msra.mxu0 0
    %971 = vmatprep.subr.bf16.mxu0 0
    %972 = vmatpush1.bf16.msra.mxu0 0
    %973 = vmatprep.subr.bf16.mxu0 0
    %974 = vmatpush1.bf16.msra.mxu0 0
    %975 = vmatprep.mubr.bf16.mxu0 0
    %976 = vmatmul.mubr.bf16.gmra.mrb[0].mxu0 0
    %v977 = vpop.f32.mrb[0].mxu0
    %v978 = vadd.f32 0.0, %v977
    %v979 = vpop.f32.mrb[0].mxu0
    %v980 = vadd.f32 0.0, %v979
    %v981 = vpop.f32.mrb[0].mxu0
    %v982 = vadd.f32 0.0, %v981
    %v983 = vpop.f32.mrb[0].mxu0
    %v984 = vadd.f32 0.0, %v983
    %985 = vdwg.mxu0
    %v986 = vadd.f32 %v700, %v935
    %v987 = vadd.f32 %v701, %v937
    %v988 = vadd.f32 %v702, %v978
    %v989 = vadd.f32 %v703, %v980
    %v990 = vadd.f32 %v704, %v939
    %v991 = vadd.f32 %v705, %v941
    %v992 = vadd.f32 %v706, %v982
    %v993 = vadd.f32 %v707, %v984
    %v994 = vxor.u32 %v986, 2147483648
    %v995 = vxor.u32 %v990, 2147483648
    %v996 = vmul.f32 %v994, 1.442695
    %v997 = vpow.pop %v996
    %v998 = vmul.f32 %v995, 1.442695
    %v999 = vpow.pop %v998
    %v1000 = vadd.f32 %v997, 1.0
    %v1001 = vadd.f32 %v999, 1.0
    %v1002 = vrcp.pop %v1000
    %v1003 = vmul.f32 1.0, %v1002
    %v1004 = vrcp.pop %v1001
    %v1005 = vmul.f32 1.0, %v1004
    %v1006 = vxor.u32 %v987, 2147483648
    %v1007 = vxor.u32 %v991, 2147483648
    %v1008 = vmul.f32 %v1006, 1.442695
    %v1009 = vpow.pop %v1008
    %v1010 = vmul.f32 %v1007, 1.442695
    %v1011 = vpow.pop %v1010
    %v1012 = vadd.f32 %v1009, 1.0
    %v1013 = vadd.f32 %v1011, 1.0
    %v1014 = vrcp.pop %v1012
    %v1015 = vmul.f32 1.0, %v1014
    %v1016 = vrcp.pop %v1013
    %v1017 = vmul.f32 1.0, %v1016
    %v1018 = vtanh.pop %v988
    %v1019 = vtanh.pop %v992
    %v1020 = vxor.u32 %v989, 2147483648
    %v1021 = vxor.u32 %v993, 2147483648
    %v1022 = vmul.f32 %v1020, 1.442695
    %v1023 = vpow.pop %v1022
    %v1024 = vmul.f32 %v1021, 1.442695
    %v1025 = vpow.pop %v1024
    %v1026 = vadd.f32 %v1023, 1.0
    %v1027 = vadd.f32 %v1025, 1.0
    %v1028 = vrcp.pop %v1026
    %v1029 = vmul.f32 1.0, %v1028
    %v1030 = vrcp.pop %v1027
    %v1031 = vmul.f32 1.0, %v1030
    %v1032 = vmul.f32 %v1015, 0.0
    %v1033 = vmul.f32 %v1017, 0.0
    %v1034 = vmul.f32 %v1003, %v1018
    %v1035 = vmul.f32 %v1005, %v1019
    %v1036 = vadd.f32 %v1032, %v1034
    %v1037 = vadd.f32 %v1033, %v1035
    %v1038 = vtanh.pop %v1036
    %v1039 = vtanh.pop %v1037
    %v1040 = vmul.f32 %v1029, %v1038
    %v1041 = vmul.f32 %v1031, %v1039
    %v1042 = vpack.c.bf16 %v1041, %v1040
    %v1044 = vunpack.c.l.b16 %v1042
    %v1045 = vunpack.c.h.b16 %v1042
    %v1046 = vpack.c.b16 %v1044, %v1044
    %v1047 = vpack.c.b16 %v1045, %v1045
    %1050 = vst [vmem:[#allocation12] sm:$0xf] %v1046
    %1051 = vst [vmem:[#allocation12 + $0x4] sm:$0xf] %v1047
    %s1052 = scalar_lea.vmem [#allocation2], 64
    %v1053 = vld [vmem:[%s1052] sm:$0xff]
    %v1054 = vld [vmem:[%s1052 + $0x8] sm:$0xff]
    %v1055 = vld [vmem:[%s1052 + $0x10] sm:$0xff]
    %v1056 = vld [vmem:[%s1052 + $0x18] sm:$0xff]
    %v1057 = vld [vmem:[%s1052 + $0x20] sm:$0xff]
    %v1058 = vld [vmem:[%s1052 + $0x28] sm:$0xff]
    %v1059 = vld [vmem:[%s1052 + $0x30] sm:$0xff]
    %v1060 = vld [vmem:[%s1052 + $0x38] sm:$0xff]
    %v1061 = vld [vmem:[#allocation8] sm:$0xff]
    %v1062 = vld [vmem:[#allocation8 + $0x8] sm:$0xff]
    %v1063 = vld [vmem:[#allocation8 + $0x10] sm:$0xff]
    %v1064 = vld [vmem:[#allocation8 + $0x18] sm:$0xff]
    %v1065 = vld [vmem:[#allocation8 + $0x20] sm:$0xff]
    %v1066 = vld [vmem:[#allocation8 + $0x28] sm:$0xff]
    %v1067 = vld [vmem:[#allocation8 + $0x30] sm:$0xff]
    %v1068 = vld [vmem:[#allocation8 + $0x38] sm:$0xff]
    %v1069 = vld [vmem:[#allocation8 + $0x40] sm:$0xff]
    %v1070 = vld [vmem:[#allocation8 + $0x48] sm:$0xff]
    %v1071 = vld [vmem:[#allocation8 + $0x50] sm:$0xff]
    %v1072 = vld [vmem:[#allocation8 + $0x58] sm:$0xff]
    %v1073 = vld [vmem:[#allocation8 + $0x60] sm:$0xff]
    %v1074 = vld [vmem:[#allocation8 + $0x68] sm:$0xff]
    %v1075 = vld [vmem:[#allocation8 + $0x70] sm:$0xff]
    %v1076 = vld [vmem:[#allocation8 + $0x78] sm:$0xff]
    %v1077 = vld [vmem:[#allocation8 + $0x80] sm:$0xff]
    %v1078 = vld [vmem:[#allocation8 + $0x88] sm:$0xff]
    %v1079 = vld [vmem:[#allocation8 + $0x90] sm:$0xff]
    %v1080 = vld [vmem:[#allocation8 + $0x98] sm:$0xff]
    %v1081 = vld [vmem:[#allocation8 + $0xa0] sm:$0xff]
    %v1082 = vld [vmem:[#allocation8 + $0xa8] sm:$0xff]
    %v1083 = vld [vmem:[#allocation8 + $0xb0] sm:$0xff]
    %v1084 = vld [vmem:[#allocation8 + $0xb8] sm:$0xff]
    %v1085 = vld [vmem:[#allocation8 + $0xc0] sm:$0xff]
    %v1086 = vld [vmem:[#allocation8 + $0xc8] sm:$0xff]
    %v1087 = vld [vmem:[#allocation8 + $0xd0] sm:$0xff]
    %v1088 = vld [vmem:[#allocation8 + $0xd8] sm:$0xff]
    %v1089 = vld [vmem:[#allocation8 + $0xe0] sm:$0xff]
    %v1090 = vld [vmem:[#allocation8 + $0xe8] sm:$0xff]
    %v1091 = vld [vmem:[#allocation8 + $0xf0] sm:$0xff]
    %v1092 = vld [vmem:[#allocation8 + $0xf8] sm:$0xff]
    %v1125 = vunpack.c.l.b16 %v1061
    %v1126 = vunpack.c.h.b16 %v1061
    %v1127 = vunpack.c.l.b16 %v1062
    %v1128 = vunpack.c.h.b16 %v1062
    %v1129 = vunpack.c.l.b16 %v1063
    %v1130 = vunpack.c.h.b16 %v1063
    %v1131 = vunpack.c.l.b16 %v1064
    %v1132 = vunpack.c.h.b16 %v1064
    %v1133 = vunpack.c.l.b16 %v1065
    %v1134 = vunpack.c.h.b16 %v1065
    %v1135 = vunpack.c.l.b16 %v1066
    %v1136 = vunpack.c.h.b16 %v1066
    %v1137 = vunpack.c.l.b16 %v1067
    %v1138 = vunpack.c.h.b16 %v1067
    %v1139 = vunpack.c.l.b16 %v1068
    %v1140 = vunpack.c.h.b16 %v1068
    %v1141 = vunpack.c.l.b16 %v1069
    %v1142 = vunpack.c.h.b16 %v1069
    %v1143 = vunpack.c.l.b16 %v1070
    %v1144 = vunpack.c.h.b16 %v1070
    %v1145 = vunpack.c.l.b16 %v1071
    %v1146 = vunpack.c.h.b16 %v1071
    %v1147 = vunpack.c.l.b16 %v1072
    %v1148 = vunpack.c.h.b16 %v1072
    %v1149 = vunpack.c.l.b16 %v1073
    %v1150 = vunpack.c.h.b16 %v1073
    %v1151 = vunpack.c.l.b16 %v1074
    %v1152 = vunpack.c.h.b16 %v1074
    %v1153 = vunpack.c.l.b16 %v1075
    %v1154 = vunpack.c.h.b16 %v1075
    %v1155 = vunpack.c.l.b16 %v1076
    %v1156 = vunpack.c.h.b16 %v1076
    %v1157 = vunpack.c.l.b16 %v1077
    %v1158 = vunpack.c.h.b16 %v1077
    %v1159 = vunpack.c.l.b16 %v1078
    %v1160 = vunpack.c.h.b16 %v1078
    %v1161 = vunpack.c.l.b16 %v1079
    %v1162 = vunpack.c.h.b16 %v1079
    %v1163 = vunpack.c.l.b16 %v1080
    %v1164 = vunpack.c.h.b16 %v1080
    %v1165 = vunpack.c.l.b16 %v1081
    %v1166 = vunpack.c.h.b16 %v1081
    %v1167 = vunpack.c.l.b16 %v1082
    %v1168 = vunpack.c.h.b16 %v1082
    %v1169 = vunpack.c.l.b16 %v1083
    %v1170 = vunpack.c.h.b16 %v1083
    %v1171 = vunpack.c.l.b16 %v1084
    %v1172 = vunpack.c.h.b16 %v1084
    %v1173 = vunpack.c.l.b16 %v1085
    %v1174 = vunpack.c.h.b16 %v1085
    %v1175 = vunpack.c.l.b16 %v1086
    %v1176 = vunpack.c.h.b16 %v1086
    %v1177 = vunpack.c.l.b16 %v1087
    %v1178 = vunpack.c.h.b16 %v1087
    %v1179 = vunpack.c.l.b16 %v1088
    %v1180 = vunpack.c.h.b16 %v1088
    %v1181 = vunpack.c.l.b16 %v1089
    %v1182 = vunpack.c.h.b16 %v1089
    %v1183 = vunpack.c.l.b16 %v1090
    %v1184 = vunpack.c.h.b16 %v1090
    %v1185 = vunpack.c.l.b16 %v1091
    %v1186 = vunpack.c.h.b16 %v1091
    %v1187 = vunpack.c.l.b16 %v1092
    %v1188 = vunpack.c.h.b16 %v1092
    %v1189 = vpack.c.b16 %v1129, %v1125
    %v1190 = vpack.c.b16 %v1130, %v1126
    %v1191 = vpack.c.b16 %v1131, %v1127
    %v1192 = vpack.c.b16 %v1132, %v1128
    %v1193 = vpack.c.b16 %v1137, %v1133
    %v1194 = vpack.c.b16 %v1138, %v1134
    %v1195 = vpack.c.b16 %v1139, %v1135
    %v1196 = vpack.c.b16 %v1140, %v1136
    %v1197 = vpack.c.b16 %v1145, %v1141
    %v1198 = vpack.c.b16 %v1146, %v1142
    %v1199 = vpack.c.b16 %v1147, %v1143
    %v1200 = vpack.c.b16 %v1148, %v1144
    %v1201 = vpack.c.b16 %v1153, %v1149
    %v1202 = vpack.c.b16 %v1154, %v1150
    %v1203 = vpack.c.b16 %v1155, %v1151
    %v1204 = vpack.c.b16 %v1156, %v1152
    %v1205 = vpack.c.b16 %v1161, %v1157
    %v1206 = vpack.c.b16 %v1162, %v1158
    %v1207 = vpack.c.b16 %v1163, %v1159
    %v1208 = vpack.c.b16 %v1164, %v1160
    %v1209 = vpack.c.b16 %v1169, %v1165
    %v1210 = vpack.c.b16 %v1170, %v1166
    %v1211 = vpack.c.b16 %v1171, %v1167
    %v1212 = vpack.c.b16 %v1172, %v1168
    %v1213 = vpack.c.b16 %v1177, %v1173
    %v1214 = vpack.c.b16 %v1178, %v1174
    %v1215 = vpack.c.b16 %v1179, %v1175
    %v1216 = vpack.c.b16 %v1180, %v1176
    %v1217 = vpack.c.b16 %v1185, %v1181
    %v1218 = vpack.c.b16 %v1186, %v1182
    %v1219 = vpack.c.b16 %v1187, %v1183
    %v1220 = vpack.c.b16 %v1188, %v1184
    %1253 = vmatprep.subr.bf16.mxu0 %v1190
    %1254 = vmatpush1.bf16.msra.mxu0 %v1189
    %1255 = vmatprep.subr.bf16.mxu0 %v1194
    %1256 = vmatpush1.bf16.msra.mxu0 %v1193
    %1257 = vmatprep.subr.bf16.mxu0 %v1198
    %1258 = vmatpush1.bf16.msra.mxu0 %v1197
    %1259 = vmatprep.subr.bf16.mxu0 %v1202
    %1260 = vmatpush1.bf16.msra.mxu0 %v1201
    %1261 = vmatprep.subr.bf16.mxu0 %v1206
    %1262 = vmatpush1.bf16.msra.mxu0 %v1205
    %1263 = vmatprep.subr.bf16.mxu0 %v1210
    %1264 = vmatpush1.bf16.msra.mxu0 %v1209
    %1265 = vmatprep.subr.bf16.mxu0 %v1214
    %1266 = vmatpush1.bf16.msra.mxu0 %v1213
    %1267 = vmatprep.subr.bf16.mxu0 %v1218
    %1268 = vmatpush1.bf16.msra.mxu0 %v1217
    %1269 = vmatprep.subr.bf16.mxu0 0
    %1270 = vmatpush1.bf16.msra.mxu0 0
    %1271 = vmatprep.subr.bf16.mxu0 0
    %1272 = vmatpush1.bf16.msra.mxu0 0
    %1273 = vmatprep.subr.bf16.mxu0 0
    %1274 = vmatpush1.bf16.msra.mxu0 0
    %1275 = vmatprep.subr.bf16.mxu0 0
    %1276 = vmatpush1.bf16.msra.mxu0 0
    %1277 = vmatprep.subr.bf16.mxu0 0
    %1278 = vmatpush1.bf16.msra.mxu0 0
    %1279 = vmatprep.subr.bf16.mxu0 0
    %1280 = vmatpush1.bf16.msra.mxu0 0
    %1281 = vmatprep.subr.bf16.mxu0 0
    %1282 = vmatpush1.bf16.msra.mxu0 0
    %1283 = vmatprep.subr.bf16.mxu0 0
    %1284 = vmatpush1.bf16.msra.mxu0 0
    %1285 = vmatprep.mubr.bf16.mxu0 0
    %1286 = vmatmul.mubr.bf16.gmra.mrb[0].mxu0 %v1042
    %v1287 = vpop.f32.mrb[0].mxu0
    %v1288 = vadd.f32 0.0, %v1287
    %v1289 = vpop.f32.mrb[0].mxu0
    %v1290 = vadd.f32 0.0, %v1289
    %v1291 = vpop.f32.mrb[0].mxu0
    %v1292 = vadd.f32 0.0, %v1291
    %v1293 = vpop.f32.mrb[0].mxu0
    %v1294 = vadd.f32 0.0, %v1293
    %1295 = vdwg.mxu0
    %1296 = vmatprep.subr.bf16.mxu0 %v1192
    %1297 = vmatpush1.bf16.msra.mxu0 %v1191
    %1298 = vmatprep.subr.bf16.mxu0 %v1196
    %1299 = vmatpush1.bf16.msra.mxu0 %v1195
    %1300 = vmatprep.subr.bf16.mxu0 %v1200
    %1301 = vmatpush1.bf16.msra.mxu0 %v1199
    %1302 = vmatprep.subr.bf16.mxu0 %v1204
    %1303 = vmatpush1.bf16.msra.mxu0 %v1203
    %1304 = vmatprep.subr.bf16.mxu0 %v1208
    %1305 = vmatpush1.bf16.msra.mxu0 %v1207
    %1306 = vmatprep.subr.bf16.mxu0 %v1212
    %1307 = vmatpush1.bf16.msra.mxu0 %v1211
    %1308 = vmatprep.subr.bf16.mxu0 %v1216
    %1309 = vmatpush1.bf16.msra.mxu0 %v1215
    %1310 = vmatprep.subr.bf16.mxu0 %v1220
    %1311 = vmatpush1.bf16.msra.mxu0 %v1219
    %1312 = vmatprep.subr.bf16.mxu0 0
    %1313 = vmatpush1.bf16.msra.mxu0 0
    %1314 = vmatprep.subr.bf16.mxu0 0
    %1315 = vmatpush1.bf16.msra.mxu0 0
    %1316 = vmatprep.subr.bf16.mxu0 0
    %1317 = vmatpush1.bf16.msra.mxu0 0
    %1318 = vmatprep.subr.bf16.mxu0 0
    %1319 = vmatpush1.bf16.msra.mxu0 0
    %1320 = vmatprep.subr.bf16.mxu0 0
    %1321 = vmatpush1.bf16.msra.mxu0 0
    %1322 = vmatprep.subr.bf16.mxu0 0
    %1323 = vmatpush1.bf16.msra.mxu0 0
    %1324 = vmatprep.subr.bf16.mxu0 0
    %1325 = vmatpush1.bf16.msra.mxu0 0
    %1326 = vmatprep.subr.bf16.mxu0 0
    %1327 = vmatpush1.bf16.msra.mxu0 0
    %1328 = vmatprep.mubr.bf16.mxu0 0
    %1329 = vmatmul.mubr.bf16.gmra.mrb[0].mxu0 %v1042
    %v1330 = vpop.f32.mrb[0].mxu0
    %v1331 = vadd.f32 0.0, %v1330
    %v1332 = vpop.f32.mrb[0].mxu0
    %v1333 = vadd.f32 0.0, %v1332
    %v1334 = vpop.f32.mrb[0].mxu0
    %v1335 = vadd.f32 0.0, %v1334
    %v1336 = vpop.f32.mrb[0].mxu0
    %v1337 = vadd.f32 0.0, %v1336
    %1338 = vdwg.mxu0
    %v1339 = vadd.f32 %v1053, %v1288
    %v1340 = vadd.f32 %v1054, %v1290
    %v1341 = vadd.f32 %v1055, %v1331
    %v1342 = vadd.f32 %v1056, %v1333
    %v1343 = vadd.f32 %v1057, %v1292
    %v1344 = vadd.f32 %v1058, %v1294
    %v1345 = vadd.f32 %v1059, %v1335
    %v1346 = vadd.f32 %v1060, %v1337
    %v1347 = vxor.u32 %v1339, 2147483648
    %v1348 = vxor.u32 %v1343, 2147483648
    %v1349 = vmul.f32 %v1347, 1.442695
    %v1350 = vpow.pop %v1349
    %v1351 = vmul.f32 %v1348, 1.442695
    %v1352 = vpow.pop %v1351
    %v1353 = vadd.f32 %v1350, 1.0
    %v1354 = vadd.f32 %v1352, 1.0
    %v1355 = vrcp.pop %v1353
    %v1356 = vmul.f32 1.0, %v1355
    %v1357 = vrcp.pop %v1354
    %v1358 = vmul.f32 1.0, %v1357
    %v1359 = vxor.u32 %v1340, 2147483648
    %v1360 = vxor.u32 %v1344, 2147483648
    %v1361 = vmul.f32 %v1359, 1.442695
    %v1362 = vpow.pop %v1361
    %v1363 = vmul.f32 %v1360, 1.442695
    %v1364 = vpow.pop %v1363
    %v1365 = vadd.f32 %v1362, 1.0
    %v1366 = vadd.f32 %v1364, 1.0
    %v1367 = vrcp.pop %v1365
    %v1368 = vmul.f32 1.0, %v1367
    %v1369 = vrcp.pop %v1366
    %v1370 = vmul.f32 1.0, %v1369
    %v1371 = vtanh.pop %v1341
    %v1372 = vtanh.pop %v1345
    %v1373 = vxor.u32 %v1342, 2147483648
    %v1374 = vxor.u32 %v1346, 2147483648
    %v1375 = vmul.f32 %v1373, 1.442695
    %v1376 = vpow.pop %v1375
    %v1377 = vmul.f32 %v1374, 1.442695
    %v1378 = vpow.pop %v1377
    %v1379 = vadd.f32 %v1376, 1.0
    %v1380 = vadd.f32 %v1378, 1.0
    %v1381 = vrcp.pop %v1379
    %v1382 = vmul.f32 1.0, %v1381
    %v1383 = vrcp.pop %v1380
    %v1384 = vmul.f32 1.0, %v1383
    %v1385 = vmul.f32 %v1368, %v1036
    %v1386 = vmul.f32 %v1370, %v1037
    %v1387 = vmul.f32 %v1356, %v1371
    %v1388 = vmul.f32 %v1358, %v1372
    %v1389 = vadd.f32 %v1385, %v1387
    %v1390 = vadd.f32 %v1386, %v1388
    %v1391 = vtanh.pop %v1389
    %v1392 = vtanh.pop %v1390
    %v1393 = vmul.f32 %v1382, %v1391
    %v1394 = vmul.f32 %v1384, %v1392
    %v1395 = vpack.c.bf16 %v1394, %v1393
    %v1397 = vunpack.c.l.b16 %v1395
    %v1398 = vunpack.c.h.b16 %v1395
    %v1399 = vpack.c.b16 %v1397, %v1397
    %v1400 = vpack.c.b16 %v1398, %v1398
    %s1403 = scalar_lea.vmem [#allocation12], 8
    %1404 = vst [vmem:[%s1403] sm:$0xf] %v1399
    %1405 = vst [vmem:[%s1403 + $0x4] sm:$0xf] %v1400
    %s1406 = scalar_lea.vmem [#allocation2], 128
    %v1407 = vld [vmem:[%s1406] sm:$0xff]
    %v1408 = vld [vmem:[%s1406 + $0x8] sm:$0xff]
    %v1409 = vld [vmem:[%s1406 + $0x10] sm:$0xff]
    %v1410 = vld [vmem:[%s1406 + $0x18] sm:$0xff]
    %v1411 = vld [vmem:[%s1406 + $0x20] sm:$0xff]
    %v1412 = vld [vmem:[%s1406 + $0x28] sm:$0xff]
    %v1413 = vld [vmem:[%s1406 + $0x30] sm:$0xff]
    %v1414 = vld [vmem:[%s1406 + $0x38] sm:$0xff]
    %v1415 = vld [vmem:[#allocation8] sm:$0xff]
    %v1416 = vld [vmem:[#allocation8 + $0x8] sm:$0xff]
    %v1417 = vld [vmem:[#allocation8 + $0x10] sm:$0xff]
    %v1418 = vld [vmem:[#allocation8 + $0x18] sm:$0xff]
    %v1419 = vld [vmem:[#allocation8 + $0x20] sm:$0xff]
    %v1420 = vld [vmem:[#allocation8 + $0x28] sm:$0xff]
    %v1421 = vld [vmem:[#allocation8 + $0x30] sm:$0xff]
    %v1422 = vld [vmem:[#allocation8 + $0x38] sm:$0xff]
    %v1423 = vld [vmem:[#allocation8 + $0x40] sm:$0xff]
    %v1424 = vld [vmem:[#allocation8 + $0x48] sm:$0xff]
    %v1425 = vld [vmem:[#allocation8 + $0x50] sm:$0xff]
    %v1426 = vld [vmem:[#allocation8 + $0x58] sm:$0xff]
    %v1427 = vld [vmem:[#allocation8 + $0x60] sm:$0xff]
    %v1428 = vld [vmem:[#allocation8 + $0x68] sm:$0xff]
    %v1429 = vld [vmem:[#allocation8 + $0x70] sm:$0xff]
    %v1430 = vld [vmem:[#allocation8 + $0x78] sm:$0xff]
    %v1431 = vld [vmem:[#allocation8 + $0x80] sm:$0xff]
    %v1432 = vld [vmem:[#allocation8 + $0x88] sm:$0xff]
    %v1433 = vld [vmem:[#allocation8 + $0x90] sm:$0xff]
    %v1434 = vld [vmem:[#allocation8 + $0x98] sm:$0xff]
    %v1435 = vld [vmem:[#allocation8 + $0xa0] sm:$0xff]
    %v1436 = vld [vmem:[#allocation8 + $0xa8] sm:$0xff]
    %v1437 = vld [vmem:[#allocation8 + $0xb0] sm:$0xff]
    %v1438 = vld [vmem:[#allocation8 + $0xb8] sm:$0xff]
    %v1439 = vld [vmem:[#allocation8 + $0xc0] sm:$0xff]
    %v1440 = vld [vmem:[#allocation8 + $0xc8] sm:$0xff]
    %v1441 = vld [vmem:[#allocation8 + $0xd0] sm:$0xff]
    %v1442 = vld [vmem:[#allocation8 + $0xd8] sm:$0xff]
    %v1443 = vld [vmem:[#allocation8 + $0xe0] sm:$0xff]
    %v1444 = vld [vmem:[#allocation8 + $0xe8] sm:$0xff]
    %v1445 = vld [vmem:[#allocation8 + $0xf0] sm:$0xff]
    %v1446 = vld [vmem:[#allocation8 + $0xf8] sm:$0xff]
    %v1479 = vunpack.c.l.b16 %v1415
    %v1480 = vunpack.c.h.b16 %v1415
    %v1481 = vunpack.c.l.b16 %v1416
    %v1482 = vunpack.c.h.b16 %v1416
    %v1483 = vunpack.c.l.b16 %v1417
    %v1484 = vunpack.c.h.b16 %v1417
    %v1485 = vunpack.c.l.b16 %v1418
    %v1486 = vunpack.c.h.b16 %v1418
    %v1487 = vunpack.c.l.b16 %v1419
    %v1488 = vunpack.c.h.b16 %v1419
    %v1489 = vunpack.c.l.b16 %v1420
    %v1490 = vunpack.c.h.b16 %v1420
    %v1491 = vunpack.c.l.b16 %v1421
    %v1492 = vunpack.c.h.b16 %v1421
    %v1493 = vunpack.c.l.b16 %v1422
    %v1494 = vunpack.c.h.b16 %v1422
    %v1495 = vunpack.c.l.b16 %v1423
    %v1496 = vunpack.c.h.b16 %v1423
    %v1497 = vunpack.c.l.b16 %v1424
    %v1498 = vunpack.c.h.b16 %v1424
    %v1499 = vunpack.c.l.b16 %v1425
    %v1500 = vunpack.c.h.b16 %v1425
    %v1501 = vunpack.c.l.b16 %v1426
    %v1502 = vunpack.c.h.b16 %v1426
    %v1503 = vunpack.c.l.b16 %v1427
    %v1504 = vunpack.c.h.b16 %v1427
    %v1505 = vunpack.c.l.b16 %v1428
    %v1506 = vunpack.c.h.b16 %v1428
    %v1507 = vunpack.c.l.b16 %v1429
    %v1508 = vunpack.c.h.b16 %v1429
    %v1509 = vunpack.c.l.b16 %v1430
    %v1510 = vunpack.c.h.b16 %v1430
    %v1511 = vunpack.c.l.b16 %v1431
    %v1512 = vunpack.c.h.b16 %v1431
    %v1513 = vunpack.c.l.b16 %v1432
    %v1514 = vunpack.c.h.b16 %v1432
    %v1515 = vunpack.c.l.b16 %v1433
    %v1516 = vunpack.c.h.b16 %v1433
    %v1517 = vunpack.c.l.b16 %v1434
    %v1518 = vunpack.c.h.b16 %v1434
    %v1519 = vunpack.c.l.b16 %v1435
    %v1520 = vunpack.c.h.b16 %v1435
    %v1521 = vunpack.c.l.b16 %v1436
    %v1522 = vunpack.c.h.b16 %v1436
    %v1523 = vunpack.c.l.b16 %v1437
    %v1524 = vunpack.c.h.b16 %v1437
    %v1525 = vunpack.c.l.b16 %v1438
    %v1526 = vunpack.c.h.b16 %v1438
    %v1527 = vunpack.c.l.b16 %v1439
    %v1528 = vunpack.c.h.b16 %v1439
    %v1529 = vunpack.c.l.b16 %v1440
    %v1530 = vunpack.c.h.b16 %v1440
    %v1531 = vunpack.c.l.b16 %v1441
    %v1532 = vunpack.c.h.b16 %v1441
    %v1533 = vunpack.c.l.b16 %v1442
    %v1534 = vunpack.c.h.b16 %v1442
    %v1535 = vunpack.c.l.b16 %v1443
    %v1536 = vunpack.c.h.b16 %v1443
    %v1537 = vunpack.c.l.b16 %v1444
    %v1538 = vunpack.c.h.b16 %v1444
    %v1539 = vunpack.c.l.b16 %v1445
    %v1540 = vunpack.c.h.b16 %v1445
    %v1541 = vunpack.c.l.b16 %v1446
    %v1542 = vunpack.c.h.b16 %v1446
    %v1543 = vpack.c.b16 %v1483, %v1479
    %v1544 = vpack.c.b16 %v1484, %v1480
    %v1545 = vpack.c.b16 %v1485, %v1481
    %v1546 = vpack.c.b16 %v1486, %v1482
    %v1547 = vpack.c.b16 %v1491, %v1487
    %v1548 = vpack.c.b16 %v1492, %v1488
    %v1549 = vpack.c.b16 %v1493, %v1489
    %v1550 = vpack.c.b16 %v1494, %v1490
    %v1551 = vpack.c.b16 %v1499, %v1495
    %v1552 = vpack.c.b16 %v1500, %v1496
    %v1553 = vpack.c.b16 %v1501, %v1497
    %v1554 = vpack.c.b16 %v1502, %v1498
    %v1555 = vpack.c.b16 %v1507, %v1503
    %v1556 = vpack.c.b16 %v1508, %v1504
    %v1557 = vpack.c.b16 %v1509, %v1505
    %v1558 = vpack.c.b16 %v1510, %v1506
    %v1559 = vpack.c.b16 %v1515, %v1511
    %v1560 = vpack.c.b16 %v1516, %v1512
    %v1561 = vpack.c.b16 %v1517, %v1513
    %v1562 = vpack.c.b16 %v1518, %v1514
    %v1563 = vpack.c.b16 %v1523, %v1519
    %v1564 = vpack.c.b16 %v1524, %v1520
    %v1565 = vpack.c.b16 %v1525, %v1521
    %v1566 = vpack.c.b16 %v1526, %v1522
    %v1567 = vpack.c.b16 %v1531, %v1527
    %v1568 = vpack.c.b16 %v1532, %v1528
    %v1569 = vpack.c.b16 %v1533, %v1529
    %v1570 = vpack.c.b16 %v1534, %v1530
    %v1571 = vpack.c.b16 %v1539, %v1535
    %v1572 = vpack.c.b16 %v1540, %v1536
    %v1573 = vpack.c.b16 %v1541, %v1537
    %v1574 = vpack.c.b16 %v1542, %v1538
    %1607 = vmatprep.subr.bf16.mxu0 %v1544
    %1608 = vmatpush1.bf16.msra.mxu0 %v1543
    %1609 = vmatprep.subr.bf16.mxu0 %v1548
    %1610 = vmatpush1.bf16.msra.mxu0 %v1547
    %1611 = vmatprep.subr.bf16.mxu0 %v1552
    %1612 = vmatpush1.bf16.msra.mxu0 %v1551
    %1613 = vmatprep.subr.bf16.mxu0 %v1556
    %1614 = vmatpush1.bf16.msra.mxu0 %v1555
    %1615 = vmatprep.subr.bf16.mxu0 %v1560
    %1616 = vmatpush1.bf16.msra.mxu0 %v1559
    %1617 = vmatprep.subr.bf16.mxu0 %v1564
    %1618 = vmatpush1.bf16.msra.mxu0 %v1563
    %1619 = vmatprep.subr.bf16.mxu0 %v1568
    %1620 = vmatpush1.bf16.msra.mxu0 %v1567
    %1621 = vmatprep.subr.bf16.mxu0 %v1572
    %1622 = vmatpush1.bf16.msra.mxu0 %v1571
    %1623 = vmatprep.subr.bf16.mxu0 0
    %1624 = vmatpush1.bf16.msra.mxu0 0
    %1625 = vmatprep.subr.bf16.mxu0 0
    %1626 = vmatpush1.bf16.msra.mxu0 0
    %1627 = vmatprep.subr.bf16.mxu0 0
    %1628 = vmatpush1.bf16.msra.mxu0 0
    %1629 = vmatprep.subr.bf16.mxu0 0
    %1630 = vmatpush1.bf16.msra.mxu0 0
    %1631 = vmatprep.subr.bf16.mxu0 0
    %1632 = vmatpush1.bf16.msra.mxu0 0
    %1633 = vmatprep.subr.bf16.mxu0 0
    %1634 = vmatpush1.bf16.msra.mxu0 0
    %1635 = vmatprep.subr.bf16.mxu0 0
    %1636 = vmatpush1.bf16.msra.mxu0 0
    %1637 = vmatprep.subr.bf16.mxu0 0
    %1638 = vmatpush1.bf16.msra.mxu0 0
    %1639 = vmatprep.mubr.bf16.mxu0 0
    %1640 = vmatmul.mubr.bf16.gmra.mrb[0].mxu0 %v1395
    %v1641 = vpop.f32.mrb[0].mxu0
    %v1642 = vadd.f32 0.0, %v1641
    %v1643 = vpop.f32.mrb[0].mxu0
    %v1644 = vadd.f32 0.0, %v1643
    %v1645 = vpop.f32.mrb[0].mxu0
    %v1646 = vadd.f32 0.0, %v1645
    %v1647 = vpop.f32.mrb[0].mxu0
    %v1648 = vadd.f32 0.0, %v1647
    %1649 = vdwg.mxu0
    %1650 = vmatprep.subr.bf16.mxu0 %v1546
    %1651 = vmatpush1.bf16.msra.mxu0 %v1545
    %1652 = vmatprep.subr.bf16.mxu0 %v1550
    %1653 = vmatpush1.bf16.msra.mxu0 %v1549
    %1654 = vmatprep.subr.bf16.mxu0 %v1554
    %1655 = vmatpush1.bf16.msra.mxu0 %v1553
    %1656 = vmatprep.subr.bf16.mxu0 %v1558
    %1657 = vmatpush1.bf16.msra.mxu0 %v1557
    %1658 = vmatprep.subr.bf16.mxu0 %v1562
    %1659 = vmatpush1.bf16.msra.mxu0 %v1561
    %1660 = vmatprep.subr.bf16.mxu0 %v1566
    %1661 = vmatpush1.bf16.msra.mxu0 %v1565
    %1662 = vmatprep.subr.bf16.mxu0 %v1570
    %1663 = vmatpush1.bf16.msra.mxu0 %v1569
    %1664 = vmatprep.subr.bf16.mxu0 %v1574
    %1665 = vmatpush1.bf16.msra.mxu0 %v1573
    %1666 = vmatprep.subr.bf16.mxu0 0
    %1667 = vmatpush1.bf16.msra.mxu0 0
    %1668 = vmatprep.subr.bf16.mxu0 0
    %1669 = vmatpush1.bf16.msra.mxu0 0
    %1670 = vmatprep.subr.bf16.mxu0 0
    %1671 = vmatpush1.bf16.msra.mxu0 0
    %1672 = vmatprep.subr.bf16.mxu0 0
    %1673 = vmatpush1.bf16.msra.mxu0 0
    %1674 = vmatprep.subr.bf16.mxu0 0
    %1675 = vmatpush1.bf16.msra.mxu0 0
    %1676 = vmatprep.subr.bf16.mxu0 0
    %1677 = vmatpush1.bf16.msra.mxu0 0
    %1678 = vmatprep.subr.bf16.mxu0 0
    %1679 = vmatpush1.bf16.msra.mxu0 0
    %1680 = vmatprep.subr.bf16.mxu0 0
    %1681 = vmatpush1.bf16.msra.mxu0 0
    %1682 = vmatprep.mubr.bf16.mxu0 0
    %1683 = vmatmul.mubr.bf16.gmra.mrb[0].mxu0 %v1395
    %v1684 = vpop.f32.mrb[0].mxu0
    %v1685 = vadd.f32 0.0, %v1684
    %v1686 = vpop.f32.mrb[0].mxu0
    %v1687 = vadd.f32 0.0, %v1686
    %v1688 = vpop.f32.mrb[0].mxu0
    %v1689 = vadd.f32 0.0, %v1688
    %v1690 = vpop.f32.mrb[0].mxu0
    %v1691 = vadd.f32 0.0, %v1690
    %1692 = vdwg.mxu0
    %v1693 = vadd.f32 %v1407, %v1642
    %v1694 = vadd.f32 %v1408, %v1644
    %v1695 = vadd.f32 %v1409, %v1685
    %v1696 = vadd.f32 %v1410, %v1687
    %v1697 = vadd.f32 %v1411, %v1646
    %v1698 = vadd.f32 %v1412, %v1648
    %v1699 = vadd.f32 %v1413, %v1689
    %v1700 = vadd.f32 %v1414, %v1691
    %v1701 = vxor.u32 %v1693, 2147483648
    %v1702 = vxor.u32 %v1697, 2147483648
    %v1703 = vmul.f32 %v1701, 1.442695
    %v1704 = vpow.pop %v1703
    %v1705 = vmul.f32 %v1702, 1.442695
    %v1706 = vpow.pop %v1705
    %v1707 = vadd.f32 %v1704, 1.0
    %v1708 = vadd.f32 %v1706, 1.0
    %v1709 = vrcp.pop %v1707
    %v1710 = vmul.f32 1.0, %v1709
    %v1711 = vrcp.pop %v1708
    %v1712 = vmul.f32 1.0, %v1711
    %v1713 = vxor.u32 %v1694, 2147483648
    %v1714 = vxor.u32 %v1698, 2147483648
    %v1715 = vmul.f32 %v1713, 1.442695
    %v1716 = vpow.pop %v1715
    %v1717 = vmul.f32 %v1714, 1.442695
    %v1718 = vpow.pop %v1717
    %v1719 = vadd.f32 %v1716, 1.0
    %v1720 = vadd.f32 %v1718, 1.0
    %v1721 = vrcp.pop %v1719
    %v1722 = vmul.f32 1.0, %v1721
    %v1723 = vrcp.pop %v1720
    %v1724 = vmul.f32 1.0, %v1723
    %v1725 = vtanh.pop %v1695
    %v1726 = vtanh.pop %v1699
    %v1727 = vxor.u32 %v1696, 2147483648
    %v1728 = vxor.u32 %v1700, 2147483648
    %v1729 = vmul.f32 %v1727, 1.442695
    %v1730 = vpow.pop %v1729
    %v1731 = vmul.f32 %v1728, 1.442695
    %v1732 = vpow.pop %v1731
    %v1733 = vadd.f32 %v1730, 1.0
    %v1734 = vadd.f32 %v1732, 1.0
    %v1735 = vrcp.pop %v1733
    %v1736 = vmul.f32 1.0, %v1735
    %v1737 = vrcp.pop %v1734
    %v1738 = vmul.f32 1.0, %v1737
    %v1739 = vmul.f32 %v1722, %v1389
    %v1740 = vmul.f32 %v1724, %v1390
    %v1741 = vmul.f32 %v1710, %v1725
    %v1742 = vmul.f32 %v1712, %v1726
    %v1743 = vadd.f32 %v1739, %v1741
    %v1744 = vadd.f32 %v1740, %v1742
    %v1745 = vtanh.pop %v1743
    %v1746 = vtanh.pop %v1744
    %v1747 = vmul.f32 %v1736, %v1745
    %v1748 = vmul.f32 %v1738, %v1746
    %v1749 = vpack.c.bf16 %v1748, %v1747
    %v1751 = vunpack.c.l.b16 %v1749
    %v1752 = vunpack.c.h.b16 %v1749
    %v1753 = vpack.c.b16 %v1751, %v1751
    %v1754 = vpack.c.b16 %v1752, %v1752
    %s1757 = scalar_lea.vmem [#allocation12], 16
    %1758 = vst [vmem:[%s1757] sm:$0xf] %v1753
    %1759 = vst [vmem:[%s1757 + $0x4] sm:$0xf] %v1754
    %s1760 = scalar_lea.vmem [#allocation2], 192
    %v1761 = vld [vmem:[%s1760] sm:$0xff]
    %v1762 = vld [vmem:[%s1760 + $0x8] sm:$0xff]
    %v1763 = vld [vmem:[%s1760 + $0x10] sm:$0xff]
    %v1764 = vld [vmem:[%s1760 + $0x18] sm:$0xff]
    %v1765 = vld [vmem:[%s1760 + $0x20] sm:$0xff]
    %v1766 = vld [vmem:[%s1760 + $0x28] sm:$0xff]
    %v1767 = vld [vmem:[%s1760 + $0x30] sm:$0xff]
    %v1768 = vld [vmem:[%s1760 + $0x38] sm:$0xff]
    %v1769 = vld [vmem:[#allocation8] sm:$0xff]
    %v1770 = vld [vmem:[#allocation8 + $0x8] sm:$0xff]
    %v1771 = vld [vmem:[#allocation8 + $0x10] sm:$0xff]
    %v1772 = vld [vmem:[#allocation8 + $0x18] sm:$0xff]
    %v1773 = vld [vmem:[#allocation8 + $0x20] sm:$0xff]
    %v1774 = vld [vmem:[#allocation8 + $0x28] sm:$0xff]
    %v1775 = vld [vmem:[#allocation8 + $0x30] sm:$0xff]
    %v1776 = vld [vmem:[#allocation8 + $0x38] sm:$0xff]
    %v1777 = vld [vmem:[#allocation8 + $0x40] sm:$0xff]
    %v1778 = vld [vmem:[#allocation8 + $0x48] sm:$0xff]
    %v1779 = vld [vmem:[#allocation8 + $0x50] sm:$0xff]
    %v1780 = vld [vmem:[#allocation8 + $0x58] sm:$0xff]
    %v1781 = vld [vmem:[#allocation8 + $0x60] sm:$0xff]
    %v1782 = vld [vmem:[#allocation8 + $0x68] sm:$0xff]
    %v1783 = vld [vmem:[#allocation8 + $0x70] sm:$0xff]
    %v1784 = vld [vmem:[#allocation8 + $0x78] sm:$0xff]
    %v1785 = vld [vmem:[#allocation8 + $0x80] sm:$0xff]
    %v1786 = vld [vmem:[#allocation8 + $0x88] sm:$0xff]
    %v1787 = vld [vmem:[#allocation8 + $0x90] sm:$0xff]
    %v1788 = vld [vmem:[#allocation8 + $0x98] sm:$0xff]
    %v1789 = vld [vmem:[#allocation8 + $0xa0] sm:$0xff]
    %v1790 = vld [vmem:[#allocation8 + $0xa8] sm:$0xff]
    %v1791 = vld [vmem:[#allocation8 + $0xb0] sm:$0xff]
    %v1792 = vld [vmem:[#allocation8 + $0xb8] sm:$0xff]
    %v1793 = vld [vmem:[#allocation8 + $0xc0] sm:$0xff]
    %v1794 = vld [vmem:[#allocation8 + $0xc8] sm:$0xff]
    %v1795 = vld [vmem:[#allocation8 + $0xd0] sm:$0xff]
    %v1796 = vld [vmem:[#allocation8 + $0xd8] sm:$0xff]
    %v1797 = vld [vmem:[#allocation8 + $0xe0] sm:$0xff]
    %v1798 = vld [vmem:[#allocation8 + $0xe8] sm:$0xff]
    %v1799 = vld [vmem:[#allocation8 + $0xf0] sm:$0xff]
    %v1800 = vld [vmem:[#allocation8 + $0xf8] sm:$0xff]
    %v1833 = vunpack.c.l.b16 %v1769
    %v1834 = vunpack.c.h.b16 %v1769
    %v1835 = vunpack.c.l.b16 %v1770
    %v1836 = vunpack.c.h.b16 %v1770
    %v1837 = vunpack.c.l.b16 %v1771
    %v1838 = vunpack.c.h.b16 %v1771
    %v1839 = vunpack.c.l.b16 %v1772
    %v1840 = vunpack.c.h.b16 %v1772
    %v1841 = vunpack.c.l.b16 %v1773
    %v1842 = vunpack.c.h.b16 %v1773
    %v1843 = vunpack.c.l.b16 %v1774
    %v1844 = vunpack.c.h.b16 %v1774
    %v1845 = vunpack.c.l.b16 %v1775
    %v1846 = vunpack.c.h.b16 %v1775
    %v1847 = vunpack.c.l.b16 %v1776
    %v1848 = vunpack.c.h.b16 %v1776
    %v1849 = vunpack.c.l.b16 %v1777
    %v1850 = vunpack.c.h.b16 %v1777
    %v1851 = vunpack.c.l.b16 %v1778
    %v1852 = vunpack.c.h.b16 %v1778
    %v1853 = vunpack.c.l.b16 %v1779
    %v1854 = vunpack.c.h.b16 %v1779
    %v1855 = vunpack.c.l.b16 %v1780
    %v1856 = vunpack.c.h.b16 %v1780
    %v1857 = vunpack.c.l.b16 %v1781
    %v1858 = vunpack.c.h.b16 %v1781
    %v1859 = vunpack.c.l.b16 %v1782
    %v1860 = vunpack.c.h.b16 %v1782
    %v1861 = vunpack.c.l.b16 %v1783
    %v1862 = vunpack.c.h.b16 %v1783
    %v1863 = vunpack.c.l.b16 %v1784
    %v1864 = vunpack.c.h.b16 %v1784
    %v1865 = vunpack.c.l.b16 %v1785
    %v1866 = vunpack.c.h.b16 %v1785
    %v1867 = vunpack.c.l.b16 %v1786
    %v1868 = vunpack.c.h.b16 %v1786
    %v1869 = vunpack.c.l.b16 %v1787
    %v1870 = vunpack.c.h.b16 %v1787
    %v1871 = vunpack.c.l.b16 %v1788
    %v1872 = vunpack.c.h.b16 %v1788
    %v1873 = vunpack.c.l.b16 %v1789
    %v1874 = vunpack.c.h.b16 %v1789
    %v1875 = vunpack.c.l.b16 %v1790
    %v1876 = vunpack.c.h.b16 %v1790
    %v1877 = vunpack.c.l.b16 %v1791
    %v1878 = vunpack.c.h.b16 %v1791
    %v1879 = vunpack.c.l.b16 %v1792
    %v1880 = vunpack.c.h.b16 %v1792
    %v1881 = vunpack.c.l.b16 %v1793
    %v1882 = vunpack.c.h.b16 %v1793
    %v1883 = vunpack.c.l.b16 %v1794
    %v1884 = vunpack.c.h.b16 %v1794
    %v1885 = vunpack.c.l.b16 %v1795
    %v1886 = vunpack.c.h.b16 %v1795
    %v1887 = vunpack.c.l.b16 %v1796
    %v1888 = vunpack.c.h.b16 %v1796
    %v1889 = vunpack.c.l.b16 %v1797
    %v1890 = vunpack.c.h.b16 %v1797
    %v1891 = vunpack.c.l.b16 %v1798
    %v1892 = vunpack.c.h.b16 %v1798
    %v1893 = vunpack.c.l.b16 %v1799
    %v1894 = vunpack.c.h.b16 %v1799
    %v1895 = vunpack.c.l.b16 %v1800
    %v1896 = vunpack.c.h.b16 %v1800
    %v1897 = vpack.c.b16 %v1837, %v1833
    %v1898 = vpack.c.b16 %v1838, %v1834
    %v1899 = vpack.c.b16 %v1839, %v1835
    %v1900 = vpack.c.b16 %v1840, %v1836
    %v1901 = vpack.c.b16 %v1845, %v1841
    %v1902 = vpack.c.b16 %v1846, %v1842
    %v1903 = vpack.c.b16 %v1847, %v1843
    %v1904 = vpack.c.b16 %v1848, %v1844
    %v1905 = vpack.c.b16 %v1853, %v1849
    %v1906 = vpack.c.b16 %v1854, %v1850
    %v1907 = vpack.c.b16 %v1855, %v1851
    %v1908 = vpack.c.b16 %v1856, %v1852
    %v1909 = vpack.c.b16 %v1861, %v1857
    %v1910 = vpack.c.b16 %v1862, %v1858
    %v1911 = vpack.c.b16 %v1863, %v1859
    %v1912 = vpack.c.b16 %v1864, %v1860
    %v1913 = vpack.c.b16 %v1869, %v1865
    %v1914 = vpack.c.b16 %v1870, %v1866
    %v1915 = vpack.c.b16 %v1871, %v1867
    %v1916 = vpack.c.b16 %v1872, %v1868
    %v1917 = vpack.c.b16 %v1877, %v1873
    %v1918 = vpack.c.b16 %v1878, %v1874
    %v1919 = vpack.c.b16 %v1879, %v1875
    %v1920 = vpack.c.b16 %v1880, %v1876
    %v1921 = vpack.c.b16 %v1885, %v1881
    %v1922 = vpack.c.b16 %v1886, %v1882
    %v1923 = vpack.c.b16 %v1887, %v1883
    %v1924 = vpack.c.b16 %v1888, %v1884
    %v1925 = vpack.c.b16 %v1893, %v1889
    %v1926 = vpack.c.b16 %v1894, %v1890
    %v1927 = vpack.c.b16 %v1895, %v1891
    %v1928 = vpack.c.b16 %v1896, %v1892
    %1961 = vmatprep.subr.bf16.mxu0 %v1898
    %1962 = vmatpush1.bf16.msra.mxu0 %v1897
    %1963 = vmatprep.subr.bf16.mxu0 %v1902
    %1964 = vmatpush1.bf16.msra.mxu0 %v1901
    %1965 = vmatprep.subr.bf16.mxu0 %v1906
    %1966 = vmatpush1.bf16.msra.mxu0 %v1905
    %1967 = vmatprep.subr.bf16.mxu0 %v1910
    %1968 = vmatpush1.bf16.msra.mxu0 %v1909
    %1969 = vmatprep.subr.bf16.mxu0 %v1914
    %1970 = vmatpush1.bf16.msra.mxu0 %v1913
    %1971 = vmatprep.subr.bf16.mxu0 %v1918
    %1972 = vmatpush1.bf16.msra.mxu0 %v1917
    %1973 = vmatprep.subr.bf16.mxu0 %v1922
    %1974 = vmatpush1.bf16.msra.mxu0 %v1921
    %1975 = vmatprep.subr.bf16.mxu0 %v1926
    %1976 = vmatpush1.bf16.msra.mxu0 %v1925
    %1977 = vmatprep.subr.bf16.mxu0 0
    %1978 = vmatpush1.bf16.msra.mxu0 0
    %1979 = vmatprep.subr.bf16.mxu0 0
    %1980 = vmatpush1.bf16.msra.mxu0 0
    %1981 = vmatprep.subr.bf16.mxu0 0
    %1982 = vmatpush1.bf16.msra.mxu0 0
    %1983 = vmatprep.subr.bf16.mxu0 0
    %1984 = vmatpush1.bf16.msra.mxu0 0
    %1985 = vmatprep.subr.bf16.mxu0 0
    %1986 = vmatpush1.bf16.msra.mxu0 0
    %1987 = vmatprep.subr.bf16.mxu0 0
    %1988 = vmatpush1.bf16.msra.mxu0 0
    %1989 = vmatprep.subr.bf16.mxu0 0
    %1990 = vmatpush1.bf16.msra.mxu0 0
    %1991 = vmatprep.subr.bf16.mxu0 0
    %1992 = vmatpush1.bf16.msra.mxu0 0
    %1993 = vmatprep.mubr.bf16.mxu0 0
    %1994 = vmatmul.mubr.bf16.gmra.mrb[0].mxu0 %v1749
    %v1995 = vpop.f32.mrb[0].mxu0
    %v1996 = vadd.f32 0.0, %v1995
    %v1997 = vpop.f32.mrb[0].mxu0
    %v1998 = vadd.f32 0.0, %v1997
    %v1999 = vpop.f32.mrb[0].mxu0
    %v2000 = vadd.f32 0.0, %v1999
    %v2001 = vpop.f32.mrb[0].mxu0
    %v2002 = vadd.f32 0.0, %v2001
    %2003 = vdwg.mxu0
    %2004 = vmatprep.subr.bf16.mxu0 %v1900
    %2005 = vmatpush1.bf16.msra.mxu0 %v1899
    %2006 = vmatprep.subr.bf16.mxu0 %v1904
    %2007 = vmatpush1.bf16.msra.mxu0 %v1903
    %2008 = vmatprep.subr.bf16.mxu0 %v1908
    %2009 = vmatpush1.bf16.msra.mxu0 %v1907
    %2010 = vmatprep.subr.bf16.mxu0 %v1912
    %2011 = vmatpush1.bf16.msra.mxu0 %v1911
    %2012 = vmatprep.subr.bf16.mxu0 %v1916
    %2013 = vmatpush1.bf16.msra.mxu0 %v1915
    %2014 = vmatprep.subr.bf16.mxu0 %v1920
    %2015 = vmatpush1.bf16.msra.mxu0 %v1919
    %2016 = vmatprep.subr.bf16.mxu0 %v1924
    %2017 = vmatpush1.bf16.msra.mxu0 %v1923
    %2018 = vmatprep.subr.bf16.mxu0 %v1928
    %2019 = vmatpush1.bf16.msra.mxu0 %v1927
    %2020 = vmatprep.subr.bf16.mxu0 0
    %2021 = vmatpush1.bf16.msra.mxu0 0
    %2022 = vmatprep.subr.bf16.mxu0 0
    %2023 = vmatpush1.bf16.msra.mxu0 0
    %2024 = vmatprep.subr.bf16.mxu0 0
    %2025 = vmatpush1.bf16.msra.mxu0 0
    %2026 = vmatprep.subr.bf16.mxu0 0
    %2027 = vmatpush1.bf16.msra.mxu0 0
    %2028 = vmatprep.subr.bf16.mxu0 0
    %2029 = vmatpush1.bf16.msra.mxu0 0
    %2030 = vmatprep.subr.bf16.mxu0 0
    %2031 = vmatpush1.bf16.msra.mxu0 0
    %2032 = vmatprep.subr.bf16.mxu0 0
    %2033 = vmatpush1.bf16.msra.mxu0 0
    %2034 = vmatprep.subr.bf16.mxu0 0
    %2035 = vmatpush1.bf16.msra.mxu0 0
    %2036 = vmatprep.mubr.bf16.mxu0 0
    %2037 = vmatmul.mubr.bf16.gmra.mrb[0].mxu0 %v1749
    %v2038 = vpop.f32.mrb[0].mxu0
    %v2039 = vadd.f32 0.0, %v2038
    %v2040 = vpop.f32.mrb[0].mxu0
    %v2041 = vadd.f32 0.0, %v2040
    %v2042 = vpop.f32.mrb[0].mxu0
    %v2043 = vadd.f32 0.0, %v2042
    %v2044 = vpop.f32.mrb[0].mxu0
    %v2045 = vadd.f32 0.0, %v2044
    %2046 = vdwg.mxu0
    %v2047 = vadd.f32 %v1761, %v1996
    %v2048 = vadd.f32 %v1762, %v1998
    %v2049 = vadd.f32 %v1763, %v2039
    %v2050 = vadd.f32 %v1764, %v2041
    %v2051 = vadd.f32 %v1765, %v2000
    %v2052 = vadd.f32 %v1766, %v2002
    %v2053 = vadd.f32 %v1767, %v2043
    %v2054 = vadd.f32 %v1768, %v2045
    %v2055 = vxor.u32 %v2047, 2147483648
    %v2056 = vxor.u32 %v2051, 2147483648
    %v2057 = vmul.f32 %v2055, 1.442695
    %v2058 = vpow.pop %v2057
    %v2059 = vmul.f32 %v2056, 1.442695
    %v2060 = vpow.pop %v2059
    %v2061 = vadd.f32 %v2058, 1.0
    %v2062 = vadd.f32 %v2060, 1.0
    %v2063 = vrcp.pop %v2061
    %v2064 = vmul.f32 1.0, %v2063
    %v2065 = vrcp.pop %v2062
    %v2066 = vmul.f32 1.0, %v2065
    %v2067 = vxor.u32 %v2048, 2147483648
    %v2068 = vxor.u32 %v2052, 2147483648
    %v2069 = vmul.f32 %v2067, 1.442695
    %v2070 = vpow.pop %v2069
    %v2071 = vmul.f32 %v2068, 1.442695
    %v2072 = vpow.pop %v2071
    %v2073 = vadd.f32 %v2070, 1.0
    %v2074 = vadd.f32 %v2072, 1.0
    %v2075 = vrcp.pop %v2073
    %v2076 = vmul.f32 1.0, %v2075
    %v2077 = vrcp.pop %v2074
    %v2078 = vmul.f32 1.0, %v2077
    %v2079 = vtanh.pop %v2049
    %v2080 = vtanh.pop %v2053
    %v2081 = vxor.u32 %v2050, 2147483648
    %v2082 = vxor.u32 %v2054, 2147483648
    %v2083 = vmul.f32 %v2081, 1.442695
    %v2084 = vpow.pop %v2083
    %v2085 = vmul.f32 %v2082, 1.442695
    %v2086 = vpow.pop %v2085
    %v2087 = vadd.f32 %v2084, 1.0
    %v2088 = vadd.f32 %v2086, 1.0
    %v2089 = vrcp.pop %v2087
    %v2090 = vmul.f32 1.0, %v2089
    %v2091 = vrcp.pop %v2088
    %v2092 = vmul.f32 1.0, %v2091
    %v2093 = vmul.f32 %v2076, %v1743
    %v2094 = vmul.f32 %v2078, %v1744
    %v2095 = vmul.f32 %v2064, %v2079
    %v2096 = vmul.f32 %v2066, %v2080
    %v2097 = vadd.f32 %v2093, %v2095
    %v2098 = vadd.f32 %v2094, %v2096
    %v2099 = vtanh.pop %v2097
    %v2100 = vtanh.pop %v2098
    %v2101 = vmul.f32 %v2090, %v2099
    %v2102 = vmul.f32 %v2092, %v2100
    %v2103 = vpack.c.bf16 %v2102, %v2101
    %v2105 = vunpack.c.l.b16 %v2103
    %v2106 = vunpack.c.h.b16 %v2103
    %v2107 = vpack.c.b16 %v2105, %v2105
    %v2108 = vpack.c.b16 %v2106, %v2106
    %s2111 = scalar_lea.vmem [#allocation12], 24
    %2112 = vst [vmem:[%s2111] sm:$0xf] %v2107
    %2113 = vst [vmem:[%s2111 + $0x4] sm:$0xf] %v2108
    %s2114 = scalar_lea.vmem [#allocation2], 256
    %v2115 = vld [vmem:[%s2114] sm:$0xff]
    %v2116 = vld [vmem:[%s2114 + $0x8] sm:$0xff]
    %v2117 = vld [vmem:[%s2114 + $0x10] sm:$0xff]
    %v2118 = vld [vmem:[%s2114 + $0x18] sm:$0xff]
    %v2119 = vld [vmem:[%s2114 + $0x20] sm:$0xff]
    %v2120 = vld [vmem:[%s2114 + $0x28] sm:$0xff]
    %v2121 = vld [vmem:[%s2114 + $0x30] sm:$0xff]
    %v2122 = vld [vmem:[%s2114 + $0x38] sm:$0xff]
    %v2123 = vld [vmem:[#allocation8] sm:$0xff]
    %v2124 = vld [vmem:[#allocation8 + $0x8] sm:$0xff]
    %v2125 = vld [vmem:[#allocation8 + $0x10] sm:$0xff]
    %v2126 = vld [vmem:[#allocation8 + $0x18] sm:$0xff]
    %v2127 = vld [vmem:[#allocation8 + $0x20] sm:$0xff]
    %v2128 = vld [vmem:[#allocation8 + $0x28] sm:$0xff]
    %v2129 = vld [vmem:[#allocation8 + $0x30] sm:$0xff]
    %v2130 = vld [vmem:[#allocation8 + $0x38] sm:$0xff]
    %v2131 = vld [vmem:[#allocation8 + $0x40] sm:$0xff]
    %v2132 = vld [vmem:[#allocation8 + $0x48] sm:$0xff]
    %v2133 = vld [vmem:[#allocation8 + $0x50] sm:$0xff]
    %v2134 = vld [vmem:[#allocation8 + $0x58] sm:$0xff]
    %v2135 = vld [vmem:[#allocation8 + $0x60] sm:$0xff]
    %v2136 = vld [vmem:[#allocation8 + $0x68] sm:$0xff]
    %v2137 = vld [vmem:[#allocation8 + $0x70] sm:$0xff]
    %v2138 = vld [vmem:[#allocation8 + $0x78] sm:$0xff]
    %v2139 = vld [vmem:[#allocation8 + $0x80] sm:$0xff]
    %v2140 = vld [vmem:[#allocation8 + $0x88] sm:$0xff]
    %v2141 = vld [vmem:[#allocation8 + $0x90] sm:$0xff]
    %v2142 = vld [vmem:[#allocation8 + $0x98] sm:$0xff]
    %v2143 = vld [vmem:[#allocation8 + $0xa0] sm:$0xff]
    %v2144 = vld [vmem:[#allocation8 + $0xa8] sm:$0xff]
    %v2145 = vld [vmem:[#allocation8 + $0xb0] sm:$0xff]
    %v2146 = vld [vmem:[#allocation8 + $0xb8] sm:$0xff]
    %v2147 = vld [vmem:[#allocation8 + $0xc0] sm:$0xff]
    %v2148 = vld [vmem:[#allocation8 + $0xc8] sm:$0xff]
    %v2149 = vld [vmem:[#allocation8 + $0xd0] sm:$0xff]
    %v2150 = vld [vmem:[#allocation8 + $0xd8] sm:$0xff]
    %v2151 = vld [vmem:[#allocation8 + $0xe0] sm:$0xff]
    %v2152 = vld [vmem:[#allocation8 + $0xe8] sm:$0xff]
    %v2153 = vld [vmem:[#allocation8 + $0xf0] sm:$0xff]
    %v2154 = vld [vmem:[#allocation8 + $0xf8] sm:$0xff]
    %v2187 = vunpack.c.l.b16 %v2123
    %v2188 = vunpack.c.h.b16 %v2123
    %v2189 = vunpack.c.l.b16 %v2124
    %v2190 = vunpack.c.h.b16 %v2124
    %v2191 = vunpack.c.l.b16 %v2125
    %v2192 = vunpack.c.h.b16 %v2125
    %v2193 = vunpack.c.l.b16 %v2126
    %v2194 = vunpack.c.h.b16 %v2126
    %v2195 = vunpack.c.l.b16 %v2127
    %v2196 = vunpack.c.h.b16 %v2127
    %v2197 = vunpack.c.l.b16 %v2128
    %v2198 = vunpack.c.h.b16 %v2128
    %v2199 = vunpack.c.l.b16 %v2129
    %v2200 = vunpack.c.h.b16 %v2129
    %v2201 = vunpack.c.l.b16 %v2130
    %v2202 = vunpack.c.h.b16 %v2130
    %v2203 = vunpack.c.l.b16 %v2131
    %v2204 = vunpack.c.h.b16 %v2131
    %v2205 = vunpack.c.l.b16 %v2132
    %v2206 = vunpack.c.h.b16 %v2132
    %v2207 = vunpack.c.l.b16 %v2133
    %v2208 = vunpack.c.h.b16 %v2133
    %v2209 = vunpack.c.l.b16 %v2134
    %v2210 = vunpack.c.h.b16 %v2134
    %v2211 = vunpack.c.l.b16 %v2135
    %v2212 = vunpack.c.h.b16 %v2135
    %v2213 = vunpack.c.l.b16 %v2136
    %v2214 = vunpack.c.h.b16 %v2136
    %v2215 = vunpack.c.l.b16 %v2137
    %v2216 = vunpack.c.h.b16 %v2137
    %v2217 = vunpack.c.l.b16 %v2138
    %v2218 = vunpack.c.h.b16 %v2138
    %v2219 = vunpack.c.l.b16 %v2139
    %v2220 = vunpack.c.h.b16 %v2139
    %v2221 = vunpack.c.l.b16 %v2140
    %v2222 = vunpack.c.h.b16 %v2140
    %v2223 = vunpack.c.l.b16 %v2141
    %v2224 = vunpack.c.h.b16 %v2141
    %v2225 = vunpack.c.l.b16 %v2142
    %v2226 = vunpack.c.h.b16 %v2142
    %v2227 = vunpack.c.l.b16 %v2143
    %v2228 = vunpack.c.h.b16 %v2143
    %v2229 = vunpack.c.l.b16 %v2144
    %v2230 = vunpack.c.h.b16 %v2144
    %v2231 = vunpack.c.l.b16 %v2145
    %v2232 = vunpack.c.h.b16 %v2145
    %v2233 = vunpack.c.l.b16 %v2146
    %v2234 = vunpack.c.h.b16 %v2146
    %v2235 = vunpack.c.l.b16 %v2147
    %v2236 = vunpack.c.h.b16 %v2147
    %v2237 = vunpack.c.l.b16 %v2148
    %v2238 = vunpack.c.h.b16 %v2148
    %v2239 = vunpack.c.l.b16 %v2149
    %v2240 = vunpack.c.h.b16 %v2149
    %v2241 = vunpack.c.l.b16 %v2150
    %v2242 = vunpack.c.h.b16 %v2150
    %v2243 = vunpack.c.l.b16 %v2151
    %v2244 = vunpack.c.h.b16 %v2151
    %v2245 = vunpack.c.l.b16 %v2152
    %v2246 = vunpack.c.h.b16 %v2152
    %v2247 = vunpack.c.l.b16 %v2153
    %v2248 = vunpack.c.h.b16 %v2153
    %v2249 = vunpack.c.l.b16 %v2154
    %v2250 = vunpack.c.h.b16 %v2154
    %v2251 = vpack.c.b16 %v2191, %v2187
    %v2252 = vpack.c.b16 %v2192, %v2188
    %v2253 = vpack.c.b16 %v2193, %v2189
    %v2254 = vpack.c.b16 %v2194, %v2190
    %v2255 = vpack.c.b16 %v2199, %v2195
    %v2256 = vpack.c.b16 %v2200, %v2196
    %v2257 = vpack.c.b16 %v2201, %v2197
    %v2258 = vpack.c.b16 %v2202, %v2198
    %v2259 = vpack.c.b16 %v2207, %v2203
    %v2260 = vpack.c.b16 %v2208, %v2204
    %v2261 = vpack.c.b16 %v2209, %v2205
    %v2262 = vpack.c.b16 %v2210, %v2206
    %v2263 = vpack.c.b16 %v2215, %v2211
    %v2264 = vpack.c.b16 %v2216, %v2212
    %v2265 = vpack.c.b16 %v2217, %v2213
    %v2266 = vpack.c.b16 %v2218, %v2214
    %v2267 = vpack.c.b16 %v2223, %v2219
    %v2268 = vpack.c.b16 %v2224, %v2220
    %v2269 = vpack.c.b16 %v2225, %v2221
    %v2270 = vpack.c.b16 %v2226, %v2222
    %v2271 = vpack.c.b16 %v2231, %v2227
    %v2272 = vpack.c.b16 %v2232, %v2228
    %v2273 = vpack.c.b16 %v2233, %v2229
    %v2274 = vpack.c.b16 %v2234, %v2230
    %v2275 = vpack.c.b16 %v2239, %v2235
    %v2276 = vpack.c.b16 %v2240, %v2236
    %v2277 = vpack.c.b16 %v2241, %v2237
    %v2278 = vpack.c.b16 %v2242, %v2238
    %v2279 = vpack.c.b16 %v2247, %v2243
    %v2280 = vpack.c.b16 %v2248, %v2244
    %v2281 = vpack.c.b16 %v2249, %v2245
    %v2282 = vpack.c.b16 %v2250, %v2246
    %2315 = vmatprep.subr.bf16.mxu0 %v2252
    %2316 = vmatpush1.bf16.msra.mxu0 %v2251
    %2317 = vmatprep.subr.bf16.mxu0 %v2256
    %2318 = vmatpush1.bf16.msra.mxu0 %v2255
    %2319 = vmatprep.subr.bf16.mxu0 %v2260
    %2320 = vmatpush1.bf16.msra.mxu0 %v2259
    %2321 = vmatprep.subr.bf16.mxu0 %v2264
    %2322 = vmatpush1.bf16.msra.mxu0 %v2263
    %2323 = vmatprep.subr.bf16.mxu0 %v2268
    %2324 = vmatpush1.bf16.msra.mxu0 %v2267
    %2325 = vmatprep.subr.bf16.mxu0 %v2272
    %2326 = vmatpush1.bf16.msra.mxu0 %v2271
    %2327 = vmatprep.subr.bf16.mxu0 %v2276
    %2328 = vmatpush1.bf16.msra.mxu0 %v2275
    %2329 = vmatprep.subr.bf16.mxu0 %v2280
    %2330 = vmatpush1.bf16.msra.mxu0 %v2279
    %2331 = vmatprep.subr.bf16.mxu0 0
    %2332 = vmatpush1.bf16.msra.mxu0 0
    %2333 = vmatprep.subr.bf16.mxu0 0
    %2334 = vmatpush1.bf16.msra.mxu0 0
    %2335 = vmatprep.subr.bf16.mxu0 0
    %2336 = vmatpush1.bf16.msra.mxu0 0
    %2337 = vmatprep.subr.bf16.mxu0 0
    %2338 = vmatpush1.bf16.msra.mxu0 0
    %2339 = vmatprep.subr.bf16.mxu0 0
    %2340 = vmatpush1.bf16.msra.mxu0 0
    %2341 = vmatprep.subr.bf16.mxu0 0
    %2342 = vmatpush1.bf16.msra.mxu0 0
    %2343 = vmatprep.subr.bf16.mxu0 0
    %2344 = vmatpush1.bf16.msra.mxu0 0
    %2345 = vmatprep.subr.bf16.mxu0 0
    %2346 = vmatpush1.bf16.msra.mxu0 0
    %2347 = vmatprep.mubr.bf16.mxu0 0
    %2348 = vmatmul.mubr.bf16.gmra.mrb[0].mxu0 %v2103
    %v2349 = vpop.f32.mrb[0].mxu0
    %v2350 = vadd.f32 0.0, %v2349
    %v2351 = vpop.f32.mrb[0].mxu0
    %v2352 = vadd.f32 0.0, %v2351
    %v2353 = vpop.f32.mrb[0].mxu0
    %v2354 = vadd.f32 0.0, %v2353
    %v2355 = vpop.f32.mrb[0].mxu0
    %v2356 = vadd.f32 0.0, %v2355
    %2357 = vdwg.mxu0
    %2358 = vmatprep.subr.bf16.mxu0 %v2254
    %2359 = vmatpush1.bf16.msra.mxu0 %v2253
    %2360 = vmatprep.subr.bf16.mxu0 %v2258
    %2361 = vmatpush1.bf16.msra.mxu0 %v2257
    %2362 = vmatprep.subr.bf16.mxu0 %v2262
    %2363 = vmatpush1.bf16.msra.mxu0 %v2261
    %2364 = vmatprep.subr.bf16.mxu0 %v2266
    %2365 = vmatpush1.bf16.msra.mxu0 %v2265
    %2366 = vmatprep.subr.bf16.mxu0 %v2270
    %2367 = vmatpush1.bf16.msra.mxu0 %v2269
    %2368 = vmatprep.subr.bf16.mxu0 %v2274
    %2369 = vmatpush1.bf16.msra.mxu0 %v2273
    %2370 = vmatprep.subr.bf16.mxu0 %v2278
    %2371 = vmatpush1.bf16.msra.mxu0 %v2277
    %2372 = vmatprep.subr.bf16.mxu0 %v2282
    %2373 = vmatpush1.bf16.msra.mxu0 %v2281
    %2374 = vmatprep.subr.bf16.mxu0 0
    %2375 = vmatpush1.bf16.msra.mxu0 0
    %2376 = vmatprep.subr.bf16.mxu0 0
    %2377 = vmatpush1.bf16.msra.mxu0 0
    %2378 = vmatprep.subr.bf16.mxu0 0
    %2379 = vmatpush1.bf16.msra.mxu0 0
    %2380 = vmatprep.subr.bf16.mxu0 0
    %2381 = vmatpush1.bf16.msra.mxu0 0
    %2382 = vmatprep.subr.bf16.mxu0 0
    %2383 = vmatpush1.bf16.msra.mxu0 0
    %2384 = vmatprep.subr.bf16.mxu0 0
    %2385 = vmatpush1.bf16.msra.mxu0 0
    %2386 = vmatprep.subr.bf16.mxu0 0
    %2387 = vmatpush1.bf16.msra.mxu0 0
    %2388 = vmatprep.subr.bf16.mxu0 0
    %2389 = vmatpush1.bf16.msra.mxu0 0
    %2390 = vmatprep.mubr.bf16.mxu0 0
    %2391 = vmatmul.mubr.bf16.gmra.mrb[0].mxu0 %v2103
    %v2392 = vpop.f32.mrb[0].mxu0
    %v2393 = vadd.f32 0.0, %v2392
    %v2394 = vpop.f32.mrb[0].mxu0
    %v2395 = vadd.f32 0.0, %v2394
    %v2396 = vpop.f32.mrb[0].mxu0
    %v2397 = vadd.f32 0.0, %v2396
    %v2398 = vpop.f32.mrb[0].mxu0
    %v2399 = vadd.f32 0.0, %v2398
    %2400 = vdwg.mxu0
    %v2401 = vadd.f32 %v2115, %v2350
    %v2402 = vadd.f32 %v2116, %v2352
    %v2403 = vadd.f32 %v2117, %v2393
    %v2404 = vadd.f32 %v2118, %v2395
    %v2405 = vadd.f32 %v2119, %v2354
    %v2406 = vadd.f32 %v2120, %v2356
    %v2407 = vadd.f32 %v2121, %v2397
    %v2408 = vadd.f32 %v2122, %v2399
    %v2409 = vxor.u32 %v2401, 2147483648
    %v2410 = vxor.u32 %v2405, 2147483648
    %v2411 = vmul.f32 %v2409, 1.442695
    %v2412 = vpow.pop %v2411
    %v2413 = vmul.f32 %v2410, 1.442695
    %v2414 = vpow.pop %v2413
    %v2415 = vadd.f32 %v2412, 1.0
    %v2416 = vadd.f32 %v2414, 1.0
    %v2417 = vrcp.pop %v2415
    %v2418 = vmul.f32 1.0, %v2417
    %v2419 = vrcp.pop %v2416
    %v2420 = vmul.f32 1.0, %v2419
    %v2421 = vxor.u32 %v2402, 2147483648
    %v2422 = vxor.u32 %v2406, 2147483648
    %v2423 = vmul.f32 %v2421, 1.442695
    %v2424 = vpow.pop %v2423
    %v2425 = vmul.f32 %v2422, 1.442695
    %v2426 = vpow.pop %v2425
    %v2427 = vadd.f32 %v2424, 1.0
    %v2428 = vadd.f32 %v2426, 1.0
    %v2429 = vrcp.pop %v2427
    %v2430 = vmul.f32 1.0, %v2429
    %v2431 = vrcp.pop %v2428
    %v2432 = vmul.f32 1.0, %v2431
    %v2433 = vtanh.pop %v2403
    %v2434 = vtanh.pop %v2407
    %v2435 = vxor.u32 %v2404, 2147483648
    %v2436 = vxor.u32 %v2408, 2147483648
    %v2437 = vmul.f32 %v2435, 1.442695
    %v2438 = vpow.pop %v2437
    %v2439 = vmul.f32 %v2436, 1.442695
    %v2440 = vpow.pop %v2439
    %v2441 = vadd.f32 %v2438, 1.0
    %v2442 = vadd.f32 %v2440, 1.0
    %v2443 = vrcp.pop %v2441
    %v2444 = vmul.f32 1.0, %v2443
    %v2445 = vrcp.pop %v2442
    %v2446 = vmul.f32 1.0, %v2445
    %v2447 = vmul.f32 %v2430, %v2097
    %v2448 = vmul.f32 %v2432, %v2098
    %v2449 = vmul.f32 %v2418, %v2433
    %v2450 = vmul.f32 %v2420, %v2434
    %v2451 = vadd.f32 %v2447, %v2449
    %v2452 = vadd.f32 %v2448, %v2450
    %v2453 = vtanh.pop %v2451
    %v2454 = vtanh.pop %v2452
    %v2455 = vmul.f32 %v2444, %v2453
    %v2456 = vmul.f32 %v2446, %v2454
    %v2457 = vpack.c.bf16 %v2456, %v2455
    %v2459 = vunpack.c.l.b16 %v2457
    %v2460 = vunpack.c.h.b16 %v2457
    %v2461 = vpack.c.b16 %v2459, %v2459
    %v2462 = vpack.c.b16 %v2460, %v2460
    %s2465 = scalar_lea.vmem [#allocation12], 32
    %2466 = vst [vmem:[%s2465] sm:$0xf] %v2461
    %2467 = vst [vmem:[%s2465 + $0x4] sm:$0xf] %v2462
    %s2468 = scalar_lea.vmem [#allocation2], 320
    %v2469 = vld [vmem:[%s2468] sm:$0xff]
    %v2470 = vld [vmem:[%s2468 + $0x8] sm:$0xff]
    %v2471 = vld [vmem:[%s2468 + $0x10] sm:$0xff]
    %v2472 = vld [vmem:[%s2468 + $0x18] sm:$0xff]
    %v2473 = vld [vmem:[%s2468 + $0x20] sm:$0xff]
    %v2474 = vld [vmem:[%s2468 + $0x28] sm:$0xff]
    %v2475 = vld [vmem:[%s2468 + $0x30] sm:$0xff]
    %v2476 = vld [vmem:[%s2468 + $0x38] sm:$0xff]
    %v2477 = vld [vmem:[#allocation8] sm:$0xff]
    %v2478 = vld [vmem:[#allocation8 + $0x8] sm:$0xff]
    %v2479 = vld [vmem:[#allocation8 + $0x10] sm:$0xff]
    %v2480 = vld [vmem:[#allocation8 + $0x18] sm:$0xff]
    %v2481 = vld [vmem:[#allocation8 + $0x20] sm:$0xff]
    %v2482 = vld [vmem:[#allocation8 + $0x28] sm:$0xff]
    %v2483 = vld [vmem:[#allocation8 + $0x30] sm:$0xff]
    %v2484 = vld [vmem:[#allocation8 + $0x38] sm:$0xff]
    %v2485 = vld [vmem:[#allocation8 + $0x40] sm:$0xff]
    %v2486 = vld [vmem:[#allocation8 + $0x48] sm:$0xff]
    %v2487 = vld [vmem:[#allocation8 + $0x50] sm:$0xff]
    %v2488 = vld [vmem:[#allocation8 + $0x58] sm:$0xff]
    %v2489 = vld [vmem:[#allocation8 + $0x60] sm:$0xff]
    %v2490 = vld [vmem:[#allocation8 + $0x68] sm:$0xff]
    %v2491 = vld [vmem:[#allocation8 + $0x70] sm:$0xff]
    %v2492 = vld [vmem:[#allocation8 + $0x78] sm:$0xff]
    %v2493 = vld [vmem:[#allocation8 + $0x80] sm:$0xff]
    %v2494 = vld [vmem:[#allocation8 + $0x88] sm:$0xff]
    %v2495 = vld [vmem:[#allocation8 + $0x90] sm:$0xff]
    %v2496 = vld [vmem:[#allocation8 + $0x98] sm:$0xff]
    %v2497 = vld [vmem:[#allocation8 + $0xa0] sm:$0xff]
    %v2498 = vld [vmem:[#allocation8 + $0xa8] sm:$0xff]
    %v2499 = vld [vmem:[#allocation8 + $0xb0] sm:$0xff]
    %v2500 = vld [vmem:[#allocation8 + $0xb8] sm:$0xff]
    %v2501 = vld [vmem:[#allocation8 + $0xc0] sm:$0xff]
    %v2502 = vld [vmem:[#allocation8 + $0xc8] sm:$0xff]
    %v2503 = vld [vmem:[#allocation8 + $0xd0] sm:$0xff]
    %v2504 = vld [vmem:[#allocation8 + $0xd8] sm:$0xff]
    %v2505 = vld [vmem:[#allocation8 + $0xe0] sm:$0xff]
    %v2506 = vld [vmem:[#allocation8 + $0xe8] sm:$0xff]
    %v2507 = vld [vmem:[#allocation8 + $0xf0] sm:$0xff]
    %v2508 = vld [vmem:[#allocation8 + $0xf8] sm:$0xff]
    %v2541 = vunpack.c.l.b16 %v2477
    %v2542 = vunpack.c.h.b16 %v2477
    %v2543 = vunpack.c.l.b16 %v2478
    %v2544 = vunpack.c.h.b16 %v2478
    %v2545 = vunpack.c.l.b16 %v2479
    %v2546 = vunpack.c.h.b16 %v2479
    %v2547 = vunpack.c.l.b16 %v2480
    %v2548 = vunpack.c.h.b16 %v2480
    %v2549 = vunpack.c.l.b16 %v2481
    %v2550 = vunpack.c.h.b16 %v2481
    %v2551 = vunpack.c.l.b16 %v2482
    %v2552 = vunpack.c.h.b16 %v2482
    %v2553 = vunpack.c.l.b16 %v2483
    %v2554 = vunpack.c.h.b16 %v2483
    %v2555 = vunpack.c.l.b16 %v2484
    %v2556 = vunpack.c.h.b16 %v2484
    %v2557 = vunpack.c.l.b16 %v2485
    %v2558 = vunpack.c.h.b16 %v2485
    %v2559 = vunpack.c.l.b16 %v2486
    %v2560 = vunpack.c.h.b16 %v2486
    %v2561 = vunpack.c.l.b16 %v2487
    %v2562 = vunpack.c.h.b16 %v2487
    %v2563 = vunpack.c.l.b16 %v2488
    %v2564 = vunpack.c.h.b16 %v2488
    %v2565 = vunpack.c.l.b16 %v2489
    %v2566 = vunpack.c.h.b16 %v2489
    %v2567 = vunpack.c.l.b16 %v2490
    %v2568 = vunpack.c.h.b16 %v2490
    %v2569 = vunpack.c.l.b16 %v2491
    %v2570 = vunpack.c.h.b16 %v2491
    %v2571 = vunpack.c.l.b16 %v2492
    %v2572 = vunpack.c.h.b16 %v2492
    %v2573 = vunpack.c.l.b16 %v2493
    %v2574 = vunpack.c.h.b16 %v2493
    %v2575 = vunpack.c.l.b16 %v2494
    %v2576 = vunpack.c.h.b16 %v2494
    %v2577 = vunpack.c.l.b16 %v2495
    %v2578 = vunpack.c.h.b16 %v2495
    %v2579 = vunpack.c.l.b16 %v2496
    %v2580 = vunpack.c.h.b16 %v2496
    %v2581 = vunpack.c.l.b16 %v2497
    %v2582 = vunpack.c.h.b16 %v2497
    %v2583 = vunpack.c.l.b16 %v2498
    %v2584 = vunpack.c.h.b16 %v2498
    %v2585 = vunpack.c.l.b16 %v2499
    %v2586 = vunpack.c.h.b16 %v2499
    %v2587 = vunpack.c.l.b16 %v2500
    %v2588 = vunpack.c.h.b16 %v2500
    %v2589 = vunpack.c.l.b16 %v2501
    %v2590 = vunpack.c.h.b16 %v2501
    %v2591 = vunpack.c.l.b16 %v2502
    %v2592 = vunpack.c.h.b16 %v2502
    %v2593 = vunpack.c.l.b16 %v2503
    %v2594 = vunpack.c.h.b16 %v2503
    %v2595 = vunpack.c.l.b16 %v2504
    %v2596 = vunpack.c.h.b16 %v2504
    %v2597 = vunpack.c.l.b16 %v2505
    %v2598 = vunpack.c.h.b16 %v2505
    %v2599 = vunpack.c.l.b16 %v2506
    %v2600 = vunpack.c.h.b16 %v2506
    %v2601 = vunpack.c.l.b16 %v2507
    %v2602 = vunpack.c.h.b16 %v2507
    %v2603 = vunpack.c.l.b16 %v2508
    %v2604 = vunpack.c.h.b16 %v2508
    %v2605 = vpack.c.b16 %v2545, %v2541
    %v2606 = vpack.c.b16 %v2546, %v2542
    %v2607 = vpack.c.b16 %v2547, %v2543
    %v2608 = vpack.c.b16 %v2548, %v2544
    %v2609 = vpack.c.b16 %v2553, %v2549
    %v2610 = vpack.c.b16 %v2554, %v2550
    %v2611 = vpack.c.b16 %v2555, %v2551
    %v2612 = vpack.c.b16 %v2556, %v2552
    %v2613 = vpack.c.b16 %v2561, %v2557
    %v2614 = vpack.c.b16 %v2562, %v2558
    %v2615 = vpack.c.b16 %v2563, %v2559
    %v2616 = vpack.c.b16 %v2564, %v2560
    %v2617 = vpack.c.b16 %v2569, %v2565
    %v2618 = vpack.c.b16 %v2570, %v2566
    %v2619 = vpack.c.b16 %v2571, %v2567
    %v2620 = vpack.c.b16 %v2572, %v2568
    %v2621 = vpack.c.b16 %v2577, %v2573
    %v2622 = vpack.c.b16 %v2578, %v2574
    %v2623 = vpack.c.b16 %v2579, %v2575
    %v2624 = vpack.c.b16 %v2580, %v2576
    %v2625 = vpack.c.b16 %v2585, %v2581
    %v2626 = vpack.c.b16 %v2586, %v2582
    %v2627 = vpack.c.b16 %v2587, %v2583
    %v2628 = vpack.c.b16 %v2588, %v2584
    %v2629 = vpack.c.b16 %v2593, %v2589
    %v2630 = vpack.c.b16 %v2594, %v2590
    %v2631 = vpack.c.b16 %v2595, %v2591
    %v2632 = vpack.c.b16 %v2596, %v2592
    %v2633 = vpack.c.b16 %v2601, %v2597
    %v2634 = vpack.c.b16 %v2602, %v2598
    %v2635 = vpack.c.b16 %v2603, %v2599
    %v2636 = vpack.c.b16 %v2604, %v2600
    %2669 = vmatprep.subr.bf16.mxu0 %v2606
    %2670 = vmatpush1.bf16.msra.mxu0 %v2605
    %2671 = vmatprep.subr.bf16.mxu0 %v2610
    %2672 = vmatpush1.bf16.msra.mxu0 %v2609
    %2673 = vmatprep.subr.bf16.mxu0 %v2614
    %2674 = vmatpush1.bf16.msra.mxu0 %v2613
    %2675 = vmatprep.subr.bf16.mxu0 %v2618
    %2676 = vmatpush1.bf16.msra.mxu0 %v2617
    %2677 = vmatprep.subr.bf16.mxu0 %v2622
    %2678 = vmatpush1.bf16.msra.mxu0 %v2621
    %2679 = vmatprep.subr.bf16.mxu0 %v2626
    %2680 = vmatpush1.bf16.msra.mxu0 %v2625
    %2681 = vmatprep.subr.bf16.mxu0 %v2630
    %2682 = vmatpush1.bf16.msra.mxu0 %v2629
    %2683 = vmatprep.subr.bf16.mxu0 %v2634
    %2684 = vmatpush1.bf16.msra.mxu0 %v2633
    %2685 = vmatprep.subr.bf16.mxu0 0
    %2686 = vmatpush1.bf16.msra.mxu0 0
    %2687 = vmatprep.subr.bf16.mxu0 0
    %2688 = vmatpush1.bf16.msra.mxu0 0
    %2689 = vmatprep.subr.bf16.mxu0 0
    %2690 = vmatpush1.bf16.msra.mxu0 0
    %2691 = vmatprep.subr.bf16.mxu0 0
    %2692 = vmatpush1.bf16.msra.mxu0 0
    %2693 = vmatprep.subr.bf16.mxu0 0
    %2694 = vmatpush1.bf16.msra.mxu0 0
    %2695 = vmatprep.subr.bf16.mxu0 0
    %2696 = vmatpush1.bf16.msra.mxu0 0
    %2697 = vmatprep.subr.bf16.mxu0 0
    %2698 = vmatpush1.bf16.msra.mxu0 0
    %2699 = vmatprep.subr.bf16.mxu0 0
    %2700 = vmatpush1.bf16.msra.mxu0 0
    %2701 = vmatprep.mubr.bf16.mxu0 0
    %2702 = vmatmul.mubr.bf16.gmra.mrb[0].mxu0 %v2457
    %v2703 = vpop.f32.mrb[0].mxu0
    %v2704 = vadd.f32 0.0, %v2703
    %v2705 = vpop.f32.mrb[0].mxu0
    %v2706 = vadd.f32 0.0, %v2705
    %v2707 = vpop.f32.mrb[0].mxu0
    %v2708 = vadd.f32 0.0, %v2707
    %v2709 = vpop.f32.mrb[0].mxu0
    %v2710 = vadd.f32 0.0, %v2709
    %2711 = vdwg.mxu0
    %2712 = vmatprep.subr.bf16.mxu0 %v2608
    %2713 = vmatpush1.bf16.msra.mxu0 %v2607
    %2714 = vmatprep.subr.bf16.mxu0 %v2612
    %2715 = vmatpush1.bf16.msra.mxu0 %v2611
    %2716 = vmatprep.subr.bf16.mxu0 %v2616
    %2717 = vmatpush1.bf16.msra.mxu0 %v2615
    %2718 = vmatprep.subr.bf16.mxu0 %v2620
    %2719 = vmatpush1.bf16.msra.mxu0 %v2619
    %2720 = vmatprep.subr.bf16.mxu0 %v2624
    %2721 = vmatpush1.bf16.msra.mxu0 %v2623
    %2722 = vmatprep.subr.bf16.mxu0 %v2628
    %2723 = vmatpush1.bf16.msra.mxu0 %v2627
    %2724 = vmatprep.subr.bf16.mxu0 %v2632
    %2725 = vmatpush1.bf16.msra.mxu0 %v2631
    %2726 = vmatprep.subr.bf16.mxu0 %v2636
    %2727 = vmatpush1.bf16.msra.mxu0 %v2635
    %2728 = vmatprep.subr.bf16.mxu0 0
    %2729 = vmatpush1.bf16.msra.mxu0 0
    %2730 = vmatprep.subr.bf16.mxu0 0
    %2731 = vmatpush1.bf16.msra.mxu0 0
    %2732 = vmatprep.subr.bf16.mxu0 0
    %2733 = vmatpush1.bf16.msra.mxu0 0
    %2734 = vmatprep.subr.bf16.mxu0 0
    %2735 = vmatpush1.bf16.msra.mxu0 0
    %2736 = vmatprep.subr.bf16.mxu0 0
    %2737 = vmatpush1.bf16.msra.mxu0 0
    %2738 = vmatprep.subr.bf16.mxu0 0
    %2739 = vmatpush1.bf16.msra.mxu0 0
    %2740 = vmatprep.subr.bf16.mxu0 0
    %2741 = vmatpush1.bf16.msra.mxu0 0
    %2742 = vmatprep.subr.bf16.mxu0 0
    %2743 = vmatpush1.bf16.msra.mxu0 0
    %2744 = vmatprep.mubr.bf16.mxu0 0
    %2745 = vmatmul.mubr.bf16.gmra.mrb[0].mxu0 %v2457
    %v2746 = vpop.f32.mrb[0].mxu0
    %v2747 = vadd.f32 0.0, %v2746
    %v2748 = vpop.f32.mrb[0].mxu0
    %v2749 = vadd.f32 0.0, %v2748
    %v2750 = vpop.f32.mrb[0].mxu0
    %v2751 = vadd.f32 0.0, %v2750
    %v2752 = vpop.f32.mrb[0].mxu0
    %v2753 = vadd.f32 0.0, %v2752
    %2754 = vdwg.mxu0
    %v2755 = vadd.f32 %v2469, %v2704
    %v2756 = vadd.f32 %v2470, %v2706
    %v2757 = vadd.f32 %v2471, %v2747
    %v2758 = vadd.f32 %v2472, %v2749
    %v2759 = vadd.f32 %v2473, %v2708
    %v2760 = vadd.f32 %v2474, %v2710
    %v2761 = vadd.f32 %v2475, %v2751
    %v2762 = vadd.f32 %v2476, %v2753
    %v2763 = vxor.u32 %v2755, 2147483648
    %v2764 = vxor.u32 %v2759, 2147483648
    %v2765 = vmul.f32 %v2763, 1.442695
    %v2766 = vpow.pop %v2765
    %v2767 = vmul.f32 %v2764, 1.442695
    %v2768 = vpow.pop %v2767
    %v2769 = vadd.f32 %v2766, 1.0
    %v2770 = vadd.f32 %v2768, 1.0
    %v2771 = vrcp.pop %v2769
    %v2772 = vmul.f32 1.0, %v2771
    %v2773 = vrcp.pop %v2770
    %v2774 = vmul.f32 1.0, %v2773
    %v2775 = vxor.u32 %v2756, 2147483648
    %v2776 = vxor.u32 %v2760, 2147483648
    %v2777 = vmul.f32 %v2775, 1.442695
    %v2778 = vpow.pop %v2777
    %v2779 = vmul.f32 %v2776, 1.442695
    %v2780 = vpow.pop %v2779
    %v2781 = vadd.f32 %v2778, 1.0
    %v2782 = vadd.f32 %v2780, 1.0
    %v2783 = vrcp.pop %v2781
    %v2784 = vmul.f32 1.0, %v2783
    %v2785 = vrcp.pop %v2782
    %v2786 = vmul.f32 1.0, %v2785
    %v2787 = vtanh.pop %v2757
    %v2788 = vtanh.pop %v2761
    %v2789 = vxor.u32 %v2758, 2147483648
    %v2790 = vxor.u32 %v2762, 2147483648
    %v2791 = vmul.f32 %v2789, 1.442695
    %v2792 = vpow.pop %v2791
    %v2793 = vmul.f32 %v2790, 1.442695
    %v2794 = vpow.pop %v2793
    %v2795 = vadd.f32 %v2792, 1.0
    %v2796 = vadd.f32 %v2794, 1.0
    %v2797 = vrcp.pop %v2795
    %v2798 = vmul.f32 1.0, %v2797
    %v2799 = vrcp.pop %v2796
    %v2800 = vmul.f32 1.0, %v2799
    %v2801 = vmul.f32 %v2784, %v2451
    %v2802 = vmul.f32 %v2786, %v2452
    %v2803 = vmul.f32 %v2772, %v2787
    %v2804 = vmul.f32 %v2774, %v2788
    %v2805 = vadd.f32 %v2801, %v2803
    %v2806 = vadd.f32 %v2802, %v2804
    %v2807 = vtanh.pop %v2805
    %v2808 = vtanh.pop %v2806
    %v2809 = vmul.f32 %v2798, %v2807
    %v2810 = vmul.f32 %v2800, %v2808
    %v2811 = vpack.c.bf16 %v2810, %v2809
    %v2813 = vunpack.c.l.b16 %v2811
    %v2814 = vunpack.c.h.b16 %v2811
    %v2815 = vpack.c.b16 %v2813, %v2813
    %v2816 = vpack.c.b16 %v2814, %v2814
    %s2819 = scalar_lea.vmem [#allocation12], 40
    %2820 = vst [vmem:[%s2819] sm:$0xf] %v2815
    %2821 = vst [vmem:[%s2819 + $0x4] sm:$0xf] %v2816
    %s2822 = scalar_lea.vmem [#allocation2], 384
    %v2823 = vld [vmem:[%s2822] sm:$0xff]
    %v2824 = vld [vmem:[%s2822 + $0x8] sm:$0xff]
    %v2825 = vld [vmem:[%s2822 + $0x10] sm:$0xff]
    %v2826 = vld [vmem:[%s2822 + $0x18] sm:$0xff]
    %v2827 = vld [vmem:[%s2822 + $0x20] sm:$0xff]
    %v2828 = vld [vmem:[%s2822 + $0x28] sm:$0xff]
    %v2829 = vld [vmem:[%s2822 + $0x30] sm:$0xff]
    %v2830 = vld [vmem:[%s2822 + $0x38] sm:$0xff]
    %v2831 = vld [vmem:[#allocation8] sm:$0xff]
    %v2832 = vld [vmem:[#allocation8 + $0x8] sm:$0xff]
    %v2833 = vld [vmem:[#allocation8 + $0x10] sm:$0xff]
    %v2834 = vld [vmem:[#allocation8 + $0x18] sm:$0xff]
    %v2835 = vld [vmem:[#allocation8 + $0x20] sm:$0xff]
    %v2836 = vld [vmem:[#allocation8 + $0x28] sm:$0xff]
    %v2837 = vld [vmem:[#allocation8 + $0x30] sm:$0xff]
    %v2838 = vld [vmem:[#allocation8 + $0x38] sm:$0xff]
    %v2839 = vld [vmem:[#allocation8 + $0x40] sm:$0xff]
    %v2840 = vld [vmem:[#allocation8 + $0x48] sm:$0xff]
    %v2841 = vld [vmem:[#allocation8 + $0x50] sm:$0xff]
    %v2842 = vld [vmem:[#allocation8 + $0x58] sm:$0xff]
    %v2843 = vld [vmem:[#allocation8 + $0x60] sm:$0xff]
    %v2844 = vld [vmem:[#allocation8 + $0x68] sm:$0xff]
    %v2845 = vld [vmem:[#allocation8 + $0x70] sm:$0xff]
    %v2846 = vld [vmem:[#allocation8 + $0x78] sm:$0xff]
    %v2847 = vld [vmem:[#allocation8 + $0x80] sm:$0xff]
    %v2848 = vld [vmem:[#allocation8 + $0x88] sm:$0xff]
    %v2849 = vld [vmem:[#allocation8 + $0x90] sm:$0xff]
    %v2850 = vld [vmem:[#allocation8 + $0x98] sm:$0xff]
    %v2851 = vld [vmem:[#allocation8 + $0xa0] sm:$0xff]
    %v2852 = vld [vmem:[#allocation8 + $0xa8] sm:$0xff]
    %v2853 = vld [vmem:[#allocation8 + $0xb0] sm:$0xff]
    %v2854 = vld [vmem:[#allocation8 + $0xb8] sm:$0xff]
    %v2855 = vld [vmem:[#allocation8 + $0xc0] sm:$0xff]
    %v2856 = vld [vmem:[#allocation8 + $0xc8] sm:$0xff]
    %v2857 = vld [vmem:[#allocation8 + $0xd0] sm:$0xff]
    %v2858 = vld [vmem:[#allocation8 + $0xd8] sm:$0xff]
    %v2859 = vld [vmem:[#allocation8 + $0xe0] sm:$0xff]
    %v2860 = vld [vmem:[#allocation8 + $0xe8] sm:$0xff]
    %v2861 = vld [vmem:[#allocation8 + $0xf0] sm:$0xff]
    %v2862 = vld [vmem:[#allocation8 + $0xf8] sm:$0xff]
    %v2895 = vunpack.c.l.b16 %v2831
    %v2896 = vunpack.c.h.b16 %v2831
    %v2897 = vunpack.c.l.b16 %v2832
    %v2898 = vunpack.c.h.b16 %v2832
    %v2899 = vunpack.c.l.b16 %v2833
    %v2900 = vunpack.c.h.b16 %v2833
    %v2901 = vunpack.c.l.b16 %v2834
    %v2902 = vunpack.c.h.b16 %v2834
    %v2903 = vunpack.c.l.b16 %v2835
    %v2904 = vunpack.c.h.b16 %v2835
    %v2905 = vunpack.c.l.b16 %v2836
    %v2906 = vunpack.c.h.b16 %v2836
    %v2907 = vunpack.c.l.b16 %v2837
    %v2908 = vunpack.c.h.b16 %v2837
    %v2909 = vunpack.c.l.b16 %v2838
    %v2910 = vunpack.c.h.b16 %v2838
    %v2911 = vunpack.c.l.b16 %v2839
    %v2912 = vunpack.c.h.b16 %v2839
    %v2913 = vunpack.c.l.b16 %v2840
    %v2914 = vunpack.c.h.b16 %v2840
    %v2915 = vunpack.c.l.b16 %v2841
    %v2916 = vunpack.c.h.b16 %v2841
    %v2917 = vunpack.c.l.b16 %v2842
    %v2918 = vunpack.c.h.b16 %v2842
    %v2919 = vunpack.c.l.b16 %v2843
    %v2920 = vunpack.c.h.b16 %v2843
    %v2921 = vunpack.c.l.b16 %v2844
    %v2922 = vunpack.c.h.b16 %v2844
    %v2923 = vunpack.c.l.b16 %v2845
    %v2924 = vunpack.c.h.b16 %v2845
    %v2925 = vunpack.c.l.b16 %v2846
    %v2926 = vunpack.c.h.b16 %v2846
    %v2927 = vunpack.c.l.b16 %v2847
    %v2928 = vunpack.c.h.b16 %v2847
    %v2929 = vunpack.c.l.b16 %v2848
    %v2930 = vunpack.c.h.b16 %v2848
    %v2931 = vunpack.c.l.b16 %v2849
    %v2932 = vunpack.c.h.b16 %v2849
    %v2933 = vunpack.c.l.b16 %v2850
    %v2934 = vunpack.c.h.b16 %v2850
    %v2935 = vunpack.c.l.b16 %v2851
    %v2936 = vunpack.c.h.b16 %v2851
    %v2937 = vunpack.c.l.b16 %v2852
    %v2938 = vunpack.c.h.b16 %v2852
    %v2939 = vunpack.c.l.b16 %v2853
    %v2940 = vunpack.c.h.b16 %v2853
    %v2941 = vunpack.c.l.b16 %v2854
    %v2942 = vunpack.c.h.b16 %v2854
    %v2943 = vunpack.c.l.b16 %v2855
    %v2944 = vunpack.c.h.b16 %v2855
    %v2945 = vunpack.c.l.b16 %v2856
    %v2946 = vunpack.c.h.b16 %v2856
    %v2947 = vunpack.c.l.b16 %v2857
    %v2948 = vunpack.c.h.b16 %v2857
    %v2949 = vunpack.c.l.b16 %v2858
    %v2950 = vunpack.c.h.b16 %v2858
    %v2951 = vunpack.c.l.b16 %v2859
    %v2952 = vunpack.c.h.b16 %v2859
    %v2953 = vunpack.c.l.b16 %v2860
    %v2954 = vunpack.c.h.b16 %v2860
    %v2955 = vunpack.c.l.b16 %v2861
    %v2956 = vunpack.c.h.b16 %v2861
    %v2957 = vunpack.c.l.b16 %v2862
    %v2958 = vunpack.c.h.b16 %v2862
    %v2959 = vpack.c.b16 %v2899, %v2895
    %v2960 = vpack.c.b16 %v2900, %v2896
    %v2961 = vpack.c.b16 %v2901, %v2897
    %v2962 = vpack.c.b16 %v2902, %v2898
    %v2963 = vpack.c.b16 %v2907, %v2903
    %v2964 = vpack.c.b16 %v2908, %v2904
    %v2965 = vpack.c.b16 %v2909, %v2905
    %v2966 = vpack.c.b16 %v2910, %v2906
    %v2967 = vpack.c.b16 %v2915, %v2911
    %v2968 = vpack.c.b16 %v2916, %v2912
    %v2969 = vpack.c.b16 %v2917, %v2913
    %v2970 = vpack.c.b16 %v2918, %v2914
    %v2971 = vpack.c.b16 %v2923, %v2919
    %v2972 = vpack.c.b16 %v2924, %v2920
    %v2973 = vpack.c.b16 %v2925, %v2921
    %v2974 = vpack.c.b16 %v2926, %v2922
    %v2975 = vpack.c.b16 %v2931, %v2927
    %v2976 = vpack.c.b16 %v2932, %v2928
    %v2977 = vpack.c.b16 %v2933, %v2929
    %v2978 = vpack.c.b16 %v2934, %v2930
    %v2979 = vpack.c.b16 %v2939, %v2935
    %v2980 = vpack.c.b16 %v2940, %v2936
    %v2981 = vpack.c.b16 %v2941, %v2937
    %v2982 = vpack.c.b16 %v2942, %v2938
    %v2983 = vpack.c.b16 %v2947, %v2943
    %v2984 = vpack.c.b16 %v2948, %v2944
    %v2985 = vpack.c.b16 %v2949, %v2945
    %v2986 = vpack.c.b16 %v2950, %v2946
    %v2987 = vpack.c.b16 %v2955, %v2951
    %v2988 = vpack.c.b16 %v2956, %v2952
    %v2989 = vpack.c.b16 %v2957, %v2953
    %v2990 = vpack.c.b16 %v2958, %v2954
    %3023 = vmatprep.subr.bf16.mxu0 %v2960
    %3024 = vmatpush1.bf16.msra.mxu0 %v2959
    %3025 = vmatprep.subr.bf16.mxu0 %v2964
    %3026 = vmatpush1.bf16.msra.mxu0 %v2963
    %3027 = vmatprep.subr.bf16.mxu0 %v2968
    %3028 = vmatpush1.bf16.msra.mxu0 %v2967
    %3029 = vmatprep.subr.bf16.mxu0 %v2972
    %3030 = vmatpush1.bf16.msra.mxu0 %v2971
    %3031 = vmatprep.subr.bf16.mxu0 %v2976
    %3032 = vmatpush1.bf16.msra.mxu0 %v2975
    %3033 = vmatprep.subr.bf16.mxu0 %v2980
    %3034 = vmatpush1.bf16.msra.mxu0 %v2979
    %3035 = vmatprep.subr.bf16.mxu0 %v2984
    %3036 = vmatpush1.bf16.msra.mxu0 %v2983
    %3037 = vmatprep.subr.bf16.mxu0 %v2988
    %3038 = vmatpush1.bf16.msra.mxu0 %v2987
    %3039 = vmatprep.subr.bf16.mxu0 0
    %3040 = vmatpush1.bf16.msra.mxu0 0
    %3041 = vmatprep.subr.bf16.mxu0 0
    %3042 = vmatpush1.bf16.msra.mxu0 0
    %3043 = vmatprep.subr.bf16.mxu0 0
    %3044 = vmatpush1.bf16.msra.mxu0 0
    %3045 = vmatprep.subr.bf16.mxu0 0
    %3046 = vmatpush1.bf16.msra.mxu0 0
    %3047 = vmatprep.subr.bf16.mxu0 0
    %3048 = vmatpush1.bf16.msra.mxu0 0
    %3049 = vmatprep.subr.bf16.mxu0 0
    %3050 = vmatpush1.bf16.msra.mxu0 0
    %3051 = vmatprep.subr.bf16.mxu0 0
    %3052 = vmatpush1.bf16.msra.mxu0 0
    %3053 = vmatprep.subr.bf16.mxu0 0
    %3054 = vmatpush1.bf16.msra.mxu0 0
    %3055 = vmatprep.mubr.bf16.mxu0 0
    %3056 = vmatmul.mubr.bf16.gmra.mrb[0].mxu0 %v2811
    %v3057 = vpop.f32.mrb[0].mxu0
    %v3058 = vadd.f32 0.0, %v3057
    %v3059 = vpop.f32.mrb[0].mxu0
    %v3060 = vadd.f32 0.0, %v3059
    %v3061 = vpop.f32.mrb[0].mxu0
    %v3062 = vadd.f32 0.0, %v3061
    %v3063 = vpop.f32.mrb[0].mxu0
    %v3064 = vadd.f32 0.0, %v3063
    %3065 = vdwg.mxu0
    %3066 = vmatprep.subr.bf16.mxu0 %v2962
    %3067 = vmatpush1.bf16.msra.mxu0 %v2961
    %3068 = vmatprep.subr.bf16.mxu0 %v2966
    %3069 = vmatpush1.bf16.msra.mxu0 %v2965
    %3070 = vmatprep.subr.bf16.mxu0 %v2970
    %3071 = vmatpush1.bf16.msra.mxu0 %v2969
    %3072 = vmatprep.subr.bf16.mxu0 %v2974
    %3073 = vmatpush1.bf16.msra.mxu0 %v2973
    %3074 = vmatprep.subr.bf16.mxu0 %v2978
    %3075 = vmatpush1.bf16.msra.mxu0 %v2977
    %3076 = vmatprep.subr.bf16.mxu0 %v2982
    %3077 = vmatpush1.bf16.msra.mxu0 %v2981
    %3078 = vmatprep.subr.bf16.mxu0 %v2986
    %3079 = vmatpush1.bf16.msra.mxu0 %v2985
    %3080 = vmatprep.subr.bf16.mxu0 %v2990
    %3081 = vmatpush1.bf16.msra.mxu0 %v2989
    %3082 = vmatprep.subr.bf16.mxu0 0
    %3083 = vmatpush1.bf16.msra.mxu0 0
    %3084 = vmatprep.subr.bf16.mxu0 0
    %3085 = vmatpush1.bf16.msra.mxu0 0
    %3086 = vmatprep.subr.bf16.mxu0 0
    %3087 = vmatpush1.bf16.msra.mxu0 0
    %3088 = vmatprep.subr.bf16.mxu0 0
    %3089 = vmatpush1.bf16.msra.mxu0 0
    %3090 = vmatprep.subr.bf16.mxu0 0
    %3091 = vmatpush1.bf16.msra.mxu0 0
    %3092 = vmatprep.subr.bf16.mxu0 0
    %3093 = vmatpush1.bf16.msra.mxu0 0
    %3094 = vmatprep.subr.bf16.mxu0 0
    %3095 = vmatpush1.bf16.msra.mxu0 0
    %3096 = vmatprep.subr.bf16.mxu0 0
    %3097 = vmatpush1.bf16.msra.mxu0 0
    %3098 = vmatprep.mubr.bf16.mxu0 0
    %3099 = vmatmul.mubr.bf16.gmra.mrb[0].mxu0 %v2811
    %v3100 = vpop.f32.mrb[0].mxu0
    %v3101 = vadd.f32 0.0, %v3100
    %v3102 = vpop.f32.mrb[0].mxu0
    %v3103 = vadd.f32 0.0, %v3102
    %v3104 = vpop.f32.mrb[0].mxu0
    %v3105 = vadd.f32 0.0, %v3104
    %v3106 = vpop.f32.mrb[0].mxu0
    %v3107 = vadd.f32 0.0, %v3106
    %3108 = vdwg.mxu0
    %v3109 = vadd.f32 %v2823, %v3058
    %v3110 = vadd.f32 %v2824, %v3060
    %v3111 = vadd.f32 %v2825, %v3101
    %v3112 = vadd.f32 %v2826, %v3103
    %v3113 = vadd.f32 %v2827, %v3062
    %v3114 = vadd.f32 %v2828, %v3064
    %v3115 = vadd.f32 %v2829, %v3105
    %v3116 = vadd.f32 %v2830, %v3107
    %v3117 = vxor.u32 %v3109, 2147483648
    %v3118 = vxor.u32 %v3113, 2147483648
    %v3119 = vmul.f32 %v3117, 1.442695
    %v3120 = vpow.pop %v3119
    %v3121 = vmul.f32 %v3118, 1.442695
    %v3122 = vpow.pop %v3121
    %v3123 = vadd.f32 %v3120, 1.0
    %v3124 = vadd.f32 %v3122, 1.0
    %v3125 = vrcp.pop %v3123
    %v3126 = vmul.f32 1.0, %v3125
    %v3127 = vrcp.pop %v3124
    %v3128 = vmul.f32 1.0, %v3127
    %v3129 = vxor.u32 %v3110, 2147483648
    %v3130 = vxor.u32 %v3114, 2147483648
    %v3131 = vmul.f32 %v3129, 1.442695
    %v3132 = vpow.pop %v3131
    %v3133 = vmul.f32 %v3130, 1.442695
    %v3134 = vpow.pop %v3133
    %v3135 = vadd.f32 %v3132, 1.0
    %v3136 = vadd.f32 %v3134, 1.0
    %v3137 = vrcp.pop %v3135
    %v3138 = vmul.f32 1.0, %v3137
    %v3139 = vrcp.pop %v3136
    %v3140 = vmul.f32 1.0, %v3139
    %v3141 = vtanh.pop %v3111
    %v3142 = vtanh.pop %v3115
    %v3143 = vxor.u32 %v3112, 2147483648
    %v3144 = vxor.u32 %v3116, 2147483648
    %v3145 = vmul.f32 %v3143, 1.442695
    %v3146 = vpow.pop %v3145
    %v3147 = vmul.f32 %v3144, 1.442695
    %v3148 = vpow.pop %v3147
    %v3149 = vadd.f32 %v3146, 1.0
    %v3150 = vadd.f32 %v3148, 1.0
    %v3151 = vrcp.pop %v3149
    %v3152 = vmul.f32 1.0, %v3151
    %v3153 = vrcp.pop %v3150
    %v3154 = vmul.f32 1.0, %v3153
    %v3155 = vmul.f32 %v3138, %v2805
    %v3156 = vmul.f32 %v3140, %v2806
    %v3157 = vmul.f32 %v3126, %v3141
    %v3158 = vmul.f32 %v3128, %v3142
    %v3159 = vadd.f32 %v3155, %v3157
    %v3160 = vadd.f32 %v3156, %v3158
    %v3161 = vtanh.pop %v3159
    %v3162 = vtanh.pop %v3160
    %v3163 = vmul.f32 %v3152, %v3161
    %v3164 = vmul.f32 %v3154, %v3162
    %v3165 = vpack.c.bf16 %v3164, %v3163
    %v3167 = vunpack.c.l.b16 %v3165
    %v3168 = vunpack.c.h.b16 %v3165
    %v3169 = vpack.c.b16 %v3167, %v3167
    %v3170 = vpack.c.b16 %v3168, %v3168
    %s3173 = scalar_lea.vmem [#allocation12], 48
    %3174 = vst [vmem:[%s3173] sm:$0xf] %v3169
    %3175 = vst [vmem:[%s3173 + $0x4] sm:$0xf] %v3170
    %s3176 = scalar_lea.vmem [#allocation2], 448
    %v3177 = vld [vmem:[%s3176] sm:$0xff]
    %v3178 = vld [vmem:[%s3176 + $0x8] sm:$0xff]
    %v3179 = vld [vmem:[%s3176 + $0x10] sm:$0xff]
    %v3180 = vld [vmem:[%s3176 + $0x18] sm:$0xff]
    %v3181 = vld [vmem:[%s3176 + $0x20] sm:$0xff]
    %v3182 = vld [vmem:[%s3176 + $0x28] sm:$0xff]
    %v3183 = vld [vmem:[%s3176 + $0x30] sm:$0xff]
    %v3184 = vld [vmem:[%s3176 + $0x38] sm:$0xff]
    %v3185 = vld [vmem:[#allocation8] sm:$0xff]
    %v3186 = vld [vmem:[#allocation8 + $0x8] sm:$0xff]
    %v3187 = vld [vmem:[#allocation8 + $0x10] sm:$0xff]
    %v3188 = vld [vmem:[#allocation8 + $0x18] sm:$0xff]
    %v3189 = vld [vmem:[#allocation8 + $0x20] sm:$0xff]
    %v3190 = vld [vmem:[#allocation8 + $0x28] sm:$0xff]
    %v3191 = vld [vmem:[#allocation8 + $0x30] sm:$0xff]
    %v3192 = vld [vmem:[#allocation8 + $0x38] sm:$0xff]
    %v3193 = vld [vmem:[#allocation8 + $0x40] sm:$0xff]
    %v3194 = vld [vmem:[#allocation8 + $0x48] sm:$0xff]
    %v3195 = vld [vmem:[#allocation8 + $0x50] sm:$0xff]
    %v3196 = vld [vmem:[#allocation8 + $0x58] sm:$0xff]
    %v3197 = vld [vmem:[#allocation8 + $0x60] sm:$0xff]
    %v3198 = vld [vmem:[#allocation8 + $0x68] sm:$0xff]
    %v3199 = vld [vmem:[#allocation8 + $0x70] sm:$0xff]
    %v3200 = vld [vmem:[#allocation8 + $0x78] sm:$0xff]
    %v3201 = vld [vmem:[#allocation8 + $0x80] sm:$0xff]
    %v3202 = vld [vmem:[#allocation8 + $0x88] sm:$0xff]
    %v3203 = vld [vmem:[#allocation8 + $0x90] sm:$0xff]
    %v3204 = vld [vmem:[#allocation8 + $0x98] sm:$0xff]
    %v3205 = vld [vmem:[#allocation8 + $0xa0] sm:$0xff]
    %v3206 = vld [vmem:[#allocation8 + $0xa8] sm:$0xff]
    %v3207 = vld [vmem:[#allocation8 + $0xb0] sm:$0xff]
    %v3208 = vld [vmem:[#allocation8 + $0xb8] sm:$0xff]
    %v3209 = vld [vmem:[#allocation8 + $0xc0] sm:$0xff]
    %v3210 = vld [vmem:[#allocation8 + $0xc8] sm:$0xff]
    %v3211 = vld [vmem:[#allocation8 + $0xd0] sm:$0xff]
    %v3212 = vld [vmem:[#allocation8 + $0xd8] sm:$0xff]
    %v3213 = vld [vmem:[#allocation8 + $0xe0] sm:$0xff]
    %v3214 = vld [vmem:[#allocation8 + $0xe8] sm:$0xff]
    %v3215 = vld [vmem:[#allocation8 + $0xf0] sm:$0xff]
    %v3216 = vld [vmem:[#allocation8 + $0xf8] sm:$0xff]
    %v3249 = vunpack.c.l.b16 %v3185
    %v3250 = vunpack.c.h.b16 %v3185
    %v3251 = vunpack.c.l.b16 %v3186
    %v3252 = vunpack.c.h.b16 %v3186
    %v3253 = vunpack.c.l.b16 %v3187
    %v3254 = vunpack.c.h.b16 %v3187
    %v3255 = vunpack.c.l.b16 %v3188
    %v3256 = vunpack.c.h.b16 %v3188
    %v3257 = vunpack.c.l.b16 %v3189
    %v3258 = vunpack.c.h.b16 %v3189
    %v3259 = vunpack.c.l.b16 %v3190
    %v3260 = vunpack.c.h.b16 %v3190
    %v3261 = vunpack.c.l.b16 %v3191
    %v3262 = vunpack.c.h.b16 %v3191
    %v3263 = vunpack.c.l.b16 %v3192
    %v3264 = vunpack.c.h.b16 %v3192
    %v3265 = vunpack.c.l.b16 %v3193
    %v3266 = vunpack.c.h.b16 %v3193
    %v3267 = vunpack.c.l.b16 %v3194
    %v3268 = vunpack.c.h.b16 %v3194
    %v3269 = vunpack.c.l.b16 %v3195
    %v3270 = vunpack.c.h.b16 %v3195
    %v3271 = vunpack.c.l.b16 %v3196
    %v3272 = vunpack.c.h.b16 %v3196
    %v3273 = vunpack.c.l.b16 %v3197
    %v3274 = vunpack.c.h.b16 %v3197
    %v3275 = vunpack.c.l.b16 %v3198
    %v3276 = vunpack.c.h.b16 %v3198
    %v3277 = vunpack.c.l.b16 %v3199
    %v3278 = vunpack.c.h.b16 %v3199
    %v3279 = vunpack.c.l.b16 %v3200
    %v3280 = vunpack.c.h.b16 %v3200
    %v3281 = vunpack.c.l.b16 %v3201
    %v3282 = vunpack.c.h.b16 %v3201
    %v3283 = vunpack.c.l.b16 %v3202
    %v3284 = vunpack.c.h.b16 %v3202
    %v3285 = vunpack.c.l.b16 %v3203
    %v3286 = vunpack.c.h.b16 %v3203
    %v3287 = vunpack.c.l.b16 %v3204
    %v3288 = vunpack.c.h.b16 %v3204
    %v3289 = vunpack.c.l.b16 %v3205
    %v3290 = vunpack.c.h.b16 %v3205
    %v3291 = vunpack.c.l.b16 %v3206
    %v3292 = vunpack.c.h.b16 %v3206
    %v3293 = vunpack.c.l.b16 %v3207
    %v3294 = vunpack.c.h.b16 %v3207
    %v3295 = vunpack.c.l.b16 %v3208
    %v3296 = vunpack.c.h.b16 %v3208
    %v3297 = vunpack.c.l.b16 %v3209
    %v3298 = vunpack.c.h.b16 %v3209
    %v3299 = vunpack.c.l.b16 %v3210
    %v3300 = vunpack.c.h.b16 %v3210
    %v3301 = vunpack.c.l.b16 %v3211
    %v3302 = vunpack.c.h.b16 %v3211
    %v3303 = vunpack.c.l.b16 %v3212
    %v3304 = vunpack.c.h.b16 %v3212
    %v3305 = vunpack.c.l.b16 %v3213
    %v3306 = vunpack.c.h.b16 %v3213
    %v3307 = vunpack.c.l.b16 %v3214
    %v3308 = vunpack.c.h.b16 %v3214
    %v3309 = vunpack.c.l.b16 %v3215
    %v3310 = vunpack.c.h.b16 %v3215
    %v3311 = vunpack.c.l.b16 %v3216
    %v3312 = vunpack.c.h.b16 %v3216
    %v3313 = vpack.c.b16 %v3253, %v3249
    %v3314 = vpack.c.b16 %v3254, %v3250
    %v3315 = vpack.c.b16 %v3255, %v3251
    %v3316 = vpack.c.b16 %v3256, %v3252
    %v3317 = vpack.c.b16 %v3261, %v3257
    %v3318 = vpack.c.b16 %v3262, %v3258
    %v3319 = vpack.c.b16 %v3263, %v3259
    %v3320 = vpack.c.b16 %v3264, %v3260
    %v3321 = vpack.c.b16 %v3269, %v3265
    %v3322 = vpack.c.b16 %v3270, %v3266
    %v3323 = vpack.c.b16 %v3271, %v3267
    %v3324 = vpack.c.b16 %v3272, %v3268
    %v3325 = vpack.c.b16 %v3277, %v3273
    %v3326 = vpack.c.b16 %v3278, %v3274
    %v3327 = vpack.c.b16 %v3279, %v3275
    %v3328 = vpack.c.b16 %v3280, %v3276
    %v3329 = vpack.c.b16 %v3285, %v3281
    %v3330 = vpack.c.b16 %v3286, %v3282
    %v3331 = vpack.c.b16 %v3287, %v3283
    %v3332 = vpack.c.b16 %v3288, %v3284
    %v3333 = vpack.c.b16 %v3293, %v3289
    %v3334 = vpack.c.b16 %v3294, %v3290
    %v3335 = vpack.c.b16 %v3295, %v3291
    %v3336 = vpack.c.b16 %v3296, %v3292
    %v3337 = vpack.c.b16 %v3301, %v3297
    %v3338 = vpack.c.b16 %v3302, %v3298
    %v3339 = vpack.c.b16 %v3303, %v3299
    %v3340 = vpack.c.b16 %v3304, %v3300
    %v3341 = vpack.c.b16 %v3309, %v3305
    %v3342 = vpack.c.b16 %v3310, %v3306
    %v3343 = vpack.c.b16 %v3311, %v3307
    %v3344 = vpack.c.b16 %v3312, %v3308
    %3377 = vmatprep.subr.bf16.mxu0 %v3314
    %3378 = vmatpush1.bf16.msra.mxu0 %v3313
    %3379 = vmatprep.subr.bf16.mxu0 %v3318
    %3380 = vmatpush1.bf16.msra.mxu0 %v3317
    %3381 = vmatprep.subr.bf16.mxu0 %v3322
    %3382 = vmatpush1.bf16.msra.mxu0 %v3321
    %3383 = vmatprep.subr.bf16.mxu0 %v3326
    %3384 = vmatpush1.bf16.msra.mxu0 %v3325
    %3385 = vmatprep.subr.bf16.mxu0 %v3330
    %3386 = vmatpush1.bf16.msra.mxu0 %v3329
    %3387 = vmatprep.subr.bf16.mxu0 %v3334
    %3388 = vmatpush1.bf16.msra.mxu0 %v3333
    %3389 = vmatprep.subr.bf16.mxu0 %v3338
    %3390 = vmatpush1.bf16.msra.mxu0 %v3337
    %3391 = vmatprep.subr.bf16.mxu0 %v3342
    %3392 = vmatpush1.bf16.msra.mxu0 %v3341
    %3393 = vmatprep.subr.bf16.mxu0 0
    %3394 = vmatpush1.bf16.msra.mxu0 0
    %3395 = vmatprep.subr.bf16.mxu0 0
    %3396 = vmatpush1.bf16.msra.mxu0 0
    %3397 = vmatprep.subr.bf16.mxu0 0
    %3398 = vmatpush1.bf16.msra.mxu0 0
    %3399 = vmatprep.subr.bf16.mxu0 0
    %3400 = vmatpush1.bf16.msra.mxu0 0
    %3401 = vmatprep.subr.bf16.mxu0 0
    %3402 = vmatpush1.bf16.msra.mxu0 0
    %3403 = vmatprep.subr.bf16.mxu0 0
    %3404 = vmatpush1.bf16.msra.mxu0 0
    %3405 = vmatprep.subr.bf16.mxu0 0
    %3406 = vmatpush1.bf16.msra.mxu0 0
    %3407 = vmatprep.subr.bf16.mxu0 0
    %3408 = vmatpush1.bf16.msra.mxu0 0
    %3409 = vmatprep.mubr.bf16.mxu0 0
    %3410 = vmatmul.mubr.bf16.gmra.mrb[0].mxu0 %v3165
    %v3411 = vpop.f32.mrb[0].mxu0
    %v3412 = vadd.f32 0.0, %v3411
    %v3413 = vpop.f32.mrb[0].mxu0
    %v3414 = vadd.f32 0.0, %v3413
    %v3415 = vpop.f32.mrb[0].mxu0
    %v3416 = vadd.f32 0.0, %v3415
    %v3417 = vpop.f32.mrb[0].mxu0
    %v3418 = vadd.f32 0.0, %v3417
    %3419 = vdwg.mxu0
    %3420 = vmatprep.subr.bf16.mxu0 %v3316
    %3421 = vmatpush1.bf16.msra.mxu0 %v3315
    %3422 = vmatprep.subr.bf16.mxu0 %v3320
    %3423 = vmatpush1.bf16.msra.mxu0 %v3319
    %3424 = vmatprep.subr.bf16.mxu0 %v3324
    %3425 = vmatpush1.bf16.msra.mxu0 %v3323
    %3426 = vmatprep.subr.bf16.mxu0 %v3328
    %3427 = vmatpush1.bf16.msra.mxu0 %v3327
    %3428 = vmatprep.subr.bf16.mxu0 %v3332
    %3429 = vmatpush1.bf16.msra.mxu0 %v3331
    %3430 = vmatprep.subr.bf16.mxu0 %v3336
    %3431 = vmatpush1.bf16.msra.mxu0 %v3335
    %3432 = vmatprep.subr.bf16.mxu0 %v3340
    %3433 = vmatpush1.bf16.msra.mxu0 %v3339
    %3434 = vmatprep.subr.bf16.mxu0 %v3344
    %3435 = vmatpush1.bf16.msra.mxu0 %v3343
    %3436 = vmatprep.subr.bf16.mxu0 0
    %3437 = vmatpush1.bf16.msra.mxu0 0
    %3438 = vmatprep.subr.bf16.mxu0 0
    %3439 = vmatpush1.bf16.msra.mxu0 0
    %3440 = vmatprep.subr.bf16.mxu0 0
    %3441 = vmatpush1.bf16.msra.mxu0 0
    %3442 = vmatprep.subr.bf16.mxu0 0
    %3443 = vmatpush1.bf16.msra.mxu0 0
    %3444 = vmatprep.subr.bf16.mxu0 0
    %3445 = vmatpush1.bf16.msra.mxu0 0
    %3446 = vmatprep.subr.bf16.mxu0 0
    %3447 = vmatpush1.bf16.msra.mxu0 0
    %3448 = vmatprep.subr.bf16.mxu0 0
    %3449 = vmatpush1.bf16.msra.mxu0 0
    %3450 = vmatprep.subr.bf16.mxu0 0
    %3451 = vmatpush1.bf16.msra.mxu0 0
    %3452 = vmatprep.mubr.bf16.mxu0 0
    %3453 = vmatmul.mubr.bf16.gmra.mrb[0].mxu0 %v3165
    %v3454 = vpop.f32.mrb[0].mxu0
    %v3455 = vadd.f32 0.0, %v3454
    %v3456 = vpop.f32.mrb[0].mxu0
    %v3457 = vadd.f32 0.0, %v3456
    %v3458 = vpop.f32.mrb[0].mxu0
    %v3459 = vadd.f32 0.0, %v3458
    %v3460 = vpop.f32.mrb[0].mxu0
    %v3461 = vadd.f32 0.0, %v3460
    %3462 = vdwg.mxu0
    %v3463 = vadd.f32 %v3177, %v3412
    %v3464 = vadd.f32 %v3178, %v3414
    %v3465 = vadd.f32 %v3179, %v3455
    %v3466 = vadd.f32 %v3180, %v3457
    %v3467 = vadd.f32 %v3181, %v3416
    %v3468 = vadd.f32 %v3182, %v3418
    %v3469 = vadd.f32 %v3183, %v3459
    %v3470 = vadd.f32 %v3184, %v3461
    %v3471 = vxor.u32 %v3463, 2147483648
    %v3472 = vxor.u32 %v3467, 2147483648
    %v3473 = vmul.f32 %v3471, 1.442695
    %v3474 = vpow.pop %v3473
    %v3475 = vmul.f32 %v3472, 1.442695
    %v3476 = vpow.pop %v3475
    %v3477 = vadd.f32 %v3474, 1.0
    %v3478 = vadd.f32 %v3476, 1.0
    %v3479 = vrcp.pop %v3477
    %v3480 = vmul.f32 1.0, %v3479
    %v3481 = vrcp.pop %v3478
    %v3482 = vmul.f32 1.0, %v3481
    %v3483 = vxor.u32 %v3464, 2147483648
    %v3484 = vxor.u32 %v3468, 2147483648
    %v3485 = vmul.f32 %v3483, 1.442695
    %v3486 = vpow.pop %v3485
    %v3487 = vmul.f32 %v3484, 1.442695
    %v3488 = vpow.pop %v3487
    %v3489 = vadd.f32 %v3486, 1.0
    %v3490 = vadd.f32 %v3488, 1.0
    %v3491 = vrcp.pop %v3489
    %v3492 = vmul.f32 1.0, %v3491
    %v3493 = vrcp.pop %v3490
    %v3494 = vmul.f32 1.0, %v3493
    %v3495 = vtanh.pop %v3465
    %v3496 = vtanh.pop %v3469
    %v3497 = vxor.u32 %v3466, 2147483648
    %v3498 = vxor.u32 %v3470, 2147483648
    %v3499 = vmul.f32 %v3497, 1.442695
    %v3500 = vpow.pop %v3499
    %v3501 = vmul.f32 %v3498, 1.442695
    %v3502 = vpow.pop %v3501
    %v3503 = vadd.f32 %v3500, 1.0
    %v3504 = vadd.f32 %v3502, 1.0
    %v3505 = vrcp.pop %v3503
    %v3506 = vmul.f32 1.0, %v3505
    %v3507 = vrcp.pop %v3504
    %v3508 = vmul.f32 1.0, %v3507
    %v3509 = vmul.f32 %v3492, %v3159
    %v3510 = vmul.f32 %v3494, %v3160
    %v3511 = vmul.f32 %v3480, %v3495
    %v3512 = vmul.f32 %v3482, %v3496
    %v3513 = vadd.f32 %v3509, %v3511
    %v3514 = vadd.f32 %v3510, %v3512
    %v3515 = vtanh.pop %v3513
    %v3516 = vtanh.pop %v3514
    %v3517 = vmul.f32 %v3506, %v3515
    %v3518 = vmul.f32 %v3508, %v3516
    %v3519 = vpack.c.bf16 %v3518, %v3517
    %v3521 = vunpack.c.l.b16 %v3519
    %v3522 = vunpack.c.h.b16 %v3519
    %v3523 = vpack.c.b16 %v3521, %v3521
    %v3524 = vpack.c.b16 %v3522, %v3522
    %s3527 = scalar_lea.vmem [#allocation12], 56
    %3528 = vst [vmem:[%s3527] sm:$0xf] %v3523
    %3529 = vst [vmem:[%s3527 + $0x4] sm:$0xf] %v3524
    %s3530 = scalar_lea.vmem [#allocation2], 512
    %v3531 = vld [vmem:[%s3530] sm:$0xff]
    %v3532 = vld [vmem:[%s3530 + $0x8] sm:$0xff]
    %v3533 = vld [vmem:[%s3530 + $0x10] sm:$0xff]
    %v3534 = vld [vmem:[%s3530 + $0x18] sm:$0xff]
    %v3535 = vld [vmem:[%s3530 + $0x20] sm:$0xff]
    %v3536 = vld [vmem:[%s3530 + $0x28] sm:$0xff]
    %v3537 = vld [vmem:[%s3530 + $0x30] sm:$0xff]
    %v3538 = vld [vmem:[%s3530 + $0x38] sm:$0xff]
    %v3539 = vld [vmem:[#allocation8] sm:$0xff]
    %v3540 = vld [vmem:[#allocation8 + $0x8] sm:$0xff]
    %v3541 = vld [vmem:[#allocation8 + $0x10] sm:$0xff]
    %v3542 = vld [vmem:[#allocation8 + $0x18] sm:$0xff]
    %v3543 = vld [vmem:[#allocation8 + $0x20] sm:$0xff]
    %v3544 = vld [vmem:[#allocation8 + $0x28] sm:$0xff]
    %v3545 = vld [vmem:[#allocation8 + $0x30] sm:$0xff]
    %v3546 = vld [vmem:[#allocation8 + $0x38] sm:$0xff]
    %v3547 = vld [vmem:[#allocation8 + $0x40] sm:$0xff]
    %v3548 = vld [vmem:[#allocation8 + $0x48] sm:$0xff]
    %v3549 = vld [vmem:[#allocation8 + $0x50] sm:$0xff]
    %v3550 = vld [vmem:[#allocation8 + $0x58] sm:$0xff]
    %v3551 = vld [vmem:[#allocation8 + $0x60] sm:$0xff]
    %v3552 = vld [vmem:[#allocation8 + $0x68] sm:$0xff]
    %v3553 = vld [vmem:[#allocation8 + $0x70] sm:$0xff]
    %v3554 = vld [vmem:[#allocation8 + $0x78] sm:$0xff]
    %v3555 = vld [vmem:[#allocation8 + $0x80] sm:$0xff]
    %v3556 = vld [vmem:[#allocation8 + $0x88] sm:$0xff]
    %v3557 = vld [vmem:[#allocation8 + $0x90] sm:$0xff]
    %v3558 = vld [vmem:[#allocation8 + $0x98] sm:$0xff]
    %v3559 = vld [vmem:[#allocation8 + $0xa0] sm:$0xff]
    %v3560 = vld [vmem:[#allocation8 + $0xa8] sm:$0xff]
    %v3561 = vld [vmem:[#allocation8 + $0xb0] sm:$0xff]
    %v3562 = vld [vmem:[#allocation8 + $0xb8] sm:$0xff]
    %v3563 = vld [vmem:[#allocation8 + $0xc0] sm:$0xff]
    %v3564 = vld [vmem:[#allocation8 + $0xc8] sm:$0xff]
    %v3565 = vld [vmem:[#allocation8 + $0xd0] sm:$0xff]
    %v3566 = vld [vmem:[#allocation8 + $0xd8] sm:$0xff]
    %v3567 = vld [vmem:[#allocation8 + $0xe0] sm:$0xff]
    %v3568 = vld [vmem:[#allocation8 + $0xe8] sm:$0xff]
    %v3569 = vld [vmem:[#allocation8 + $0xf0] sm:$0xff]
    %v3570 = vld [vmem:[#allocation8 + $0xf8] sm:$0xff]
    %v3603 = vunpack.c.l.b16 %v3539
    %v3604 = vunpack.c.h.b16 %v3539
    %v3605 = vunpack.c.l.b16 %v3540
    %v3606 = vunpack.c.h.b16 %v3540
    %v3607 = vunpack.c.l.b16 %v3541
    %v3608 = vunpack.c.h.b16 %v3541
    %v3609 = vunpack.c.l.b16 %v3542
    %v3610 = vunpack.c.h.b16 %v3542
    %v3611 = vunpack.c.l.b16 %v3543
    %v3612 = vunpack.c.h.b16 %v3543
    %v3613 = vunpack.c.l.b16 %v3544
    %v3614 = vunpack.c.h.b16 %v3544
    %v3615 = vunpack.c.l.b16 %v3545
    %v3616 = vunpack.c.h.b16 %v3545
    %v3617 = vunpack.c.l.b16 %v3546
    %v3618 = vunpack.c.h.b16 %v3546
    %v3619 = vunpack.c.l.b16 %v3547
    %v3620 = vunpack.c.h.b16 %v3547
    %v3621 = vunpack.c.l.b16 %v3548
    %v3622 = vunpack.c.h.b16 %v3548
    %v3623 = vunpack.c.l.b16 %v3549
    %v3624 = vunpack.c.h.b16 %v3549
    %v3625 = vunpack.c.l.b16 %v3550
    %v3626 = vunpack.c.h.b16 %v3550
    %v3627 = vunpack.c.l.b16 %v3551
    %v3628 = vunpack.c.h.b16 %v3551
    %v3629 = vunpack.c.l.b16 %v3552
    %v3630 = vunpack.c.h.b16 %v3552
    %v3631 = vunpack.c.l.b16 %v3553
    %v3632 = vunpack.c.h.b16 %v3553
    %v3633 = vunpack.c.l.b16 %v3554
    %v3634 = vunpack.c.h.b16 %v3554
    %v3635 = vunpack.c.l.b16 %v3555
    %v3636 = vunpack.c.h.b16 %v3555
    %v3637 = vunpack.c.l.b16 %v3556
    %v3638 = vunpack.c.h.b16 %v3556
    %v3639 = vunpack.c.l.b16 %v3557
    %v3640 = vunpack.c.h.b16 %v3557
    %v3641 = vunpack.c.l.b16 %v3558
    %v3642 = vunpack.c.h.b16 %v3558
    %v3643 = vunpack.c.l.b16 %v3559
    %v3644 = vunpack.c.h.b16 %v3559
    %v3645 = vunpack.c.l.b16 %v3560
    %v3646 = vunpack.c.h.b16 %v3560
    %v3647 = vunpack.c.l.b16 %v3561
    %v3648 = vunpack.c.h.b16 %v3561
    %v3649 = vunpack.c.l.b16 %v3562
    %v3650 = vunpack.c.h.b16 %v3562
    %v3651 = vunpack.c.l.b16 %v3563
    %v3652 = vunpack.c.h.b16 %v3563
    %v3653 = vunpack.c.l.b16 %v3564
    %v3654 = vunpack.c.h.b16 %v3564
    %v3655 = vunpack.c.l.b16 %v3565
    %v3656 = vunpack.c.h.b16 %v3565
    %v3657 = vunpack.c.l.b16 %v3566
    %v3658 = vunpack.c.h.b16 %v3566
    %v3659 = vunpack.c.l.b16 %v3567
    %v3660 = vunpack.c.h.b16 %v3567
    %v3661 = vunpack.c.l.b16 %v3568
    %v3662 = vunpack.c.h.b16 %v3568
    %v3663 = vunpack.c.l.b16 %v3569
    %v3664 = vunpack.c.h.b16 %v3569
    %v3665 = vunpack.c.l.b16 %v3570
    %v3666 = vunpack.c.h.b16 %v3570
    %v3667 = vpack.c.b16 %v3607, %v3603
    %v3668 = vpack.c.b16 %v3608, %v3604
    %v3669 = vpack.c.b16 %v3609, %v3605
    %v3670 = vpack.c.b16 %v3610, %v3606
    %v3671 = vpack.c.b16 %v3615, %v3611
    %v3672 = vpack.c.b16 %v3616, %v3612
    %v3673 = vpack.c.b16 %v3617, %v3613
    %v3674 = vpack.c.b16 %v3618, %v3614
    %v3675 = vpack.c.b16 %v3623, %v3619
    %v3676 = vpack.c.b16 %v3624, %v3620
    %v3677 = vpack.c.b16 %v3625, %v3621
    %v3678 = vpack.c.b16 %v3626, %v3622
    %v3679 = vpack.c.b16 %v3631, %v3627
    %v3680 = vpack.c.b16 %v3632, %v3628
    %v3681 = vpack.c.b16 %v3633, %v3629
    %v3682 = vpack.c.b16 %v3634, %v3630
    %v3683 = vpack.c.b16 %v3639, %v3635
    %v3684 = vpack.c.b16 %v3640, %v3636
    %v3685 = vpack.c.b16 %v3641, %v3637
    %v3686 = vpack.c.b16 %v3642, %v3638
    %v3687 = vpack.c.b16 %v3647, %v3643
    %v3688 = vpack.c.b16 %v3648, %v3644
    %v3689 = vpack.c.b16 %v3649, %v3645
    %v3690 = vpack.c.b16 %v3650, %v3646
    %v3691 = vpack.c.b16 %v3655, %v3651
    %v3692 = vpack.c.b16 %v3656, %v3652
    %v3693 = vpack.c.b16 %v3657, %v3653
    %v3694 = vpack.c.b16 %v3658, %v3654
    %v3695 = vpack.c.b16 %v3663, %v3659
    %v3696 = vpack.c.b16 %v3664, %v3660
    %v3697 = vpack.c.b16 %v3665, %v3661
    %v3698 = vpack.c.b16 %v3666, %v3662
    %3731 = vmatprep.subr.bf16.mxu0 %v3668
    %3732 = vmatpush1.bf16.msra.mxu0 %v3667
    %3733 = vmatprep.subr.bf16.mxu0 %v3672
    %3734 = vmatpush1.bf16.msra.mxu0 %v3671
    %3735 = vmatprep.subr.bf16.mxu0 %v3676
    %3736 = vmatpush1.bf16.msra.mxu0 %v3675
    %3737 = vmatprep.subr.bf16.mxu0 %v3680
    %3738 = vmatpush1.bf16.msra.mxu0 %v3679
    %3739 = vmatprep.subr.bf16.mxu0 %v3684
    %3740 = vmatpush1.bf16.msra.mxu0 %v3683
    %3741 = vmatprep.subr.bf16.mxu0 %v3688
    %3742 = vmatpush1.bf16.msra.mxu0 %v3687
    %3743 = vmatprep.subr.bf16.mxu0 %v3692
    %3744 = vmatpush1.bf16.msra.mxu0 %v3691
    %3745 = vmatprep.subr.bf16.mxu0 %v3696
    %3746 = vmatpush1.bf16.msra.mxu0 %v3695
    %3747 = vmatprep.subr.bf16.mxu0 0
    %3748 = vmatpush1.bf16.msra.mxu0 0
    %3749 = vmatprep.subr.bf16.mxu0 0
    %3750 = vmatpush1.bf16.msra.mxu0 0
    %3751 = vmatprep.subr.bf16.mxu0 0
    %3752 = vmatpush1.bf16.msra.mxu0 0
    %3753 = vmatprep.subr.bf16.mxu0 0
    %3754 = vmatpush1.bf16.msra.mxu0 0
    %3755 = vmatprep.subr.bf16.mxu0 0
    %3756 = vmatpush1.bf16.msra.mxu0 0
    %3757 = vmatprep.subr.bf16.mxu0 0
    %3758 = vmatpush1.bf16.msra.mxu0 0
    %3759 = vmatprep.subr.bf16.mxu0 0
    %3760 = vmatpush1.bf16.msra.mxu0 0
    %3761 = vmatprep.subr.bf16.mxu0 0
    %3762 = vmatpush1.bf16.msra.mxu0 0
    %3763 = vmatprep.mubr.bf16.mxu0 0
    %3764 = vmatmul.mubr.bf16.gmra.mrb[0].mxu0 %v3519
    %v3765 = vpop.f32.mrb[0].mxu0
    %v3766 = vadd.f32 0.0, %v3765
    %v3767 = vpop.f32.mrb[0].mxu0
    %v3768 = vadd.f32 0.0, %v3767
    %v3769 = vpop.f32.mrb[0].mxu0
    %v3770 = vadd.f32 0.0, %v3769
    %v3771 = vpop.f32.mrb[0].mxu0
    %v3772 = vadd.f32 0.0, %v3771
    %3773 = vdwg.mxu0
    %3774 = vmatprep.subr.bf16.mxu0 %v3670
    %3775 = vmatpush1.bf16.msra.mxu0 %v3669
    %3776 = vmatprep.subr.bf16.mxu0 %v3674
    %3777 = vmatpush1.bf16.msra.mxu0 %v3673
    %3778 = vmatprep.subr.bf16.mxu0 %v3678
    %3779 = vmatpush1.bf16.msra.mxu0 %v3677
    %3780 = vmatprep.subr.bf16.mxu0 %v3682
    %3781 = vmatpush1.bf16.msra.mxu0 %v3681
    %3782 = vmatprep.subr.bf16.mxu0 %v3686
    %3783 = vmatpush1.bf16.msra.mxu0 %v3685
    %3784 = vmatprep.subr.bf16.mxu0 %v3690
    %3785 = vmatpush1.bf16.msra.mxu0 %v3689
    %3786 = vmatprep.subr.bf16.mxu0 %v3694
    %3787 = vmatpush1.bf16.msra.mxu0 %v3693
    %3788 = vmatprep.subr.bf16.mxu0 %v3698
    %3789 = vmatpush1.bf16.msra.mxu0 %v3697
    %3790 = vmatprep.subr.bf16.mxu0 0
    %3791 = vmatpush1.bf16.msra.mxu0 0
    %3792 = vmatprep.subr.bf16.mxu0 0
    %3793 = vmatpush1.bf16.msra.mxu0 0
    %3794 = vmatprep.subr.bf16.mxu0 0
    %3795 = vmatpush1.bf16.msra.mxu0 0
    %3796 = vmatprep.subr.bf16.mxu0 0
    %3797 = vmatpush1.bf16.msra.mxu0 0
    %3798 = vmatprep.subr.bf16.mxu0 0
    %3799 = vmatpush1.bf16.msra.mxu0 0
    %3800 = vmatprep.subr.bf16.mxu0 0
    %3801 = vmatpush1.bf16.msra.mxu0 0
    %3802 = vmatprep.subr.bf16.mxu0 0
    %3803 = vmatpush1.bf16.msra.mxu0 0
    %3804 = vmatprep.subr.bf16.mxu0 0
    %3805 = vmatpush1.bf16.msra.mxu0 0
    %3806 = vmatprep.mubr.bf16.mxu0 0
    %3807 = vmatmul.mubr.bf16.gmra.mrb[0].mxu0 %v3519
    %v3808 = vpop.f32.mrb[0].mxu0
    %v3809 = vadd.f32 0.0, %v3808
    %v3810 = vpop.f32.mrb[0].mxu0
    %v3811 = vadd.f32 0.0, %v3810
    %v3812 = vpop.f32.mrb[0].mxu0
    %v3813 = vadd.f32 0.0, %v3812
    %v3814 = vpop.f32.mrb[0].mxu0
    %v3815 = vadd.f32 0.0, %v3814
    %3816 = vdwg.mxu0
    %v3817 = vadd.f32 %v3531, %v3766
    %v3818 = vadd.f32 %v3532, %v3768
    %v3819 = vadd.f32 %v3533, %v3809
    %v3820 = vadd.f32 %v3534, %v3811
    %v3821 = vadd.f32 %v3535, %v3770
    %v3822 = vadd.f32 %v3536, %v3772
    %v3823 = vadd.f32 %v3537, %v3813
    %v3824 = vadd.f32 %v3538, %v3815
    %v3825 = vxor.u32 %v3817, 2147483648
    %v3826 = vxor.u32 %v3821, 2147483648
    %v3827 = vmul.f32 %v3825, 1.442695
    %v3828 = vpow.pop %v3827
    %v3829 = vmul.f32 %v3826, 1.442695
    %v3830 = vpow.pop %v3829
    %v3831 = vadd.f32 %v3828, 1.0
    %v3832 = vadd.f32 %v3830, 1.0
    %v3833 = vrcp.pop %v3831
    %v3834 = vmul.f32 1.0, %v3833
    %v3835 = vrcp.pop %v3832
    %v3836 = vmul.f32 1.0, %v3835
    %v3837 = vxor.u32 %v3818, 2147483648
    %v3838 = vxor.u32 %v3822, 2147483648
    %v3839 = vmul.f32 %v3837, 1.442695
    %v3840 = vpow.pop %v3839
    %v3841 = vmul.f32 %v3838, 1.442695
    %v3842 = vpow.pop %v3841
    %v3843 = vadd.f32 %v3840, 1.0
    %v3844 = vadd.f32 %v3842, 1.0
    %v3845 = vrcp.pop %v3843
    %v3846 = vmul.f32 1.0, %v3845
    %v3847 = vrcp.pop %v3844
    %v3848 = vmul.f32 1.0, %v3847
    %v3849 = vtanh.pop %v3819
    %v3850 = vtanh.pop %v3823
    %v3851 = vxor.u32 %v3820, 2147483648
    %v3852 = vxor.u32 %v3824, 2147483648
    %v3853 = vmul.f32 %v3851, 1.442695
    %v3854 = vpow.pop %v3853
    %v3855 = vmul.f32 %v3852, 1.442695
    %v3856 = vpow.pop %v3855
    %v3857 = vadd.f32 %v3854, 1.0
    %v3858 = vadd.f32 %v3856, 1.0
    %v3859 = vrcp.pop %v3857
    %v3860 = vmul.f32 1.0, %v3859
    %v3861 = vrcp.pop %v3858
    %v3862 = vmul.f32 1.0, %v3861
    %v3863 = vmul.f32 %v3846, %v3513
    %v3864 = vmul.f32 %v3848, %v3514
    %v3865 = vmul.f32 %v3834, %v3849
    %v3866 = vmul.f32 %v3836, %v3850
    %v3867 = vadd.f32 %v3863, %v3865
    %v3868 = vadd.f32 %v3864, %v3866
    %v3869 = vtanh.pop %v3867
    %v3870 = vtanh.pop %v3868
    %v3871 = vmul.f32 %v3860, %v3869
    %v3872 = vmul.f32 %v3862, %v3870
    %v3873 = vpack.c.bf16 %v3872, %v3871
    %v3875 = vunpack.c.l.b16 %v3873
    %v3876 = vunpack.c.h.b16 %v3873
    %v3877 = vpack.c.b16 %v3875, %v3875
    %v3878 = vpack.c.b16 %v3876, %v3876
    %s3881 = scalar_lea.vmem [#allocation12], 64
    %3882 = vst [vmem:[%s3881] sm:$0xf] %v3877
    %3883 = vst [vmem:[%s3881 + $0x4] sm:$0xf] %v3878
    %v3884 = vld [vmem:[#allocation12] sm:$0xf]
    %v3885 = vld [vmem:[#allocation12 + $0x4] sm:$0xf]
    %v3886 = vld [vmem:[#allocation12 + $0x8] sm:$0xf]
    %v3887 = vld [vmem:[#allocation12 + $0xc] sm:$0xf]
    %v3888 = vld [vmem:[#allocation12 + $0x10] sm:$0xf]
    %v3889 = vld [vmem:[#allocation12 + $0x14] sm:$0xf]
    %v3890 = vld [vmem:[#allocation12 + $0x18] sm:$0xf]
    %v3891 = vld [vmem:[#allocation12 + $0x1c] sm:$0xf]
    %v3892 = vld [vmem:[#allocation12 + $0x20] sm:$0xf]
    %v3893 = vld [vmem:[#allocation12 + $0x24] sm:$0xf]
    %v3894 = vld [vmem:[#allocation12 + $0x28] sm:$0xf]
    %v3895 = vld [vmem:[#allocation12 + $0x2c] sm:$0xf]
    %v3896 = vld [vmem:[#allocation12 + $0x30] sm:$0xf]
    %v3897 = vld [vmem:[#allocation12 + $0x34] sm:$0xf]
    %v3898 = vld [vmem:[#allocation12 + $0x38] sm:$0xf]
    %v3899 = vld [vmem:[#allocation12 + $0x3c] sm:$0xf]
    %v3900 = vld [vmem:[#allocation12 + $0x40] sm:$0xf]
    %v3901 = vld [vmem:[#allocation12 + $0x44] sm:$0xf]
    %v3902 = vld [vmem:[#allocation9] sm:$0xff]
    %v3903 = vld [vmem:[#allocation9 + $0x8] sm:$0xff]
    %v3904 = vld [vmem:[#allocation9 + $0x10] sm:$0xff]
    %v3905 = vld [vmem:[#allocation9 + $0x18] sm:$0xff]
    %v3906 = vld [vmem:[#allocation9 + $0x20] sm:$0xff]
    %v3907 = vld [vmem:[#allocation9 + $0x28] sm:$0xff]
    %v3908 = vld [vmem:[#allocation9 + $0x30] sm:$0xff]
    %v3909 = vld [vmem:[#allocation9 + $0x38] sm:$0xff]
    %v3910 = vld [vmem:[#allocation9 + $0x40] sm:$0xff]
    %v3911 = vld [vmem:[#allocation9 + $0x48] sm:$0xff]
    %v3912 = vld [vmem:[#allocation9 + $0x50] sm:$0xff]
    %v3913 = vld [vmem:[#allocation9 + $0x58] sm:$0xff]
    %v3914 = vld [vmem:[#allocation9 + $0x60] sm:$0xff]
    %v3915 = vld [vmem:[#allocation9 + $0x68] sm:$0xff]
    %v3916 = vld [vmem:[#allocation9 + $0x70] sm:$0xff]
    %v3917 = vld [vmem:[#allocation9 + $0x78] sm:$0xff]
    %v3918 = vld [vmem:[#allocation9 + $0x80] sm:$0xff]
    %v3919 = vld [vmem:[#allocation9 + $0x88] sm:$0xff]
    %v3920 = vld [vmem:[#allocation9 + $0x90] sm:$0xff]
    %v3921 = vld [vmem:[#allocation9 + $0x98] sm:$0xff]
    %v3922 = vld [vmem:[#allocation9 + $0xa0] sm:$0xff]
    %v3923 = vld [vmem:[#allocation9 + $0xa8] sm:$0xff]
    %v3924 = vld [vmem:[#allocation9 + $0xb0] sm:$0xff]
    %v3925 = vld [vmem:[#allocation9 + $0xb8] sm:$0xff]
    %v3926 = vld [vmem:[#allocation9 + $0xc0] sm:$0xff]
    %v3927 = vld [vmem:[#allocation9 + $0xc8] sm:$0xff]
    %v3928 = vld [vmem:[#allocation9 + $0xd0] sm:$0xff]
    %v3929 = vld [vmem:[#allocation9 + $0xd8] sm:$0xff]
    %v3930 = vld [vmem:[#allocation9 + $0xe0] sm:$0xff]
    %v3931 = vld [vmem:[#allocation9 + $0xe8] sm:$0xff]
    %v3932 = vld [vmem:[#allocation9 + $0xf0] sm:$0xff]
    %v3933 = vld [vmem:[#allocation9 + $0xf8] sm:$0xff]
    %v3934 = vld [vmem:[%s6] sm:$0xf]
    %v3936 = vlaneseq
    %v3937 = vshrl.u32 %v3936, 7
    %v3938 = vsub.s32 0, %v3937
    %v3939 = vrot.slane %v3934, %v3938
    %v3940 = vlaneseq
    %v3941 = vshrl.u32 %v3940, 7
    %v3942 = vsub.s32 1, %v3941
    %v3943 = vrot.slane %v3934, %v3942
    %v3944 = vlaneseq
    %v3945 = vshrl.u32 %v3944, 7
    %v3946 = vsub.s32 2, %v3945
    %v3947 = vrot.slane %v3934, %v3946
    %v3948 = vlaneseq
    %v3949 = vshrl.u32 %v3948, 7
    %v3950 = vsub.s32 3, %v3949
    %v3951 = vrot.slane %v3934, %v3950
    %v3974 = vunpack.c.l.b16 %v3884
    %v3975 = vunpack.c.l.b16 %v3885
    %v3976 = vunpack.c.l.b16 %v3886
    %v3977 = vunpack.c.l.b16 %v3887
    %v3978 = vunpack.c.l.b16 %v3888
    %v3979 = vunpack.c.l.b16 %v3889
    %v3980 = vunpack.c.l.b16 %v3890
    %v3981 = vunpack.c.l.b16 %v3891
    %v3982 = vunpack.c.l.b16 %v3892
    %v3983 = vunpack.c.l.b16 %v3893
    %v3984 = vunpack.c.l.b16 %v3894
    %v3985 = vunpack.c.l.b16 %v3895
    %v3986 = vunpack.c.l.b16 %v3896
    %v3987 = vunpack.c.l.b16 %v3897
    %v3988 = vunpack.c.l.b16 %v3898
    %v3989 = vunpack.c.l.b16 %v3899
    %v3990 = vunpack.c.l.b16 %v3900
    %v3991 = vunpack.c.l.b16 %v3901
    %v3992 = vpack.c.b16 %v3975, %v3974
    %v3993 = vpack.c.b16 %v3977, %v3976
    %v3994 = vpack.c.b16 %v3979, %v3978
    %v3995 = vpack.c.b16 %v3981, %v3980
    %v3996 = vpack.c.b16 %v3983, %v3982
    %v3997 = vpack.c.b16 %v3985, %v3984
    %v3998 = vpack.c.b16 %v3987, %v3986
    %v3999 = vpack.c.b16 %v3989, %v3988
    %v4000 = vpack.c.b16 %v3991, %v3990
    %v4042 = vunpack.c.l.b16 %v3902
    %v4043 = vunpack.c.h.b16 %v3902
    %v4044 = vunpack.c.l.b16 %v3903
    %v4045 = vunpack.c.h.b16 %v3903
    %v4046 = vunpack.c.l.b16 %v3904
    %v4047 = vunpack.c.h.b16 %v3904
    %v4048 = vunpack.c.l.b16 %v3905
    %v4049 = vunpack.c.h.b16 %v3905
    %v4050 = vunpack.c.l.b16 %v3906
    %v4051 = vunpack.c.h.b16 %v3906
    %v4052 = vunpack.c.l.b16 %v3907
    %v4053 = vunpack.c.h.b16 %v3907
    %v4054 = vunpack.c.l.b16 %v3908
    %v4055 = vunpack.c.h.b16 %v3908
    %v4056 = vunpack.c.l.b16 %v3909
    %v4057 = vunpack.c.h.b16 %v3909
    %v4058 = vunpack.c.l.b16 %v3910
    %v4059 = vunpack.c.h.b16 %v3910
    %v4060 = vunpack.c.l.b16 %v3911
    %v4061 = vunpack.c.h.b16 %v3911
    %v4062 = vunpack.c.l.b16 %v3912
    %v4063 = vunpack.c.h.b16 %v3912
    %v4064 = vunpack.c.l.b16 %v3913
    %v4065 = vunpack.c.h.b16 %v3913
    %v4066 = vunpack.c.l.b16 %v3914
    %v4067 = vunpack.c.h.b16 %v3914
    %v4068 = vunpack.c.l.b16 %v3915
    %v4069 = vunpack.c.h.b16 %v3915
    %v4070 = vunpack.c.l.b16 %v3916
    %v4071 = vunpack.c.h.b16 %v3916
    %v4072 = vunpack.c.l.b16 %v3917
    %v4073 = vunpack.c.h.b16 %v3917
    %v4074 = vunpack.c.l.b16 %v3918
    %v4075 = vunpack.c.h.b16 %v3918
    %v4076 = vunpack.c.l.b16 %v3919
    %v4077 = vunpack.c.h.b16 %v3919
    %v4078 = vunpack.c.l.b16 %v3920
    %v4079 = vunpack.c.h.b16 %v3920
    %v4080 = vunpack.c.l.b16 %v3921
    %v4081 = vunpack.c.h.b16 %v3921
    %v4082 = vunpack.c.l.b16 %v3922
    %v4083 = vunpack.c.h.b16 %v3922
    %v4084 = vunpack.c.l.b16 %v3923
    %v4085 = vunpack.c.h.b16 %v3923
    %v4086 = vunpack.c.l.b16 %v3924
    %v4087 = vunpack.c.h.b16 %v3924
    %v4088 = vunpack.c.l.b16 %v3925
    %v4089 = vunpack.c.h.b16 %v3925
    %v4090 = vunpack.c.l.b16 %v3926
    %v4091 = vunpack.c.h.b16 %v3926
    %v4092 = vunpack.c.l.b16 %v3927
    %v4093 = vunpack.c.h.b16 %v3927
    %v4094 = vunpack.c.l.b16 %v3928
    %v4095 = vunpack.c.h.b16 %v3928
    %v4096 = vunpack.c.l.b16 %v3929
    %v4097 = vunpack.c.h.b16 %v3929
    %v4098 = vunpack.c.l.b16 %v3930
    %v4099 = vunpack.c.h.b16 %v3930
    %v4100 = vunpack.c.l.b16 %v3931
    %v4101 = vunpack.c.h.b16 %v3931
    %v4102 = vunpack.c.l.b16 %v3932
    %v4103 = vunpack.c.h.b16 %v3932
    %v4104 = vunpack.c.l.b16 %v3933
    %v4105 = vunpack.c.h.b16 %v3933
    %v4106 = vpack.c.b16 %v4046, %v4042
    %v4107 = vpack.c.b16 %v4047, %v4043
    %v4108 = vpack.c.b16 %v4048, %v4044
    %v4109 = vpack.c.b16 %v4049, %v4045
    %v4110 = vpack.c.b16 %v4054, %v4050
    %v4111 = vpack.c.b16 %v4055, %v4051
    %v4112 = vpack.c.b16 %v4056, %v4052
    %v4113 = vpack.c.b16 %v4057, %v4053
    %v4114 = vpack.c.b16 %v4062, %v4058
    %v4115 = vpack.c.b16 %v4063, %v4059
    %v4116 = vpack.c.b16 %v4064, %v4060
    %v4117 = vpack.c.b16 %v4065, %v4061
    %v4118 = vpack.c.b16 %v4070, %v4066
    %v4119 = vpack.c.b16 %v4071, %v4067
    %v4120 = vpack.c.b16 %v4072, %v4068
    %v4121 = vpack.c.b16 %v4073, %v4069
    %v4122 = vpack.c.b16 %v4078, %v4074
    %v4123 = vpack.c.b16 %v4079, %v4075
    %v4124 = vpack.c.b16 %v4080, %v4076
    %v4125 = vpack.c.b16 %v4081, %v4077
    %v4126 = vpack.c.b16 %v4086, %v4082
    %v4127 = vpack.c.b16 %v4087, %v4083
    %v4128 = vpack.c.b16 %v4088, %v4084
    %v4129 = vpack.c.b16 %v4089, %v4085
    %v4130 = vpack.c.b16 %v4094, %v4090
    %v4131 = vpack.c.b16 %v4095, %v4091
    %v4132 = vpack.c.b16 %v4096, %v4092
    %v4133 = vpack.c.b16 %v4097, %v4093
    %v4134 = vpack.c.b16 %v4102, %v4098
    %v4135 = vpack.c.b16 %v4103, %v4099
    %v4136 = vpack.c.b16 %v4104, %v4100
    %v4137 = vpack.c.b16 %v4105, %v4101
    %4170 = vmatprep.subr.bf16.mxu0 %v4107
    %4171 = vmatpush1.bf16.msra.mxu0 %v4106
    %4172 = vmatprep.subr.bf16.mxu0 %v4111
    %4173 = vmatpush1.bf16.msra.mxu0 %v4110
    %4174 = vmatprep.subr.bf16.mxu0 %v4115
    %4175 = vmatpush1.bf16.msra.mxu0 %v4114
    %4176 = vmatprep.subr.bf16.mxu0 %v4119
    %4177 = vmatpush1.bf16.msra.mxu0 %v4118
    %4178 = vmatprep.subr.bf16.mxu0 %v4123
    %4179 = vmatpush1.bf16.msra.mxu0 %v4122
    %4180 = vmatprep.subr.bf16.mxu0 %v4127
    %4181 = vmatpush1.bf16.msra.mxu0 %v4126
    %4182 = vmatprep.subr.bf16.mxu0 %v4131
    %4183 = vmatpush1.bf16.msra.mxu0 %v4130
    %4184 = vmatprep.subr.bf16.mxu0 %v4135
    %4185 = vmatpush1.bf16.msra.mxu0 %v4134
    %4186 = vmatprep.subr.bf16.mxu0 0
    %4187 = vmatpush1.bf16.msra.mxu0 0
    %4188 = vmatprep.subr.bf16.mxu0 0
    %4189 = vmatpush1.bf16.msra.mxu0 0
    %4190 = vmatprep.subr.bf16.mxu0 0
    %4191 = vmatpush1.bf16.msra.mxu0 0
    %4192 = vmatprep.subr.bf16.mxu0 0
    %4193 = vmatpush1.bf16.msra.mxu0 0
    %4194 = vmatprep.subr.bf16.mxu0 0
    %4195 = vmatpush1.bf16.msra.mxu0 0
    %4196 = vmatprep.subr.bf16.mxu0 0
    %4197 = vmatpush1.bf16.msra.mxu0 0
    %4198 = vmatprep.subr.bf16.mxu0 0
    %4199 = vmatpush1.bf16.msra.mxu0 0
    %4200 = vmatprep.subr.bf16.mxu0 0
    %4201 = vmatpush1.bf16.msra.mxu0 0
    %4202 = vmatprep.mubr.bf16.mxu0 0
    %4203 = vmatmul.mubr.bf16.gmra.mrb[0].mxu0 %v3992
    %v4204 = vpop.f32.mrb[0].mxu0
    %v4205 = vadd.f32 %v3939, %v4204
    %v4206 = vpop.f32.mrb[0].mxu0
    %v4207 = vadd.f32 %v3943, %v4206
    %v4208 = vpop.f32.mrb[0].mxu0
    %v4209 = vadd.f32 %v3939, %v4208
    %v4210 = vpop.f32.mrb[0].mxu0
    %v4211 = vadd.f32 %v3943, %v4210
    %4212 = vmatprep.mubr.bf16.mxu0 0
    %4213 = vmatmul.mubr.bf16.gmra.mrb[0].mxu0 %v3993
    %v4214 = vpop.f32.mrb[0].mxu0
    %v4215 = vadd.f32 %v3939, %v4214
    %v4216 = vpop.f32.mrb[0].mxu0
    %v4217 = vadd.f32 %v3943, %v4216
    %v4218 = vpop.f32.mrb[0].mxu0
    %v4219 = vadd.f32 %v3939, %v4218
    %v4220 = vpop.f32.mrb[0].mxu0
    %v4221 = vadd.f32 %v3943, %v4220
    %4222 = vmatprep.mubr.bf16.mxu0 0
    %4223 = vmatmul.mubr.bf16.gmra.mrb[0].mxu0 %v3994
    %v4224 = vpop.f32.mrb[0].mxu0
    %v4225 = vadd.f32 %v3939, %v4224
    %v4226 = vpop.f32.mrb[0].mxu0
    %v4227 = vadd.f32 %v3943, %v4226
    %v4228 = vpop.f32.mrb[0].mxu0
    %v4229 = vadd.f32 %v3939, %v4228
    %v4230 = vpop.f32.mrb[0].mxu0
    %v4231 = vadd.f32 %v3943, %v4230
    %4232 = vmatprep.mubr.bf16.mxu0 0
    %4233 = vmatmul.mubr.bf16.gmra.mrb[0].mxu0 %v3995
    %v4234 = vpop.f32.mrb[0].mxu0
    %v4235 = vadd.f32 %v3939, %v4234
    %v4236 = vpop.f32.mrb[0].mxu0
    %v4237 = vadd.f32 %v3943, %v4236
    %v4238 = vpop.f32.mrb[0].mxu0
    %v4239 = vadd.f32 %v3939, %v4238
    %v4240 = vpop.f32.mrb[0].mxu0
    %v4241 = vadd.f32 %v3943, %v4240
    %4242 = vmatprep.mubr.bf16.mxu0 0
    %4243 = vmatmul.mubr.bf16.gmra.mrb[0].mxu0 %v3996
    %v4244 = vpop.f32.mrb[0].mxu0
    %v4245 = vadd.f32 %v3939, %v4244
    %v4246 = vpop.f32.mrb[0].mxu0
    %v4247 = vadd.f32 %v3943, %v4246
    %v4248 = vpop.f32.mrb[0].mxu0
    %v4249 = vadd.f32 %v3939, %v4248
    %v4250 = vpop.f32.mrb[0].mxu0
    %v4251 = vadd.f32 %v3943, %v4250
    %4252 = vmatprep.mubr.bf16.mxu0 0
    %4253 = vmatmul.mubr.bf16.gmra.mrb[0].mxu0 %v3997
    %v4254 = vpop.f32.mrb[0].mxu0
    %v4255 = vadd.f32 %v3939, %v4254
    %v4256 = vpop.f32.mrb[0].mxu0
    %v4257 = vadd.f32 %v3943, %v4256
    %v4258 = vpop.f32.mrb[0].mxu0
    %v4259 = vadd.f32 %v3939, %v4258
    %v4260 = vpop.f32.mrb[0].mxu0
    %v4261 = vadd.f32 %v3943, %v4260
    %4262 = vmatprep.mubr.bf16.mxu0 0
    %4263 = vmatmul.mubr.bf16.gmra.mrb[0].mxu0 %v3998
    %v4264 = vpop.f32.mrb[0].mxu0
    %v4265 = vadd.f32 %v3939, %v4264
    %v4266 = vpop.f32.mrb[0].mxu0
    %v4267 = vadd.f32 %v3943, %v4266
    %v4268 = vpop.f32.mrb[0].mxu0
    %v4269 = vadd.f32 %v3939, %v4268
    %v4270 = vpop.f32.mrb[0].mxu0
    %v4271 = vadd.f32 %v3943, %v4270
    %4272 = vmatprep.mubr.bf16.mxu0 0
    %4273 = vmatmul.mubr.bf16.gmra.mrb[0].mxu0 %v3999
    %v4274 = vpop.f32.mrb[0].mxu0
    %v4275 = vadd.f32 %v3939, %v4274
    %v4276 = vpop.f32.mrb[0].mxu0
    %v4277 = vadd.f32 %v3943, %v4276
    %v4278 = vpop.f32.mrb[0].mxu0
    %v4279 = vadd.f32 %v3939, %v4278
    %v4280 = vpop.f32.mrb[0].mxu0
    %v4281 = vadd.f32 %v3943, %v4280
    %4282 = vmatprep.mubr.bf16.mxu0 0
    %4283 = vmatmul.mubr.bf16.gmra.mrb[0].mxu0 %v4000
    %v4284 = vpop.f32.mrb[0].mxu0
    %v4285 = vadd.f32 %v3939, %v4284
    %v4286 = vpop.f32.mrb[0].mxu0
    %v4287 = vadd.f32 %v3943, %v4286
    %v4288 = vpop.f32.mrb[0].mxu0
    %v4289 = vadd.f32 %v3939, %v4288
    %v4290 = vpop.f32.mrb[0].mxu0
    %v4291 = vadd.f32 %v3943, %v4290
    %4292 = vdwg.mxu0
    %4293 = vmatprep.subr.bf16.mxu0 %v4109
    %4294 = vmatpush1.bf16.msra.mxu0 %v4108
    %4295 = vmatprep.subr.bf16.mxu0 %v4113
    %4296 = vmatpush1.bf16.msra.mxu0 %v4112
    %4297 = vmatprep.subr.bf16.mxu0 %v4117
    %4298 = vmatpush1.bf16.msra.mxu0 %v4116
    %4299 = vmatprep.subr.bf16.mxu0 %v4121
    %4300 = vmatpush1.bf16.msra.mxu0 %v4120
    %4301 = vmatprep.subr.bf16.mxu0 %v4125
    %4302 = vmatpush1.bf16.msra.mxu0 %v4124
    %4303 = vmatprep.subr.bf16.mxu0 %v4129
    %4304 = vmatpush1.bf16.msra.mxu0 %v4128
    %4305 = vmatprep.subr.bf16.mxu0 %v4133
    %4306 = vmatpush1.bf16.msra.mxu0 %v4132
    %4307 = vmatprep.subr.bf16.mxu0 %v4137
    %4308 = vmatpush1.bf16.msra.mxu0 %v4136
    %4309 = vmatprep.subr.bf16.mxu0 0
    %4310 = vmatpush1.bf16.msra.mxu0 0
    %4311 = vmatprep.subr.bf16.mxu0 0
    %4312 = vmatpush1.bf16.msra.mxu0 0
    %4313 = vmatprep.subr.bf16.mxu0 0
    %4314 = vmatpush1.bf16.msra.mxu0 0
    %4315 = vmatprep.subr.bf16.mxu0 0
    %4316 = vmatpush1.bf16.msra.mxu0 0
    %4317 = vmatprep.subr.bf16.mxu0 0
    %4318 = vmatpush1.bf16.msra.mxu0 0
    %4319 = vmatprep.subr.bf16.mxu0 0
    %4320 = vmatpush1.bf16.msra.mxu0 0
    %4321 = vmatprep.subr.bf16.mxu0 0
    %4322 = vmatpush1.bf16.msra.mxu0 0
    %4323 = vmatprep.subr.bf16.mxu0 0
    %4324 = vmatpush1.bf16.msra.mxu0 0
    %4325 = vmatprep.mubr.bf16.mxu0 0
    %4326 = vmatmul.mubr.bf16.gmra.mrb[0].mxu0 %v3992
    %v4327 = vpop.f32.mrb[0].mxu0
    %v4328 = vadd.f32 %v3947, %v4327
    %v4329 = vpop.f32.mrb[0].mxu0
    %v4330 = vadd.f32 %v3951, %v4329
    %v4331 = vpop.f32.mrb[0].mxu0
    %v4332 = vadd.f32 %v3947, %v4331
    %v4333 = vpop.f32.mrb[0].mxu0
    %v4334 = vadd.f32 %v3951, %v4333
    %4335 = vmatprep.mubr.bf16.mxu0 0
    %4336 = vmatmul.mubr.bf16.gmra.mrb[0].mxu0 %v3993
    %v4337 = vpop.f32.mrb[0].mxu0
    %v4338 = vadd.f32 %v3947, %v4337
    %v4339 = vpop.f32.mrb[0].mxu0
    %v4340 = vadd.f32 %v3951, %v4339
    %v4341 = vpop.f32.mrb[0].mxu0
    %v4342 = vadd.f32 %v3947, %v4341
    %v4343 = vpop.f32.mrb[0].mxu0
    %v4344 = vadd.f32 %v3951, %v4343
    %4345 = vmatprep.mubr.bf16.mxu0 0
    %4346 = vmatmul.mubr.bf16.gmra.mrb[0].mxu0 %v3994
    %v4347 = vpop.f32.mrb[0].mxu0
    %v4348 = vadd.f32 %v3947, %v4347
    %v4349 = vpop.f32.mrb[0].mxu0
    %v4350 = vadd.f32 %v3951, %v4349
    %v4351 = vpop.f32.mrb[0].mxu0
    %v4352 = vadd.f32 %v3947, %v4351
    %v4353 = vpop.f32.mrb[0].mxu0
    %v4354 = vadd.f32 %v3951, %v4353
    %4355 = vmatprep.mubr.bf16.mxu0 0
    %4356 = vmatmul.mubr.bf16.gmra.mrb[0].mxu0 %v3995
    %v4357 = vpop.f32.mrb[0].mxu0
    %v4358 = vadd.f32 %v3947, %v4357
    %v4359 = vpop.f32.mrb[0].mxu0
    %v4360 = vadd.f32 %v3951, %v4359
    %v4361 = vpop.f32.mrb[0].mxu0
    %v4362 = vadd.f32 %v3947, %v4361
    %v4363 = vpop.f32.mrb[0].mxu0
    %v4364 = vadd.f32 %v3951, %v4363
    %4365 = vmatprep.mubr.bf16.mxu0 0
    %4366 = vmatmul.mubr.bf16.gmra.mrb[0].mxu0 %v3996
    %v4367 = vpop.f32.mrb[0].mxu0
    %v4368 = vadd.f32 %v3947, %v4367
    %v4369 = vpop.f32.mrb[0].mxu0
    %v4370 = vadd.f32 %v3951, %v4369
    %v4371 = vpop.f32.mrb[0].mxu0
    %v4372 = vadd.f32 %v3947, %v4371
    %v4373 = vpop.f32.mrb[0].mxu0
    %v4374 = vadd.f32 %v3951, %v4373
    %4375 = vmatprep.mubr.bf16.mxu0 0
    %4376 = vmatmul.mubr.bf16.gmra.mrb[0].mxu0 %v3997
    %v4377 = vpop.f32.mrb[0].mxu0
    %v4378 = vadd.f32 %v3947, %v4377
    %v4379 = vpop.f32.mrb[0].mxu0
    %v4380 = vadd.f32 %v3951, %v4379
    %v4381 = vpop.f32.mrb[0].mxu0
    %v4382 = vadd.f32 %v3947, %v4381
    %v4383 = vpop.f32.mrb[0].mxu0
    %v4384 = vadd.f32 %v3951, %v4383
    %4385 = vmatprep.mubr.bf16.mxu0 0
    %4386 = vmatmul.mubr.bf16.gmra.mrb[0].mxu0 %v3998
    %v4387 = vpop.f32.mrb[0].mxu0
    %v4388 = vadd.f32 %v3947, %v4387
    %v4389 = vpop.f32.mrb[0].mxu0
    %v4390 = vadd.f32 %v3951, %v4389
    %v4391 = vpop.f32.mrb[0].mxu0
    %v4392 = vadd.f32 %v3947, %v4391
    %v4393 = vpop.f32.mrb[0].mxu0
    %v4394 = vadd.f32 %v3951, %v4393
    %4395 = vmatprep.mubr.bf16.mxu0 0
    %4396 = vmatmul.mubr.bf16.gmra.mrb[0].mxu0 %v3999
    %v4397 = vpop.f32.mrb[0].mxu0
    %v4398 = vadd.f32 %v3947, %v4397
    %v4399 = vpop.f32.mrb[0].mxu0
    %v4400 = vadd.f32 %v3951, %v4399
    %v4401 = vpop.f32.mrb[0].mxu0
    %v4402 = vadd.f32 %v3947, %v4401
    %v4403 = vpop.f32.mrb[0].mxu0
    %v4404 = vadd.f32 %v3951, %v4403
    %4405 = vmatprep.mubr.bf16.mxu0 0
    %4406 = vmatmul.mubr.bf16.gmra.mrb[0].mxu0 %v4000
    %v4407 = vpop.f32.mrb[0].mxu0
    %v4408 = vadd.f32 %v3947, %v4407
    %v4409 = vpop.f32.mrb[0].mxu0
    %v4410 = vadd.f32 %v3951, %v4409
    %v4411 = vpop.f32.mrb[0].mxu0
    %v4412 = vadd.f32 %v3947, %v4411
    %v4413 = vpop.f32.mrb[0].mxu0
    %v4414 = vadd.f32 %v3951, %v4413
    %4415 = vdwg.mxu0
    %4416 = vst [vmem:[#allocation2] sm:$0xff] %v4205
    %4417 = vst [vmem:[#allocation2 + $0x8] sm:$0xff] %v4207
    %4418 = vst [vmem:[#allocation2 + $0x10] sm:$0xff] %v4328
    %4419 = vst [vmem:[#allocation2 + $0x18] sm:$0xff] %v4330
    %4420 = vst [vmem:[#allocation2 + $0x20] sm:$0xff] %v4209
    %4421 = vst [vmem:[#allocation2 + $0x28] sm:$0xff] %v4211
    %4422 = vst [vmem:[#allocation2 + $0x30] sm:$0xff] %v4332
    %4423 = vst [vmem:[#allocation2 + $0x38] sm:$0xff] %v4334
    %4424 = vst [vmem:[#allocation2 + $0x40] sm:$0xff] %v4215
    %4425 = vst [vmem:[#allocation2 + $0x48] sm:$0xff] %v4217
    %4426 = vst [vmem:[#allocation2 + $0x50] sm:$0xff] %v4338
    %4427 = vst [vmem:[#allocation2 + $0x58] sm:$0xff] %v4340
    %4428 = vst [vmem:[#allocation2 + $0x60] sm:$0xff] %v4219
    %4429 = vst [vmem:[#allocation2 + $0x68] sm:$0xff] %v4221
    %4430 = vst [vmem:[#allocation2 + $0x70] sm:$0xff] %v4342
    %4431 = vst [vmem:[#allocation2 + $0x78] sm:$0xff] %v4344
    %4432 = vst [vmem:[#allocation2 + $0x80] sm:$0xff] %v4225
    %4433 = vst [vmem:[#allocation2 + $0x88] sm:$0xff] %v4227
    %4434 = vst [vmem:[#allocation2 + $0x90] sm:$0xff] %v4348
    %4435 = vst [vmem:[#allocation2 + $0x98] sm:$0xff] %v4350
    %4436 = vst [vmem:[#allocation2 + $0xa0] sm:$0xff] %v4229
    %4437 = vst [vmem:[#allocation2 + $0xa8] sm:$0xff] %v4231
    %4438 = vst [vmem:[#allocation2 + $0xb0] sm:$0xff] %v4352
    %4439 = vst [vmem:[#allocation2 + $0xb8] sm:$0xff] %v4354
    %4440 = vst [vmem:[#allocation2 + $0xc0] sm:$0xff] %v4235
    %4441 = vst [vmem:[#allocation2 + $0xc8] sm:$0xff] %v4237
    %4442 = vst [vmem:[#allocation2 + $0xd0] sm:$0xff] %v4358
    %4443 = vst [vmem:[#allocation2 + $0xd8] sm:$0xff] %v4360
    %4444 = vst [vmem:[#allocation2 + $0xe0] sm:$0xff] %v4239
    %4445 = vst [vmem:[#allocation2 + $0xe8] sm:$0xff] %v4241
    %4446 = vst [vmem:[#allocation2 + $0xf0] sm:$0xff] %v4362
    %4447 = vst [vmem:[#allocation2 + $0xf8] sm:$0xff] %v4364
    %4448 = vst [vmem:[#allocation2 + $0x100] sm:$0xff] %v4245
    %4449 = vst [vmem:[#allocation2 + $0x108] sm:$0xff] %v4247
    %4450 = vst [vmem:[#allocation2 + $0x110] sm:$0xff] %v4368
    %4451 = vst [vmem:[#allocation2 + $0x118] sm:$0xff] %v4370
    %4452 = vst [vmem:[#allocation2 + $0x120] sm:$0xff] %v4249
    %4453 = vst [vmem:[#allocation2 + $0x128] sm:$0xff] %v4251
    %4454 = vst [vmem:[#allocation2 + $0x130] sm:$0xff] %v4372
    %4455 = vst [vmem:[#allocation2 + $0x138] sm:$0xff] %v4374
    %4456 = vst [vmem:[#allocation2 + $0x140] sm:$0xff] %v4255
    %4457 = vst [vmem:[#allocation2 + $0x148] sm:$0xff] %v4257
    %4458 = vst [vmem:[#allocation2 + $0x150] sm:$0xff] %v4378
    %4459 = vst [vmem:[#allocation2 + $0x158] sm:$0xff] %v4380
    %4460 = vst [vmem:[#allocation2 + $0x160] sm:$0xff] %v4259
    %4461 = vst [vmem:[#allocation2 + $0x168] sm:$0xff] %v4261
    %4462 = vst [vmem:[#allocation2 + $0x170] sm:$0xff] %v4382
    %4463 = vst [vmem:[#allocation2 + $0x178] sm:$0xff] %v4384
    %4464 = vst [vmem:[#allocation2 + $0x180] sm:$0xff] %v4265
    %4465 = vst [vmem:[#allocation2 + $0x188] sm:$0xff] %v4267
    %4466 = vst [vmem:[#allocation2 + $0x190] sm:$0xff] %v4388
    %4467 = vst [vmem:[#allocation2 + $0x198] sm:$0xff] %v4390
    %4468 = vst [vmem:[#allocation2 + $0x1a0] sm:$0xff] %v4269
    %4469 = vst [vmem:[#allocation2 + $0x1a8] sm:$0xff] %v4271
    %4470 = vst [vmem:[#allocation2 + $0x1b0] sm:$0xff] %v4392
    %4471 = vst [vmem:[#allocation2 + $0x1b8] sm:$0xff] %v4394
    %4472 = vst [vmem:[#allocation2 + $0x1c0] sm:$0xff] %v4275
    %4473 = vst [vmem:[#allocation2 + $0x1c8] sm:$0xff] %v4277
    %4474 = vst [vmem:[#allocation2 + $0x1d0] sm:$0xff] %v4398
    %4475 = vst [vmem:[#allocation2 + $0x1d8] sm:$0xff] %v4400
    %4476 = vst [vmem:[#allocation2 + $0x1e0] sm:$0xff] %v4279
    %4477 = vst [vmem:[#allocation2 + $0x1e8] sm:$0xff] %v4281
    %4478 = vst [vmem:[#allocation2 + $0x1f0] sm:$0xff] %v4402
    %4479 = vst [vmem:[#allocation2 + $0x1f8] sm:$0xff] %v4404
    %4480 = vst [vmem:[#allocation2 + $0x200] sm:$0xff] %v4285
    %4481 = vst [vmem:[#allocation2 + $0x208] sm:$0xff] %v4287
    %4482 = vst [vmem:[#allocation2 + $0x210] sm:$0xff] %v4408
    %4483 = vst [vmem:[#allocation2 + $0x218] sm:$0xff] %v4410
    %4484 = vst [vmem:[#allocation2 + $0x220] sm:$0xff] %v4289
    %4485 = vst [vmem:[#allocation2 + $0x228] sm:$0xff] %v4291
    %4486 = vst [vmem:[#allocation2 + $0x230] sm:$0xff] %v4412
    %4487 = vst [vmem:[#allocation2 + $0x238] sm:$0xff] %v4414
    %v4488 = vld [vmem:[#allocation2] sm:$0xff]
    %v4489 = vld [vmem:[#allocation2 + $0x8] sm:$0xff]
    %v4490 = vld [vmem:[#allocation2 + $0x10] sm:$0xff]
    %v4491 = vld [vmem:[#allocation2 + $0x18] sm:$0xff]
    %v4492 = vld [vmem:[#allocation2 + $0x20] sm:$0xff]
    %v4493 = vld [vmem:[#allocation2 + $0x28] sm:$0xff]
    %v4494 = vld [vmem:[#allocation2 + $0x30] sm:$0xff]
    %v4495 = vld [vmem:[#allocation2 + $0x38] sm:$0xff]
    %v4496 = vld [vmem:[#allocation11] sm:$0xff]
    %v4497 = vld [vmem:[#allocation11 + $0x8] sm:$0xff]
    %v4498 = vld [vmem:[#allocation11 + $0x10] sm:$0xff]
    %v4499 = vld [vmem:[#allocation11 + $0x18] sm:$0xff]
    %v4500 = vld [vmem:[#allocation11 + $0x20] sm:$0xff]
    %v4501 = vld [vmem:[#allocation11 + $0x28] sm:$0xff]
    %v4502 = vld [vmem:[#allocation11 + $0x30] sm:$0xff]
    %v4503 = vld [vmem:[#allocation11 + $0x38] sm:$0xff]
    %v4504 = vld [vmem:[#allocation11 + $0x40] sm:$0xff]
    %v4505 = vld [vmem:[#allocation11 + $0x48] sm:$0xff]
    %v4506 = vld [vmem:[#allocation11 + $0x50] sm:$0xff]
    %v4507 = vld [vmem:[#allocation11 + $0x58] sm:$0xff]
    %v4508 = vld [vmem:[#allocation11 + $0x60] sm:$0xff]
    %v4509 = vld [vmem:[#allocation11 + $0x68] sm:$0xff]
    %v4510 = vld [vmem:[#allocation11 + $0x70] sm:$0xff]
    %v4511 = vld [vmem:[#allocation11 + $0x78] sm:$0xff]
    %v4512 = vld [vmem:[#allocation11 + $0x80] sm:$0xff]
    %v4513 = vld [vmem:[#allocation11 + $0x88] sm:$0xff]
    %v4514 = vld [vmem:[#allocation11 + $0x90] sm:$0xff]
    %v4515 = vld [vmem:[#allocation11 + $0x98] sm:$0xff]
    %v4516 = vld [vmem:[#allocation11 + $0xa0] sm:$0xff]
    %v4517 = vld [vmem:[#allocation11 + $0xa8] sm:$0xff]
    %v4518 = vld [vmem:[#allocation11 + $0xb0] sm:$0xff]
    %v4519 = vld [vmem:[#allocation11 + $0xb8] sm:$0xff]
    %v4520 = vld [vmem:[#allocation11 + $0xc0] sm:$0xff]
    %v4521 = vld [vmem:[#allocation11 + $0xc8] sm:$0xff]
    %v4522 = vld [vmem:[#allocation11 + $0xd0] sm:$0xff]
    %v4523 = vld [vmem:[#allocation11 + $0xd8] sm:$0xff]
    %v4524 = vld [vmem:[#allocation11 + $0xe0] sm:$0xff]
    %v4525 = vld [vmem:[#allocation11 + $0xe8] sm:$0xff]
    %v4526 = vld [vmem:[#allocation11 + $0xf0] sm:$0xff]
    %v4527 = vld [vmem:[#allocation11 + $0xf8] sm:$0xff]
    %v4560 = vunpack.c.l.b16 %v4496
    %v4561 = vunpack.c.h.b16 %v4496
    %v4562 = vunpack.c.l.b16 %v4497
    %v4563 = vunpack.c.h.b16 %v4497
    %v4564 = vunpack.c.l.b16 %v4498
    %v4565 = vunpack.c.h.b16 %v4498
    %v4566 = vunpack.c.l.b16 %v4499
    %v4567 = vunpack.c.h.b16 %v4499
    %v4568 = vunpack.c.l.b16 %v4500
    %v4569 = vunpack.c.h.b16 %v4500
    %v4570 = vunpack.c.l.b16 %v4501
    %v4571 = vunpack.c.h.b16 %v4501
    %v4572 = vunpack.c.l.b16 %v4502
    %v4573 = vunpack.c.h.b16 %v4502
    %v4574 = vunpack.c.l.b16 %v4503
    %v4575 = vunpack.c.h.b16 %v4503
    %v4576 = vunpack.c.l.b16 %v4504
    %v4577 = vunpack.c.h.b16 %v4504
    %v4578 = vunpack.c.l.b16 %v4505
    %v4579 = vunpack.c.h.b16 %v4505
    %v4580 = vunpack.c.l.b16 %v4506
    %v4581 = vunpack.c.h.b16 %v4506
    %v4582 = vunpack.c.l.b16 %v4507
    %v4583 = vunpack.c.h.b16 %v4507
    %v4584 = vunpack.c.l.b16 %v4508
    %v4585 = vunpack.c.h.b16 %v4508
    %v4586 = vunpack.c.l.b16 %v4509
    %v4587 = vunpack.c.h.b16 %v4509
    %v4588 = vunpack.c.l.b16 %v4510
    %v4589 = vunpack.c.h.b16 %v4510
    %v4590 = vunpack.c.l.b16 %v4511
    %v4591 = vunpack.c.h.b16 %v4511
    %v4592 = vunpack.c.l.b16 %v4512
    %v4593 = vunpack.c.h.b16 %v4512
    %v4594 = vunpack.c.l.b16 %v4513
    %v4595 = vunpack.c.h.b16 %v4513
    %v4596 = vunpack.c.l.b16 %v4514
    %v4597 = vunpack.c.h.b16 %v4514
    %v4598 = vunpack.c.l.b16 %v4515
    %v4599 = vunpack.c.h.b16 %v4515
    %v4600 = vunpack.c.l.b16 %v4516
    %v4601 = vunpack.c.h.b16 %v4516
    %v4602 = vunpack.c.l.b16 %v4517
    %v4603 = vunpack.c.h.b16 %v4517
    %v4604 = vunpack.c.l.b16 %v4518
    %v4605 = vunpack.c.h.b16 %v4518
    %v4606 = vunpack.c.l.b16 %v4519
    %v4607 = vunpack.c.h.b16 %v4519
    %v4608 = vunpack.c.l.b16 %v4520
    %v4609 = vunpack.c.h.b16 %v4520
    %v4610 = vunpack.c.l.b16 %v4521
    %v4611 = vunpack.c.h.b16 %v4521
    %v4612 = vunpack.c.l.b16 %v4522
    %v4613 = vunpack.c.h.b16 %v4522
    %v4614 = vunpack.c.l.b16 %v4523
    %v4615 = vunpack.c.h.b16 %v4523
    %v4616 = vunpack.c.l.b16 %v4524
    %v4617 = vunpack.c.h.b16 %v4524
    %v4618 = vunpack.c.l.b16 %v4525
    %v4619 = vunpack.c.h.b16 %v4525
    %v4620 = vunpack.c.l.b16 %v4526
    %v4621 = vunpack.c.h.b16 %v4526
    %v4622 = vunpack.c.l.b16 %v4527
    %v4623 = vunpack.c.h.b16 %v4527
    %v4624 = vpack.c.b16 %v4564, %v4560
    %v4625 = vpack.c.b16 %v4565, %v4561
    %v4626 = vpack.c.b16 %v4566, %v4562
    %v4627 = vpack.c.b16 %v4567, %v4563
    %v4628 = vpack.c.b16 %v4572, %v4568
    %v4629 = vpack.c.b16 %v4573, %v4569
    %v4630 = vpack.c.b16 %v4574, %v4570
    %v4631 = vpack.c.b16 %v4575, %v4571
    %v4632 = vpack.c.b16 %v4580, %v4576
    %v4633 = vpack.c.b16 %v4581, %v4577
    %v4634 = vpack.c.b16 %v4582, %v4578
    %v4635 = vpack.c.b16 %v4583, %v4579
    %v4636 = vpack.c.b16 %v4588, %v4584
    %v4637 = vpack.c.b16 %v4589, %v4585
    %v4638 = vpack.c.b16 %v4590, %v4586
    %v4639 = vpack.c.b16 %v4591, %v4587
    %v4640 = vpack.c.b16 %v4596, %v4592
    %v4641 = vpack.c.b16 %v4597, %v4593
    %v4642 = vpack.c.b16 %v4598, %v4594
    %v4643 = vpack.c.b16 %v4599, %v4595
    %v4644 = vpack.c.b16 %v4604, %v4600
    %v4645 = vpack.c.b16 %v4605, %v4601
    %v4646 = vpack.c.b16 %v4606, %v4602
    %v4647 = vpack.c.b16 %v4607, %v4603
    %v4648 = vpack.c.b16 %v4612, %v4608
    %v4649 = vpack.c.b16 %v4613, %v4609
    %v4650 = vpack.c.b16 %v4614, %v4610
    %v4651 = vpack.c.b16 %v4615, %v4611
    %v4652 = vpack.c.b16 %v4620, %v4616
    %v4653 = vpack.c.b16 %v4621, %v4617
    %v4654 = vpack.c.b16 %v4622, %v4618
    %v4655 = vpack.c.b16 %v4623, %v4619
    %4688 = vmatprep.subr.bf16.mxu0 %v4625
    %4689 = vmatpush1.bf16.msra.mxu0 %v4624
    %4690 = vmatprep.subr.bf16.mxu0 %v4629
    %4691 = vmatpush1.bf16.msra.mxu0 %v4628
    %4692 = vmatprep.subr.bf16.mxu0 %v4633
    %4693 = vmatpush1.bf16.msra.mxu0 %v4632
    %4694 = vmatprep.subr.bf16.mxu0 %v4637
    %4695 = vmatpush1.bf16.msra.mxu0 %v4636
    %4696 = vmatprep.subr.bf16.mxu0 %v4641
    %4697 = vmatpush1.bf16.msra.mxu0 %v4640
    %4698 = vmatprep.subr.bf16.mxu0 %v4645
    %4699 = vmatpush1.bf16.msra.mxu0 %v4644
    %4700 = vmatprep.subr.bf16.mxu0 %v4649
    %4701 = vmatpush1.bf16.msra.mxu0 %v4648
    %4702 = vmatprep.subr.bf16.mxu0 %v4653
    %4703 = vmatpush1.bf16.msra.mxu0 %v4652
    %4704 = vmatprep.subr.bf16.mxu0 0
    %4705 = vmatpush1.bf16.msra.mxu0 0
    %4706 = vmatprep.subr.bf16.mxu0 0
    %4707 = vmatpush1.bf16.msra.mxu0 0
    %4708 = vmatprep.subr.bf16.mxu0 0
    %4709 = vmatpush1.bf16.msra.mxu0 0
    %4710 = vmatprep.subr.bf16.mxu0 0
    %4711 = vmatpush1.bf16.msra.mxu0 0
    %4712 = vmatprep.subr.bf16.mxu0 0
    %4713 = vmatpush1.bf16.msra.mxu0 0
    %4714 = vmatprep.subr.bf16.mxu0 0
    %4715 = vmatpush1.bf16.msra.mxu0 0
    %4716 = vmatprep.subr.bf16.mxu0 0
    %4717 = vmatpush1.bf16.msra.mxu0 0
    %4718 = vmatprep.subr.bf16.mxu0 0
    %4719 = vmatpush1.bf16.msra.mxu0 0
    %4720 = vmatprep.mubr.bf16.mxu0 0
    %4721 = vmatmul.mubr.bf16.gmra.mrb[0].mxu0 0
    %v4722 = vpop.f32.mrb[0].mxu0
    %v4723 = vadd.f32 0.0, %v4722
    %v4724 = vpop.f32.mrb[0].mxu0
    %v4725 = vadd.f32 0.0, %v4724
    %v4726 = vpop.f32.mrb[0].mxu0
    %v4727 = vadd.f32 0.0, %v4726
    %v4728 = vpop.f32.mrb[0].mxu0
    %v4729 = vadd.f32 0.0, %v4728
    %4730 = vdwg.mxu0
    %4731 = vmatprep.subr.bf16.mxu0 %v4627
    %4732 = vmatpush1.bf16.msra.mxu0 %v4626
    %4733 = vmatprep.subr.bf16.mxu0 %v4631
    %4734 = vmatpush1.bf16.msra.mxu0 %v4630
    %4735 = vmatprep.subr.bf16.mxu0 %v4635
    %4736 = vmatpush1.bf16.msra.mxu0 %v4634
    %4737 = vmatprep.subr.bf16.mxu0 %v4639
    %4738 = vmatpush1.bf16.msra.mxu0 %v4638
    %4739 = vmatprep.subr.bf16.mxu0 %v4643
    %4740 = vmatpush1.bf16.msra.mxu0 %v4642
    %4741 = vmatprep.subr.bf16.mxu0 %v4647
    %4742 = vmatpush1.bf16.msra.mxu0 %v4646
    %4743 = vmatprep.subr.bf16.mxu0 %v4651
    %4744 = vmatpush1.bf16.msra.mxu0 %v4650
    %4745 = vmatprep.subr.bf16.mxu0 %v4655
    %4746 = vmatpush1.bf16.msra.mxu0 %v4654
    %4747 = vmatprep.subr.bf16.mxu0 0
    %4748 = vmatpush1.bf16.msra.mxu0 0
    %4749 = vmatprep.subr.bf16.mxu0 0
    %4750 = vmatpush1.bf16.msra.mxu0 0
    %4751 = vmatprep.subr.bf16.mxu0 0
    %4752 = vmatpush1.bf16.msra.mxu0 0
    %4753 = vmatprep.subr.bf16.mxu0 0
    %4754 = vmatpush1.bf16.msra.mxu0 0
    %4755 = vmatprep.subr.bf16.mxu0 0
    %4756 = vmatpush1.bf16.msra.mxu0 0
    %4757 = vmatprep.subr.bf16.mxu0 0
    %4758 = vmatpush1.bf16.msra.mxu0 0
    %4759 = vmatprep.subr.bf16.mxu0 0
    %4760 = vmatpush1.bf16.msra.mxu0 0
    %4761 = vmatprep.subr.bf16.mxu0 0
    %4762 = vmatpush1.bf16.msra.mxu0 0
    %4763 = vmatprep.mubr.bf16.mxu0 0
    %4764 = vmatmul.mubr.bf16.gmra.mrb[0].mxu0 0
    %v4765 = vpop.f32.mrb[0].mxu0
    %v4766 = vadd.f32 0.0, %v4765
    %v4767 = vpop.f32.mrb[0].mxu0
    %v4768 = vadd.f32 0.0, %v4767
    %v4769 = vpop.f32.mrb[0].mxu0
    %v4770 = vadd.f32 0.0, %v4769
    %v4771 = vpop.f32.mrb[0].mxu0
    %v4772 = vadd.f32 0.0, %v4771
    %4773 = vdwg.mxu0
    %v4774 = vadd.f32 %v4488, %v4723
    %v4775 = vadd.f32 %v4489, %v4725
    %v4776 = vadd.f32 %v4490, %v4766
    %v4777 = vadd.f32 %v4491, %v4768
    %v4778 = vadd.f32 %v4492, %v4727
    %v4779 = vadd.f32 %v4493, %v4729
    %v4780 = vadd.f32 %v4494, %v4770
    %v4781 = vadd.f32 %v4495, %v4772
    %v4782 = vxor.u32 %v4774, 2147483648
    %v4783 = vxor.u32 %v4778, 2147483648
    %v4784 = vmul.f32 %v4782, 1.442695
    %v4785 = vpow.pop %v4784
    %v4786 = vmul.f32 %v4783, 1.442695
    %v4787 = vpow.pop %v4786
    %v4788 = vadd.f32 %v4785, 1.0
    %v4789 = vadd.f32 %v4787, 1.0
    %v4790 = vrcp.pop %v4788
    %v4791 = vmul.f32 1.0, %v4790
    %v4792 = vrcp.pop %v4789
    %v4793 = vmul.f32 1.0, %v4792
    %v4794 = vxor.u32 %v4775, 2147483648
    %v4795 = vxor.u32 %v4779, 2147483648
    %v4796 = vmul.f32 %v4794, 1.442695
    %v4797 = vpow.pop %v4796
    %v4798 = vmul.f32 %v4795, 1.442695
    %v4799 = vpow.pop %v4798
    %v4800 = vadd.f32 %v4797, 1.0
    %v4801 = vadd.f32 %v4799, 1.0
    %v4802 = vrcp.pop %v4800
    %v4803 = vmul.f32 1.0, %v4802
    %v4804 = vrcp.pop %v4801
    %v4805 = vmul.f32 1.0, %v4804
    %v4806 = vtanh.pop %v4776
    %v4807 = vtanh.pop %v4780
    %v4808 = vxor.u32 %v4777, 2147483648
    %v4809 = vxor.u32 %v4781, 2147483648
    %v4810 = vmul.f32 %v4808, 1.442695
    %v4811 = vpow.pop %v4810
    %v4812 = vmul.f32 %v4809, 1.442695
    %v4813 = vpow.pop %v4812
    %v4814 = vadd.f32 %v4811, 1.0
    %v4815 = vadd.f32 %v4813, 1.0
    %v4816 = vrcp.pop %v4814
    %v4817 = vmul.f32 1.0, %v4816
    %v4818 = vrcp.pop %v4815
    %v4819 = vmul.f32 1.0, %v4818
    %v4820 = vmul.f32 %v4803, 0.0
    %v4821 = vmul.f32 %v4805, 0.0
    %v4822 = vmul.f32 %v4791, %v4806
    %v4823 = vmul.f32 %v4793, %v4807
    %v4824 = vadd.f32 %v4820, %v4822
    %v4825 = vadd.f32 %v4821, %v4823
    %v4826 = vtanh.pop %v4824
    %v4827 = vtanh.pop %v4825
    %v4828 = vmul.f32 %v4817, %v4826
    %v4829 = vmul.f32 %v4819, %v4827
    %v4830 = vpack.c.bf16 %v4829, %v4828
    %v4832 = vunpack.c.l.b16 %v4830
    %v4833 = vunpack.c.h.b16 %v4830
    %v4834 = vpack.c.b16 %v4832, %v4832
    %v4835 = vpack.c.b16 %v4833, %v4833
    %4838 = vst [vmem:[#allocation12] sm:$0xf] %v4834
    %4839 = vst [vmem:[#allocation12 + $0x4] sm:$0xf] %v4835
    %v4840 = vld [vmem:[%s1052] sm:$0xff]
    %v4841 = vld [vmem:[%s1052 + $0x8] sm:$0xff]
    %v4842 = vld [vmem:[%s1052 + $0x10] sm:$0xff]
    %v4843 = vld [vmem:[%s1052 + $0x18] sm:$0xff]
    %v4844 = vld [vmem:[%s1052 + $0x20] sm:$0xff]
    %v4845 = vld [vmem:[%s1052 + $0x28] sm:$0xff]
    %v4846 = vld [vmem:[%s1052 + $0x30] sm:$0xff]
    %v4847 = vld [vmem:[%s1052 + $0x38] sm:$0xff]
    %v4848 = vld [vmem:[#allocation11] sm:$0xff]
    %v4849 = vld [vmem:[#allocation11 + $0x8] sm:$0xff]
    %v4850 = vld [vmem:[#allocation11 + $0x10] sm:$0xff]
    %v4851 = vld [vmem:[#allocation11 + $0x18] sm:$0xff]
    %v4852 = vld [vmem:[#allocation11 + $0x20] sm:$0xff]
    %v4853 = vld [vmem:[#allocation11 + $0x28] sm:$0xff]
    %v4854 = vld [vmem:[#allocation11 + $0x30] sm:$0xff]
    %v4855 = vld [vmem:[#allocation11 + $0x38] sm:$0xff]
    %v4856 = vld [vmem:[#allocation11 + $0x40] sm:$0xff]
    %v4857 = vld [vmem:[#allocation11 + $0x48] sm:$0xff]
    %v4858 = vld [vmem:[#allocation11 + $0x50] sm:$0xff]
    %v4859 = vld [vmem:[#allocation11 + $0x58] sm:$0xff]
    %v4860 = vld [vmem:[#allocation11 + $0x60] sm:$0xff]
    %v4861 = vld [vmem:[#allocation11 + $0x68] sm:$0xff]
    %v4862 = vld [vmem:[#allocation11 + $0x70] sm:$0xff]
    %v4863 = vld [vmem:[#allocation11 + $0x78] sm:$0xff]
    %v4864 = vld [vmem:[#allocation11 + $0x80] sm:$0xff]
    %v4865 = vld [vmem:[#allocation11 + $0x88] sm:$0xff]
    %v4866 = vld [vmem:[#allocation11 + $0x90] sm:$0xff]
    %v4867 = vld [vmem:[#allocation11 + $0x98] sm:$0xff]
    %v4868 = vld [vmem:[#allocation11 + $0xa0] sm:$0xff]
    %v4869 = vld [vmem:[#allocation11 + $0xa8] sm:$0xff]
    %v4870 = vld [vmem:[#allocation11 + $0xb0] sm:$0xff]
    %v4871 = vld [vmem:[#allocation11 + $0xb8] sm:$0xff]
    %v4872 = vld [vmem:[#allocation11 + $0xc0] sm:$0xff]
    %v4873 = vld [vmem:[#allocation11 + $0xc8] sm:$0xff]
    %v4874 = vld [vmem:[#allocation11 + $0xd0] sm:$0xff]
    %v4875 = vld [vmem:[#allocation11 + $0xd8] sm:$0xff]
    %v4876 = vld [vmem:[#allocation11 + $0xe0] sm:$0xff]
    %v4877 = vld [vmem:[#allocation11 + $0xe8] sm:$0xff]
    %v4878 = vld [vmem:[#allocation11 + $0xf0] sm:$0xff]
    %v4879 = vld [vmem:[#allocation11 + $0xf8] sm:$0xff]
    %v4912 = vunpack.c.l.b16 %v4848
    %v4913 = vunpack.c.h.b16 %v4848
    %v4914 = vunpack.c.l.b16 %v4849
    %v4915 = vunpack.c.h.b16 %v4849
    %v4916 = vunpack.c.l.b16 %v4850
    %v4917 = vunpack.c.h.b16 %v4850
    %v4918 = vunpack.c.l.b16 %v4851
    %v4919 = vunpack.c.h.b16 %v4851
    %v4920 = vunpack.c.l.b16 %v4852
    %v4921 = vunpack.c.h.b16 %v4852
    %v4922 = vunpack.c.l.b16 %v4853
    %v4923 = vunpack.c.h.b16 %v4853
    %v4924 = vunpack.c.l.b16 %v4854
    %v4925 = vunpack.c.h.b16 %v4854
    %v4926 = vunpack.c.l.b16 %v4855
    %v4927 = vunpack.c.h.b16 %v4855
    %v4928 = vunpack.c.l.b16 %v4856
    %v4929 = vunpack.c.h.b16 %v4856
    %v4930 = vunpack.c.l.b16 %v4857
    %v4931 = vunpack.c.h.b16 %v4857
    %v4932 = vunpack.c.l.b16 %v4858
    %v4933 = vunpack.c.h.b16 %v4858
    %v4934 = vunpack.c.l.b16 %v4859
    %v4935 = vunpack.c.h.b16 %v4859
    %v4936 = vunpack.c.l.b16 %v4860
    %v4937 = vunpack.c.h.b16 %v4860
    %v4938 = vunpack.c.l.b16 %v4861
    %v4939 = vunpack.c.h.b16 %v4861
    %v4940 = vunpack.c.l.b16 %v4862
    %v4941 = vunpack.c.h.b16 %v4862
    %v4942 = vunpack.c.l.b16 %v4863
    %v4943 = vunpack.c.h.b16 %v4863
    %v4944 = vunpack.c.l.b16 %v4864
    %v4945 = vunpack.c.h.b16 %v4864
    %v4946 = vunpack.c.l.b16 %v4865
    %v4947 = vunpack.c.h.b16 %v4865
    %v4948 = vunpack.c.l.b16 %v4866
    %v4949 = vunpack.c.h.b16 %v4866
    %v4950 = vunpack.c.l.b16 %v4867
    %v4951 = vunpack.c.h.b16 %v4867
    %v4952 = vunpack.c.l.b16 %v4868
    %v4953 = vunpack.c.h.b16 %v4868
    %v4954 = vunpack.c.l.b16 %v4869
    %v4955 = vunpack.c.h.b16 %v4869
    %v4956 = vunpack.c.l.b16 %v4870
    %v4957 = vunpack.c.h.b16 %v4870
    %v4958 = vunpack.c.l.b16 %v4871
    %v4959 = vunpack.c.h.b16 %v4871
    %v4960 = vunpack.c.l.b16 %v4872
    %v4961 = vunpack.c.h.b16 %v4872
    %v4962 = vunpack.c.l.b16 %v4873
    %v4963 = vunpack.c.h.b16 %v4873
    %v4964 = vunpack.c.l.b16 %v4874
    %v4965 = vunpack.c.h.b16 %v4874
    %v4966 = vunpack.c.l.b16 %v4875
    %v4967 = vunpack.c.h.b16 %v4875
    %v4968 = vunpack.c.l.b16 %v4876
    %v4969 = vunpack.c.h.b16 %v4876
    %v4970 = vunpack.c.l.b16 %v4877
    %v4971 = vunpack.c.h.b16 %v4877
    %v4972 = vunpack.c.l.b16 %v4878
    %v4973 = vunpack.c.h.b16 %v4878
    %v4974 = vunpack.c.l.b16 %v4879
    %v4975 = vunpack.c.h.b16 %v4879
    %v4976 = vpack.c.b16 %v4916, %v4912
    %v4977 = vpack.c.b16 %v4917, %v4913
    %v4978 = vpack.c.b16 %v4918, %v4914
    %v4979 = vpack.c.b16 %v4919, %v4915
    %v4980 = vpack.c.b16 %v4924, %v4920
    %v4981 = vpack.c.b16 %v4925, %v4921
    %v4982 = vpack.c.b16 %v4926, %v4922
    %v4983 = vpack.c.b16 %v4927, %v4923
    %v4984 = vpack.c.b16 %v4932, %v4928
    %v4985 = vpack.c.b16 %v4933, %v4929
    %v4986 = vpack.c.b16 %v4934, %v4930
    %v4987 = vpack.c.b16 %v4935, %v4931
    %v4988 = vpack.c.b16 %v4940, %v4936
    %v4989 = vpack.c.b16 %v4941, %v4937
    %v4990 = vpack.c.b16 %v4942, %v4938
    %v4991 = vpack.c.b16 %v4943, %v4939
    %v4992 = vpack.c.b16 %v4948, %v4944
    %v4993 = vpack.c.b16 %v4949, %v4945
    %v4994 = vpack.c.b16 %v4950, %v4946
    %v4995 = vpack.c.b16 %v4951, %v4947
    %v4996 = vpack.c.b16 %v4956, %v4952
    %v4997 = vpack.c.b16 %v4957, %v4953
    %v4998 = vpack.c.b16 %v4958, %v4954
    %v4999 = vpack.c.b16 %v4959, %v4955
    %v5000 = vpack.c.b16 %v4964, %v4960
    %v5001 = vpack.c.b16 %v4965, %v4961
    %v5002 = vpack.c.b16 %v4966, %v4962
    %v5003 = vpack.c.b16 %v4967, %v4963
    %v5004 = vpack.c.b16 %v4972, %v4968
    %v5005 = vpack.c.b16 %v4973, %v4969
    %v5006 = vpack.c.b16 %v4974, %v4970
    %v5007 = vpack.c.b16 %v4975, %v4971
    %5040 = vmatprep.subr.bf16.mxu0 %v4977
    %5041 = vmatpush1.bf16.msra.mxu0 %v4976
    %5042 = vmatprep.subr.bf16.mxu0 %v4981
    %5043 = vmatpush1.bf16.msra.mxu0 %v4980
    %5044 = vmatprep.subr.bf16.mxu0 %v4985
    %5045 = vmatpush1.bf16.msra.mxu0 %v4984
    %5046 = vmatprep.subr.bf16.mxu0 %v4989
    %5047 = vmatpush1.bf16.msra.mxu0 %v4988
    %5048 = vmatprep.subr.bf16.mxu0 %v4993
    %5049 = vmatpush1.bf16.msra.mxu0 %v4992
    %5050 = vmatprep.subr.bf16.mxu0 %v4997
    %5051 = vmatpush1.bf16.msra.mxu0 %v4996
    %5052 = vmatprep.subr.bf16.mxu0 %v5001
    %5053 = vmatpush1.bf16.msra.mxu0 %v5000
    %5054 = vmatprep.subr.bf16.mxu0 %v5005
    %5055 = vmatpush1.bf16.msra.mxu0 %v5004
    %5056 = vmatprep.subr.bf16.mxu0 0
    %5057 = vmatpush1.bf16.msra.mxu0 0
    %5058 = vmatprep.subr.bf16.mxu0 0
    %5059 = vmatpush1.bf16.msra.mxu0 0
    %5060 = vmatprep.subr.bf16.mxu0 0
    %5061 = vmatpush1.bf16.msra.mxu0 0
    %5062 = vmatprep.subr.bf16.mxu0 0
    %5063 = vmatpush1.bf16.msra.mxu0 0
    %5064 = vmatprep.subr.bf16.mxu0 0
    %5065 = vmatpush1.bf16.msra.mxu0 0
    %5066 = vmatprep.subr.bf16.mxu0 0
    %5067 = vmatpush1.bf16.msra.mxu0 0
    %5068 = vmatprep.subr.bf16.mxu0 0
    %5069 = vmatpush1.bf16.msra.mxu0 0
    %5070 = vmatprep.subr.bf16.mxu0 0
    %5071 = vmatpush1.bf16.msra.mxu0 0
    %5072 = vmatprep.mubr.bf16.mxu0 0
    %5073 = vmatmul.mubr.bf16.gmra.mrb[0].mxu0 %v4830
    %v5074 = vpop.f32.mrb[0].mxu0
    %v5075 = vadd.f32 0.0, %v5074
    %v5076 = vpop.f32.mrb[0].mxu0
    %v5077 = vadd.f32 0.0, %v5076
    %v5078 = vpop.f32.mrb[0].mxu0
    %v5079 = vadd.f32 0.0, %v5078
    %v5080 = vpop.f32.mrb[0].mxu0
    %v5081 = vadd.f32 0.0, %v5080
    %5082 = vdwg.mxu0
    %5083 = vmatprep.subr.bf16.mxu0 %v4979
    %5084 = vmatpush1.bf16.msra.mxu0 %v4978
    %5085 = vmatprep.subr.bf16.mxu0 %v4983
    %5086 = vmatpush1.bf16.msra.mxu0 %v4982
    %5087 = vmatprep.subr.bf16.mxu0 %v4987
    %5088 = vmatpush1.bf16.msra.mxu0 %v4986
    %5089 = vmatprep.subr.bf16.mxu0 %v4991
    %5090 = vmatpush1.bf16.msra.mxu0 %v4990
    %5091 = vmatprep.subr.bf16.mxu0 %v4995
    %5092 = vmatpush1.bf16.msra.mxu0 %v4994
    %5093 = vmatprep.subr.bf16.mxu0 %v4999
    %5094 = vmatpush1.bf16.msra.mxu0 %v4998
    %5095 = vmatprep.subr.bf16.mxu0 %v5003
    %5096 = vmatpush1.bf16.msra.mxu0 %v5002
    %5097 = vmatprep.subr.bf16.mxu0 %v5007
    %5098 = vmatpush1.bf16.msra.mxu0 %v5006
    %5099 = vmatprep.subr.bf16.mxu0 0
    %5100 = vmatpush1.bf16.msra.mxu0 0
    %5101 = vmatprep.subr.bf16.mxu0 0
    %5102 = vmatpush1.bf16.msra.mxu0 0
    %5103 = vmatprep.subr.bf16.mxu0 0
    %5104 = vmatpush1.bf16.msra.mxu0 0
    %5105 = vmatprep.subr.bf16.mxu0 0
    %5106 = vmatpush1.bf16.msra.mxu0 0
    %5107 = vmatprep.subr.bf16.mxu0 0
    %5108 = vmatpush1.bf16.msra.mxu0 0
    %5109 = vmatprep.subr.bf16.mxu0 0
    %5110 = vmatpush1.bf16.msra.mxu0 0
    %5111 = vmatprep.subr.bf16.mxu0 0
    %5112 = vmatpush1.bf16.msra.mxu0 0
    %5113 = vmatprep.subr.bf16.mxu0 0
    %5114 = vmatpush1.bf16.msra.mxu0 0
    %5115 = vmatprep.mubr.bf16.mxu0 0
    %5116 = vmatmul.mubr.bf16.gmra.mrb[0].mxu0 %v4830
    %v5117 = vpop.f32.mrb[0].mxu0
    %v5118 = vadd.f32 0.0, %v5117
    %v5119 = vpop.f32.mrb[0].mxu0
    %v5120 = vadd.f32 0.0, %v5119
    %v5121 = vpop.f32.mrb[0].mxu0
    %v5122 = vadd.f32 0.0, %v5121
    %v5123 = vpop.f32.mrb[0].mxu0
    %v5124 = vadd.f32 0.0, %v5123
    %5125 = vdwg.mxu0
    %v5126 = vadd.f32 %v4840, %v5075
    %v5127 = vadd.f32 %v4841, %v5077
    %v5128 = vadd.f32 %v4842, %v5118
    %v5129 = vadd.f32 %v4843, %v5120
    %v5130 = vadd.f32 %v4844, %v5079
    %v5131 = vadd.f32 %v4845, %v5081
    %v5132 = vadd.f32 %v4846, %v5122
    %v5133 = vadd.f32 %v4847, %v5124
    %v5134 = vxor.u32 %v5126, 2147483648
    %v5135 = vxor.u32 %v5130, 2147483648
    %v5136 = vmul.f32 %v5134, 1.442695
    %v5137 = vpow.pop %v5136
    %v5138 = vmul.f32 %v5135, 1.442695
    %v5139 = vpow.pop %v5138
    %v5140 = vadd.f32 %v5137, 1.0
    %v5141 = vadd.f32 %v5139, 1.0
    %v5142 = vrcp.pop %v5140
    %v5143 = vmul.f32 1.0, %v5142
    %v5144 = vrcp.pop %v5141
    %v5145 = vmul.f32 1.0, %v5144
    %v5146 = vxor.u32 %v5127, 2147483648
    %v5147 = vxor.u32 %v5131, 2147483648
    %v5148 = vmul.f32 %v5146, 1.442695
    %v5149 = vpow.pop %v5148
    %v5150 = vmul.f32 %v5147, 1.442695
    %v5151 = vpow.pop %v5150
    %v5152 = vadd.f32 %v5149, 1.0
    %v5153 = vadd.f32 %v5151, 1.0
    %v5154 = vrcp.pop %v5152
    %v5155 = vmul.f32 1.0, %v5154
    %v5156 = vrcp.pop %v5153
    %v5157 = vmul.f32 1.0, %v5156
    %v5158 = vtanh.pop %v5128
    %v5159 = vtanh.pop %v5132
    %v5160 = vxor.u32 %v5129, 2147483648
    %v5161 = vxor.u32 %v5133, 2147483648
    %v5162 = vmul.f32 %v5160, 1.442695
    %v5163 = vpow.pop %v5162
    %v5164 = vmul.f32 %v5161, 1.442695
    %v5165 = vpow.pop %v5164
    %v5166 = vadd.f32 %v5163, 1.0
    %v5167 = vadd.f32 %v5165, 1.0
    %v5168 = vrcp.pop %v5166
    %v5169 = vmul.f32 1.0, %v5168
    %v5170 = vrcp.pop %v5167
    %v5171 = vmul.f32 1.0, %v5170
    %v5172 = vmul.f32 %v5155, %v4824
    %v5173 = vmul.f32 %v5157, %v4825
    %v5174 = vmul.f32 %v5143, %v5158
    %v5175 = vmul.f32 %v5145, %v5159
    %v5176 = vadd.f32 %v5172, %v5174
    %v5177 = vadd.f32 %v5173, %v5175
    %v5178 = vtanh.pop %v5176
    %v5179 = vtanh.pop %v5177
    %v5180 = vmul.f32 %v5169, %v5178
    %v5181 = vmul.f32 %v5171, %v5179
    %v5182 = vpack.c.bf16 %v5181, %v5180
    %v5184 = vunpack.c.l.b16 %v5182
    %v5185 = vunpack.c.h.b16 %v5182
    %v5186 = vpack.c.b16 %v5184, %v5184
    %v5187 = vpack.c.b16 %v5185, %v5185
    %5190 = vst [vmem:[%s1403] sm:$0xf] %v5186
    %5191 = vst [vmem:[%s1403 + $0x4] sm:$0xf] %v5187
    %v5192 = vld [vmem:[%s1406] sm:$0xff]
    %v5193 = vld [vmem:[%s1406 + $0x8] sm:$0xff]
    %v5194 = vld [vmem:[%s1406 + $0x10] sm:$0xff]
    %v5195 = vld [vmem:[%s1406 + $0x18] sm:$0xff]
    %v5196 = vld [vmem:[%s1406 + $0x20] sm:$0xff]
    %v5197 = vld [vmem:[%s1406 + $0x28] sm:$0xff]
    %v5198 = vld [vmem:[%s1406 + $0x30] sm:$0xff]
    %v5199 = vld [vmem:[%s1406 + $0x38] sm:$0xff]
    %v5200 = vld [vmem:[#allocation11] sm:$0xff]
    %v5201 = vld [vmem:[#allocation11 + $0x8] sm:$0xff]
    %v5202 = vld [vmem:[#allocation11 + $0x10] sm:$0xff]
    %v5203 = vld [vmem:[#allocation11 + $0x18] sm:$0xff]
    %v5204 = vld [vmem:[#allocation11 + $0x20] sm:$0xff]
    %v5205 = vld [vmem:[#allocation11 + $0x28] sm:$0xff]
    %v5206 = vld [vmem:[#allocation11 + $0x30] sm:$0xff]
    %v5207 = vld [vmem:[#allocation11 + $0x38] sm:$0xff]
    %v5208 = vld [vmem:[#allocation11 + $0x40] sm:$0xff]
    %v5209 = vld [vmem:[#allocation11 + $0x48] sm:$0xff]
    %v5210 = vld [vmem:[#allocation11 + $0x50] sm:$0xff]
    %v5211 = vld [vmem:[#allocation11 + $0x58] sm:$0xff]
    %v5212 = vld [vmem:[#allocation11 + $0x60] sm:$0xff]
    %v5213 = vld [vmem:[#allocation11 + $0x68] sm:$0xff]
    %v5214 = vld [vmem:[#allocation11 + $0x70] sm:$0xff]
    %v5215 = vld [vmem:[#allocation11 + $0x78] sm:$0xff]
    %v5216 = vld [vmem:[#allocation11 + $0x80] sm:$0xff]
    %v5217 = vld [vmem:[#allocation11 + $0x88] sm:$0xff]
    %v5218 = vld [vmem:[#allocation11 + $0x90] sm:$0xff]
    %v5219 = vld [vmem:[#allocation11 + $0x98] sm:$0xff]
    %v5220 = vld [vmem:[#allocation11 + $0xa0] sm:$0xff]
    %v5221 = vld [vmem:[#allocation11 + $0xa8] sm:$0xff]
    %v5222 = vld [vmem:[#allocation11 + $0xb0] sm:$0xff]
    %v5223 = vld [vmem:[#allocation11 + $0xb8] sm:$0xff]
    %v5224 = vld [vmem:[#allocation11 + $0xc0] sm:$0xff]
    %v5225 = vld [vmem:[#allocation11 + $0xc8] sm:$0xff]
    %v5226 = vld [vmem:[#allocation11 + $0xd0] sm:$0xff]
    %v5227 = vld [vmem:[#allocation11 + $0xd8] sm:$0xff]
    %v5228 = vld [vmem:[#allocation11 + $0xe0] sm:$0xff]
    %v5229 = vld [vmem:[#allocation11 + $0xe8] sm:$0xff]
    %v5230 = vld [vmem:[#allocation11 + $0xf0] sm:$0xff]
    %v5231 = vld [vmem:[#allocation11 + $0xf8] sm:$0xff]
    %v5264 = vunpack.c.l.b16 %v5200
    %v5265 = vunpack.c.h.b16 %v5200
    %v5266 = vunpack.c.l.b16 %v5201
    %v5267 = vunpack.c.h.b16 %v5201
    %v5268 = vunpack.c.l.b16 %v5202
    %v5269 = vunpack.c.h.b16 %v5202
    %v5270 = vunpack.c.l.b16 %v5203
    %v5271 = vunpack.c.h.b16 %v5203
    %v5272 = vunpack.c.l.b16 %v5204
    %v5273 = vunpack.c.h.b16 %v5204
    %v5274 = vunpack.c.l.b16 %v5205
    %v5275 = vunpack.c.h.b16 %v5205
    %v5276 = vunpack.c.l.b16 %v5206
    %v5277 = vunpack.c.h.b16 %v5206
    %v5278 = vunpack.c.l.b16 %v5207
    %v5279 = vunpack.c.h.b16 %v5207
    %v5280 = vunpack.c.l.b16 %v5208
    %v5281 = vunpack.c.h.b16 %v5208
    %v5282 = vunpack.c.l.b16 %v5209
    %v5283 = vunpack.c.h.b16 %v5209
    %v5284 = vunpack.c.l.b16 %v5210
    %v5285 = vunpack.c.h.b16 %v5210
    %v5286 = vunpack.c.l.b16 %v5211
    %v5287 = vunpack.c.h.b16 %v5211
    %v5288 = vunpack.c.l.b16 %v5212
    %v5289 = vunpack.c.h.b16 %v5212
    %v5290 = vunpack.c.l.b16 %v5213
    %v5291 = vunpack.c.h.b16 %v5213
    %v5292 = vunpack.c.l.b16 %v5214
    %v5293 = vunpack.c.h.b16 %v5214
    %v5294 = vunpack.c.l.b16 %v5215
    %v5295 = vunpack.c.h.b16 %v5215
    %v5296 = vunpack.c.l.b16 %v5216
    %v5297 = vunpack.c.h.b16 %v5216
    %v5298 = vunpack.c.l.b16 %v5217
    %v5299 = vunpack.c.h.b16 %v5217
    %v5300 = vunpack.c.l.b16 %v5218
    %v5301 = vunpack.c.h.b16 %v5218
    %v5302 = vunpack.c.l.b16 %v5219
    %v5303 = vunpack.c.h.b16 %v5219
    %v5304 = vunpack.c.l.b16 %v5220
    %v5305 = vunpack.c.h.b16 %v5220
    %v5306 = vunpack.c.l.b16 %v5221
    %v5307 = vunpack.c.h.b16 %v5221
    %v5308 = vunpack.c.l.b16 %v5222
    %v5309 = vunpack.c.h.b16 %v5222
    %v5310 = vunpack.c.l.b16 %v5223
    %v5311 = vunpack.c.h.b16 %v5223
    %v5312 = vunpack.c.l.b16 %v5224
    %v5313 = vunpack.c.h.b16 %v5224
    %v5314 = vunpack.c.l.b16 %v5225
    %v5315 = vunpack.c.h.b16 %v5225
    %v5316 = vunpack.c.l.b16 %v5226
    %v5317 = vunpack.c.h.b16 %v5226
    %v5318 = vunpack.c.l.b16 %v5227
    %v5319 = vunpack.c.h.b16 %v5227
    %v5320 = vunpack.c.l.b16 %v5228
    %v5321 = vunpack.c.h.b16 %v5228
    %v5322 = vunpack.c.l.b16 %v5229
    %v5323 = vunpack.c.h.b16 %v5229
    %v5324 = vunpack.c.l.b16 %v5230
    %v5325 = vunpack.c.h.b16 %v5230
    %v5326 = vunpack.c.l.b16 %v5231
    %v5327 = vunpack.c.h.b16 %v5231
    %v5328 = vpack.c.b16 %v5268, %v5264
    %v5329 = vpack.c.b16 %v5269, %v5265
    %v5330 = vpack.c.b16 %v5270, %v5266
    %v5331 = vpack.c.b16 %v5271, %v5267
    %v5332 = vpack.c.b16 %v5276, %v5272
    %v5333 = vpack.c.b16 %v5277, %v5273
    %v5334 = vpack.c.b16 %v5278, %v5274
    %v5335 = vpack.c.b16 %v5279, %v5275
    %v5336 = vpack.c.b16 %v5284, %v5280
    %v5337 = vpack.c.b16 %v5285, %v5281
    %v5338 = vpack.c.b16 %v5286, %v5282
    %v5339 = vpack.c.b16 %v5287, %v5283
    %v5340 = vpack.c.b16 %v5292, %v5288
    %v5341 = vpack.c.b16 %v5293, %v5289
    %v5342 = vpack.c.b16 %v5294, %v5290
    %v5343 = vpack.c.b16 %v5295, %v5291
    %v5344 = vpack.c.b16 %v5300, %v5296
    %v5345 = vpack.c.b16 %v5301, %v5297
    %v5346 = vpack.c.b16 %v5302, %v5298
    %v5347 = vpack.c.b16 %v5303, %v5299
    %v5348 = vpack.c.b16 %v5308, %v5304
    %v5349 = vpack.c.b16 %v5309, %v5305
    %v5350 = vpack.c.b16 %v5310, %v5306
    %v5351 = vpack.c.b16 %v5311, %v5307
    %v5352 = vpack.c.b16 %v5316, %v5312
    %v5353 = vpack.c.b16 %v5317, %v5313
    %v5354 = vpack.c.b16 %v5318, %v5314
    %v5355 = vpack.c.b16 %v5319, %v5315
    %v5356 = vpack.c.b16 %v5324, %v5320
    %v5357 = vpack.c.b16 %v5325, %v5321
    %v5358 = vpack.c.b16 %v5326, %v5322
    %v5359 = vpack.c.b16 %v5327, %v5323
    %5392 = vmatprep.subr.bf16.mxu0 %v5329
    %5393 = vmatpush1.bf16.msra.mxu0 %v5328
    %5394 = vmatprep.subr.bf16.mxu0 %v5333
    %5395 = vmatpush1.bf16.msra.mxu0 %v5332
    %5396 = vmatprep.subr.bf16.mxu0 %v5337
    %5397 = vmatpush1.bf16.msra.mxu0 %v5336
    %5398 = vmatprep.subr.bf16.mxu0 %v5341
    %5399 = vmatpush1.bf16.msra.mxu0 %v5340
    %5400 = vmatprep.subr.bf16.mxu0 %v5345
    %5401 = vmatpush1.bf16.msra.mxu0 %v5344
    %5402 = vmatprep.subr.bf16.mxu0 %v5349
    %5403 = vmatpush1.bf16.msra.mxu0 %v5348
    %5404 = vmatprep.subr.bf16.mxu0 %v5353
    %5405 = vmatpush1.bf16.msra.mxu0 %v5352
    %5406 = vmatprep.subr.bf16.mxu0 %v5357
    %5407 = vmatpush1.bf16.msra.mxu0 %v5356
    %5408 = vmatprep.subr.bf16.mxu0 0
    %5409 = vmatpush1.bf16.msra.mxu0 0
    %5410 = vmatprep.subr.bf16.mxu0 0
    %5411 = vmatpush1.bf16.msra.mxu0 0
    %5412 = vmatprep.subr.bf16.mxu0 0
    %5413 = vmatpush1.bf16.msra.mxu0 0
    %5414 = vmatprep.subr.bf16.mxu0 0
    %5415 = vmatpush1.bf16.msra.mxu0 0
    %5416 = vmatprep.subr.bf16.mxu0 0
    %5417 = vmatpush1.bf16.msra.mxu0 0
    %5418 = vmatprep.subr.bf16.mxu0 0
    %5419 = vmatpush1.bf16.msra.mxu0 0
    %5420 = vmatprep.subr.bf16.mxu0 0
    %5421 = vmatpush1.bf16.msra.mxu0 0
    %5422 = vmatprep.subr.bf16.mxu0 0
    %5423 = vmatpush1.bf16.msra.mxu0 0
    %5424 = vmatprep.mubr.bf16.mxu0 0
    %5425 = vmatmul.mubr.bf16.gmra.mrb[0].mxu0 %v5182
    %v5426 = vpop.f32.mrb[0].mxu0
    %v5427 = vadd.f32 0.0, %v5426
    %v5428 = vpop.f32.mrb[0].mxu0
    %v5429 = vadd.f32 0.0, %v5428
    %v5430 = vpop.f32.mrb[0].mxu0
    %v5431 = vadd.f32 0.0, %v5430
    %v5432 = vpop.f32.mrb[0].mxu0
    %v5433 = vadd.f32 0.0, %v5432
    %5434 = vdwg.mxu0
    %5435 = vmatprep.subr.bf16.mxu0 %v5331
    %5436 = vmatpush1.bf16.msra.mxu0 %v5330
    %5437 = vmatprep.subr.bf16.mxu0 %v5335
    %5438 = vmatpush1.bf16.msra.mxu0 %v5334
    %5439 = vmatprep.subr.bf16.mxu0 %v5339
    %5440 = vmatpush1.bf16.msra.mxu0 %v5338
    %5441 = vmatprep.subr.bf16.mxu0 %v5343
    %5442 = vmatpush1.bf16.msra.mxu0 %v5342
    %5443 = vmatprep.subr.bf16.mxu0 %v5347
    %5444 = vmatpush1.bf16.msra.mxu0 %v5346
    %5445 = vmatprep.subr.bf16.mxu0 %v5351
    %5446 = vmatpush1.bf16.msra.mxu0 %v5350
    %5447 = vmatprep.subr.bf16.mxu0 %v5355
    %5448 = vmatpush1.bf16.msra.mxu0 %v5354
    %5449 = vmatprep.subr.bf16.mxu0 %v5359
    %5450 = vmatpush1.bf16.msra.mxu0 %v5358
    %5451 = vmatprep.subr.bf16.mxu0 0
    %5452 = vmatpush1.bf16.msra.mxu0 0
    %5453 = vmatprep.subr.bf16.mxu0 0
    %5454 = vmatpush1.bf16.msra.mxu0 0
    %5455 = vmatprep.subr.bf16.mxu0 0
    %5456 = vmatpush1.bf16.msra.mxu0 0
    %5457 = vmatprep.subr.bf16.mxu0 0
    %5458 = vmatpush1.bf16.msra.mxu0 0
    %5459 = vmatprep.subr.bf16.mxu0 0
    %5460 = vmatpush1.bf16.msra.mxu0 0
    %5461 = vmatprep.subr.bf16.mxu0 0
    %5462 = vmatpush1.bf16.msra.mxu0 0
    %5463 = vmatprep.subr.bf16.mxu0 0
    %5464 = vmatpush1.bf16.msra.mxu0 0
    %5465 = vmatprep.subr.bf16.mxu0 0
    %5466 = vmatpush1.bf16.msra.mxu0 0
    %5467 = vmatprep.mubr.bf16.mxu0 0
    %5468 = vmatmul.mubr.bf16.gmra.mrb[0].mxu0 %v5182
    %v5469 = vpop.f32.mrb[0].mxu0
    %v5470 = vadd.f32 0.0, %v5469
    %v5471 = vpop.f32.mrb[0].mxu0
    %v5472 = vadd.f32 0.0, %v5471
    %v5473 = vpop.f32.mrb[0].mxu0
    %v5474 = vadd.f32 0.0, %v5473
    %v5475 = vpop.f32.mrb[0].mxu0
    %v5476 = vadd.f32 0.0, %v5475
    %5477 = vdwg.mxu0
    %v5478 = vadd.f32 %v5192, %v5427
    %v5479 = vadd.f32 %v5193, %v5429
    %v5480 = vadd.f32 %v5194, %v5470
    %v5481 = vadd.f32 %v5195, %v5472
    %v5482 = vadd.f32 %v5196, %v5431
    %v5483 = vadd.f32 %v5197, %v5433
    %v5484 = vadd.f32 %v5198, %v5474
    %v5485 = vadd.f32 %v5199, %v5476
    %v5486 = vxor.u32 %v5478, 2147483648
    %v5487 = vxor.u32 %v5482, 2147483648
    %v5488 = vmul.f32 %v5486, 1.442695
    %v5489 = vpow.pop %v5488
    %v5490 = vmul.f32 %v5487, 1.442695
    %v5491 = vpow.pop %v5490
    %v5492 = vadd.f32 %v5489, 1.0
    %v5493 = vadd.f32 %v5491, 1.0
    %v5494 = vrcp.pop %v5492
    %v5495 = vmul.f32 1.0, %v5494
    %v5496 = vrcp.pop %v5493
    %v5497 = vmul.f32 1.0, %v5496
    %v5498 = vxor.u32 %v5479, 2147483648
    %v5499 = vxor.u32 %v5483, 2147483648
    %v5500 = vmul.f32 %v5498, 1.442695
    %v5501 = vpow.pop %v5500
    %v5502 = vmul.f32 %v5499, 1.442695
    %v5503 = vpow.pop %v5502
    %v5504 = vadd.f32 %v5501, 1.0
    %v5505 = vadd.f32 %v5503, 1.0
    %v5506 = vrcp.pop %v5504
    %v5507 = vmul.f32 1.0, %v5506
    %v5508 = vrcp.pop %v5505
    %v5509 = vmul.f32 1.0, %v5508
    %v5510 = vtanh.pop %v5480
    %v5511 = vtanh.pop %v5484
    %v5512 = vxor.u32 %v5481, 2147483648
    %v5513 = vxor.u32 %v5485, 2147483648
    %v5514 = vmul.f32 %v5512, 1.442695
    %v5515 = vpow.pop %v5514
    %v5516 = vmul.f32 %v5513, 1.442695
    %v5517 = vpow.pop %v5516
    %v5518 = vadd.f32 %v5515, 1.0
    %v5519 = vadd.f32 %v5517, 1.0
    %v5520 = vrcp.pop %v5518
    %v5521 = vmul.f32 1.0, %v5520
    %v5522 = vrcp.pop %v5519
    %v5523 = vmul.f32 1.0, %v5522
    %v5524 = vmul.f32 %v5507, %v5176
    %v5525 = vmul.f32 %v5509, %v5177
    %v5526 = vmul.f32 %v5495, %v5510
    %v5527 = vmul.f32 %v5497, %v5511
    %v5528 = vadd.f32 %v5524, %v5526
    %v5529 = vadd.f32 %v5525, %v5527
    %v5530 = vtanh.pop %v5528
    %v5531 = vtanh.pop %v5529
    %v5532 = vmul.f32 %v5521, %v5530
    %v5533 = vmul.f32 %v5523, %v5531
    %v5534 = vpack.c.bf16 %v5533, %v5532
    %v5536 = vunpack.c.l.b16 %v5534
    %v5537 = vunpack.c.h.b16 %v5534
    %v5538 = vpack.c.b16 %v5536, %v5536
    %v5539 = vpack.c.b16 %v5537, %v5537
    %5542 = vst [vmem:[%s1757] sm:$0xf] %v5538
    %5543 = vst [vmem:[%s1757 + $0x4] sm:$0xf] %v5539
    %v5544 = vld [vmem:[%s1760] sm:$0xff]
    %v5545 = vld [vmem:[%s1760 + $0x8] sm:$0xff]
    %v5546 = vld [vmem:[%s1760 + $0x10] sm:$0xff]
    %v5547 = vld [vmem:[%s1760 + $0x18] sm:$0xff]
    %v5548 = vld [vmem:[%s1760 + $0x20] sm:$0xff]
    %v5549 = vld [vmem:[%s1760 + $0x28] sm:$0xff]
    %v5550 = vld [vmem:[%s1760 + $0x30] sm:$0xff]
    %v5551 = vld [vmem:[%s1760 + $0x38] sm:$0xff]
    %v5552 = vld [vmem:[#allocation11] sm:$0xff]
    %v5553 = vld [vmem:[#allocation11 + $0x8] sm:$0xff]
    %v5554 = vld [vmem:[#allocation11 + $0x10] sm:$0xff]
    %v5555 = vld [vmem:[#allocation11 + $0x18] sm:$0xff]
    %v5556 = vld [vmem:[#allocation11 + $0x20] sm:$0xff]
    %v5557 = vld [vmem:[#allocation11 + $0x28] sm:$0xff]
    %v5558 = vld [vmem:[#allocation11 + $0x30] sm:$0xff]
    %v5559 = vld [vmem:[#allocation11 + $0x38] sm:$0xff]
    %v5560 = vld [vmem:[#allocation11 + $0x40] sm:$0xff]
    %v5561 = vld [vmem:[#allocation11 + $0x48] sm:$0xff]
    %v5562 = vld [vmem:[#allocation11 + $0x50] sm:$0xff]
    %v5563 = vld [vmem:[#allocation11 + $0x58] sm:$0xff]
    %v5564 = vld [vmem:[#allocation11 + $0x60] sm:$0xff]
    %v5565 = vld [vmem:[#allocation11 + $0x68] sm:$0xff]
    %v5566 = vld [vmem:[#allocation11 + $0x70] sm:$0xff]
    %v5567 = vld [vmem:[#allocation11 + $0x78] sm:$0xff]
    %v5568 = vld [vmem:[#allocation11 + $0x80] sm:$0xff]
    %v5569 = vld [vmem:[#allocation11 + $0x88] sm:$0xff]
    %v5570 = vld [vmem:[#allocation11 + $0x90] sm:$0xff]
    %v5571 = vld [vmem:[#allocation11 + $0x98] sm:$0xff]
    %v5572 = vld [vmem:[#allocation11 + $0xa0] sm:$0xff]
    %v5573 = vld [vmem:[#allocation11 + $0xa8] sm:$0xff]
    %v5574 = vld [vmem:[#allocation11 + $0xb0] sm:$0xff]
    %v5575 = vld [vmem:[#allocation11 + $0xb8] sm:$0xff]
    %v5576 = vld [vmem:[#allocation11 + $0xc0] sm:$0xff]
    %v5577 = vld [vmem:[#allocation11 + $0xc8] sm:$0xff]
    %v5578 = vld [vmem:[#allocation11 + $0xd0] sm:$0xff]
    %v5579 = vld [vmem:[#allocation11 + $0xd8] sm:$0xff]
    %v5580 = vld [vmem:[#allocation11 + $0xe0] sm:$0xff]
    %v5581 = vld [vmem:[#allocation11 + $0xe8] sm:$0xff]
    %v5582 = vld [vmem:[#allocation11 + $0xf0] sm:$0xff]
    %v5583 = vld [vmem:[#allocation11 + $0xf8] sm:$0xff]
    %v5616 = vunpack.c.l.b16 %v5552
    %v5617 = vunpack.c.h.b16 %v5552
    %v5618 = vunpack.c.l.b16 %v5553
    %v5619 = vunpack.c.h.b16 %v5553
    %v5620 = vunpack.c.l.b16 %v5554
    %v5621 = vunpack.c.h.b16 %v5554
    %v5622 = vunpack.c.l.b16 %v5555
    %v5623 = vunpack.c.h.b16 %v5555
    %v5624 = vunpack.c.l.b16 %v5556
    %v5625 = vunpack.c.h.b16 %v5556
    %v5626 = vunpack.c.l.b16 %v5557
    %v5627 = vunpack.c.h.b16 %v5557
    %v5628 = vunpack.c.l.b16 %v5558
    %v5629 = vunpack.c.h.b16 %v5558
    %v5630 = vunpack.c.l.b16 %v5559
    %v5631 = vunpack.c.h.b16 %v5559
    %v5632 = vunpack.c.l.b16 %v5560
    %v5633 = vunpack.c.h.b16 %v5560
    %v5634 = vunpack.c.l.b16 %v5561
    %v5635 = vunpack.c.h.b16 %v5561
    %v5636 = vunpack.c.l.b16 %v5562
    %v5637 = vunpack.c.h.b16 %v5562
    %v5638 = vunpack.c.l.b16 %v5563
    %v5639 = vunpack.c.h.b16 %v5563
    %v5640 = vunpack.c.l.b16 %v5564
    %v5641 = vunpack.c.h.b16 %v5564
    %v5642 = vunpack.c.l.b16 %v5565
    %v5643 = vunpack.c.h.b16 %v5565
    %v5644 = vunpack.c.l.b16 %v5566
    %v5645 = vunpack.c.h.b16 %v5566
    %v5646 = vunpack.c.l.b16 %v5567
    %v5647 = vunpack.c.h.b16 %v5567
    %v5648 = vunpack.c.l.b16 %v5568
    %v5649 = vunpack.c.h.b16 %v5568
    %v5650 = vunpack.c.l.b16 %v5569
    %v5651 = vunpack.c.h.b16 %v5569
    %v5652 = vunpack.c.l.b16 %v5570
    %v5653 = vunpack.c.h.b16 %v5570
    %v5654 = vunpack.c.l.b16 %v5571
    %v5655 = vunpack.c.h.b16 %v5571
    %v5656 = vunpack.c.l.b16 %v5572
    %v5657 = vunpack.c.h.b16 %v5572
    %v5658 = vunpack.c.l.b16 %v5573
    %v5659 = vunpack.c.h.b16 %v5573
    %v5660 = vunpack.c.l.b16 %v5574
    %v5661 = vunpack.c.h.b16 %v5574
    %v5662 = vunpack.c.l.b16 %v5575
    %v5663 = vunpack.c.h.b16 %v5575
    %v5664 = vunpack.c.l.b16 %v5576
    %v5665 = vunpack.c.h.b16 %v5576
    %v5666 = vunpack.c.l.b16 %v5577
    %v5667 = vunpack.c.h.b16 %v5577
    %v5668 = vunpack.c.l.b16 %v5578
    %v5669 = vunpack.c.h.b16 %v5578
    %v5670 = vunpack.c.l.b16 %v5579
    %v5671 = vunpack.c.h.b16 %v5579
    %v5672 = vunpack.c.l.b16 %v5580
    %v5673 = vunpack.c.h.b16 %v5580
    %v5674 = vunpack.c.l.b16 %v5581
    %v5675 = vunpack.c.h.b16 %v5581
    %v5676 = vunpack.c.l.b16 %v5582
    %v5677 = vunpack.c.h.b16 %v5582
    %v5678 = vunpack.c.l.b16 %v5583
    %v5679 = vunpack.c.h.b16 %v5583
    %v5680 = vpack.c.b16 %v5620, %v5616
    %v5681 = vpack.c.b16 %v5621, %v5617
    %v5682 = vpack.c.b16 %v5622, %v5618
    %v5683 = vpack.c.b16 %v5623, %v5619
    %v5684 = vpack.c.b16 %v5628, %v5624
    %v5685 = vpack.c.b16 %v5629, %v5625
    %v5686 = vpack.c.b16 %v5630, %v5626
    %v5687 = vpack.c.b16 %v5631, %v5627
    %v5688 = vpack.c.b16 %v5636, %v5632
    %v5689 = vpack.c.b16 %v5637, %v5633
    %v5690 = vpack.c.b16 %v5638, %v5634
    %v5691 = vpack.c.b16 %v5639, %v5635
    %v5692 = vpack.c.b16 %v5644, %v5640
    %v5693 = vpack.c.b16 %v5645, %v5641
    %v5694 = vpack.c.b16 %v5646, %v5642
    %v5695 = vpack.c.b16 %v5647, %v5643
    %v5696 = vpack.c.b16 %v5652, %v5648
    %v5697 = vpack.c.b16 %v5653, %v5649
    %v5698 = vpack.c.b16 %v5654, %v5650
    %v5699 = vpack.c.b16 %v5655, %v5651
    %v5700 = vpack.c.b16 %v5660, %v5656
    %v5701 = vpack.c.b16 %v5661, %v5657
    %v5702 = vpack.c.b16 %v5662, %v5658
    %v5703 = vpack.c.b16 %v5663, %v5659
    %v5704 = vpack.c.b16 %v5668, %v5664
    %v5705 = vpack.c.b16 %v5669, %v5665
    %v5706 = vpack.c.b16 %v5670, %v5666
    %v5707 = vpack.c.b16 %v5671, %v5667
    %v5708 = vpack.c.b16 %v5676, %v5672
    %v5709 = vpack.c.b16 %v5677, %v5673
    %v5710 = vpack.c.b16 %v5678, %v5674
    %v5711 = vpack.c.b16 %v5679, %v5675
    %5744 = vmatprep.subr.bf16.mxu0 %v5681
    %5745 = vmatpush1.bf16.msra.mxu0 %v5680
    %5746 = vmatprep.subr.bf16.mxu0 %v5685
    %5747 = vmatpush1.bf16.msra.mxu0 %v5684
    %5748 = vmatprep.subr.bf16.mxu0 %v5689
    %5749 = vmatpush1.bf16.msra.mxu0 %v5688
    %5750 = vmatprep.subr.bf16.mxu0 %v5693
    %5751 = vmatpush1.bf16.msra.mxu0 %v5692
    %5752 = vmatprep.subr.bf16.mxu0 %v5697
    %5753 = vmatpush1.bf16.msra.mxu0 %v5696
    %5754 = vmatprep.subr.bf16.mxu0 %v5701
    %5755 = vmatpush1.bf16.msra.mxu0 %v5700
    %5756 = vmatprep.subr.bf16.mxu0 %v5705
    %5757 = vmatpush1.bf16.msra.mxu0 %v5704
    %5758 = vmatprep.subr.bf16.mxu0 %v5709
    %5759 = vmatpush1.bf16.msra.mxu0 %v5708
    %5760 = vmatprep.subr.bf16.mxu0 0
    %5761 = vmatpush1.bf16.msra.mxu0 0
    %5762 = vmatprep.subr.bf16.mxu0 0
    %5763 = vmatpush1.bf16.msra.mxu0 0
    %5764 = vmatprep.subr.bf16.mxu0 0
    %5765 = vmatpush1.bf16.msra.mxu0 0
    %5766 = vmatprep.subr.bf16.mxu0 0
    %5767 = vmatpush1.bf16.msra.mxu0 0
    %5768 = vmatprep.subr.bf16.mxu0 0
    %5769 = vmatpush1.bf16.msra.mxu0 0
    %5770 = vmatprep.subr.bf16.mxu0 0
    %5771 = vmatpush1.bf16.msra.mxu0 0
    %5772 = vmatprep.subr.bf16.mxu0 0
    %5773 = vmatpush1.bf16.msra.mxu0 0
    %5774 = vmatprep.subr.bf16.mxu0 0
    %5775 = vmatpush1.bf16.msra.mxu0 0
    %5776 = vmatprep.mubr.bf16.mxu0 0
    %5777 = vmatmul.mubr.bf16.gmra.mrb[0].mxu0 %v5534
    %v5778 = vpop.f32.mrb[0].mxu0
    %v5779 = vadd.f32 0.0, %v5778
    %v5780 = vpop.f32.mrb[0].mxu0
    %v5781 = vadd.f32 0.0, %v5780
    %v5782 = vpop.f32.mrb[0].mxu0
    %v5783 = vadd.f32 0.0, %v5782
    %v5784 = vpop.f32.mrb[0].mxu0
    %v5785 = vadd.f32 0.0, %v5784
    %5786 = vdwg.mxu0
    %5787 = vmatprep.subr.bf16.mxu0 %v5683
    %5788 = vmatpush1.bf16.msra.mxu0 %v5682
    %5789 = vmatprep.subr.bf16.mxu0 %v5687
    %5790 = vmatpush1.bf16.msra.mxu0 %v5686
    %5791 = vmatprep.subr.bf16.mxu0 %v5691
    %5792 = vmatpush1.bf16.msra.mxu0 %v5690
    %5793 = vmatprep.subr.bf16.mxu0 %v5695
    %5794 = vmatpush1.bf16.msra.mxu0 %v5694
    %5795 = vmatprep.subr.bf16.mxu0 %v5699
    %5796 = vmatpush1.bf16.msra.mxu0 %v5698
    %5797 = vmatprep.subr.bf16.mxu0 %v5703
    %5798 = vmatpush1.bf16.msra.mxu0 %v5702
    %5799 = vmatprep.subr.bf16.mxu0 %v5707
    %5800 = vmatpush1.bf16.msra.mxu0 %v5706
    %5801 = vmatprep.subr.bf16.mxu0 %v5711
    %5802 = vmatpush1.bf16.msra.mxu0 %v5710
    %5803 = vmatprep.subr.bf16.mxu0 0
    %5804 = vmatpush1.bf16.msra.mxu0 0
    %5805 = vmatprep.subr.bf16.mxu0 0
    %5806 = vmatpush1.bf16.msra.mxu0 0
    %5807 = vmatprep.subr.bf16.mxu0 0
    %5808 = vmatpush1.bf16.msra.mxu0 0
    %5809 = vmatprep.subr.bf16.mxu0 0
    %5810 = vmatpush1.bf16.msra.mxu0 0
    %5811 = vmatprep.subr.bf16.mxu0 0
    %5812 = vmatpush1.bf16.msra.mxu0 0
    %5813 = vmatprep.subr.bf16.mxu0 0
    %5814 = vmatpush1.bf16.msra.mxu0 0
    %5815 = vmatprep.subr.bf16.mxu0 0
    %5816 = vmatpush1.bf16.msra.mxu0 0
    %5817 = vmatprep.subr.bf16.mxu0 0
    %5818 = vmatpush1.bf16.msra.mxu0 0
    %5819 = vmatprep.mubr.bf16.mxu0 0
    %5820 = vmatmul.mubr.bf16.gmra.mrb[0].mxu0 %v5534
    %v5821 = vpop.f32.mrb[0].mxu0
    %v5822 = vadd.f32 0.0, %v5821
    %v5823 = vpop.f32.mrb[0].mxu0
    %v5824 = vadd.f32 0.0, %v5823
    %v5825 = vpop.f32.mrb[0].mxu0
    %v5826 = vadd.f32 0.0, %v5825
    %v5827 = vpop.f32.mrb[0].mxu0
    %v5828 = vadd.f32 0.0, %v5827
    %5829 = vdwg.mxu0
    %v5830 = vadd.f32 %v5544, %v5779
    %v5831 = vadd.f32 %v5545, %v5781
    %v5832 = vadd.f32 %v5546, %v5822
    %v5833 = vadd.f32 %v5547, %v5824
    %v5834 = vadd.f32 %v5548, %v5783
    %v5835 = vadd.f32 %v5549, %v5785
    %v5836 = vadd.f32 %v5550, %v5826
    %v5837 = vadd.f32 %v5551, %v5828
    %v5838 = vxor.u32 %v5830, 2147483648
    %v5839 = vxor.u32 %v5834, 2147483648
    %v5840 = vmul.f32 %v5838, 1.442695
    %v5841 = vpow.pop %v5840
    %v5842 = vmul.f32 %v5839, 1.442695
    %v5843 = vpow.pop %v5842
    %v5844 = vadd.f32 %v5841, 1.0
    %v5845 = vadd.f32 %v5843, 1.0
    %v5846 = vrcp.pop %v5844
    %v5847 = vmul.f32 1.0, %v5846
    %v5848 = vrcp.pop %v5845
    %v5849 = vmul.f32 1.0, %v5848
    %v5850 = vxor.u32 %v5831, 2147483648
    %v5851 = vxor.u32 %v5835, 2147483648
    %v5852 = vmul.f32 %v5850, 1.442695
    %v5853 = vpow.pop %v5852
    %v5854 = vmul.f32 %v5851, 1.442695
    %v5855 = vpow.pop %v5854
    %v5856 = vadd.f32 %v5853, 1.0
    %v5857 = vadd.f32 %v5855, 1.0
    %v5858 = vrcp.pop %v5856
    %v5859 = vmul.f32 1.0, %v5858
    %v5860 = vrcp.pop %v5857
    %v5861 = vmul.f32 1.0, %v5860
    %v5862 = vtanh.pop %v5832
    %v5863 = vtanh.pop %v5836
    %v5864 = vxor.u32 %v5833, 2147483648
    %v5865 = vxor.u32 %v5837, 2147483648
    %v5866 = vmul.f32 %v5864, 1.442695
    %v5867 = vpow.pop %v5866
    %v5868 = vmul.f32 %v5865, 1.442695
    %v5869 = vpow.pop %v5868
    %v5870 = vadd.f32 %v5867, 1.0
    %v5871 = vadd.f32 %v5869, 1.0
    %v5872 = vrcp.pop %v5870
    %v5873 = vmul.f32 1.0, %v5872
    %v5874 = vrcp.pop %v5871
    %v5875 = vmul.f32 1.0, %v5874
    %v5876 = vmul.f32 %v5859, %v5528
    %v5877 = vmul.f32 %v5861, %v5529
    %v5878 = vmul.f32 %v5847, %v5862
    %v5879 = vmul.f32 %v5849, %v5863
    %v5880 = vadd.f32 %v5876, %v5878
    %v5881 = vadd.f32 %v5877, %v5879
    %v5882 = vtanh.pop %v5880
    %v5883 = vtanh.pop %v5881
    %v5884 = vmul.f32 %v5873, %v5882
    %v5885 = vmul.f32 %v5875, %v5883
    %v5886 = vpack.c.bf16 %v5885, %v5884
    %v5888 = vunpack.c.l.b16 %v5886
    %v5889 = vunpack.c.h.b16 %v5886
    %v5890 = vpack.c.b16 %v5888, %v5888
    %v5891 = vpack.c.b16 %v5889, %v5889
    %5894 = vst [vmem:[%s2111] sm:$0xf] %v5890
    %5895 = vst [vmem:[%s2111 + $0x4] sm:$0xf] %v5891
    %v5896 = vld [vmem:[%s2114] sm:$0xff]
    %v5897 = vld [vmem:[%s2114 + $0x8] sm:$0xff]
    %v5898 = vld [vmem:[%s2114 + $0x10] sm:$0xff]
    %v5899 = vld [vmem:[%s2114 + $0x18] sm:$0xff]
    %v5900 = vld [vmem:[%s2114 + $0x20] sm:$0xff]
    %v5901 = vld [vmem:[%s2114 + $0x28] sm:$0xff]
    %v5902 = vld [vmem:[%s2114 + $0x30] sm:$0xff]
    %v5903 = vld [vmem:[%s2114 + $0x38] sm:$0xff]
    %v5904 = vld [vmem:[#allocation11] sm:$0xff]
    %v5905 = vld [vmem:[#allocation11 + $0x8] sm:$0xff]
    %v5906 = vld [vmem:[#allocation11 + $0x10] sm:$0xff]
    %v5907 = vld [vmem:[#allocation11 + $0x18] sm:$0xff]
    %v5908 = vld [vmem:[#allocation11 + $0x20] sm:$0xff]
    %v5909 = vld [vmem:[#allocation11 + $0x28] sm:$0xff]
    %v5910 = vld [vmem:[#allocation11 + $0x30] sm:$0xff]
    %v5911 = vld [vmem:[#allocation11 + $0x38] sm:$0xff]
    %v5912 = vld [vmem:[#allocation11 + $0x40] sm:$0xff]
    %v5913 = vld [vmem:[#allocation11 + $0x48] sm:$0xff]
    %v5914 = vld [vmem:[#allocation11 + $0x50] sm:$0xff]
    %v5915 = vld [vmem:[#allocation11 + $0x58] sm:$0xff]
    %v5916 = vld [vmem:[#allocation11 + $0x60] sm:$0xff]
    %v5917 = vld [vmem:[#allocation11 + $0x68] sm:$0xff]
    %v5918 = vld [vmem:[#allocation11 + $0x70] sm:$0xff]
    %v5919 = vld [vmem:[#allocation11 + $0x78] sm:$0xff]
    %v5920 = vld [vmem:[#allocation11 + $0x80] sm:$0xff]
    %v5921 = vld [vmem:[#allocation11 + $0x88] sm:$0xff]
    %v5922 = vld [vmem:[#allocation11 + $0x90] sm:$0xff]
    %v5923 = vld [vmem:[#allocation11 + $0x98] sm:$0xff]
    %v5924 = vld [vmem:[#allocation11 + $0xa0] sm:$0xff]
    %v5925 = vld [vmem:[#allocation11 + $0xa8] sm:$0xff]
    %v5926 = vld [vmem:[#allocation11 + $0xb0] sm:$0xff]
    %v5927 = vld [vmem:[#allocation11 + $0xb8] sm:$0xff]
    %v5928 = vld [vmem:[#allocation11 + $0xc0] sm:$0xff]
    %v5929 = vld [vmem:[#allocation11 + $0xc8] sm:$0xff]
    %v5930 = vld [vmem:[#allocation11 + $0xd0] sm:$0xff]
    %v5931 = vld [vmem:[#allocation11 + $0xd8] sm:$0xff]
    %v5932 = vld [vmem:[#allocation11 + $0xe0] sm:$0xff]
    %v5933 = vld [vmem:[#allocation11 + $0xe8] sm:$0xff]
    %v5934 = vld [vmem:[#allocation11 + $0xf0] sm:$0xff]
    %v5935 = vld [vmem:[#allocation11 + $0xf8] sm:$0xff]
    %v5968 = vunpack.c.l.b16 %v5904
    %v5969 = vunpack.c.h.b16 %v5904
    %v5970 = vunpack.c.l.b16 %v5905
    %v5971 = vunpack.c.h.b16 %v5905
    %v5972 = vunpack.c.l.b16 %v5906
    %v5973 = vunpack.c.h.b16 %v5906
    %v5974 = vunpack.c.l.b16 %v5907
    %v5975 = vunpack.c.h.b16 %v5907
    %v5976 = vunpack.c.l.b16 %v5908
    %v5977 = vunpack.c.h.b16 %v5908
    %v5978 = vunpack.c.l.b16 %v5909
    %v5979 = vunpack.c.h.b16 %v5909
    %v5980 = vunpack.c.l.b16 %v5910
    %v5981 = vunpack.c.h.b16 %v5910
    %v5982 = vunpack.c.l.b16 %v5911
    %v5983 = vunpack.c.h.b16 %v5911
    %v5984 = vunpack.c.l.b16 %v5912
    %v5985 = vunpack.c.h.b16 %v5912
    %v5986 = vunpack.c.l.b16 %v5913
    %v5987 = vunpack.c.h.b16 %v5913
    %v5988 = vunpack.c.l.b16 %v5914
    %v5989 = vunpack.c.h.b16 %v5914
    %v5990 = vunpack.c.l.b16 %v5915
    %v5991 = vunpack.c.h.b16 %v5915
    %v5992 = vunpack.c.l.b16 %v5916
    %v5993 = vunpack.c.h.b16 %v5916
    %v5994 = vunpack.c.l.b16 %v5917
    %v5995 = vunpack.c.h.b16 %v5917
    %v5996 = vunpack.c.l.b16 %v5918
    %v5997 = vunpack.c.h.b16 %v5918
    %v5998 = vunpack.c.l.b16 %v5919
    %v5999 = vunpack.c.h.b16 %v5919
    %v6000 = vunpack.c.l.b16 %v5920
    %v6001 = vunpack.c.h.b16 %v5920
    %v6002 = vunpack.c.l.b16 %v5921
    %v6003 = vunpack.c.h.b16 %v5921
    %v6004 = vunpack.c.l.b16 %v5922
    %v6005 = vunpack.c.h.b16 %v5922
    %v6006 = vunpack.c.l.b16 %v5923
    %v6007 = vunpack.c.h.b16 %v5923
    %v6008 = vunpack.c.l.b16 %v5924
    %v6009 = vunpack.c.h.b16 %v5924
    %v6010 = vunpack.c.l.b16 %v5925
    %v6011 = vunpack.c.h.b16 %v5925
    %v6012 = vunpack.c.l.b16 %v5926
    %v6013 = vunpack.c.h.b16 %v5926
    %v6014 = vunpack.c.l.b16 %v5927
    %v6015 = vunpack.c.h.b16 %v5927
    %v6016 = vunpack.c.l.b16 %v5928
    %v6017 = vunpack.c.h.b16 %v5928
    %v6018 = vunpack.c.l.b16 %v5929
    %v6019 = vunpack.c.h.b16 %v5929
    %v6020 = vunpack.c.l.b16 %v5930
    %v6021 = vunpack.c.h.b16 %v5930
    %v6022 = vunpack.c.l.b16 %v5931
    %v6023 = vunpack.c.h.b16 %v5931
    %v6024 = vunpack.c.l.b16 %v5932
    %v6025 = vunpack.c.h.b16 %v5932
    %v6026 = vunpack.c.l.b16 %v5933
    %v6027 = vunpack.c.h.b16 %v5933
    %v6028 = vunpack.c.l.b16 %v5934
    %v6029 = vunpack.c.h.b16 %v5934
    %v6030 = vunpack.c.l.b16 %v5935
    %v6031 = vunpack.c.h.b16 %v5935
    %v6032 = vpack.c.b16 %v5972, %v5968
    %v6033 = vpack.c.b16 %v5973, %v5969
    %v6034 = vpack.c.b16 %v5974, %v5970
    %v6035 = vpack.c.b16 %v5975, %v5971
    %v6036 = vpack.c.b16 %v5980, %v5976
    %v6037 = vpack.c.b16 %v5981, %v5977
    %v6038 = vpack.c.b16 %v5982, %v5978
    %v6039 = vpack.c.b16 %v5983, %v5979
    %v6040 = vpack.c.b16 %v5988, %v5984
    %v6041 = vpack.c.b16 %v5989, %v5985
    %v6042 = vpack.c.b16 %v5990, %v5986
    %v6043 = vpack.c.b16 %v5991, %v5987
    %v6044 = vpack.c.b16 %v5996, %v5992
    %v6045 = vpack.c.b16 %v5997, %v5993
    %v6046 = vpack.c.b16 %v5998, %v5994
    %v6047 = vpack.c.b16 %v5999, %v5995
    %v6048 = vpack.c.b16 %v6004, %v6000
    %v6049 = vpack.c.b16 %v6005, %v6001
    %v6050 = vpack.c.b16 %v6006, %v6002
    %v6051 = vpack.c.b16 %v6007, %v6003
    %v6052 = vpack.c.b16 %v6012, %v6008
    %v6053 = vpack.c.b16 %v6013, %v6009
    %v6054 = vpack.c.b16 %v6014, %v6010
    %v6055 = vpack.c.b16 %v6015, %v6011
    %v6056 = vpack.c.b16 %v6020, %v6016
    %v6057 = vpack.c.b16 %v6021, %v6017
    %v6058 = vpack.c.b16 %v6022, %v6018
    %v6059 = vpack.c.b16 %v6023, %v6019
    %v6060 = vpack.c.b16 %v6028, %v6024
    %v6061 = vpack.c.b16 %v6029, %v6025
    %v6062 = vpack.c.b16 %v6030, %v6026
    %v6063 = vpack.c.b16 %v6031, %v6027
    %6096 = vmatprep.subr.bf16.mxu0 %v6033
    %6097 = vmatpush1.bf16.msra.mxu0 %v6032
    %6098 = vmatprep.subr.bf16.mxu0 %v6037
    %6099 = vmatpush1.bf16.msra.mxu0 %v6036
    %6100 = vmatprep.subr.bf16.mxu0 %v6041
    %6101 = vmatpush1.bf16.msra.mxu0 %v6040
    %6102 = vmatprep.subr.bf16.mxu0 %v6045
    %6103 = vmatpush1.bf16.msra.mxu0 %v6044
    %6104 = vmatprep.subr.bf16.mxu0 %v6049
    %6105 = vmatpush1.bf16.msra.mxu0 %v6048
    %6106 = vmatprep.subr.bf16.mxu0 %v6053
    %6107 = vmatpush1.bf16.msra.mxu0 %v6052
    %6108 = vmatprep.subr.bf16.mxu0 %v6057
    %6109 = vmatpush1.bf16.msra.mxu0 %v6056
    %6110 = vmatprep.subr.bf16.mxu0 %v6061
    %6111 = vmatpush1.bf16.msra.mxu0 %v6060
    %6112 = vmatprep.subr.bf16.mxu0 0
    %6113 = vmatpush1.bf16.msra.mxu0 0
    %6114 = vmatprep.subr.bf16.mxu0 0
    %6115 = vmatpush1.bf16.msra.mxu0 0
    %6116 = vmatprep.subr.bf16.mxu0 0
    %6117 = vmatpush1.bf16.msra.mxu0 0
    %6118 = vmatprep.subr.bf16.mxu0 0
    %6119 = vmatpush1.bf16.msra.mxu0 0
    %6120 = vmatprep.subr.bf16.mxu0 0
    %6121 = vmatpush1.bf16.msra.mxu0 0
    %6122 = vmatprep.subr.bf16.mxu0 0
    %6123 = vmatpush1.bf16.msra.mxu0 0
    %6124 = vmatprep.subr.bf16.mxu0 0
    %6125 = vmatpush1.bf16.msra.mxu0 0
    %6126 = vmatprep.subr.bf16.mxu0 0
    %6127 = vmatpush1.bf16.msra.mxu0 0
    %6128 = vmatprep.mubr.bf16.mxu0 0
    %6129 = vmatmul.mubr.bf16.gmra.mrb[0].mxu0 %v5886
    %v6130 = vpop.f32.mrb[0].mxu0
    %v6131 = vadd.f32 0.0, %v6130
    %v6132 = vpop.f32.mrb[0].mxu0
    %v6133 = vadd.f32 0.0, %v6132
    %v6134 = vpop.f32.mrb[0].mxu0
    %v6135 = vadd.f32 0.0, %v6134
    %v6136 = vpop.f32.mrb[0].mxu0
    %v6137 = vadd.f32 0.0, %v6136
    %6138 = vdwg.mxu0
    %6139 = vmatprep.subr.bf16.mxu0 %v6035
    %6140 = vmatpush1.bf16.msra.mxu0 %v6034
    %6141 = vmatprep.subr.bf16.mxu0 %v6039
    %6142 = vmatpush1.bf16.msra.mxu0 %v6038
    %6143 = vmatprep.subr.bf16.mxu0 %v6043
    %6144 = vmatpush1.bf16.msra.mxu0 %v6042
    %6145 = vmatprep.subr.bf16.mxu0 %v6047
    %6146 = vmatpush1.bf16.msra.mxu0 %v6046
    %6147 = vmatprep.subr.bf16.mxu0 %v6051
    %6148 = vmatpush1.bf16.msra.mxu0 %v6050
    %6149 = vmatprep.subr.bf16.mxu0 %v6055
    %6150 = vmatpush1.bf16.msra.mxu0 %v6054
    %6151 = vmatprep.subr.bf16.mxu0 %v6059
    %6152 = vmatpush1.bf16.msra.mxu0 %v6058
    %6153 = vmatprep.subr.bf16.mxu0 %v6063
    %6154 = vmatpush1.bf16.msra.mxu0 %v6062
    %6155 = vmatprep.subr.bf16.mxu0 0
    %6156 = vmatpush1.bf16.msra.mxu0 0
    %6157 = vmatprep.subr.bf16.mxu0 0
    %6158 = vmatpush1.bf16.msra.mxu0 0
    %6159 = vmatprep.subr.bf16.mxu0 0
    %6160 = vmatpush1.bf16.msra.mxu0 0
    %6161 = vmatprep.subr.bf16.mxu0 0
    %6162 = vmatpush1.bf16.msra.mxu0 0
    %6163 = vmatprep.subr.bf16.mxu0 0
    %6164 = vmatpush1.bf16.msra.mxu0 0
    %6165 = vmatprep.subr.bf16.mxu0 0
    %6166 = vmatpush1.bf16.msra.mxu0 0
    %6167 = vmatprep.subr.bf16.mxu0 0
    %6168 = vmatpush1.bf16.msra.mxu0 0
    %6169 = vmatprep.subr.bf16.mxu0 0
    %6170 = vmatpush1.bf16.msra.mxu0 0
    %6171 = vmatprep.mubr.bf16.mxu0 0
    %6172 = vmatmul.mubr.bf16.gmra.mrb[0].mxu0 %v5886
    %v6173 = vpop.f32.mrb[0].mxu0
    %v6174 = vadd.f32 0.0, %v6173
    %v6175 = vpop.f32.mrb[0].mxu0
    %v6176 = vadd.f32 0.0, %v6175
    %v6177 = vpop.f32.mrb[0].mxu0
    %v6178 = vadd.f32 0.0, %v6177
    %v6179 = vpop.f32.mrb[0].mxu0
    %v6180 = vadd.f32 0.0, %v6179
    %6181 = vdwg.mxu0
    %v6182 = vadd.f32 %v5896, %v6131
    %v6183 = vadd.f32 %v5897, %v6133
    %v6184 = vadd.f32 %v5898, %v6174
    %v6185 = vadd.f32 %v5899, %v6176
    %v6186 = vadd.f32 %v5900, %v6135
    %v6187 = vadd.f32 %v5901, %v6137
    %v6188 = vadd.f32 %v5902, %v6178
    %v6189 = vadd.f32 %v5903, %v6180
    %v6190 = vxor.u32 %v6182, 2147483648
    %v6191 = vxor.u32 %v6186, 2147483648
    %v6192 = vmul.f32 %v6190, 1.442695
    %v6193 = vpow.pop %v6192
    %v6194 = vmul.f32 %v6191, 1.442695
    %v6195 = vpow.pop %v6194
    %v6196 = vadd.f32 %v6193, 1.0
    %v6197 = vadd.f32 %v6195, 1.0
    %v6198 = vrcp.pop %v6196
    %v6199 = vmul.f32 1.0, %v6198
    %v6200 = vrcp.pop %v6197
    %v6201 = vmul.f32 1.0, %v6200
    %v6202 = vxor.u32 %v6183, 2147483648
    %v6203 = vxor.u32 %v6187, 2147483648
    %v6204 = vmul.f32 %v6202, 1.442695
    %v6205 = vpow.pop %v6204
    %v6206 = vmul.f32 %v6203, 1.442695
    %v6207 = vpow.pop %v6206
    %v6208 = vadd.f32 %v6205, 1.0
    %v6209 = vadd.f32 %v6207, 1.0
    %v6210 = vrcp.pop %v6208
    %v6211 = vmul.f32 1.0, %v6210
    %v6212 = vrcp.pop %v6209
    %v6213 = vmul.f32 1.0, %v6212
    %v6214 = vtanh.pop %v6184
    %v6215 = vtanh.pop %v6188
    %v6216 = vxor.u32 %v6185, 2147483648
    %v6217 = vxor.u32 %v6189, 2147483648
    %v6218 = vmul.f32 %v6216, 1.442695
    %v6219 = vpow.pop %v6218
    %v6220 = vmul.f32 %v6217, 1.442695
    %v6221 = vpow.pop %v6220
    %v6222 = vadd.f32 %v6219, 1.0
    %v6223 = vadd.f32 %v6221, 1.0
    %v6224 = vrcp.pop %v6222
    %v6225 = vmul.f32 1.0, %v6224
    %v6226 = vrcp.pop %v6223
    %v6227 = vmul.f32 1.0, %v6226
    %v6228 = vmul.f32 %v6211, %v5880
    %v6229 = vmul.f32 %v6213, %v5881
    %v6230 = vmul.f32 %v6199, %v6214
    %v6231 = vmul.f32 %v6201, %v6215
    %v6232 = vadd.f32 %v6228, %v6230
    %v6233 = vadd.f32 %v6229, %v6231
    %v6234 = vtanh.pop %v6232
    %v6235 = vtanh.pop %v6233
    %v6236 = vmul.f32 %v6225, %v6234
    %v6237 = vmul.f32 %v6227, %v6235
    %v6238 = vpack.c.bf16 %v6237, %v6236
    %v6240 = vunpack.c.l.b16 %v6238
    %v6241 = vunpack.c.h.b16 %v6238
    %v6242 = vpack.c.b16 %v6240, %v6240
    %v6243 = vpack.c.b16 %v6241, %v6241
    %6246 = vst [vmem:[%s2465] sm:$0xf] %v6242
    %6247 = vst [vmem:[%s2465 + $0x4] sm:$0xf] %v6243
    %v6248 = vld [vmem:[%s2468] sm:$0xff]
    %v6249 = vld [vmem:[%s2468 + $0x8] sm:$0xff]
    %v6250 = vld [vmem:[%s2468 + $0x10] sm:$0xff]
    %v6251 = vld [vmem:[%s2468 + $0x18] sm:$0xff]
    %v6252 = vld [vmem:[%s2468 + $0x20] sm:$0xff]
    %v6253 = vld [vmem:[%s2468 + $0x28] sm:$0xff]
    %v6254 = vld [vmem:[%s2468 + $0x30] sm:$0xff]
    %v6255 = vld [vmem:[%s2468 + $0x38] sm:$0xff]
    %v6256 = vld [vmem:[#allocation11] sm:$0xff]
    %v6257 = vld [vmem:[#allocation11 + $0x8] sm:$0xff]
    %v6258 = vld [vmem:[#allocation11 + $0x10] sm:$0xff]
    %v6259 = vld [vmem:[#allocation11 + $0x18] sm:$0xff]
    %v6260 = vld [vmem:[#allocation11 + $0x20] sm:$0xff]
    %v6261 = vld [vmem:[#allocation11 + $0x28] sm:$0xff]
    %v6262 = vld [vmem:[#allocation11 + $0x30] sm:$0xff]
    %v6263 = vld [vmem:[#allocation11 + $0x38] sm:$0xff]
    %v6264 = vld [vmem:[#allocation11 + $0x40] sm:$0xff]
    %v6265 = vld [vmem:[#allocation11 + $0x48] sm:$0xff]
    %v6266 = vld [vmem:[#allocation11 + $0x50] sm:$0xff]
    %v6267 = vld [vmem:[#allocation11 + $0x58] sm:$0xff]
    %v6268 = vld [vmem:[#allocation11 + $0x60] sm:$0xff]
    %v6269 = vld [vmem:[#allocation11 + $0x68] sm:$0xff]
    %v6270 = vld [vmem:[#allocation11 + $0x70] sm:$0xff]
    %v6271 = vld [vmem:[#allocation11 + $0x78] sm:$0xff]
    %v6272 = vld [vmem:[#allocation11 + $0x80] sm:$0xff]
    %v6273 = vld [vmem:[#allocation11 + $0x88] sm:$0xff]
    %v6274 = vld [vmem:[#allocation11 + $0x90] sm:$0xff]
    %v6275 = vld [vmem:[#allocation11 + $0x98] sm:$0xff]
    %v6276 = vld [vmem:[#allocation11 + $0xa0] sm:$0xff]
    %v6277 = vld [vmem:[#allocation11 + $0xa8] sm:$0xff]
    %v6278 = vld [vmem:[#allocation11 + $0xb0] sm:$0xff]
    %v6279 = vld [vmem:[#allocation11 + $0xb8] sm:$0xff]
    %v6280 = vld [vmem:[#allocation11 + $0xc0] sm:$0xff]
    %v6281 = vld [vmem:[#allocation11 + $0xc8] sm:$0xff]
    %v6282 = vld [vmem:[#allocation11 + $0xd0] sm:$0xff]
    %v6283 = vld [vmem:[#allocation11 + $0xd8] sm:$0xff]
    %v6284 = vld [vmem:[#allocation11 + $0xe0] sm:$0xff]
    %v6285 = vld [vmem:[#allocation11 + $0xe8] sm:$0xff]
    %v6286 = vld [vmem:[#allocation11 + $0xf0] sm:$0xff]
    %v6287 = vld [vmem:[#allocation11 + $0xf8] sm:$0xff]
    %v6320 = vunpack.c.l.b16 %v6256
    %v6321 = vunpack.c.h.b16 %v6256
    %v6322 = vunpack.c.l.b16 %v6257
    %v6323 = vunpack.c.h.b16 %v6257
    %v6324 = vunpack.c.l.b16 %v6258
    %v6325 = vunpack.c.h.b16 %v6258
    %v6326 = vunpack.c.l.b16 %v6259
    %v6327 = vunpack.c.h.b16 %v6259
    %v6328 = vunpack.c.l.b16 %v6260
    %v6329 = vunpack.c.h.b16 %v6260
    %v6330 = vunpack.c.l.b16 %v6261
    %v6331 = vunpack.c.h.b16 %v6261
    %v6332 = vunpack.c.l.b16 %v6262
    %v6333 = vunpack.c.h.b16 %v6262
    %v6334 = vunpack.c.l.b16 %v6263
    %v6335 = vunpack.c.h.b16 %v6263
    %v6336 = vunpack.c.l.b16 %v6264
    %v6337 = vunpack.c.h.b16 %v6264
    %v6338 = vunpack.c.l.b16 %v6265
    %v6339 = vunpack.c.h.b16 %v6265
    %v6340 = vunpack.c.l.b16 %v6266
    %v6341 = vunpack.c.h.b16 %v6266
    %v6342 = vunpack.c.l.b16 %v6267
    %v6343 = vunpack.c.h.b16 %v6267
    %v6344 = vunpack.c.l.b16 %v6268
    %v6345 = vunpack.c.h.b16 %v6268
    %v6346 = vunpack.c.l.b16 %v6269
    %v6347 = vunpack.c.h.b16 %v6269
    %v6348 = vunpack.c.l.b16 %v6270
    %v6349 = vunpack.c.h.b16 %v6270
    %v6350 = vunpack.c.l.b16 %v6271
    %v6351 = vunpack.c.h.b16 %v6271
    %v6352 = vunpack.c.l.b16 %v6272
    %v6353 = vunpack.c.h.b16 %v6272
    %v6354 = vunpack.c.l.b16 %v6273
    %v6355 = vunpack.c.h.b16 %v6273
    %v6356 = vunpack.c.l.b16 %v6274
    %v6357 = vunpack.c.h.b16 %v6274
    %v6358 = vunpack.c.l.b16 %v6275
    %v6359 = vunpack.c.h.b16 %v6275
    %v6360 = vunpack.c.l.b16 %v6276
    %v6361 = vunpack.c.h.b16 %v6276
    %v6362 = vunpack.c.l.b16 %v6277
    %v6363 = vunpack.c.h.b16 %v6277
    %v6364 = vunpack.c.l.b16 %v6278
    %v6365 = vunpack.c.h.b16 %v6278
    %v6366 = vunpack.c.l.b16 %v6279
    %v6367 = vunpack.c.h.b16 %v6279
    %v6368 = vunpack.c.l.b16 %v6280
    %v6369 = vunpack.c.h.b16 %v6280
    %v6370 = vunpack.c.l.b16 %v6281
    %v6371 = vunpack.c.h.b16 %v6281
    %v6372 = vunpack.c.l.b16 %v6282
    %v6373 = vunpack.c.h.b16 %v6282
    %v6374 = vunpack.c.l.b16 %v6283
    %v6375 = vunpack.c.h.b16 %v6283
    %v6376 = vunpack.c.l.b16 %v6284
    %v6377 = vunpack.c.h.b16 %v6284
    %v6378 = vunpack.c.l.b16 %v6285
    %v6379 = vunpack.c.h.b16 %v6285
    %v6380 = vunpack.c.l.b16 %v6286
    %v6381 = vunpack.c.h.b16 %v6286
    %v6382 = vunpack.c.l.b16 %v6287
    %v6383 = vunpack.c.h.b16 %v6287
    %v6384 = vpack.c.b16 %v6324, %v6320
    %v6385 = vpack.c.b16 %v6325, %v6321
    %v6386 = vpack.c.b16 %v6326, %v6322
    %v6387 = vpack.c.b16 %v6327, %v6323
    %v6388 = vpack.c.b16 %v6332, %v6328
    %v6389 = vpack.c.b16 %v6333, %v6329
    %v6390 = vpack.c.b16 %v6334, %v6330
    %v6391 = vpack.c.b16 %v6335, %v6331
    %v6392 = vpack.c.b16 %v6340, %v6336
    %v6393 = vpack.c.b16 %v6341, %v6337
    %v6394 = vpack.c.b16 %v6342, %v6338
    %v6395 = vpack.c.b16 %v6343, %v6339
    %v6396 = vpack.c.b16 %v6348, %v6344
    %v6397 = vpack.c.b16 %v6349, %v6345
    %v6398 = vpack.c.b16 %v6350, %v6346
    %v6399 = vpack.c.b16 %v6351, %v6347
    %v6400 = vpack.c.b16 %v6356, %v6352
    %v6401 = vpack.c.b16 %v6357, %v6353
    %v6402 = vpack.c.b16 %v6358, %v6354
    %v6403 = vpack.c.b16 %v6359, %v6355
    %v6404 = vpack.c.b16 %v6364, %v6360
    %v6405 = vpack.c.b16 %v6365, %v6361
    %v6406 = vpack.c.b16 %v6366, %v6362
    %v6407 = vpack.c.b16 %v6367, %v6363
    %v6408 = vpack.c.b16 %v6372, %v6368
    %v6409 = vpack.c.b16 %v6373, %v6369
    %v6410 = vpack.c.b16 %v6374, %v6370
    %v6411 = vpack.c.b16 %v6375, %v6371
    %v6412 = vpack.c.b16 %v6380, %v6376
    %v6413 = vpack.c.b16 %v6381, %v6377
    %v6414 = vpack.c.b16 %v6382, %v6378
    %v6415 = vpack.c.b16 %v6383, %v6379
    %6448 = vmatprep.subr.bf16.mxu0 %v6385
    %6449 = vmatpush1.bf16.msra.mxu0 %v6384
    %6450 = vmatprep.subr.bf16.mxu0 %v6389
    %6451 = vmatpush1.bf16.msra.mxu0 %v6388
    %6452 = vmatprep.subr.bf16.mxu0 %v6393
    %6453 = vmatpush1.bf16.msra.mxu0 %v6392
    %6454 = vmatprep.subr.bf16.mxu0 %v6397
    %6455 = vmatpush1.bf16.msra.mxu0 %v6396
    %6456 = vmatprep.subr.bf16.mxu0 %v6401
    %6457 = vmatpush1.bf16.msra.mxu0 %v6400
    %6458 = vmatprep.subr.bf16.mxu0 %v6405
    %6459 = vmatpush1.bf16.msra.mxu0 %v6404
    %6460 = vmatprep.subr.bf16.mxu0 %v6409
    %6461 = vmatpush1.bf16.msra.mxu0 %v6408
    %6462 = vmatprep.subr.bf16.mxu0 %v6413
    %6463 = vmatpush1.bf16.msra.mxu0 %v6412
    %6464 = vmatprep.subr.bf16.mxu0 0
    %6465 = vmatpush1.bf16.msra.mxu0 0
    %6466 = vmatprep.subr.bf16.mxu0 0
    %6467 = vmatpush1.bf16.msra.mxu0 0
    %6468 = vmatprep.subr.bf16.mxu0 0
    %6469 = vmatpush1.bf16.msra.mxu0 0
    %6470 = vmatprep.subr.bf16.mxu0 0
    %6471 = vmatpush1.bf16.msra.mxu0 0
    %6472 = vmatprep.subr.bf16.mxu0 0
    %6473 = vmatpush1.bf16.msra.mxu0 0
    %6474 = vmatprep.subr.bf16.mxu0 0
    %6475 = vmatpush1.bf16.msra.mxu0 0
    %6476 = vmatprep.subr.bf16.mxu0 0
    %6477 = vmatpush1.bf16.msra.mxu0 0
    %6478 = vmatprep.subr.bf16.mxu0 0
    %6479 = vmatpush1.bf16.msra.mxu0 0
    %6480 = vmatprep.mubr.bf16.mxu0 0
    %6481 = vmatmul.mubr.bf16.gmra.mrb[0].mxu0 %v6238
    %v6482 = vpop.f32.mrb[0].mxu0
    %v6483 = vadd.f32 0.0, %v6482
    %v6484 = vpop.f32.mrb[0].mxu0
    %v6485 = vadd.f32 0.0, %v6484
    %v6486 = vpop.f32.mrb[0].mxu0
    %v6487 = vadd.f32 0.0, %v6486
    %v6488 = vpop.f32.mrb[0].mxu0
    %v6489 = vadd.f32 0.0, %v6488
    %6490 = vdwg.mxu0
    %6491 = vmatprep.subr.bf16.mxu0 %v6387
    %6492 = vmatpush1.bf16.msra.mxu0 %v6386
    %6493 = vmatprep.subr.bf16.mxu0 %v6391
    %6494 = vmatpush1.bf16.msra.mxu0 %v6390
    %6495 = vmatprep.subr.bf16.mxu0 %v6395
    %6496 = vmatpush1.bf16.msra.mxu0 %v6394
    %6497 = vmatprep.subr.bf16.mxu0 %v6399
    %6498 = vmatpush1.bf16.msra.mxu0 %v6398
    %6499 = vmatprep.subr.bf16.mxu0 %v6403
    %6500 = vmatpush1.bf16.msra.mxu0 %v6402
    %6501 = vmatprep.subr.bf16.mxu0 %v6407
    %6502 = vmatpush1.bf16.msra.mxu0 %v6406
    %6503 = vmatprep.subr.bf16.mxu0 %v6411
    %6504 = vmatpush1.bf16.msra.mxu0 %v6410
    %6505 = vmatprep.subr.bf16.mxu0 %v6415
    %6506 = vmatpush1.bf16.msra.mxu0 %v6414
    %6507 = vmatprep.subr.bf16.mxu0 0
    %6508 = vmatpush1.bf16.msra.mxu0 0
    %6509 = vmatprep.subr.bf16.mxu0 0
    %6510 = vmatpush1.bf16.msra.mxu0 0
    %6511 = vmatprep.subr.bf16.mxu0 0
    %6512 = vmatpush1.bf16.msra.mxu0 0
    %6513 = vmatprep.subr.bf16.mxu0 0
    %6514 = vmatpush1.bf16.msra.mxu0 0
    %6515 = vmatprep.subr.bf16.mxu0 0
    %6516 = vmatpush1.bf16.msra.mxu0 0
    %6517 = vmatprep.subr.bf16.mxu0 0
    %6518 = vmatpush1.bf16.msra.mxu0 0
    %6519 = vmatprep.subr.bf16.mxu0 0
    %6520 = vmatpush1.bf16.msra.mxu0 0
    %6521 = vmatprep.subr.bf16.mxu0 0
    %6522 = vmatpush1.bf16.msra.mxu0 0
    %6523 = vmatprep.mubr.bf16.mxu0 0
    %6524 = vmatmul.mubr.bf16.gmra.mrb[0].mxu0 %v6238
    %v6525 = vpop.f32.mrb[0].mxu0
    %v6526 = vadd.f32 0.0, %v6525
    %v6527 = vpop.f32.mrb[0].mxu0
    %v6528 = vadd.f32 0.0, %v6527
    %v6529 = vpop.f32.mrb[0].mxu0
    %v6530 = vadd.f32 0.0, %v6529
    %v6531 = vpop.f32.mrb[0].mxu0
    %v6532 = vadd.f32 0.0, %v6531
    %6533 = vdwg.mxu0
    %v6534 = vadd.f32 %v6248, %v6483
    %v6535 = vadd.f32 %v6249, %v6485
    %v6536 = vadd.f32 %v6250, %v6526
    %v6537 = vadd.f32 %v6251, %v6528
    %v6538 = vadd.f32 %v6252, %v6487
    %v6539 = vadd.f32 %v6253, %v6489
    %v6540 = vadd.f32 %v6254, %v6530
    %v6541 = vadd.f32 %v6255, %v6532
    %v6542 = vxor.u32 %v6534, 2147483648
    %v6543 = vxor.u32 %v6538, 2147483648
    %v6544 = vmul.f32 %v6542, 1.442695
    %v6545 = vpow.pop %v6544
    %v6546 = vmul.f32 %v6543, 1.442695
    %v6547 = vpow.pop %v6546
    %v6548 = vadd.f32 %v6545, 1.0
    %v6549 = vadd.f32 %v6547, 1.0
    %v6550 = vrcp.pop %v6548
    %v6551 = vmul.f32 1.0, %v6550
    %v6552 = vrcp.pop %v6549
    %v6553 = vmul.f32 1.0, %v6552
    %v6554 = vxor.u32 %v6535, 2147483648
    %v6555 = vxor.u32 %v6539, 2147483648
    %v6556 = vmul.f32 %v6554, 1.442695
    %v6557 = vpow.pop %v6556
    %v6558 = vmul.f32 %v6555, 1.442695
    %v6559 = vpow.pop %v6558
    %v6560 = vadd.f32 %v6557, 1.0
    %v6561 = vadd.f32 %v6559, 1.0
    %v6562 = vrcp.pop %v6560
    %v6563 = vmul.f32 1.0, %v6562
    %v6564 = vrcp.pop %v6561
    %v6565 = vmul.f32 1.0, %v6564
    %v6566 = vtanh.pop %v6536
    %v6567 = vtanh.pop %v6540
    %v6568 = vxor.u32 %v6537, 2147483648
    %v6569 = vxor.u32 %v6541, 2147483648
    %v6570 = vmul.f32 %v6568, 1.442695
    %v6571 = vpow.pop %v6570
    %v6572 = vmul.f32 %v6569, 1.442695
    %v6573 = vpow.pop %v6572
    %v6574 = vadd.f32 %v6571, 1.0
    %v6575 = vadd.f32 %v6573, 1.0
    %v6576 = vrcp.pop %v6574
    %v6577 = vmul.f32 1.0, %v6576
    %v6578 = vrcp.pop %v6575
    %v6579 = vmul.f32 1.0, %v6578
    %v6580 = vmul.f32 %v6563, %v6232
    %v6581 = vmul.f32 %v6565, %v6233
    %v6582 = vmul.f32 %v6551, %v6566
    %v6583 = vmul.f32 %v6553, %v6567
    %v6584 = vadd.f32 %v6580, %v6582
    %v6585 = vadd.f32 %v6581, %v6583
    %v6586 = vtanh.pop %v6584
    %v6587 = vtanh.pop %v6585
    %v6588 = vmul.f32 %v6577, %v6586
    %v6589 = vmul.f32 %v6579, %v6587
    %v6590 = vpack.c.bf16 %v6589, %v6588
    %v6592 = vunpack.c.l.b16 %v6590
    %v6593 = vunpack.c.h.b16 %v6590
    %v6594 = vpack.c.b16 %v6592, %v6592
    %v6595 = vpack.c.b16 %v6593, %v6593
    %6598 = vst [vmem:[%s2819] sm:$0xf] %v6594
    %6599 = vst [vmem:[%s2819 + $0x4] sm:$0xf] %v6595
    %v6600 = vld [vmem:[%s2822] sm:$0xff]
    %v6601 = vld [vmem:[%s2822 + $0x8] sm:$0xff]
    %v6602 = vld [vmem:[%s2822 + $0x10] sm:$0xff]
    %v6603 = vld [vmem:[%s2822 + $0x18] sm:$0xff]
    %v6604 = vld [vmem:[%s2822 + $0x20] sm:$0xff]
    %v6605 = vld [vmem:[%s2822 + $0x28] sm:$0xff]
    %v6606 = vld [vmem:[%s2822 + $0x30] sm:$0xff]
    %v6607 = vld [vmem:[%s2822 + $0x38] sm:$0xff]
    %v6608 = vld [vmem:[#allocation11] sm:$0xff]
    %v6609 = vld [vmem:[#allocation11 + $0x8] sm:$0xff]
    %v6610 = vld [vmem:[#allocation11 + $0x10] sm:$0xff]
    %v6611 = vld [vmem:[#allocation11 + $0x18] sm:$0xff]
    %v6612 = vld [vmem:[#allocation11 + $0x20] sm:$0xff]
    %v6613 = vld [vmem:[#allocation11 + $0x28] sm:$0xff]
    %v6614 = vld [vmem:[#allocation11 + $0x30] sm:$0xff]
    %v6615 = vld [vmem:[#allocation11 + $0x38] sm:$0xff]
    %v6616 = vld [vmem:[#allocation11 + $0x40] sm:$0xff]
    %v6617 = vld [vmem:[#allocation11 + $0x48] sm:$0xff]
    %v6618 = vld [vmem:[#allocation11 + $0x50] sm:$0xff]
    %v6619 = vld [vmem:[#allocation11 + $0x58] sm:$0xff]
    %v6620 = vld [vmem:[#allocation11 + $0x60] sm:$0xff]
    %v6621 = vld [vmem:[#allocation11 + $0x68] sm:$0xff]
    %v6622 = vld [vmem:[#allocation11 + $0x70] sm:$0xff]
    %v6623 = vld [vmem:[#allocation11 + $0x78] sm:$0xff]
    %v6624 = vld [vmem:[#allocation11 + $0x80] sm:$0xff]
    %v6625 = vld [vmem:[#allocation11 + $0x88] sm:$0xff]
    %v6626 = vld [vmem:[#allocation11 + $0x90] sm:$0xff]
    %v6627 = vld [vmem:[#allocation11 + $0x98] sm:$0xff]
    %v6628 = vld [vmem:[#allocation11 + $0xa0] sm:$0xff]
    %v6629 = vld [vmem:[#allocation11 + $0xa8] sm:$0xff]
    %v6630 = vld [vmem:[#allocation11 + $0xb0] sm:$0xff]
    %v6631 = vld [vmem:[#allocation11 + $0xb8] sm:$0xff]
    %v6632 = vld [vmem:[#allocation11 + $0xc0] sm:$0xff]
    %v6633 = vld [vmem:[#allocation11 + $0xc8] sm:$0xff]
    %v6634 = vld [vmem:[#allocation11 + $0xd0] sm:$0xff]
    %v6635 = vld [vmem:[#allocation11 + $0xd8] sm:$0xff]
    %v6636 = vld [vmem:[#allocation11 + $0xe0] sm:$0xff]
    %v6637 = vld [vmem:[#allocation11 + $0xe8] sm:$0xff]
    %v6638 = vld [vmem:[#allocation11 + $0xf0] sm:$0xff]
    %v6639 = vld [vmem:[#allocation11 + $0xf8] sm:$0xff]
    %v6672 = vunpack.c.l.b16 %v6608
    %v6673 = vunpack.c.h.b16 %v6608
    %v6674 = vunpack.c.l.b16 %v6609
    %v6675 = vunpack.c.h.b16 %v6609
    %v6676 = vunpack.c.l.b16 %v6610
    %v6677 = vunpack.c.h.b16 %v6610
    %v6678 = vunpack.c.l.b16 %v6611
    %v6679 = vunpack.c.h.b16 %v6611
    %v6680 = vunpack.c.l.b16 %v6612
    %v6681 = vunpack.c.h.b16 %v6612
    %v6682 = vunpack.c.l.b16 %v6613
    %v6683 = vunpack.c.h.b16 %v6613
    %v6684 = vunpack.c.l.b16 %v6614
    %v6685 = vunpack.c.h.b16 %v6614
    %v6686 = vunpack.c.l.b16 %v6615
    %v6687 = vunpack.c.h.b16 %v6615
    %v6688 = vunpack.c.l.b16 %v6616
    %v6689 = vunpack.c.h.b16 %v6616
    %v6690 = vunpack.c.l.b16 %v6617
    %v6691 = vunpack.c.h.b16 %v6617
    %v6692 = vunpack.c.l.b16 %v6618
    %v6693 = vunpack.c.h.b16 %v6618
    %v6694 = vunpack.c.l.b16 %v6619
    %v6695 = vunpack.c.h.b16 %v6619
    %v6696 = vunpack.c.l.b16 %v6620
    %v6697 = vunpack.c.h.b16 %v6620
    %v6698 = vunpack.c.l.b16 %v6621
    %v6699 = vunpack.c.h.b16 %v6621
    %v6700 = vunpack.c.l.b16 %v6622
    %v6701 = vunpack.c.h.b16 %v6622
    %v6702 = vunpack.c.l.b16 %v6623
    %v6703 = vunpack.c.h.b16 %v6623
    %v6704 = vunpack.c.l.b16 %v6624
    %v6705 = vunpack.c.h.b16 %v6624
    %v6706 = vunpack.c.l.b16 %v6625
    %v6707 = vunpack.c.h.b16 %v6625
    %v6708 = vunpack.c.l.b16 %v6626
    %v6709 = vunpack.c.h.b16 %v6626
    %v6710 = vunpack.c.l.b16 %v6627
    %v6711 = vunpack.c.h.b16 %v6627
    %v6712 = vunpack.c.l.b16 %v6628
    %v6713 = vunpack.c.h.b16 %v6628
    %v6714 = vunpack.c.l.b16 %v6629
    %v6715 = vunpack.c.h.b16 %v6629
    %v6716 = vunpack.c.l.b16 %v6630
    %v6717 = vunpack.c.h.b16 %v6630
    %v6718 = vunpack.c.l.b16 %v6631
    %v6719 = vunpack.c.h.b16 %v6631
    %v6720 = vunpack.c.l.b16 %v6632
    %v6721 = vunpack.c.h.b16 %v6632
    %v6722 = vunpack.c.l.b16 %v6633
    %v6723 = vunpack.c.h.b16 %v6633
    %v6724 = vunpack.c.l.b16 %v6634
    %v6725 = vunpack.c.h.b16 %v6634
    %v6726 = vunpack.c.l.b16 %v6635
    %v6727 = vunpack.c.h.b16 %v6635
    %v6728 = vunpack.c.l.b16 %v6636
    %v6729 = vunpack.c.h.b16 %v6636
    %v6730 = vunpack.c.l.b16 %v6637
    %v6731 = vunpack.c.h.b16 %v6637
    %v6732 = vunpack.c.l.b16 %v6638
    %v6733 = vunpack.c.h.b16 %v6638
    %v6734 = vunpack.c.l.b16 %v6639
    %v6735 = vunpack.c.h.b16 %v6639
    %v6736 = vpack.c.b16 %v6676, %v6672
    %v6737 = vpack.c.b16 %v6677, %v6673
    %v6738 = vpack.c.b16 %v6678, %v6674
    %v6739 = vpack.c.b16 %v6679, %v6675
    %v6740 = vpack.c.b16 %v6684, %v6680
    %v6741 = vpack.c.b16 %v6685, %v6681
    %v6742 = vpack.c.b16 %v6686, %v6682
    %v6743 = vpack.c.b16 %v6687, %v6683
    %v6744 = vpack.c.b16 %v6692, %v6688
    %v6745 = vpack.c.b16 %v6693, %v6689
    %v6746 = vpack.c.b16 %v6694, %v6690
    %v6747 = vpack.c.b16 %v6695, %v6691
    %v6748 = vpack.c.b16 %v6700, %v6696
    %v6749 = vpack.c.b16 %v6701, %v6697
    %v6750 = vpack.c.b16 %v6702, %v6698
    %v6751 = vpack.c.b16 %v6703, %v6699
    %v6752 = vpack.c.b16 %v6708, %v6704
    %v6753 = vpack.c.b16 %v6709, %v6705
    %v6754 = vpack.c.b16 %v6710, %v6706
    %v6755 = vpack.c.b16 %v6711, %v6707
    %v6756 = vpack.c.b16 %v6716, %v6712
    %v6757 = vpack.c.b16 %v6717, %v6713
    %v6758 = vpack.c.b16 %v6718, %v6714
    %v6759 = vpack.c.b16 %v6719, %v6715
    %v6760 = vpack.c.b16 %v6724, %v6720
    %v6761 = vpack.c.b16 %v6725, %v6721
    %v6762 = vpack.c.b16 %v6726, %v6722
    %v6763 = vpack.c.b16 %v6727, %v6723
    %v6764 = vpack.c.b16 %v6732, %v6728
    %v6765 = vpack.c.b16 %v6733, %v6729
    %v6766 = vpack.c.b16 %v6734, %v6730
    %v6767 = vpack.c.b16 %v6735, %v6731
    %6800 = vmatprep.subr.bf16.mxu0 %v6737
    %6801 = vmatpush1.bf16.msra.mxu0 %v6736
    %6802 = vmatprep.subr.bf16.mxu0 %v6741
    %6803 = vmatpush1.bf16.msra.mxu0 %v6740
    %6804 = vmatprep.subr.bf16.mxu0 %v6745
    %6805 = vmatpush1.bf16.msra.mxu0 %v6744
    %6806 = vmatprep.subr.bf16.mxu0 %v6749
    %6807 = vmatpush1.bf16.msra.mxu0 %v6748
    %6808 = vmatprep.subr.bf16.mxu0 %v6753
    %6809 = vmatpush1.bf16.msra.mxu0 %v6752
    %6810 = vmatprep.subr.bf16.mxu0 %v6757
    %6811 = vmatpush1.bf16.msra.mxu0 %v6756
    %6812 = vmatprep.subr.bf16.mxu0 %v6761
    %6813 = vmatpush1.bf16.msra.mxu0 %v6760
    %6814 = vmatprep.subr.bf16.mxu0 %v6765
    %6815 = vmatpush1.bf16.msra.mxu0 %v6764
    %6816 = vmatprep.subr.bf16.mxu0 0
    %6817 = vmatpush1.bf16.msra.mxu0 0
    %6818 = vmatprep.subr.bf16.mxu0 0
    %6819 = vmatpush1.bf16.msra.mxu0 0
    %6820 = vmatprep.subr.bf16.mxu0 0
    %6821 = vmatpush1.bf16.msra.mxu0 0
    %6822 = vmatprep.subr.bf16.mxu0 0
    %6823 = vmatpush1.bf16.msra.mxu0 0
    %6824 = vmatprep.subr.bf16.mxu0 0
    %6825 = vmatpush1.bf16.msra.mxu0 0
    %6826 = vmatprep.subr.bf16.mxu0 0
    %6827 = vmatpush1.bf16.msra.mxu0 0
    %6828 = vmatprep.subr.bf16.mxu0 0
    %6829 = vmatpush1.bf16.msra.mxu0 0
    %6830 = vmatprep.subr.bf16.mxu0 0
    %6831 = vmatpush1.bf16.msra.mxu0 0
    %6832 = vmatprep.mubr.bf16.mxu0 0
    %6833 = vmatmul.mubr.bf16.gmra.mrb[0].mxu0 %v6590
    %v6834 = vpop.f32.mrb[0].mxu0
    %v6835 = vadd.f32 0.0, %v6834
    %v6836 = vpop.f32.mrb[0].mxu0
    %v6837 = vadd.f32 0.0, %v6836
    %v6838 = vpop.f32.mrb[0].mxu0
    %v6839 = vadd.f32 0.0, %v6838
    %v6840 = vpop.f32.mrb[0].mxu0
    %v6841 = vadd.f32 0.0, %v6840
    %6842 = vdwg.mxu0
    %6843 = vmatprep.subr.bf16.mxu0 %v6739
    %6844 = vmatpush1.bf16.msra.mxu0 %v6738
    %6845 = vmatprep.subr.bf16.mxu0 %v6743
    %6846 = vmatpush1.bf16.msra.mxu0 %v6742
    %6847 = vmatprep.subr.bf16.mxu0 %v6747
    %6848 = vmatpush1.bf16.msra.mxu0 %v6746
    %6849 = vmatprep.subr.bf16.mxu0 %v6751
    %6850 = vmatpush1.bf16.msra.mxu0 %v6750
    %6851 = vmatprep.subr.bf16.mxu0 %v6755
    %6852 = vmatpush1.bf16.msra.mxu0 %v6754
    %6853 = vmatprep.subr.bf16.mxu0 %v6759
    %6854 = vmatpush1.bf16.msra.mxu0 %v6758
    %6855 = vmatprep.subr.bf16.mxu0 %v6763
    %6856 = vmatpush1.bf16.msra.mxu0 %v6762
    %6857 = vmatprep.subr.bf16.mxu0 %v6767
    %6858 = vmatpush1.bf16.msra.mxu0 %v6766
    %6859 = vmatprep.subr.bf16.mxu0 0
    %6860 = vmatpush1.bf16.msra.mxu0 0
    %6861 = vmatprep.subr.bf16.mxu0 0
    %6862 = vmatpush1.bf16.msra.mxu0 0
    %6863 = vmatprep.subr.bf16.mxu0 0
    %6864 = vmatpush1.bf16.msra.mxu0 0
    %6865 = vmatprep.subr.bf16.mxu0 0
    %6866 = vmatpush1.bf16.msra.mxu0 0
    %6867 = vmatprep.subr.bf16.mxu0 0
    %6868 = vmatpush1.bf16.msra.mxu0 0
    %6869 = vmatprep.subr.bf16.mxu0 0
    %6870 = vmatpush1.bf16.msra.mxu0 0
    %6871 = vmatprep.subr.bf16.mxu0 0
    %6872 = vmatpush1.bf16.msra.mxu0 0
    %6873 = vmatprep.subr.bf16.mxu0 0
    %6874 = vmatpush1.bf16.msra.mxu0 0
    %6875 = vmatprep.mubr.bf16.mxu0 0
    %6876 = vmatmul.mubr.bf16.gmra.mrb[0].mxu0 %v6590
    %v6877 = vpop.f32.mrb[0].mxu0
    %v6878 = vadd.f32 0.0, %v6877
    %v6879 = vpop.f32.mrb[0].mxu0
    %v6880 = vadd.f32 0.0, %v6879
    %v6881 = vpop.f32.mrb[0].mxu0
    %v6882 = vadd.f32 0.0, %v6881
    %v6883 = vpop.f32.mrb[0].mxu0
    %v6884 = vadd.f32 0.0, %v6883
    %6885 = vdwg.mxu0
    %v6886 = vadd.f32 %v6600, %v6835
    %v6887 = vadd.f32 %v6601, %v6837
    %v6888 = vadd.f32 %v6602, %v6878
    %v6889 = vadd.f32 %v6603, %v6880
    %v6890 = vadd.f32 %v6604, %v6839
    %v6891 = vadd.f32 %v6605, %v6841
    %v6892 = vadd.f32 %v6606, %v6882
    %v6893 = vadd.f32 %v6607, %v6884
    %v6894 = vxor.u32 %v6886, 2147483648
    %v6895 = vxor.u32 %v6890, 2147483648
    %v6896 = vmul.f32 %v6894, 1.442695
    %v6897 = vpow.pop %v6896
    %v6898 = vmul.f32 %v6895, 1.442695
    %v6899 = vpow.pop %v6898
    %v6900 = vadd.f32 %v6897, 1.0
    %v6901 = vadd.f32 %v6899, 1.0
    %v6902 = vrcp.pop %v6900
    %v6903 = vmul.f32 1.0, %v6902
    %v6904 = vrcp.pop %v6901
    %v6905 = vmul.f32 1.0, %v6904
    %v6906 = vxor.u32 %v6887, 2147483648
    %v6907 = vxor.u32 %v6891, 2147483648
    %v6908 = vmul.f32 %v6906, 1.442695
    %v6909 = vpow.pop %v6908
    %v6910 = vmul.f32 %v6907, 1.442695
    %v6911 = vpow.pop %v6910
    %v6912 = vadd.f32 %v6909, 1.0
    %v6913 = vadd.f32 %v6911, 1.0
    %v6914 = vrcp.pop %v6912
    %v6915 = vmul.f32 1.0, %v6914
    %v6916 = vrcp.pop %v6913
    %v6917 = vmul.f32 1.0, %v6916
    %v6918 = vtanh.pop %v6888
    %v6919 = vtanh.pop %v6892
    %v6920 = vxor.u32 %v6889, 2147483648
    %v6921 = vxor.u32 %v6893, 2147483648
    %v6922 = vmul.f32 %v6920, 1.442695
    %v6923 = vpow.pop %v6922
    %v6924 = vmul.f32 %v6921, 1.442695
    %v6925 = vpow.pop %v6924
    %v6926 = vadd.f32 %v6923, 1.0
    %v6927 = vadd.f32 %v6925, 1.0
    %v6928 = vrcp.pop %v6926
    %v6929 = vmul.f32 1.0, %v6928
    %v6930 = vrcp.pop %v6927
    %v6931 = vmul.f32 1.0, %v6930
    %v6932 = vmul.f32 %v6915, %v6584
    %v6933 = vmul.f32 %v6917, %v6585
    %v6934 = vmul.f32 %v6903, %v6918
    %v6935 = vmul.f32 %v6905, %v6919
    %v6936 = vadd.f32 %v6932, %v6934
    %v6937 = vadd.f32 %v6933, %v6935
    %v6938 = vtanh.pop %v6936
    %v6939 = vtanh.pop %v6937
    %v6940 = vmul.f32 %v6929, %v6938
    %v6941 = vmul.f32 %v6931, %v6939
    %v6942 = vpack.c.bf16 %v6941, %v6940
    %v6944 = vunpack.c.l.b16 %v6942
    %v6945 = vunpack.c.h.b16 %v6942
    %v6946 = vpack.c.b16 %v6944, %v6944
    %v6947 = vpack.c.b16 %v6945, %v6945
    %6950 = vst [vmem:[%s3173] sm:$0xf] %v6946
    %6951 = vst [vmem:[%s3173 + $0x4] sm:$0xf] %v6947
    %v6952 = vld [vmem:[%s3176] sm:$0xff]
    %v6953 = vld [vmem:[%s3176 + $0x8] sm:$0xff]
    %v6954 = vld [vmem:[%s3176 + $0x10] sm:$0xff]
    %v6955 = vld [vmem:[%s3176 + $0x18] sm:$0xff]
    %v6956 = vld [vmem:[%s3176 + $0x20] sm:$0xff]
    %v6957 = vld [vmem:[%s3176 + $0x28] sm:$0xff]
    %v6958 = vld [vmem:[%s3176 + $0x30] sm:$0xff]
    %v6959 = vld [vmem:[%s3176 + $0x38] sm:$0xff]
    %v6960 = vld [vmem:[#allocation11] sm:$0xff]
    %v6961 = vld [vmem:[#allocation11 + $0x8] sm:$0xff]
    %v6962 = vld [vmem:[#allocation11 + $0x10] sm:$0xff]
    %v6963 = vld [vmem:[#allocation11 + $0x18] sm:$0xff]
    %v6964 = vld [vmem:[#allocation11 + $0x20] sm:$0xff]
    %v6965 = vld [vmem:[#allocation11 + $0x28] sm:$0xff]
    %v6966 = vld [vmem:[#allocation11 + $0x30] sm:$0xff]
    %v6967 = vld [vmem:[#allocation11 + $0x38] sm:$0xff]
    %v6968 = vld [vmem:[#allocation11 + $0x40] sm:$0xff]
    %v6969 = vld [vmem:[#allocation11 + $0x48] sm:$0xff]
    %v6970 = vld [vmem:[#allocation11 + $0x50] sm:$0xff]
    %v6971 = vld [vmem:[#allocation11 + $0x58] sm:$0xff]
    %v6972 = vld [vmem:[#allocation11 + $0x60] sm:$0xff]
    %v6973 = vld [vmem:[#allocation11 + $0x68] sm:$0xff]
    %v6974 = vld [vmem:[#allocation11 + $0x70] sm:$0xff]
    %v6975 = vld [vmem:[#allocation11 + $0x78] sm:$0xff]
    %v6976 = vld [vmem:[#allocation11 + $0x80] sm:$0xff]
    %v6977 = vld [vmem:[#allocation11 + $0x88] sm:$0xff]
    %v6978 = vld [vmem:[#allocation11 + $0x90] sm:$0xff]
    %v6979 = vld [vmem:[#allocation11 + $0x98] sm:$0xff]
    %v6980 = vld [vmem:[#allocation11 + $0xa0] sm:$0xff]
    %v6981 = vld [vmem:[#allocation11 + $0xa8] sm:$0xff]
    %v6982 = vld [vmem:[#allocation11 + $0xb0] sm:$0xff]
    %v6983 = vld [vmem:[#allocation11 + $0xb8] sm:$0xff]
    %v6984 = vld [vmem:[#allocation11 + $0xc0] sm:$0xff]
    %v6985 = vld [vmem:[#allocation11 + $0xc8] sm:$0xff]
    %v6986 = vld [vmem:[#allocation11 + $0xd0] sm:$0xff]
    %v6987 = vld [vmem:[#allocation11 + $0xd8] sm:$0xff]
    %v6988 = vld [vmem:[#allocation11 + $0xe0] sm:$0xff]
    %v6989 = vld [vmem:[#allocation11 + $0xe8] sm:$0xff]
    %v6990 = vld [vmem:[#allocation11 + $0xf0] sm:$0xff]
    %v6991 = vld [vmem:[#allocation11 + $0xf8] sm:$0xff]
    %v7024 = vunpack.c.l.b16 %v6960
    %v7025 = vunpack.c.h.b16 %v6960
    %v7026 = vunpack.c.l.b16 %v6961
    %v7027 = vunpack.c.h.b16 %v6961
    %v7028 = vunpack.c.l.b16 %v6962
    %v7029 = vunpack.c.h.b16 %v6962
    %v7030 = vunpack.c.l.b16 %v6963
    %v7031 = vunpack.c.h.b16 %v6963
    %v7032 = vunpack.c.l.b16 %v6964
    %v7033 = vunpack.c.h.b16 %v6964
    %v7034 = vunpack.c.l.b16 %v6965
    %v7035 = vunpack.c.h.b16 %v6965
    %v7036 = vunpack.c.l.b16 %v6966
    %v7037 = vunpack.c.h.b16 %v6966
    %v7038 = vunpack.c.l.b16 %v6967
    %v7039 = vunpack.c.h.b16 %v6967
    %v7040 = vunpack.c.l.b16 %v6968
    %v7041 = vunpack.c.h.b16 %v6968
    %v7042 = vunpack.c.l.b16 %v6969
    %v7043 = vunpack.c.h.b16 %v6969
    %v7044 = vunpack.c.l.b16 %v6970
    %v7045 = vunpack.c.h.b16 %v6970
    %v7046 = vunpack.c.l.b16 %v6971
    %v7047 = vunpack.c.h.b16 %v6971
    %v7048 = vunpack.c.l.b16 %v6972
    %v7049 = vunpack.c.h.b16 %v6972
    %v7050 = vunpack.c.l.b16 %v6973
    %v7051 = vunpack.c.h.b16 %v6973
    %v7052 = vunpack.c.l.b16 %v6974
    %v7053 = vunpack.c.h.b16 %v6974
    %v7054 = vunpack.c.l.b16 %v6975
    %v7055 = vunpack.c.h.b16 %v6975
    %v7056 = vunpack.c.l.b16 %v6976
    %v7057 = vunpack.c.h.b16 %v6976
    %v7058 = vunpack.c.l.b16 %v6977
    %v7059 = vunpack.c.h.b16 %v6977
    %v7060 = vunpack.c.l.b16 %v6978
    %v7061 = vunpack.c.h.b16 %v6978
    %v7062 = vunpack.c.l.b16 %v6979
    %v7063 = vunpack.c.h.b16 %v6979
    %v7064 = vunpack.c.l.b16 %v6980
    %v7065 = vunpack.c.h.b16 %v6980
    %v7066 = vunpack.c.l.b16 %v6981
    %v7067 = vunpack.c.h.b16 %v6981
    %v7068 = vunpack.c.l.b16 %v6982
    %v7069 = vunpack.c.h.b16 %v6982
    %v7070 = vunpack.c.l.b16 %v6983
    %v7071 = vunpack.c.h.b16 %v6983
    %v7072 = vunpack.c.l.b16 %v6984
    %v7073 = vunpack.c.h.b16 %v6984
    %v7074 = vunpack.c.l.b16 %v6985
    %v7075 = vunpack.c.h.b16 %v6985
    %v7076 = vunpack.c.l.b16 %v6986
    %v7077 = vunpack.c.h.b16 %v6986
    %v7078 = vunpack.c.l.b16 %v6987
    %v7079 = vunpack.c.h.b16 %v6987
    %v7080 = vunpack.c.l.b16 %v6988
    %v7081 = vunpack.c.h.b16 %v6988
    %v7082 = vunpack.c.l.b16 %v6989
    %v7083 = vunpack.c.h.b16 %v6989
    %v7084 = vunpack.c.l.b16 %v6990
    %v7085 = vunpack.c.h.b16 %v6990
    %v7086 = vunpack.c.l.b16 %v6991
    %v7087 = vunpack.c.h.b16 %v6991
    %v7088 = vpack.c.b16 %v7028, %v7024
    %v7089 = vpack.c.b16 %v7029, %v7025
    %v7090 = vpack.c.b16 %v7030, %v7026
    %v7091 = vpack.c.b16 %v7031, %v7027
    %v7092 = vpack.c.b16 %v7036, %v7032
    %v7093 = vpack.c.b16 %v7037, %v7033
    %v7094 = vpack.c.b16 %v7038, %v7034
    %v7095 = vpack.c.b16 %v7039, %v7035
    %v7096 = vpack.c.b16 %v7044, %v7040
    %v7097 = vpack.c.b16 %v7045, %v7041
    %v7098 = vpack.c.b16 %v7046, %v7042
    %v7099 = vpack.c.b16 %v7047, %v7043
    %v7100 = vpack.c.b16 %v7052, %v7048
    %v7101 = vpack.c.b16 %v7053, %v7049
    %v7102 = vpack.c.b16 %v7054, %v7050
    %v7103 = vpack.c.b16 %v7055, %v7051
    %v7104 = vpack.c.b16 %v7060, %v7056
    %v7105 = vpack.c.b16 %v7061, %v7057
    %v7106 = vpack.c.b16 %v7062, %v7058
    %v7107 = vpack.c.b16 %v7063, %v7059
    %v7108 = vpack.c.b16 %v7068, %v7064
    %v7109 = vpack.c.b16 %v7069, %v7065
    %v7110 = vpack.c.b16 %v7070, %v7066
    %v7111 = vpack.c.b16 %v7071, %v7067
    %v7112 = vpack.c.b16 %v7076, %v7072
    %v7113 = vpack.c.b16 %v7077, %v7073
    %v7114 = vpack.c.b16 %v7078, %v7074
    %v7115 = vpack.c.b16 %v7079, %v7075
    %v7116 = vpack.c.b16 %v7084, %v7080
    %v7117 = vpack.c.b16 %v7085, %v7081
    %v7118 = vpack.c.b16 %v7086, %v7082
    %v7119 = vpack.c.b16 %v7087, %v7083
    %7152 = vmatprep.subr.bf16.mxu0 %v7089
    %7153 = vmatpush1.bf16.msra.mxu0 %v7088
    %7154 = vmatprep.subr.bf16.mxu0 %v7093
    %7155 = vmatpush1.bf16.msra.mxu0 %v7092
    %7156 = vmatprep.subr.bf16.mxu0 %v7097
    %7157 = vmatpush1.bf16.msra.mxu0 %v7096
    %7158 = vmatprep.subr.bf16.mxu0 %v7101
    %7159 = vmatpush1.bf16.msra.mxu0 %v7100
    %7160 = vmatprep.subr.bf16.mxu0 %v7105
    %7161 = vmatpush1.bf16.msra.mxu0 %v7104
    %7162 = vmatprep.subr.bf16.mxu0 %v7109
    %7163 = vmatpush1.bf16.msra.mxu0 %v7108
    %7164 = vmatprep.subr.bf16.mxu0 %v7113
    %7165 = vmatpush1.bf16.msra.mxu0 %v7112
    %7166 = vmatprep.subr.bf16.mxu0 %v7117
    %7167 = vmatpush1.bf16.msra.mxu0 %v7116
    %7168 = vmatprep.subr.bf16.mxu0 0
    %7169 = vmatpush1.bf16.msra.mxu0 0
    %7170 = vmatprep.subr.bf16.mxu0 0
    %7171 = vmatpush1.bf16.msra.mxu0 0
    %7172 = vmatprep.subr.bf16.mxu0 0
    %7173 = vmatpush1.bf16.msra.mxu0 0
    %7174 = vmatprep.subr.bf16.mxu0 0
    %7175 = vmatpush1.bf16.msra.mxu0 0
    %7176 = vmatprep.subr.bf16.mxu0 0
    %7177 = vmatpush1.bf16.msra.mxu0 0
    %7178 = vmatprep.subr.bf16.mxu0 0
    %7179 = vmatpush1.bf16.msra.mxu0 0
    %7180 = vmatprep.subr.bf16.mxu0 0
    %7181 = vmatpush1.bf16.msra.mxu0 0
    %7182 = vmatprep.subr.bf16.mxu0 0
    %7183 = vmatpush1.bf16.msra.mxu0 0
    %7184 = vmatprep.mubr.bf16.mxu0 0
    %7185 = vmatmul.mubr.bf16.gmra.mrb[0].mxu0 %v6942
    %v7186 = vpop.f32.mrb[0].mxu0
    %v7187 = vadd.f32 0.0, %v7186
    %v7188 = vpop.f32.mrb[0].mxu0
    %v7189 = vadd.f32 0.0, %v7188
    %v7190 = vpop.f32.mrb[0].mxu0
    %v7191 = vadd.f32 0.0, %v7190
    %v7192 = vpop.f32.mrb[0].mxu0
    %v7193 = vadd.f32 0.0, %v7192
    %7194 = vdwg.mxu0
    %7195 = vmatprep.subr.bf16.mxu0 %v7091
    %7196 = vmatpush1.bf16.msra.mxu0 %v7090
    %7197 = vmatprep.subr.bf16.mxu0 %v7095
    %7198 = vmatpush1.bf16.msra.mxu0 %v7094
    %7199 = vmatprep.subr.bf16.mxu0 %v7099
    %7200 = vmatpush1.bf16.msra.mxu0 %v7098
    %7201 = vmatprep.subr.bf16.mxu0 %v7103
    %7202 = vmatpush1.bf16.msra.mxu0 %v7102
    %7203 = vmatprep.subr.bf16.mxu0 %v7107
    %7204 = vmatpush1.bf16.msra.mxu0 %v7106
    %7205 = vmatprep.subr.bf16.mxu0 %v7111
    %7206 = vmatpush1.bf16.msra.mxu0 %v7110
    %7207 = vmatprep.subr.bf16.mxu0 %v7115
    %7208 = vmatpush1.bf16.msra.mxu0 %v7114
    %7209 = vmatprep.subr.bf16.mxu0 %v7119
    %7210 = vmatpush1.bf16.msra.mxu0 %v7118
    %7211 = vmatprep.subr.bf16.mxu0 0
    %7212 = vmatpush1.bf16.msra.mxu0 0
    %7213 = vmatprep.subr.bf16.mxu0 0
    %7214 = vmatpush1.bf16.msra.mxu0 0
    %7215 = vmatprep.subr.bf16.mxu0 0
    %7216 = vmatpush1.bf16.msra.mxu0 0
    %7217 = vmatprep.subr.bf16.mxu0 0
    %7218 = vmatpush1.bf16.msra.mxu0 0
    %7219 = vmatprep.subr.bf16.mxu0 0
    %7220 = vmatpush1.bf16.msra.mxu0 0
    %7221 = vmatprep.subr.bf16.mxu0 0
    %7222 = vmatpush1.bf16.msra.mxu0 0
    %7223 = vmatprep.subr.bf16.mxu0 0
    %7224 = vmatpush1.bf16.msra.mxu0 0
    %7225 = vmatprep.subr.bf16.mxu0 0
    %7226 = vmatpush1.bf16.msra.mxu0 0
    %7227 = vmatprep.mubr.bf16.mxu0 0
    %7228 = vmatmul.mubr.bf16.gmra.mrb[0].mxu0 %v6942
    %v7229 = vpop.f32.mrb[0].mxu0
    %v7230 = vadd.f32 0.0, %v7229
    %v7231 = vpop.f32.mrb[0].mxu0
    %v7232 = vadd.f32 0.0, %v7231
    %v7233 = vpop.f32.mrb[0].mxu0
    %v7234 = vadd.f32 0.0, %v7233
    %v7235 = vpop.f32.mrb[0].mxu0
    %v7236 = vadd.f32 0.0, %v7235
    %7237 = vdwg.mxu0
    %v7238 = vadd.f32 %v6952, %v7187
    %v7239 = vadd.f32 %v6953, %v7189
    %v7240 = vadd.f32 %v6954, %v7230
    %v7241 = vadd.f32 %v6955, %v7232
    %v7242 = vadd.f32 %v6956, %v7191
    %v7243 = vadd.f32 %v6957, %v7193
    %v7244 = vadd.f32 %v6958, %v7234
    %v7245 = vadd.f32 %v6959, %v7236
    %v7246 = vxor.u32 %v7238, 2147483648
    %v7247 = vxor.u32 %v7242, 2147483648
    %v7248 = vmul.f32 %v7246, 1.442695
    %v7249 = vpow.pop %v7248
    %v7250 = vmul.f32 %v7247, 1.442695
    %v7251 = vpow.pop %v7250
    %v7252 = vadd.f32 %v7249, 1.0
    %v7253 = vadd.f32 %v7251, 1.0
    %v7254 = vrcp.pop %v7252
    %v7255 = vmul.f32 1.0, %v7254
    %v7256 = vrcp.pop %v7253
    %v7257 = vmul.f32 1.0, %v7256
    %v7258 = vxor.u32 %v7239, 2147483648
    %v7259 = vxor.u32 %v7243, 2147483648
    %v7260 = vmul.f32 %v7258, 1.442695
    %v7261 = vpow.pop %v7260
    %v7262 = vmul.f32 %v7259, 1.442695
    %v7263 = vpow.pop %v7262
    %v7264 = vadd.f32 %v7261, 1.0
    %v7265 = vadd.f32 %v7263, 1.0
    %v7266 = vrcp.pop %v7264
    %v7267 = vmul.f32 1.0, %v7266
    %v7268 = vrcp.pop %v7265
    %v7269 = vmul.f32 1.0, %v7268
    %v7270 = vtanh.pop %v7240
    %v7271 = vtanh.pop %v7244
    %v7272 = vxor.u32 %v7241, 2147483648
    %v7273 = vxor.u32 %v7245, 2147483648
    %v7274 = vmul.f32 %v7272, 1.442695
    %v7275 = vpow.pop %v7274
    %v7276 = vmul.f32 %v7273, 1.442695
    %v7277 = vpow.pop %v7276
    %v7278 = vadd.f32 %v7275, 1.0
    %v7279 = vadd.f32 %v7277, 1.0
    %v7280 = vrcp.pop %v7278
    %v7281 = vmul.f32 1.0, %v7280
    %v7282 = vrcp.pop %v7279
    %v7283 = vmul.f32 1.0, %v7282
    %v7284 = vmul.f32 %v7267, %v6936
    %v7285 = vmul.f32 %v7269, %v6937
    %v7286 = vmul.f32 %v7255, %v7270
    %v7287 = vmul.f32 %v7257, %v7271
    %v7288 = vadd.f32 %v7284, %v7286
    %v7289 = vadd.f32 %v7285, %v7287
    %v7290 = vtanh.pop %v7288
    %v7291 = vtanh.pop %v7289
    %v7292 = vmul.f32 %v7281, %v7290
    %v7293 = vmul.f32 %v7283, %v7291
    %v7294 = vpack.c.bf16 %v7293, %v7292
    %v7296 = vunpack.c.l.b16 %v7294
    %v7297 = vunpack.c.h.b16 %v7294
    %v7298 = vpack.c.b16 %v7296, %v7296
    %v7299 = vpack.c.b16 %v7297, %v7297
    %7302 = vst [vmem:[%s3527] sm:$0xf] %v7298
    %7303 = vst [vmem:[%s3527 + $0x4] sm:$0xf] %v7299
    %v7304 = vld [vmem:[%s3530] sm:$0xff]
    %v7305 = vld [vmem:[%s3530 + $0x8] sm:$0xff]
    %v7306 = vld [vmem:[%s3530 + $0x10] sm:$0xff]
    %v7307 = vld [vmem:[%s3530 + $0x18] sm:$0xff]
    %v7308 = vld [vmem:[%s3530 + $0x20] sm:$0xff]
    %v7309 = vld [vmem:[%s3530 + $0x28] sm:$0xff]
    %v7310 = vld [vmem:[%s3530 + $0x30] sm:$0xff]
    %v7311 = vld [vmem:[%s3530 + $0x38] sm:$0xff]
    %v7312 = vld [vmem:[#allocation11] sm:$0xff]
    %v7313 = vld [vmem:[#allocation11 + $0x8] sm:$0xff]
    %v7314 = vld [vmem:[#allocation11 + $0x10] sm:$0xff]
    %v7315 = vld [vmem:[#allocation11 + $0x18] sm:$0xff]
    %v7316 = vld [vmem:[#allocation11 + $0x20] sm:$0xff]
    %v7317 = vld [vmem:[#allocation11 + $0x28] sm:$0xff]
    %v7318 = vld [vmem:[#allocation11 + $0x30] sm:$0xff]
    %v7319 = vld [vmem:[#allocation11 + $0x38] sm:$0xff]
    %v7320 = vld [vmem:[#allocation11 + $0x40] sm:$0xff]
    %v7321 = vld [vmem:[#allocation11 + $0x48] sm:$0xff]
    %v7322 = vld [vmem:[#allocation11 + $0x50] sm:$0xff]
    %v7323 = vld [vmem:[#allocation11 + $0x58] sm:$0xff]
    %v7324 = vld [vmem:[#allocation11 + $0x60] sm:$0xff]
    %v7325 = vld [vmem:[#allocation11 + $0x68] sm:$0xff]
    %v7326 = vld [vmem:[#allocation11 + $0x70] sm:$0xff]
    %v7327 = vld [vmem:[#allocation11 + $0x78] sm:$0xff]
    %v7328 = vld [vmem:[#allocation11 + $0x80] sm:$0xff]
    %v7329 = vld [vmem:[#allocation11 + $0x88] sm:$0xff]
    %v7330 = vld [vmem:[#allocation11 + $0x90] sm:$0xff]
    %v7331 = vld [vmem:[#allocation11 + $0x98] sm:$0xff]
    %v7332 = vld [vmem:[#allocation11 + $0xa0] sm:$0xff]
    %v7333 = vld [vmem:[#allocation11 + $0xa8] sm:$0xff]
    %v7334 = vld [vmem:[#allocation11 + $0xb0] sm:$0xff]
    %v7335 = vld [vmem:[#allocation11 + $0xb8] sm:$0xff]
    %v7336 = vld [vmem:[#allocation11 + $0xc0] sm:$0xff]
    %v7337 = vld [vmem:[#allocation11 + $0xc8] sm:$0xff]
    %v7338 = vld [vmem:[#allocation11 + $0xd0] sm:$0xff]
    %v7339 = vld [vmem:[#allocation11 + $0xd8] sm:$0xff]
    %v7340 = vld [vmem:[#allocation11 + $0xe0] sm:$0xff]
    %v7341 = vld [vmem:[#allocation11 + $0xe8] sm:$0xff]
    %v7342 = vld [vmem:[#allocation11 + $0xf0] sm:$0xff]
    %v7343 = vld [vmem:[#allocation11 + $0xf8] sm:$0xff]
    %v7376 = vunpack.c.l.b16 %v7312
    %v7377 = vunpack.c.h.b16 %v7312
    %v7378 = vunpack.c.l.b16 %v7313
    %v7379 = vunpack.c.h.b16 %v7313
    %v7380 = vunpack.c.l.b16 %v7314
    %v7381 = vunpack.c.h.b16 %v7314
    %v7382 = vunpack.c.l.b16 %v7315
    %v7383 = vunpack.c.h.b16 %v7315
    %v7384 = vunpack.c.l.b16 %v7316
    %v7385 = vunpack.c.h.b16 %v7316
    %v7386 = vunpack.c.l.b16 %v7317
    %v7387 = vunpack.c.h.b16 %v7317
    %v7388 = vunpack.c.l.b16 %v7318
    %v7389 = vunpack.c.h.b16 %v7318
    %v7390 = vunpack.c.l.b16 %v7319
    %v7391 = vunpack.c.h.b16 %v7319
    %v7392 = vunpack.c.l.b16 %v7320
    %v7393 = vunpack.c.h.b16 %v7320
    %v7394 = vunpack.c.l.b16 %v7321
    %v7395 = vunpack.c.h.b16 %v7321
    %v7396 = vunpack.c.l.b16 %v7322
    %v7397 = vunpack.c.h.b16 %v7322
    %v7398 = vunpack.c.l.b16 %v7323
    %v7399 = vunpack.c.h.b16 %v7323
    %v7400 = vunpack.c.l.b16 %v7324
    %v7401 = vunpack.c.h.b16 %v7324
    %v7402 = vunpack.c.l.b16 %v7325
    %v7403 = vunpack.c.h.b16 %v7325
    %v7404 = vunpack.c.l.b16 %v7326
    %v7405 = vunpack.c.h.b16 %v7326
    %v7406 = vunpack.c.l.b16 %v7327
    %v7407 = vunpack.c.h.b16 %v7327
    %v7408 = vunpack.c.l.b16 %v7328
    %v7409 = vunpack.c.h.b16 %v7328
    %v7410 = vunpack.c.l.b16 %v7329
    %v7411 = vunpack.c.h.b16 %v7329
    %v7412 = vunpack.c.l.b16 %v7330
    %v7413 = vunpack.c.h.b16 %v7330
    %v7414 = vunpack.c.l.b16 %v7331
    %v7415 = vunpack.c.h.b16 %v7331
    %v7416 = vunpack.c.l.b16 %v7332
    %v7417 = vunpack.c.h.b16 %v7332
    %v7418 = vunpack.c.l.b16 %v7333
    %v7419 = vunpack.c.h.b16 %v7333
    %v7420 = vunpack.c.l.b16 %v7334
    %v7421 = vunpack.c.h.b16 %v7334
    %v7422 = vunpack.c.l.b16 %v7335
    %v7423 = vunpack.c.h.b16 %v7335
    %v7424 = vunpack.c.l.b16 %v7336
    %v7425 = vunpack.c.h.b16 %v7336
    %v7426 = vunpack.c.l.b16 %v7337
    %v7427 = vunpack.c.h.b16 %v7337
    %v7428 = vunpack.c.l.b16 %v7338
    %v7429 = vunpack.c.h.b16 %v7338
    %v7430 = vunpack.c.l.b16 %v7339
    %v7431 = vunpack.c.h.b16 %v7339
    %v7432 = vunpack.c.l.b16 %v7340
    %v7433 = vunpack.c.h.b16 %v7340
    %v7434 = vunpack.c.l.b16 %v7341
    %v7435 = vunpack.c.h.b16 %v7341
    %v7436 = vunpack.c.l.b16 %v7342
    %v7437 = vunpack.c.h.b16 %v7342
    %v7438 = vunpack.c.l.b16 %v7343
    %v7439 = vunpack.c.h.b16 %v7343
    %v7440 = vpack.c.b16 %v7380, %v7376
    %v7441 = vpack.c.b16 %v7381, %v7377
    %v7442 = vpack.c.b16 %v7382, %v7378
    %v7443 = vpack.c.b16 %v7383, %v7379
    %v7444 = vpack.c.b16 %v7388, %v7384
    %v7445 = vpack.c.b16 %v7389, %v7385
    %v7446 = vpack.c.b16 %v7390, %v7386
    %v7447 = vpack.c.b16 %v7391, %v7387
    %v7448 = vpack.c.b16 %v7396, %v7392
    %v7449 = vpack.c.b16 %v7397, %v7393
    %v7450 = vpack.c.b16 %v7398, %v7394
    %v7451 = vpack.c.b16 %v7399, %v7395
    %v7452 = vpack.c.b16 %v7404, %v7400
    %v7453 = vpack.c.b16 %v7405, %v7401
    %v7454 = vpack.c.b16 %v7406, %v7402
    %v7455 = vpack.c.b16 %v7407, %v7403
    %v7456 = vpack.c.b16 %v7412, %v7408
    %v7457 = vpack.c.b16 %v7413, %v7409
    %v7458 = vpack.c.b16 %v7414, %v7410
    %v7459 = vpack.c.b16 %v7415, %v7411
    %v7460 = vpack.c.b16 %v7420, %v7416
    %v7461 = vpack.c.b16 %v7421, %v7417
    %v7462 = vpack.c.b16 %v7422, %v7418
    %v7463 = vpack.c.b16 %v7423, %v7419
    %v7464 = vpack.c.b16 %v7428, %v7424
    %v7465 = vpack.c.b16 %v7429, %v7425
    %v7466 = vpack.c.b16 %v7430, %v7426
    %v7467 = vpack.c.b16 %v7431, %v7427
    %v7468 = vpack.c.b16 %v7436, %v7432
    %v7469 = vpack.c.b16 %v7437, %v7433
    %v7470 = vpack.c.b16 %v7438, %v7434
    %v7471 = vpack.c.b16 %v7439, %v7435
    %7504 = vmatprep.subr.bf16.mxu0 %v7441
    %7505 = vmatpush1.bf16.msra.mxu0 %v7440
    %7506 = vmatprep.subr.bf16.mxu0 %v7445
    %7507 = vmatpush1.bf16.msra.mxu0 %v7444
    %7508 = vmatprep.subr.bf16.mxu0 %v7449
    %7509 = vmatpush1.bf16.msra.mxu0 %v7448
    %7510 = vmatprep.subr.bf16.mxu0 %v7453
    %7511 = vmatpush1.bf16.msra.mxu0 %v7452
    %7512 = vmatprep.subr.bf16.mxu0 %v7457
    %7513 = vmatpush1.bf16.msra.mxu0 %v7456
    %7514 = vmatprep.subr.bf16.mxu0 %v7461
    %7515 = vmatpush1.bf16.msra.mxu0 %v7460
    %7516 = vmatprep.subr.bf16.mxu0 %v7465
    %7517 = vmatpush1.bf16.msra.mxu0 %v7464
    %7518 = vmatprep.subr.bf16.mxu0 %v7469
    %7519 = vmatpush1.bf16.msra.mxu0 %v7468
    %7520 = vmatprep.subr.bf16.mxu0 0
    %7521 = vmatpush1.bf16.msra.mxu0 0
    %7522 = vmatprep.subr.bf16.mxu0 0
    %7523 = vmatpush1.bf16.msra.mxu0 0
    %7524 = vmatprep.subr.bf16.mxu0 0
    %7525 = vmatpush1.bf16.msra.mxu0 0
    %7526 = vmatprep.subr.bf16.mxu0 0
    %7527 = vmatpush1.bf16.msra.mxu0 0
    %7528 = vmatprep.subr.bf16.mxu0 0
    %7529 = vmatpush1.bf16.msra.mxu0 0
    %7530 = vmatprep.subr.bf16.mxu0 0
    %7531 = vmatpush1.bf16.msra.mxu0 0
    %7532 = vmatprep.subr.bf16.mxu0 0
    %7533 = vmatpush1.bf16.msra.mxu0 0
    %7534 = vmatprep.subr.bf16.mxu0 0
    %7535 = vmatpush1.bf16.msra.mxu0 0
    %7536 = vmatprep.mubr.bf16.mxu0 0
    %7537 = vmatmul.mubr.bf16.gmra.mrb[0].mxu0 %v7294
    %v7538 = vpop.f32.mrb[0].mxu0
    %v7539 = vadd.f32 0.0, %v7538
    %v7540 = vpop.f32.mrb[0].mxu0
    %v7541 = vadd.f32 0.0, %v7540
    %v7542 = vpop.f32.mrb[0].mxu0
    %v7543 = vadd.f32 0.0, %v7542
    %v7544 = vpop.f32.mrb[0].mxu0
    %v7545 = vadd.f32 0.0, %v7544
    %7546 = vdwg.mxu0
    %7547 = vmatprep.subr.bf16.mxu0 %v7443
    %7548 = vmatpush1.bf16.msra.mxu0 %v7442
    %7549 = vmatprep.subr.bf16.mxu0 %v7447
    %7550 = vmatpush1.bf16.msra.mxu0 %v7446
    %7551 = vmatprep.subr.bf16.mxu0 %v7451
    %7552 = vmatpush1.bf16.msra.mxu0 %v7450
    %7553 = vmatprep.subr.bf16.mxu0 %v7455
    %7554 = vmatpush1.bf16.msra.mxu0 %v7454
    %7555 = vmatprep.subr.bf16.mxu0 %v7459
    %7556 = vmatpush1.bf16.msra.mxu0 %v7458
    %7557 = vmatprep.subr.bf16.mxu0 %v7463
    %7558 = vmatpush1.bf16.msra.mxu0 %v7462
    %7559 = vmatprep.subr.bf16.mxu0 %v7467
    %7560 = vmatpush1.bf16.msra.mxu0 %v7466
    %7561 = vmatprep.subr.bf16.mxu0 %v7471
    %7562 = vmatpush1.bf16.msra.mxu0 %v7470
    %7563 = vmatprep.subr.bf16.mxu0 0
    %7564 = vmatpush1.bf16.msra.mxu0 0
    %7565 = vmatprep.subr.bf16.mxu0 0
    %7566 = vmatpush1.bf16.msra.mxu0 0
    %7567 = vmatprep.subr.bf16.mxu0 0
    %7568 = vmatpush1.bf16.msra.mxu0 0
    %7569 = vmatprep.subr.bf16.mxu0 0
    %7570 = vmatpush1.bf16.msra.mxu0 0
    %7571 = vmatprep.subr.bf16.mxu0 0
    %7572 = vmatpush1.bf16.msra.mxu0 0
    %7573 = vmatprep.subr.bf16.mxu0 0
    %7574 = vmatpush1.bf16.msra.mxu0 0
    %7575 = vmatprep.subr.bf16.mxu0 0
    %7576 = vmatpush1.bf16.msra.mxu0 0
    %7577 = vmatprep.subr.bf16.mxu0 0
    %7578 = vmatpush1.bf16.msra.mxu0 0
    %7579 = vmatprep.mubr.bf16.mxu0 0
    %7580 = vmatmul.mubr.bf16.gmra.mrb[0].mxu0 %v7294
    %v7581 = vpop.f32.mrb[0].mxu0
    %v7582 = vadd.f32 0.0, %v7581
    %v7583 = vpop.f32.mrb[0].mxu0
    %v7584 = vadd.f32 0.0, %v7583
    %v7585 = vpop.f32.mrb[0].mxu0
    %v7586 = vadd.f32 0.0, %v7585
    %v7587 = vpop.f32.mrb[0].mxu0
    %v7588 = vadd.f32 0.0, %v7587
    %7589 = vdwg.mxu0
    %v7590 = vadd.f32 %v7304, %v7539
    %v7591 = vadd.f32 %v7305, %v7541
    %v7592 = vadd.f32 %v7306, %v7582
    %v7593 = vadd.f32 %v7307, %v7584
    %v7594 = vadd.f32 %v7308, %v7543
    %v7595 = vadd.f32 %v7309, %v7545
    %v7596 = vadd.f32 %v7310, %v7586
    %v7597 = vadd.f32 %v7311, %v7588
    %v7598 = vxor.u32 %v7590, 2147483648
    %v7599 = vxor.u32 %v7594, 2147483648
    %v7600 = vmul.f32 %v7598, 1.442695
    %v7601 = vpow.pop %v7600
    %v7602 = vmul.f32 %v7599, 1.442695
    %v7603 = vpow.pop %v7602
    %v7604 = vadd.f32 %v7601, 1.0
    %v7605 = vadd.f32 %v7603, 1.0
    %v7606 = vrcp.pop %v7604
    %v7607 = vmul.f32 1.0, %v7606
    %v7608 = vrcp.pop %v7605
    %v7609 = vmul.f32 1.0, %v7608
    %v7610 = vxor.u32 %v7591, 2147483648
    %v7611 = vxor.u32 %v7595, 2147483648
    %v7612 = vmul.f32 %v7610, 1.442695
    %v7613 = vpow.pop %v7612
    %v7614 = vmul.f32 %v7611, 1.442695
    %v7615 = vpow.pop %v7614
    %v7616 = vadd.f32 %v7613, 1.0
    %v7617 = vadd.f32 %v7615, 1.0
    %v7618 = vrcp.pop %v7616
    %v7619 = vmul.f32 1.0, %v7618
    %v7620 = vrcp.pop %v7617
    %v7621 = vmul.f32 1.0, %v7620
    %v7622 = vtanh.pop %v7592
    %v7623 = vtanh.pop %v7596
    %v7624 = vxor.u32 %v7593, 2147483648
    %v7625 = vxor.u32 %v7597, 2147483648
    %v7626 = vmul.f32 %v7624, 1.442695
    %v7627 = vpow.pop %v7626
    %v7628 = vmul.f32 %v7625, 1.442695
    %v7629 = vpow.pop %v7628
    %v7630 = vadd.f32 %v7627, 1.0
    %v7631 = vadd.f32 %v7629, 1.0
    %v7632 = vrcp.pop %v7630
    %v7633 = vmul.f32 1.0, %v7632
    %v7634 = vrcp.pop %v7631
    %v7635 = vmul.f32 1.0, %v7634
    %v7636 = vmul.f32 %v7619, %v7288
    %v7637 = vmul.f32 %v7621, %v7289
    %v7638 = vmul.f32 %v7607, %v7622
    %v7639 = vmul.f32 %v7609, %v7623
    %v7640 = vadd.f32 %v7636, %v7638
    %v7641 = vadd.f32 %v7637, %v7639
    %v7642 = vtanh.pop %v7640
    %v7643 = vtanh.pop %v7641
    %v7644 = vmul.f32 %v7633, %v7642
    %v7645 = vmul.f32 %v7635, %v7643
    %v7646 = vpack.c.bf16 %v7645, %v7644
    %v7648 = vunpack.c.l.b16 %v7646
    %v7649 = vunpack.c.h.b16 %v7646
    %v7650 = vpack.c.b16 %v7648, %v7648
    %v7651 = vpack.c.b16 %v7649, %v7649
    %7654 = vst [vmem:[%s3881] sm:$0xf] %v7650
    %7655 = vst [vmem:[%s3881 + $0x4] sm:$0xf] %v7651
    // Predicated region
    $region50: #{tpu_custom_call.1} parent=1 // pred_check
      _
    $region51: #{tpu_custom_call.1} parent=1 // pred_check_branch
      %7657 = sbr.rel (0) target = $region53
    $region52: #{tpu_custom_call.1} parent=1 // pred_region
      %s7659 = ssub.s32 1152, 1152
      %7660 = vsyncadd [#allocation5], %s7659
      %s7661 = sshll.u32 [#allocation12], 4
      %s7662 = int_to_ptr.vmem [resolvable:$true] %s7661
      %7667 = dma.vmem_to_hbm [thread:$0]  %s7662, 1152, %s7, [#allocation5], 64, 64, 4
    $region53: #{tpu_custom_call.1} parent=1 // pred_fallthru
      _
    // Predicated region
    $region54: #{tpu_custom_call.1} parent=1 // pred_check
      _
    $region55: #{tpu_custom_call.1} parent=1 // pred_check_branch
      %7669 = sbr.rel (0) target = $region57
    $region56: #{tpu_custom_call.1} parent=1 // pred_region
      %7670 = dma.done [#allocation5], 1152
    $region57: #{tpu_custom_call.1} parent=1 // pred_fallthru
      _
    %7671 = vsyncpa [#allocation4], 1
    %7672 = vsyncpa [#allocation7], 1
    %7673 = vsyncpa [#allocation10], 1
    %7674 = vsyncpa [#allocation5], 1

</llo_original>
